<compile_context>
chip_gen: v5e
topology: v5e:2x2
jax: 0.10.0
libtpu: 0.0.40
codegen_flags: <defaults>
</compile_context>

<pallas_src>
import jax
import jax.numpy as jnp
import numpy as np
from jax.experimental import pallas as pl
from jax.experimental.pallas import tpu as pltpu

VMEM_LIMIT = 40 * 1024 * 1024  # well above actual need, < v7x 64 MiB physical


def _round_up(x, m):
    return (x + m - 1) // m * m


# ----------------- Layer 1 kernel: matmul + bias + BN + ReLU -----------------
# Output columns are ordered (ky, kx, oc); per-channel BN stats therefore
# reduce over the valid rows AND the 49 spatial column groups (static unroll).

def _make_l1_kernel(Mp, C, S, n_valid):
    count = float(n_valid * S)

    def kernel(z_ref, w_ref, bias_ref, gamma_ref, beta_ref, o_ref):
        y = jnp.dot(z_ref[...], w_ref[...], preferred_element_type=jnp.float32)
        y = y + bias_ref[...]
        # mask padded batch rows (they carry bias values) out of the stats
        row_ids = jax.lax.broadcasted_iota(jnp.int32, (Mp, 1), 0)
        ym = jnp.where(row_ids < n_valid, y, 0.0)
        acc = jnp.zeros((Mp, C), jnp.float32)
        acc2 = jnp.zeros((Mp, C), jnp.float32)
        for s in range(S):                      # static unroll, lane-aligned slices
            blk = ym[:, s * C:(s + 1) * C]
            acc = acc + blk
            acc2 = acc2 + blk * blk
        tot = jnp.sum(acc, axis=0, keepdims=True)     # (1, C)
        tot2 = jnp.sum(acc2, axis=0, keepdims=True)   # (1, C)
        mean = tot / count
        var = tot2 / count - mean * mean              # biased batch variance
        scale = gamma_ref[...] * jax.lax.rsqrt(var + 1e-5)
        shift = beta_ref[...] - mean * scale
        for s in range(S):
            sl = slice(s * C, (s + 1) * C)
            o_ref[:, sl] = jnp.maximum(y[:, sl] * scale + shift, 0.0)

    return kernel


def layer1_fused(z, w1, b1, gamma, beta):
    """ConvTranspose2d(latent, C, k, 1, 0) on a 1x1 input (== dense) + BN + ReLU."""
    N, latent = z.shape
    _, C, k, _ = w1.shape
    S = k * k
    Mp = _round_up(N, 8)
    z_p = jnp.pad(z, ((0, Mp - N), (0, 0)))
    # weight columns ordered (ky, kx, oc) -> kernel output is NHWC-flattened
    W = w1.transpose(0, 2, 3, 1).reshape(latent, S * C)
    bias_full = jnp.tile(b1, S).reshape(1, S * C)

    out = pl.pallas_call(
        _make_l1_kernel(Mp, C, S, N),
        out_shape=jax.ShapeDtypeStruct((Mp, S * C), jnp.float32),
        grid=(1,),
        in_specs=[
            pl.BlockSpec((Mp, latent), lambda i: (0, 0)),
            pl.BlockSpec((latent, S * C), lambda i: (0, 0)),
            pl.BlockSpec((1, S * C), lambda i: (0, 0)),
            pl.BlockSpec((1, C), lambda i: (0, 0)),
            pl.BlockSpec((1, C), lambda i: (0, 0)),
        ],
        out_specs=pl.BlockSpec((Mp, S * C), lambda i: (0, 0)),
        compiler_params=pltpu.CompilerParams(vmem_limit_bytes=VMEM_LIMIT),
    )(z_p, W, bias_full, gamma.reshape(1, C), beta.reshape(1, C))
    return out[:N].reshape(N, k, k, C)            # NHWC, no transpose needed


# ----------------- Layer 2 kernel: matmul + bias + BN + ReLU -----------------

def _mm_bias_bn_relu_kernel(a_ref, b_ref, bias_ref, gamma_ref, beta_ref, o_ref):
    y = jnp.dot(a_ref[...], b_ref[...], preferred_element_type=jnp.float32)
    y = y + bias_ref[...]
    mean = jnp.mean(y, axis=0, keepdims=True)         # all rows are valid
    var = jnp.mean(jnp.square(y - mean), axis=0, keepdims=True)
    scale = gamma_ref[...] * jax.lax.rsqrt(var + 1e-5)
    o_ref[...] = jnp.maximum((y - mean) * scale + beta_ref[...], 0.0)


def matmul_bias_bn_relu(a, b, bias, gamma, beta):
    M, K = a.shape
    _, C = b.shape
    return pl.pallas_call(
        _mm_bias_bn_relu_kernel,
        out_shape=jax.ShapeDtypeStruct((M, C), jnp.float32),
        grid=(1,),
        in_specs=[
            pl.BlockSpec((M, K), lambda i: (0, 0)),
            pl.BlockSpec((K, C), lambda i: (0, 0)),
            pl.BlockSpec((1, C), lambda i: (0, 0)),
            pl.BlockSpec((1, C), lambda i: (0, 0)),
            pl.BlockSpec((1, C), lambda i: (0, 0)),
        ],
        out_specs=pl.BlockSpec((M, C), lambda i: (0, 0)),
        compiler_params=pltpu.CompilerParams(vmem_limit_bytes=VMEM_LIMIT),
    )(a, b, bias.reshape(1, C), gamma.reshape(1, C), beta.reshape(1, C))


# -------- Layer 3 kernel (C_out = 1): VPU multiply + lane reduce + tanh -------

def _rowdot_bias_tanh_kernel(a_ref, w_ref, b_ref, o_ref):
    s = jnp.sum(a_ref[...] * w_ref[...], axis=-1, keepdims=True) + b_ref[...]
    o_ref[...] = jnp.tanh(s)


def rowdot_bias_tanh(a, w_row, bias, tile_rows):
    M, K = a.shape
    assert M % tile_rows == 0
    return pl.pallas_call(
        _rowdot_bias_tanh_kernel,
        out_shape=jax.ShapeDtypeStruct((M, 1), jnp.float32),
        grid=(M // tile_rows,),
        in_specs=[
            pl.BlockSpec((tile_rows, K), lambda i: (i, 0)),
            pl.BlockSpec((1, K), lambda i: (0, 0)),
            pl.BlockSpec((1, 1), lambda i: (0, 0)),
        ],
        out_specs=pl.BlockSpec((tile_rows, 1), lambda i: (i, 0)),
        compiler_params=pltpu.CompilerParams(
            dimension_semantics=("parallel",),
            vmem_limit_bytes=VMEM_LIMIT),
    )(a, w_row, bias.reshape(1, 1))


# -------------------- ConvTranspose2d glue (XLA, data movement) --------------

def _dilate_and_pad(x_nhwc, stride, pad, k):
    N, H, W, C = x_nhwc.shape
    Hd, Wd = (H - 1) * stride + 1, (W - 1) * stride + 1
    y = jnp.zeros((N, Hd, Wd, C), x_nhwc.dtype)
    y = y.at[:, ::stride, ::stride, :].set(x_nhwc)
    e = k - 1 - pad
    return jnp.pad(y, ((0, 0), (e, e), (e, e), (0, 0)))


def _im2col(xp, k):
    N, Hp, Wp, C = xp.shape
    OH, OW = Hp - k + 1, Wp - k + 1
    cols = []
    for ky in range(k):
        for kx in range(k):
            cols.append(xp[:, ky:ky + OH, kx:kx + OW, :])
    # contraction-dim order = (ky, kx, ic)
    return jnp.concatenate(cols, axis=-1), OH, OW


# --------------------------------- Generator ---------------------------------

def generator_forward(z_nchw, p):
    # TODO(synk): PyTorch training-mode BatchNorm also updates running_mean/var
    # buffers; that side effect is not part of forward()'s returned value.
    N, latent = z_nchw.shape[0], z_nchw.shape[1]
    z = z_nchw.reshape(N, latent)

    # Layer 1: ConvTranspose2d(latent,128,7,1,0) + BN + ReLU (one fused kernel)
    x = layer1_fused(z, p["w1"], p["b1"], p["g1"], p["be1"])       # (N,7,7,128)

    # Layer 2: ConvTranspose2d(128,64,4,2,1) + BN + ReLU -> 14x14
    k2, c_in2, c_out2 = p["w2"].shape[2], p["w2"].shape[0], p["w2"].shape[1]
    patches, OH2, OW2 = _im2col(_dilate_and_pad(x, 2, 1, k2), k2)
    A2 = patches.reshape(N * OH2 * OW2, k2 * k2 * c_in2)
    B2 = jnp.flip(p["w2"], axis=(2, 3)).transpose(2, 3, 0, 1).reshape(
        k2 * k2 * c_in2, c_out2)
    x = matmul_bias_bn_relu(A2, B2, p["b2"], p["g2"], p["be2"])
    x = x.reshape(N, OH2, OW2, c_out2)                             # (N,14,14,64)

    # Layer 3: ConvTranspose2d(64,1,4,2,1) + tanh -> 28x28
    k3, c_in3 = p["w3"].shape[2], p["w3"].shape[0]
    patches, OH3, OW3 = _im2col(_dilate_and_pad(x, 2, 1, k3), k3)
    A3 = patches.reshape(N * OH3 * OW3, k3 * k3 * c_in3)
    w3_row = jnp.flip(p["w3"], axis=(2, 3)).transpose(2, 3, 0, 1).reshape(
        1, k3 * k3 * c_in3)
    y = rowdot_bias_tanh(A3, w3_row, p["b3"], tile_rows=OH3 * OW3)  # (N*784, 1)
    return y.reshape(N, OH3, OW3, 1).transpose(0, 3, 1, 2)          # NCHW


def init_params(key, latent_dim=100):
    ks = jax.random.split(key, 10)

    def nrm(k, shape, scale=0.05):
        return scale * jax.random.normal(k, shape, jnp.float32)

    return dict(
        w1=nrm(ks[0], (latent_dim, 128, 7, 7)), b1=nrm(ks[1], (128,)),
        g1=1.0 + nrm(ks[2], (128,)), be1=nrm(ks[3], (128,)),
        w2=nrm(ks[4], (128, 64, 4, 4)), b2=nrm(ks[5], (64,)),
        g2=1.0 + nrm(ks[6], (64,)), be2=nrm(ks[7], (64,)),
        w3=nrm(ks[8], (64, 1, 4, 4)), b3=nrm(ks[9], (1,)),
    )


# ------------------------------ Pure-JAX reference ---------------------------

def _conv_transpose_ref(x, w_ct, b, stride, pad):
    k = w_ct.shape[2]
    w = jnp.flip(w_ct, axis=(2, 3)).transpose(1, 0, 2, 3)  # (O, I, kH, kW)
    y = jax.lax.conv_general_dilated(
        x, w, window_strides=(1, 1),
        padding=[(k - 1 - pad, k - 1 - pad)] * 2,
        lhs_dilation=(stride, stride),
        dimension_numbers=("NCHW", "OIHW", "NCHW"),
        precision=jax.lax.Precision.HIGHEST)
    return y + b.reshape(1, -1, 1, 1)


def _bn_relu_ref(x, g, b, eps=1e-5):
    mean = x.mean(axis=(0, 2, 3), keepdims=True)
    var = jnp.square(x - mean).mean(axis=(0, 2, 3), keepdims=True)
    y = (x - mean) * jax.lax.rsqrt(var + eps)
    y = y * g.reshape(1, -1, 1, 1) + b.reshape(1, -1, 1, 1)
    return jnp.maximum(y, 0.0)


def generator_ref(z, p):
    x = _conv_transpose_ref(z, p["w1"], p["b1"], 1, 0)
    x = _bn_relu_ref(x, p["g1"], p["be1"])
    x = _conv_transpose_ref(x, p["w2"], p["b2"], 2, 1)
    x = _bn_relu_ref(x, p["g2"], p["be2"])
    x = _conv_transpose_ref(x, p["w3"], p["b3"], 2, 1)
    return jnp.tanh(x)


if __name__ == "__main__":
    key = jax.random.PRNGKey(0)
    pkey, zkey = jax.random.split(key)
    latent_dim = 100
    params = init_params(pkey, latent_dim)
    z = jax.random.normal(zkey, (2, latent_dim, 1, 1), jnp.float32)

    out = jax.jit(generator_forward)(z, params)
    out = jax.block_until_ready(out)

    assert out.shape == (2, 1, 28, 28), out.shape
    assert np.isfinite(np.asarray(out)).all()

    ref = generator_ref(z, params)
    max_err = float(jnp.max(jnp.abs(out - ref)))
    assert max_err < 5e-3, f"max abs err vs reference: {max_err}"

    print("KERNEL_OK")
</pallas_src>

<mosaic_0001>
module attributes {stable_mosaic.version = 11 : i64} {
  func.func @kernel(%arg0: i32, %arg1: memref<8x100xf32, #tpu.memory_space<vmem>>, %arg2: memref<100x6272xf32, #tpu.memory_space<vmem>>, %arg3: memref<1x6272xf32, #tpu.memory_space<vmem>>, %arg4: memref<1x128xf32, #tpu.memory_space<vmem>>, %arg5: memref<1x128xf32, #tpu.memory_space<vmem>>, %arg6: memref<8x6272xf32, #tpu.memory_space<vmem>>) attributes {dimension_semantics = [#tpu.dimension_semantics<arbitrary>], iteration_bounds = array<i64: 1>, scalar_prefetch = 0 : i64, scratch_operands = 0 : i64, tpu.core_type = #tpu.core_type<tc>, window_params = [{pipeline_mode = #tpu.pipeline_mode<synchronous>, transform_indices = @transform_0, window_bounds = array<i64: 8, 100>}, {pipeline_mode = #tpu.pipeline_mode<synchronous>, transform_indices = @transform_1, window_bounds = array<i64: 100, 6272>}, {pipeline_mode = #tpu.pipeline_mode<synchronous>, transform_indices = @transform_2, window_bounds = array<i64: 1, 6272>}, {pipeline_mode = #tpu.pipeline_mode<synchronous>, transform_indices = @transform_3, window_bounds = array<i64: 1, 128>}, {pipeline_mode = #tpu.pipeline_mode<synchronous>, transform_indices = @transform_4, window_bounds = array<i64: 1, 128>}, {pipeline_mode = #tpu.pipeline_mode<synchronous>, transform_indices = @transform_5, window_bounds = array<i64: 8, 6272>}]} {
    %c0 = arith.constant 0 : index
    %c0_0 = arith.constant 0 : index
    %0 = vector.load %arg1[%c0, %c0_0] : memref<8x100xf32, #tpu.memory_space<vmem>>, vector<8x100xf32>
    %c0_1 = arith.constant 0 : index
    %c0_2 = arith.constant 0 : index
    %1 = vector.load %arg2[%c0_1, %c0_2] : memref<100x6272xf32, #tpu.memory_space<vmem>>, vector<100x6272xf32>
    %cst = arith.constant dense<0.000000e+00> : vector<8x6272xf32>
    %2 = tpu.matmul %0, %1, %cst {dimension_numbers = #tpu.dot_dimension_numbers<[1], [0], [0], [1], [0, 0, 1, 1], [], []>} : vector<8x100xf32>, vector<100x6272xf32>, vector<8x6272xf32> -> vector<8x6272xf32>
    %c0_3 = arith.constant 0 : index
    %c0_4 = arith.constant 0 : index
    %3 = vector.load %arg3[%c0_3, %c0_4] : memref<1x6272xf32, #tpu.memory_space<vmem>>, vector<1x6272xf32>
    %4 = vector.broadcast %3 : vector<1x6272xf32> to vector<8x6272xf32>
    %5 = arith.addf %2, %4 : vector<8x6272xf32>
    %6 = tpu.iota {dimensions = array<i32: 0>} : vector<8x1xi32>
    %c2_i32 = arith.constant 2 : i32
    %7 = vector.broadcast %c2_i32 : i32 to vector<8x1xi32>
    %8 = arith.cmpi slt, %6, %7 : vector<8x1xi32>
    %cst_5 = arith.constant 0.000000e+00 : f32
    %9 = vector.shape_cast %8 : vector<8x1xi1> to vector<8x1xi1>
    %10 = vector.broadcast %9 : vector<8x1xi1> to vector<8x6272xi1>
    %11 = vector.broadcast %cst_5 : f32 to vector<8x6272xf32>
    %12 = arith.select %10, %5, %11 : vector<8x6272xi1>, vector<8x6272xf32>
    %cst_6 = arith.constant 0.000000e+00 : f32
    %13 = vector.broadcast %cst_6 : f32 to vector<8x128xf32>
    %cst_7 = arith.constant 0.000000e+00 : f32
    %14 = vector.broadcast %cst_7 : f32 to vector<8x128xf32>
    %15 = vector.extract_strided_slice %12 {offsets = [0, 0], sizes = [8, 128], strides = [1, 1]} : vector<8x6272xf32> to vector<8x128xf32>
    %16 = arith.addf %13, %15 : vector<8x128xf32>
    %17 = arith.mulf %15, %15 : vector<8x128xf32>
    %18 = arith.addf %14, %17 : vector<8x128xf32>
    %19 = vector.extract_strided_slice %12 {offsets = [0, 128], sizes = [8, 128], strides = [1, 1]} : vector<8x6272xf32> to vector<8x128xf32>
    %20 = arith.addf %16, %19 : vector<8x128xf32>
    %21 = arith.mulf %19, %19 : vector<8x128xf32>
    %22 = arith.addf %18, %21 : vector<8x128xf32>
    %23 = vector.extract_strided_slice %12 {offsets = [0, 256], sizes = [8, 128], strides = [1, 1]} : vector<8x6272xf32> to vector<8x128xf32>
    %24 = arith.addf %20, %23 : vector<8x128xf32>
    %25 = arith.mulf %23, %23 : vector<8x128xf32>
    %26 = arith.addf %22, %25 : vector<8x128xf32>
    %27 = vector.extract_strided_slice %12 {offsets = [0, 384], sizes = [8, 128], strides = [1, 1]} : vector<8x6272xf32> to vector<8x128xf32>
    %28 = arith.addf %24, %27 : vector<8x128xf32>
    %29 = arith.mulf %27, %27 : vector<8x128xf32>
    %30 = arith.addf %26, %29 : vector<8x128xf32>
    %31 = vector.extract_strided_slice %12 {offsets = [0, 512], sizes = [8, 128], strides = [1, 1]} : vector<8x6272xf32> to vector<8x128xf32>
    %32 = arith.addf %28, %31 : vector<8x128xf32>
    %33 = arith.mulf %31, %31 : vector<8x128xf32>
    %34 = arith.addf %30, %33 : vector<8x128xf32>
    %35 = vector.extract_strided_slice %12 {offsets = [0, 640], sizes = [8, 128], strides = [1, 1]} : vector<8x6272xf32> to vector<8x128xf32>
    %36 = arith.addf %32, %35 : vector<8x128xf32>
    %37 = arith.mulf %35, %35 : vector<8x128xf32>
    %38 = arith.addf %34, %37 : vector<8x128xf32>
    %39 = vector.extract_strided_slice %12 {offsets = [0, 768], sizes = [8, 128], strides = [1, 1]} : vector<8x6272xf32> to vector<8x128xf32>
    %40 = arith.addf %36, %39 : vector<8x128xf32>
    %41 = arith.mulf %39, %39 : vector<8x128xf32>
    %42 = arith.addf %38, %41 : vector<8x128xf32>
    %43 = vector.extract_strided_slice %12 {offsets = [0, 896], sizes = [8, 128], strides = [1, 1]} : vector<8x6272xf32> to vector<8x128xf32>
    %44 = arith.addf %40, %43 : vector<8x128xf32>
    %45 = arith.mulf %43, %43 : vector<8x128xf32>
    %46 = arith.addf %42, %45 : vector<8x128xf32>
    %47 = vector.extract_strided_slice %12 {offsets = [0, 1024], sizes = [8, 128], strides = [1, 1]} : vector<8x6272xf32> to vector<8x128xf32>
    %48 = arith.addf %44, %47 : vector<8x128xf32>
    %49 = arith.mulf %47, %47 : vector<8x128xf32>
    %50 = arith.addf %46, %49 : vector<8x128xf32>
    %51 = vector.extract_strided_slice %12 {offsets = [0, 1152], sizes = [8, 128], strides = [1, 1]} : vector<8x6272xf32> to vector<8x128xf32>
    %52 = arith.addf %48, %51 : vector<8x128xf32>
    %53 = arith.mulf %51, %51 : vector<8x128xf32>
    %54 = arith.addf %50, %53 : vector<8x128xf32>
    %55 = vector.extract_strided_slice %12 {offsets = [0, 1280], sizes = [8, 128], strides = [1, 1]} : vector<8x6272xf32> to vector<8x128xf32>
    %56 = arith.addf %52, %55 : vector<8x128xf32>
    %57 = arith.mulf %55, %55 : vector<8x128xf32>
    %58 = arith.addf %54, %57 : vector<8x128xf32>
    %59 = vector.extract_strided_slice %12 {offsets = [0, 1408], sizes = [8, 128], strides = [1, 1]} : vector<8x6272xf32> to vector<8x128xf32>
    %60 = arith.addf %56, %59 : vector<8x128xf32>
    %61 = arith.mulf %59, %59 : vector<8x128xf32>
    %62 = arith.addf %58, %61 : vector<8x128xf32>
    %63 = vector.extract_strided_slice %12 {offsets = [0, 1536], sizes = [8, 128], strides = [1, 1]} : vector<8x6272xf32> to vector<8x128xf32>
    %64 = arith.addf %60, %63 : vector<8x128xf32>
    %65 = arith.mulf %63, %63 : vector<8x128xf32>
    %66 = arith.addf %62, %65 : vector<8x128xf32>
    %67 = vector.extract_strided_slice %12 {offsets = [0, 1664], sizes = [8, 128], strides = [1, 1]} : vector<8x6272xf32> to vector<8x128xf32>
    %68 = arith.addf %64, %67 : vector<8x128xf32>
    %69 = arith.mulf %67, %67 : vector<8x128xf32>
    %70 = arith.addf %66, %69 : vector<8x128xf32>
    %71 = vector.extract_strided_slice %12 {offsets = [0, 1792], sizes = [8, 128], strides = [1, 1]} : vector<8x6272xf32> to vector<8x128xf32>
    %72 = arith.addf %68, %71 : vector<8x128xf32>
    %73 = arith.mulf %71, %71 : vector<8x128xf32>
    %74 = arith.addf %70, %73 : vector<8x128xf32>
    %75 = vector.extract_strided_slice %12 {offsets = [0, 1920], sizes = [8, 128], strides = [1, 1]} : vector<8x6272xf32> to vector<8x128xf32>
    %76 = arith.addf %72, %75 : vector<8x128xf32>
    %77 = arith.mulf %75, %75 : vector<8x128xf32>
    %78 = arith.addf %74, %77 : vector<8x128xf32>
    %79 = vector.extract_strided_slice %12 {offsets = [0, 2048], sizes = [8, 128], strides = [1, 1]} : vector<8x6272xf32> to vector<8x128xf32>
    %80 = arith.addf %76, %79 : vector<8x128xf32>
    %81 = arith.mulf %79, %79 : vector<8x128xf32>
    %82 = arith.addf %78, %81 : vector<8x128xf32>
    %83 = vector.extract_strided_slice %12 {offsets = [0, 2176], sizes = [8, 128], strides = [1, 1]} : vector<8x6272xf32> to vector<8x128xf32>
    %84 = arith.addf %80, %83 : vector<8x128xf32>
    %85 = arith.mulf %83, %83 : vector<8x128xf32>
    %86 = arith.addf %82, %85 : vector<8x128xf32>
    %87 = vector.extract_strided_slice %12 {offsets = [0, 2304], sizes = [8, 128], strides = [1, 1]} : vector<8x6272xf32> to vector<8x128xf32>
    %88 = arith.addf %84, %87 : vector<8x128xf32>
    %89 = arith.mulf %87, %87 : vector<8x128xf32>
    %90 = arith.addf %86, %89 : vector<8x128xf32>
    %91 = vector.extract_strided_slice %12 {offsets = [0, 2432], sizes = [8, 128], strides = [1, 1]} : vector<8x6272xf32> to vector<8x128xf32>
    %92 = arith.addf %88, %91 : vector<8x128xf32>
    %93 = arith.mulf %91, %91 : vector<8x128xf32>
    %94 = arith.addf %90, %93 : vector<8x128xf32>
    %95 = vector.extract_strided_slice %12 {offsets = [0, 2560], sizes = [8, 128], strides = [1, 1]} : vector<8x6272xf32> to vector<8x128xf32>
    %96 = arith.addf %92, %95 : vector<8x128xf32>
    %97 = arith.mulf %95, %95 : vector<8x128xf32>
    %98 = arith.addf %94, %97 : vector<8x128xf32>
    %99 = vector.extract_strided_slice %12 {offsets = [0, 2688], sizes = [8, 128], strides = [1, 1]} : vector<8x6272xf32> to vector<8x128xf32>
    %100 = arith.addf %96, %99 : vector<8x128xf32>
    %101 = arith.mulf %99, %99 : vector<8x128xf32>
    %102 = arith.addf %98, %101 : vector<8x128xf32>
    %103 = vector.extract_strided_slice %12 {offsets = [0, 2816], sizes = [8, 128], strides = [1, 1]} : vector<8x6272xf32> to vector<8x128xf32>
    %104 = arith.addf %100, %103 : vector<8x128xf32>
    %105 = arith.mulf %103, %103 : vector<8x128xf32>
    %106 = arith.addf %102, %105 : vector<8x128xf32>
    %107 = vector.extract_strided_slice %12 {offsets = [0, 2944], sizes = [8, 128], strides = [1, 1]} : vector<8x6272xf32> to vector<8x128xf32>
    %108 = arith.addf %104, %107 : vector<8x128xf32>
    %109 = arith.mulf %107, %107 : vector<8x128xf32>
    %110 = arith.addf %106, %109 : vector<8x128xf32>
    %111 = vector.extract_strided_slice %12 {offsets = [0, 3072], sizes = [8, 128], strides = [1, 1]} : vector<8x6272xf32> to vector<8x128xf32>
    %112 = arith.addf %108, %111 : vector<8x128xf32>
    %113 = arith.mulf %111, %111 : vector<8x128xf32>
    %114 = arith.addf %110, %113 : vector<8x128xf32>
    %115 = vector.extract_strided_slice %12 {offsets = [0, 3200], sizes = [8, 128], strides = [1, 1]} : vector<8x6272xf32> to vector<8x128xf32>
    %116 = arith.addf %112, %115 : vector<8x128xf32>
    %117 = arith.mulf %115, %115 : vector<8x128xf32>
    %118 = arith.addf %114, %117 : vector<8x128xf32>
    %119 = vector.extract_strided_slice %12 {offsets = [0, 3328], sizes = [8, 128], strides = [1, 1]} : vector<8x6272xf32> to vector<8x128xf32>
    %120 = arith.addf %116, %119 : vector<8x128xf32>
    %121 = arith.mulf %119, %119 : vector<8x128xf32>
    %122 = arith.addf %118, %121 : vector<8x128xf32>
    %123 = vector.extract_strided_slice %12 {offsets = [0, 3456], sizes = [8, 128], strides = [1, 1]} : vector<8x6272xf32> to vector<8x128xf32>
    %124 = arith.addf %120, %123 : vector<8x128xf32>
    %125 = arith.mulf %123, %123 : vector<8x128xf32>
    %126 = arith.addf %122, %125 : vector<8x128xf32>
    %127 = vector.extract_strided_slice %12 {offsets = [0, 3584], sizes = [8, 128], strides = [1, 1]} : vector<8x6272xf32> to vector<8x128xf32>
    %128 = arith.addf %124, %127 : vector<8x128xf32>
    %129 = arith.mulf %127, %127 : vector<8x128xf32>
    %130 = arith.addf %126, %129 : vector<8x128xf32>
    %131 = vector.extract_strided_slice %12 {offsets = [0, 3712], sizes = [8, 128], strides = [1, 1]} : vector<8x6272xf32> to vector<8x128xf32>
    %132 = arith.addf %128, %131 : vector<8x128xf32>
    %133 = arith.mulf %131, %131 : vector<8x128xf32>
    %134 = arith.addf %130, %133 : vector<8x128xf32>
    %135 = vector.extract_strided_slice %12 {offsets = [0, 3840], sizes = [8, 128], strides = [1, 1]} : vector<8x6272xf32> to vector<8x128xf32>
    %136 = arith.addf %132, %135 : vector<8x128xf32>
    %137 = arith.mulf %135, %135 : vector<8x128xf32>
    %138 = arith.addf %134, %137 : vector<8x128xf32>
    %139 = vector.extract_strided_slice %12 {offsets = [0, 3968], sizes = [8, 128], strides = [1, 1]} : vector<8x6272xf32> to vector<8x128xf32>
    %140 = arith.addf %136, %139 : vector<8x128xf32>
    %141 = arith.mulf %139, %139 : vector<8x128xf32>
    %142 = arith.addf %138, %141 : vector<8x128xf32>
    %143 = vector.extract_strided_slice %12 {offsets = [0, 4096], sizes = [8, 128], strides = [1, 1]} : vector<8x6272xf32> to vector<8x128xf32>
    %144 = arith.addf %140, %143 : vector<8x128xf32>
    %145 = arith.mulf %143, %143 : vector<8x128xf32>
    %146 = arith.addf %142, %145 : vector<8x128xf32>
    %147 = vector.extract_strided_slice %12 {offsets = [0, 4224], sizes = [8, 128], strides = [1, 1]} : vector<8x6272xf32> to vector<8x128xf32>
    %148 = arith.addf %144, %147 : vector<8x128xf32>
    %149 = arith.mulf %147, %147 : vector<8x128xf32>
    %150 = arith.addf %146, %149 : vector<8x128xf32>
    %151 = vector.extract_strided_slice %12 {offsets = [0, 4352], sizes = [8, 128], strides = [1, 1]} : vector<8x6272xf32> to vector<8x128xf32>
    %152 = arith.addf %148, %151 : vector<8x128xf32>
    %153 = arith.mulf %151, %151 : vector<8x128xf32>
    %154 = arith.addf %150, %153 : vector<8x128xf32>
    %155 = vector.extract_strided_slice %12 {offsets = [0, 4480], sizes = [8, 128], strides = [1, 1]} : vector<8x6272xf32> to vector<8x128xf32>
    %156 = arith.addf %152, %155 : vector<8x128xf32>
    %157 = arith.mulf %155, %155 : vector<8x128xf32>
    %158 = arith.addf %154, %157 : vector<8x128xf32>
    %159 = vector.extract_strided_slice %12 {offsets = [0, 4608], sizes = [8, 128], strides = [1, 1]} : vector<8x6272xf32> to vector<8x128xf32>
    %160 = arith.addf %156, %159 : vector<8x128xf32>
    %161 = arith.mulf %159, %159 : vector<8x128xf32>
    %162 = arith.addf %158, %161 : vector<8x128xf32>
    %163 = vector.extract_strided_slice %12 {offsets = [0, 4736], sizes = [8, 128], strides = [1, 1]} : vector<8x6272xf32> to vector<8x128xf32>
    %164 = arith.addf %160, %163 : vector<8x128xf32>
    %165 = arith.mulf %163, %163 : vector<8x128xf32>
    %166 = arith.addf %162, %165 : vector<8x128xf32>
    %167 = vector.extract_strided_slice %12 {offsets = [0, 4864], sizes = [8, 128], strides = [1, 1]} : vector<8x6272xf32> to vector<8x128xf32>
    %168 = arith.addf %164, %167 : vector<8x128xf32>
    %169 = arith.mulf %167, %167 : vector<8x128xf32>
    %170 = arith.addf %166, %169 : vector<8x128xf32>
    %171 = vector.extract_strided_slice %12 {offsets = [0, 4992], sizes = [8, 128], strides = [1, 1]} : vector<8x6272xf32> to vector<8x128xf32>
    %172 = arith.addf %168, %171 : vector<8x128xf32>
    %173 = arith.mulf %171, %171 : vector<8x128xf32>
    %174 = arith.addf %170, %173 : vector<8x128xf32>
    %175 = vector.extract_strided_slice %12 {offsets = [0, 5120], sizes = [8, 128], strides = [1, 1]} : vector<8x6272xf32> to vector<8x128xf32>
    %176 = arith.addf %172, %175 : vector<8x128xf32>
    %177 = arith.mulf %175, %175 : vector<8x128xf32>
    %178 = arith.addf %174, %177 : vector<8x128xf32>
    %179 = vector.extract_strided_slice %12 {offsets = [0, 5248], sizes = [8, 128], strides = [1, 1]} : vector<8x6272xf32> to vector<8x128xf32>
    %180 = arith.addf %176, %179 : vector<8x128xf32>
    %181 = arith.mulf %179, %179 : vector<8x128xf32>
    %182 = arith.addf %178, %181 : vector<8x128xf32>
    %183 = vector.extract_strided_slice %12 {offsets = [0, 5376], sizes = [8, 128], strides = [1, 1]} : vector<8x6272xf32> to vector<8x128xf32>
    %184 = arith.addf %180, %183 : vector<8x128xf32>
    %185 = arith.mulf %183, %183 : vector<8x128xf32>
    %186 = arith.addf %182, %185 : vector<8x128xf32>
    %187 = vector.extract_strided_slice %12 {offsets = [0, 5504], sizes = [8, 128], strides = [1, 1]} : vector<8x6272xf32> to vector<8x128xf32>
    %188 = arith.addf %184, %187 : vector<8x128xf32>
    %189 = arith.mulf %187, %187 : vector<8x128xf32>
    %190 = arith.addf %186, %189 : vector<8x128xf32>
    %191 = vector.extract_strided_slice %12 {offsets = [0, 5632], sizes = [8, 128], strides = [1, 1]} : vector<8x6272xf32> to vector<8x128xf32>
    %192 = arith.addf %188, %191 : vector<8x128xf32>
    %193 = arith.mulf %191, %191 : vector<8x128xf32>
    %194 = arith.addf %190, %193 : vector<8x128xf32>
    %195 = vector.extract_strided_slice %12 {offsets = [0, 5760], sizes = [8, 128], strides = [1, 1]} : vector<8x6272xf32> to vector<8x128xf32>
    %196 = arith.addf %192, %195 : vector<8x128xf32>
    %197 = arith.mulf %195, %195 : vector<8x128xf32>
    %198 = arith.addf %194, %197 : vector<8x128xf32>
    %199 = vector.extract_strided_slice %12 {offsets = [0, 5888], sizes = [8, 128], strides = [1, 1]} : vector<8x6272xf32> to vector<8x128xf32>
    %200 = arith.addf %196, %199 : vector<8x128xf32>
    %201 = arith.mulf %199, %199 : vector<8x128xf32>
    %202 = arith.addf %198, %201 : vector<8x128xf32>
    %203 = vector.extract_strided_slice %12 {offsets = [0, 6016], sizes = [8, 128], strides = [1, 1]} : vector<8x6272xf32> to vector<8x128xf32>
    %204 = arith.addf %200, %203 : vector<8x128xf32>
    %205 = arith.mulf %203, %203 : vector<8x128xf32>
    %206 = arith.addf %202, %205 : vector<8x128xf32>
    %207 = vector.extract_strided_slice %12 {offsets = [0, 6144], sizes = [8, 128], strides = [1, 1]} : vector<8x6272xf32> to vector<8x128xf32>
    %208 = arith.addf %204, %207 : vector<8x128xf32>
    %209 = arith.mulf %207, %207 : vector<8x128xf32>
    %210 = arith.addf %206, %209 : vector<8x128xf32>
    %cst_8 = arith.constant dense<0.000000e+00> : vector<128xf32>
    %211 = vector.multi_reduction <add>, %208, %cst_8 [0] : vector<8x128xf32> to vector<128xf32>
    %212 = vector.shape_cast %211 : vector<128xf32> to vector<1x128xf32>
    %cst_9 = arith.constant dense<0.000000e+00> : vector<128xf32>
    %213 = vector.multi_reduction <add>, %210, %cst_9 [0] : vector<8x128xf32> to vector<128xf32>
    %214 = vector.shape_cast %213 : vector<128xf32> to vector<1x128xf32>
    %cst_10 = arith.constant 9.800000e+01 : f32
    %215 = vector.broadcast %cst_10 : f32 to vector<1x128xf32>
    %216 = arith.divf %212, %215 : vector<1x128xf32>
    %cst_11 = arith.constant 9.800000e+01 : f32
    %217 = vector.broadcast %cst_11 : f32 to vector<1x128xf32>
    %218 = arith.divf %214, %217 : vector<1x128xf32>
    %219 = arith.mulf %216, %216 : vector<1x128xf32>
    %220 = arith.subf %218, %219 : vector<1x128xf32>
    %c0_12 = arith.constant 0 : index
    %c0_13 = arith.constant 0 : index
    %221 = vector.load %arg4[%c0_12, %c0_13] : memref<1x128xf32, #tpu.memory_space<vmem>>, vector<1x128xf32>
    %cst_14 = arith.constant 9.99999974E-6 : f32
    %222 = vector.broadcast %cst_14 : f32 to vector<1x128xf32>
    %223 = arith.addf %220, %222 : vector<1x128xf32>
    %224 = math.rsqrt %223 : vector<1x128xf32>
    %225 = arith.mulf %221, %224 : vector<1x128xf32>
    %c0_15 = arith.constant 0 : index
    %c0_16 = arith.constant 0 : index
    %226 = vector.load %arg5[%c0_15, %c0_16] : memref<1x128xf32, #tpu.memory_space<vmem>>, vector<1x128xf32>
    %227 = arith.mulf %216, %225 : vector<1x128xf32>
    %228 = arith.subf %226, %227 : vector<1x128xf32>
    %229 = vector.extract_strided_slice %5 {offsets = [0, 0], sizes = [8, 128], strides = [1, 1]} : vector<8x6272xf32> to vector<8x128xf32>
    %230 = vector.broadcast %225 : vector<1x128xf32> to vector<8x128xf32>
    %231 = arith.mulf %229, %230 : vector<8x128xf32>
    %232 = vector.broadcast %228 : vector<1x128xf32> to vector<8x128xf32>
    %233 = arith.addf %231, %232 : vector<8x128xf32>
    %cst_17 = arith.constant 0.000000e+00 : f32
    %234 = vector.broadcast %cst_17 : f32 to vector<8x128xf32>
    %235 = arith.maximumf %233, %234 : vector<8x128xf32>
    %c0_18 = arith.constant 0 : index
    %c0_19 = arith.constant 0 : index
    %236 = vector.load %arg6[%c0_18, %c0_19] : memref<8x6272xf32, #tpu.memory_space<vmem>>, vector<8x128xf32>
    tpu.vector_store %arg6[%c0_18, %c0_19], %235 {strides = array<i32>} : memref<8x6272xf32, #tpu.memory_space<vmem>>, vector<8x128xf32>,
    %237 = vector.extract_strided_slice %5 {offsets = [0, 128], sizes = [8, 128], strides = [1, 1]} : vector<8x6272xf32> to vector<8x128xf32>
    %238 = vector.broadcast %225 : vector<1x128xf32> to vector<8x128xf32>
    %239 = arith.mulf %237, %238 : vector<8x128xf32>
    %240 = vector.broadcast %228 : vector<1x128xf32> to vector<8x128xf32>
    %241 = arith.addf %239, %240 : vector<8x128xf32>
    %cst_20 = arith.constant 0.000000e+00 : f32
    %242 = vector.broadcast %cst_20 : f32 to vector<8x128xf32>
    %243 = arith.maximumf %241, %242 : vector<8x128xf32>
    %c0_21 = arith.constant 0 : index
    %c128 = arith.constant 128 : index
    %244 = vector.load %arg6[%c0_21, %c128] : memref<8x6272xf32, #tpu.memory_space<vmem>>, vector<8x128xf32>
    tpu.vector_store %arg6[%c0_21, %c128], %243 {strides = array<i32>} : memref<8x6272xf32, #tpu.memory_space<vmem>>, vector<8x128xf32>,
    %245 = vector.extract_strided_slice %5 {offsets = [0, 256], sizes = [8, 128], strides = [1, 1]} : vector<8x6272xf32> to vector<8x128xf32>
    %246 = vector.broadcast %225 : vector<1x128xf32> to vector<8x128xf32>
    %247 = arith.mulf %245, %246 : vector<8x128xf32>
    %248 = vector.broadcast %228 : vector<1x128xf32> to vector<8x128xf32>
    %249 = arith.addf %247, %248 : vector<8x128xf32>
    %cst_22 = arith.constant 0.000000e+00 : f32
    %250 = vector.broadcast %cst_22 : f32 to vector<8x128xf32>
    %251 = arith.maximumf %249, %250 : vector<8x128xf32>
    %c0_23 = arith.constant 0 : index
    %c256 = arith.constant 256 : index
    %252 = vector.load %arg6[%c0_23, %c256] : memref<8x6272xf32, #tpu.memory_space<vmem>>, vector<8x128xf32>
    tpu.vector_store %arg6[%c0_23, %c256], %251 {strides = array<i32>} : memref<8x6272xf32, #tpu.memory_space<vmem>>, vector<8x128xf32>,
    %253 = vector.extract_strided_slice %5 {offsets = [0, 384], sizes = [8, 128], strides = [1, 1]} : vector<8x6272xf32> to vector<8x128xf32>
    %254 = vector.broadcast %225 : vector<1x128xf32> to vector<8x128xf32>
    %255 = arith.mulf %253, %254 : vector<8x128xf32>
    %256 = vector.broadcast %228 : vector<1x128xf32> to vector<8x128xf32>
    %257 = arith.addf %255, %256 : vector<8x128xf32>
    %cst_24 = arith.constant 0.000000e+00 : f32
    %258 = vector.broadcast %cst_24 : f32 to vector<8x128xf32>
    %259 = arith.maximumf %257, %258 : vector<8x128xf32>
    %c0_25 = arith.constant 0 : index
    %c384 = arith.constant 384 : index
    %260 = vector.load %arg6[%c0_25, %c384] : memref<8x6272xf32, #tpu.memory_space<vmem>>, vector<8x128xf32>
    tpu.vector_store %arg6[%c0_25, %c384], %259 {strides = array<i32>} : memref<8x6272xf32, #tpu.memory_space<vmem>>, vector<8x128xf32>,
    %261 = vector.extract_strided_slice %5 {offsets = [0, 512], sizes = [8, 128], strides = [1, 1]} : vector<8x6272xf32> to vector<8x128xf32>
    %262 = vector.broadcast %225 : vector<1x128xf32> to vector<8x128xf32>
    %263 = arith.mulf %261, %262 : vector<8x128xf32>
    %264 = vector.broadcast %228 : vector<1x128xf32> to vector<8x128xf32>
    %265 = arith.addf %263, %264 : vector<8x128xf32>
    %cst_26 = arith.constant 0.000000e+00 : f32
    %266 = vector.broadcast %cst_26 : f32 to vector<8x128xf32>
    %267 = arith.maximumf %265, %266 : vector<8x128xf32>
    %c0_27 = arith.constant 0 : index
    %c512 = arith.constant 512 : index
    %268 = vector.load %arg6[%c0_27, %c512] : memref<8x6272xf32, #tpu.memory_space<vmem>>, vector<8x128xf32>
    tpu.vector_store %arg6[%c0_27, %c512], %267 {strides = array<i32>} : memref<8x6272xf32, #tpu.memory_space<vmem>>, vector<8x128xf32>,
    %269 = vector.extract_strided_slice %5 {offsets = [0, 640], sizes = [8, 128], strides = [1, 1]} : vector<8x6272xf32> to vector<8x128xf32>
    %270 = vector.broadcast %225 : vector<1x128xf32> to vector<8x128xf32>
    %271 = arith.mulf %269, %270 : vector<8x128xf32>
    %272 = vector.broadcast %228 : vector<1x128xf32> to vector<8x128xf32>
    %273 = arith.addf %271, %272 : vector<8x128xf32>
    %cst_28 = arith.constant 0.000000e+00 : f32
    %274 = vector.broadcast %cst_28 : f32 to vector<8x128xf32>
    %275 = arith.maximumf %273, %274 : vector<8x128xf32>
    %c0_29 = arith.constant 0 : index
    %c640 = arith.constant 640 : index
    %276 = vector.load %arg6[%c0_29, %c640] : memref<8x6272xf32, #tpu.memory_space<vmem>>, vector<8x128xf32>
    tpu.vector_store %arg6[%c0_29, %c640], %275 {strides = array<i32>} : memref<8x6272xf32, #tpu.memory_space<vmem>>, vector<8x128xf32>,
    %277 = vector.extract_strided_slice %5 {offsets = [0, 768], sizes = [8, 128], strides = [1, 1]} : vector<8x6272xf32> to vector<8x128xf32>
    %278 = vector.broadcast %225 : vector<1x128xf32> to vector<8x128xf32>
    %279 = arith.mulf %277, %278 : vector<8x128xf32>
    %280 = vector.broadcast %228 : vector<1x128xf32> to vector<8x128xf32>
    %281 = arith.addf %279, %280 : vector<8x128xf32>
    %cst_30 = arith.constant 0.000000e+00 : f32
    %282 = vector.broadcast %cst_30 : f32 to vector<8x128xf32>
    %283 = arith.maximumf %281, %282 : vector<8x128xf32>
    %c0_31 = arith.constant 0 : index
    %c768 = arith.constant 768 : index
    %284 = vector.load %arg6[%c0_31, %c768] : memref<8x6272xf32, #tpu.memory_space<vmem>>, vector<8x128xf32>
    tpu.vector_store %arg6[%c0_31, %c768], %283 {strides = array<i32>} : memref<8x6272xf32, #tpu.memory_space<vmem>>, vector<8x128xf32>,
    %285 = vector.extract_strided_slice %5 {offsets = [0, 896], sizes = [8, 128], strides = [1, 1]} : vector<8x6272xf32> to vector<8x128xf32>
    %286 = vector.broadcast %225 : vector<1x128xf32> to vector<8x128xf32>
    %287 = arith.mulf %285, %286 : vector<8x128xf32>
    %288 = vector.broadcast %228 : vector<1x128xf32> to vector<8x128xf32>
    %289 = arith.addf %287, %288 : vector<8x128xf32>
    %cst_32 = arith.constant 0.000000e+00 : f32
    %290 = vector.broadcast %cst_32 : f32 to vector<8x128xf32>
    %291 = arith.maximumf %289, %290 : vector<8x128xf32>
    %c0_33 = arith.constant 0 : index
    %c896 = arith.constant 896 : index
    %292 = vector.load %arg6[%c0_33, %c896] : memref<8x6272xf32, #tpu.memory_space<vmem>>, vector<8x128xf32>
    tpu.vector_store %arg6[%c0_33, %c896], %291 {strides = array<i32>} : memref<8x6272xf32, #tpu.memory_space<vmem>>, vector<8x128xf32>,
    %293 = vector.extract_strided_slice %5 {offsets = [0, 1024], sizes = [8, 128], strides = [1, 1]} : vector<8x6272xf32> to vector<8x128xf32>
    %294 = vector.broadcast %225 : vector<1x128xf32> to vector<8x128xf32>
    %295 = arith.mulf %293, %294 : vector<8x128xf32>
    %296 = vector.broadcast %228 : vector<1x128xf32> to vector<8x128xf32>
    %297 = arith.addf %295, %296 : vector<8x128xf32>
    %cst_34 = arith.constant 0.000000e+00 : f32
    %298 = vector.broadcast %cst_34 : f32 to vector<8x128xf32>
    %299 = arith.maximumf %297, %298 : vector<8x128xf32>
    %c0_35 = arith.constant 0 : index
    %c1024 = arith.constant 1024 : index
    %300 = vector.load %arg6[%c0_35, %c1024] : memref<8x6272xf32, #tpu.memory_space<vmem>>, vector<8x128xf32>
    tpu.vector_store %arg6[%c0_35, %c1024], %299 {strides = array<i32>} : memref<8x6272xf32, #tpu.memory_space<vmem>>, vector<8x128xf32>,
    %301 = vector.extract_strided_slice %5 {offsets = [0, 1152], sizes = [8, 128], strides = [1, 1]} : vector<8x6272xf32> to vector<8x128xf32>
    %302 = vector.broadcast %225 : vector<1x128xf32> to vector<8x128xf32>
    %303 = arith.mulf %301, %302 : vector<8x128xf32>
    %304 = vector.broadcast %228 : vector<1x128xf32> to vector<8x128xf32>
    %305 = arith.addf %303, %304 : vector<8x128xf32>
    %cst_36 = arith.constant 0.000000e+00 : f32
    %306 = vector.broadcast %cst_36 : f32 to vector<8x128xf32>
    %307 = arith.maximumf %305, %306 : vector<8x128xf32>
    %c0_37 = arith.constant 0 : index
    %c1152 = arith.constant 1152 : index
    %308 = vector.load %arg6[%c0_37, %c1152] : memref<8x6272xf32, #tpu.memory_space<vmem>>, vector<8x128xf32>
    tpu.vector_store %arg6[%c0_37, %c1152], %307 {strides = array<i32>} : memref<8x6272xf32, #tpu.memory_space<vmem>>, vector<8x128xf32>,
    %309 = vector.extract_strided_slice %5 {offsets = [0, 1280], sizes = [8, 128], strides = [1, 1]} : vector<8x6272xf32> to vector<8x128xf32>
    %310 = vector.broadcast %225 : vector<1x128xf32> to vector<8x128xf32>
    %311 = arith.mulf %309, %310 : vector<8x128xf32>
    %312 = vector.broadcast %228 : vector<1x128xf32> to vector<8x128xf32>
    %313 = arith.addf %311, %312 : vector<8x128xf32>
    %cst_38 = arith.constant 0.000000e+00 : f32
    %314 = vector.broadcast %cst_38 : f32 to vector<8x128xf32>
    %315 = arith.maximumf %313, %314 : vector<8x128xf32>
    %c0_39 = arith.constant 0 : index
    %c1280 = arith.constant 1280 : index
    %316 = vector.load %arg6[%c0_39, %c1280] : memref<8x6272xf32, #tpu.memory_space<vmem>>, vector<8x128xf32>
    tpu.vector_store %arg6[%c0_39, %c1280], %315 {strides = array<i32>} : memref<8x6272xf32, #tpu.memory_space<vmem>>, vector<8x128xf32>,
    %317 = vector.extract_strided_slice %5 {offsets = [0, 1408], sizes = [8, 128], strides = [1, 1]} : vector<8x6272xf32> to vector<8x128xf32>
    %318 = vector.broadcast %225 : vector<1x128xf32> to vector<8x128xf32>
    %319 = arith.mulf %317, %318 : vector<8x128xf32>
    %320 = vector.broadcast %228 : vector<1x128xf32> to vector<8x128xf32>
    %321 = arith.addf %319, %320 : vector<8x128xf32>
    %cst_40 = arith.constant 0.000000e+00 : f32
    %322 = vector.broadcast %cst_40 : f32 to vector<8x128xf32>
    %323 = arith.maximumf %321, %322 : vector<8x128xf32>
    %c0_41 = arith.constant 0 : index
    %c1408 = arith.constant 1408 : index
    %324 = vector.load %arg6[%c0_41, %c1408] : memref<8x6272xf32, #tpu.memory_space<vmem>>, vector<8x128xf32>
    tpu.vector_store %arg6[%c0_41, %c1408], %323 {strides = array<i32>} : memref<8x6272xf32, #tpu.memory_space<vmem>>, vector<8x128xf32>,
    %325 = vector.extract_strided_slice %5 {offsets = [0, 1536], sizes = [8, 128], strides = [1, 1]} : vector<8x6272xf32> to vector<8x128xf32>
    %326 = vector.broadcast %225 : vector<1x128xf32> to vector<8x128xf32>
    %327 = arith.mulf %325, %326 : vector<8x128xf32>
    %328 = vector.broadcast %228 : vector<1x128xf32> to vector<8x128xf32>
    %329 = arith.addf %327, %328 : vector<8x128xf32>
    %cst_42 = arith.constant 0.000000e+00 : f32
    %330 = vector.broadcast %cst_42 : f32 to vector<8x128xf32>
    %331 = arith.maximumf %329, %330 : vector<8x128xf32>
    %c0_43 = arith.constant 0 : index
    %c1536 = arith.constant 1536 : index
    %332 = vector.load %arg6[%c0_43, %c1536] : memref<8x6272xf32, #tpu.memory_space<vmem>>, vector<8x128xf32>
    tpu.vector_store %arg6[%c0_43, %c1536], %331 {strides = array<i32>} : memref<8x6272xf32, #tpu.memory_space<vmem>>, vector<8x128xf32>,
    %333 = vector.extract_strided_slice %5 {offsets = [0, 1664], sizes = [8, 128], strides = [1, 1]} : vector<8x6272xf32> to vector<8x128xf32>
    %334 = vector.broadcast %225 : vector<1x128xf32> to vector<8x128xf32>
    %335 = arith.mulf %333, %334 : vector<8x128xf32>
    %336 = vector.broadcast %228 : vector<1x128xf32> to vector<8x128xf32>
    %337 = arith.addf %335, %336 : vector<8x128xf32>
    %cst_44 = arith.constant 0.000000e+00 : f32
    %338 = vector.broadcast %cst_44 : f32 to vector<8x128xf32>
    %339 = arith.maximumf %337, %338 : vector<8x128xf32>
    %c0_45 = arith.constant 0 : index
    %c1664 = arith.constant 1664 : index
    %340 = vector.load %arg6[%c0_45, %c1664] : memref<8x6272xf32, #tpu.memory_space<vmem>>, vector<8x128xf32>
    tpu.vector_store %arg6[%c0_45, %c1664], %339 {strides = array<i32>} : memref<8x6272xf32, #tpu.memory_space<vmem>>, vector<8x128xf32>,
    %341 = vector.extract_strided_slice %5 {offsets = [0, 1792], sizes = [8, 128], strides = [1, 1]} : vector<8x6272xf32> to vector<8x128xf32>
    %342 = vector.broadcast %225 : vector<1x128xf32> to vector<8x128xf32>
    %343 = arith.mulf %341, %342 : vector<8x128xf32>
    %344 = vector.broadcast %228 : vector<1x128xf32> to vector<8x128xf32>
    %345 = arith.addf %343, %344 : vector<8x128xf32>
    %cst_46 = arith.constant 0.000000e+00 : f32
    %346 = vector.broadcast %cst_46 : f32 to vector<8x128xf32>
    %347 = arith.maximumf %345, %346 : vector<8x128xf32>
    %c0_47 = arith.constant 0 : index
    %c1792 = arith.constant 1792 : index
    %348 = vector.load %arg6[%c0_47, %c1792] : memref<8x6272xf32, #tpu.memory_space<vmem>>, vector<8x128xf32>
    tpu.vector_store %arg6[%c0_47, %c1792], %347 {strides = array<i32>} : memref<8x6272xf32, #tpu.memory_space<vmem>>, vector<8x128xf32>,
    %349 = vector.extract_strided_slice %5 {offsets = [0, 1920], sizes = [8, 128], strides = [1, 1]} : vector<8x6272xf32> to vector<8x128xf32>
    %350 = vector.broadcast %225 : vector<1x128xf32> to vector<8x128xf32>
    %351 = arith.mulf %349, %350 : vector<8x128xf32>
    %352 = vector.broadcast %228 : vector<1x128xf32> to vector<8x128xf32>
    %353 = arith.addf %351, %352 : vector<8x128xf32>
    %cst_48 = arith.constant 0.000000e+00 : f32
    %354 = vector.broadcast %cst_48 : f32 to vector<8x128xf32>
    %355 = arith.maximumf %353, %354 : vector<8x128xf32>
    %c0_49 = arith.constant 0 : index
    %c1920 = arith.constant 1920 : index
    %356 = vector.load %arg6[%c0_49, %c1920] : memref<8x6272xf32, #tpu.memory_space<vmem>>, vector<8x128xf32>
    tpu.vector_store %arg6[%c0_49, %c1920], %355 {strides = array<i32>} : memref<8x6272xf32, #tpu.memory_space<vmem>>, vector<8x128xf32>,
    %357 = vector.extract_strided_slice %5 {offsets = [0, 2048], sizes = [8, 128], strides = [1, 1]} : vector<8x6272xf32> to vector<8x128xf32>
    %358 = vector.broadcast %225 : vector<1x128xf32> to vector<8x128xf32>
    %359 = arith.mulf %357, %358 : vector<8x128xf32>
    %360 = vector.broadcast %228 : vector<1x128xf32> to vector<8x128xf32>
    %361 = arith.addf %359, %360 : vector<8x128xf32>
    %cst_50 = arith.constant 0.000000e+00 : f32
    %362 = vector.broadcast %cst_50 : f32 to vector<8x128xf32>
    %363 = arith.maximumf %361, %362 : vector<8x128xf32>
    %c0_51 = arith.constant 0 : index
    %c2048 = arith.constant 2048 : index
    %364 = vector.load %arg6[%c0_51, %c2048] : memref<8x6272xf32, #tpu.memory_space<vmem>>, vector<8x128xf32>
    tpu.vector_store %arg6[%c0_51, %c2048], %363 {strides = array<i32>} : memref<8x6272xf32, #tpu.memory_space<vmem>>, vector<8x128xf32>,
    %365 = vector.extract_strided_slice %5 {offsets = [0, 2176], sizes = [8, 128], strides = [1, 1]} : vector<8x6272xf32> to vector<8x128xf32>
    %366 = vector.broadcast %225 : vector<1x128xf32> to vector<8x128xf32>
    %367 = arith.mulf %365, %366 : vector<8x128xf32>
    %368 = vector.broadcast %228 : vector<1x128xf32> to vector<8x128xf32>
    %369 = arith.addf %367, %368 : vector<8x128xf32>
    %cst_52 = arith.constant 0.000000e+00 : f32
    %370 = vector.broadcast %cst_52 : f32 to vector<8x128xf32>
    %371 = arith.maximumf %369, %370 : vector<8x128xf32>
    %c0_53 = arith.constant 0 : index
    %c2176 = arith.constant 2176 : index
    %372 = vector.load %arg6[%c0_53, %c2176] : memref<8x6272xf32, #tpu.memory_space<vmem>>, vector<8x128xf32>
    tpu.vector_store %arg6[%c0_53, %c2176], %371 {strides = array<i32>} : memref<8x6272xf32, #tpu.memory_space<vmem>>, vector<8x128xf32>,
    %373 = vector.extract_strided_slice %5 {offsets = [0, 2304], sizes = [8, 128], strides = [1, 1]} : vector<8x6272xf32> to vector<8x128xf32>
    %374 = vector.broadcast %225 : vector<1x128xf32> to vector<8x128xf32>
    %375 = arith.mulf %373, %374 : vector<8x128xf32>
    %376 = vector.broadcast %228 : vector<1x128xf32> to vector<8x128xf32>
    %377 = arith.addf %375, %376 : vector<8x128xf32>
    %cst_54 = arith.constant 0.000000e+00 : f32
    %378 = vector.broadcast %cst_54 : f32 to vector<8x128xf32>
    %379 = arith.maximumf %377, %378 : vector<8x128xf32>
    %c0_55 = arith.constant 0 : index
    %c2304 = arith.constant 2304 : index
    %380 = vector.load %arg6[%c0_55, %c2304] : memref<8x6272xf32, #tpu.memory_space<vmem>>, vector<8x128xf32>
    tpu.vector_store %arg6[%c0_55, %c2304], %379 {strides = array<i32>} : memref<8x6272xf32, #tpu.memory_space<vmem>>, vector<8x128xf32>,
    %381 = vector.extract_strided_slice %5 {offsets = [0, 2432], sizes = [8, 128], strides = [1, 1]} : vector<8x6272xf32> to vector<8x128xf32>
    %382 = vector.broadcast %225 : vector<1x128xf32> to vector<8x128xf32>
    %383 = arith.mulf %381, %382 : vector<8x128xf32>
    %384 = vector.broadcast %228 : vector<1x128xf32> to vector<8x128xf32>
    %385 = arith.addf %383, %384 : vector<8x128xf32>
    %cst_56 = arith.constant 0.000000e+00 : f32
    %386 = vector.broadcast %cst_56 : f32 to vector<8x128xf32>
    %387 = arith.maximumf %385, %386 : vector<8x128xf32>
    %c0_57 = arith.constant 0 : index
    %c2432 = arith.constant 2432 : index
    %388 = vector.load %arg6[%c0_57, %c2432] : memref<8x6272xf32, #tpu.memory_space<vmem>>, vector<8x128xf32>
    tpu.vector_store %arg6[%c0_57, %c2432], %387 {strides = array<i32>} : memref<8x6272xf32, #tpu.memory_space<vmem>>, vector<8x128xf32>,
    %389 = vector.extract_strided_slice %5 {offsets = [0, 2560], sizes = [8, 128], strides = [1, 1]} : vector<8x6272xf32> to vector<8x128xf32>
    %390 = vector.broadcast %225 : vector<1x128xf32> to vector<8x128xf32>
    %391 = arith.mulf %389, %390 : vector<8x128xf32>
    %392 = vector.broadcast %228 : vector<1x128xf32> to vector<8x128xf32>
    %393 = arith.addf %391, %392 : vector<8x128xf32>
    %cst_58 = arith.constant 0.000000e+00 : f32
    %394 = vector.broadcast %cst_58 : f32 to vector<8x128xf32>
    %395 = arith.maximumf %393, %394 : vector<8x128xf32>
    %c0_59 = arith.constant 0 : index
    %c2560 = arith.constant 2560 : index
    %396 = vector.load %arg6[%c0_59, %c2560] : memref<8x6272xf32, #tpu.memory_space<vmem>>, vector<8x128xf32>
    tpu.vector_store %arg6[%c0_59, %c2560], %395 {strides = array<i32>} : memref<8x6272xf32, #tpu.memory_space<vmem>>, vector<8x128xf32>,
    %397 = vector.extract_strided_slice %5 {offsets = [0, 2688], sizes = [8, 128], strides = [1, 1]} : vector<8x6272xf32> to vector<8x128xf32>
    %398 = vector.broadcast %225 : vector<1x128xf32> to vector<8x128xf32>
    %399 = arith.mulf %397, %398 : vector<8x128xf32>
    %400 = vector.broadcast %228 : vector<1x128xf32> to vector<8x128xf32>
    %401 = arith.addf %399, %400 : vector<8x128xf32>
    %cst_60 = arith.constant 0.000000e+00 : f32
    %402 = vector.broadcast %cst_60 : f32 to vector<8x128xf32>
    %403 = arith.maximumf %401, %402 : vector<8x128xf32>
    %c0_61 = arith.constant 0 : index
    %c2688 = arith.constant 2688 : index
    %404 = vector.load %arg6[%c0_61, %c2688] : memref<8x6272xf32, #tpu.memory_space<vmem>>, vector<8x128xf32>
    tpu.vector_store %arg6[%c0_61, %c2688], %403 {strides = array<i32>} : memref<8x6272xf32, #tpu.memory_space<vmem>>, vector<8x128xf32>,
    %405 = vector.extract_strided_slice %5 {offsets = [0, 2816], sizes = [8, 128], strides = [1, 1]} : vector<8x6272xf32> to vector<8x128xf32>
    %406 = vector.broadcast %225 : vector<1x128xf32> to vector<8x128xf32>
    %407 = arith.mulf %405, %406 : vector<8x128xf32>
    %408 = vector.broadcast %228 : vector<1x128xf32> to vector<8x128xf32>
    %409 = arith.addf %407, %408 : vector<8x128xf32>
    %cst_62 = arith.constant 0.000000e+00 : f32
    %410 = vector.broadcast %cst_62 : f32 to vector<8x128xf32>
    %411 = arith.maximumf %409, %410 : vector<8x128xf32>
    %c0_63 = arith.constant 0 : index
    %c2816 = arith.constant 2816 : index
    %412 = vector.load %arg6[%c0_63, %c2816] : memref<8x6272xf32, #tpu.memory_space<vmem>>, vector<8x128xf32>
    tpu.vector_store %arg6[%c0_63, %c2816], %411 {strides = array<i32>} : memref<8x6272xf32, #tpu.memory_space<vmem>>, vector<8x128xf32>,
    %413 = vector.extract_strided_slice %5 {offsets = [0, 2944], sizes = [8, 128], strides = [1, 1]} : vector<8x6272xf32> to vector<8x128xf32>
    %414 = vector.broadcast %225 : vector<1x128xf32> to vector<8x128xf32>
    %415 = arith.mulf %413, %414 : vector<8x128xf32>
    %416 = vector.broadcast %228 : vector<1x128xf32> to vector<8x128xf32>
    %417 = arith.addf %415, %416 : vector<8x128xf32>
    %cst_64 = arith.constant 0.000000e+00 : f32
    %418 = vector.broadcast %cst_64 : f32 to vector<8x128xf32>
    %419 = arith.maximumf %417, %418 : vector<8x128xf32>
    %c0_65 = arith.constant 0 : index
    %c2944 = arith.constant 2944 : index
    %420 = vector.load %arg6[%c0_65, %c2944] : memref<8x6272xf32, #tpu.memory_space<vmem>>, vector<8x128xf32>
    tpu.vector_store %arg6[%c0_65, %c2944], %419 {strides = array<i32>} : memref<8x6272xf32, #tpu.memory_space<vmem>>, vector<8x128xf32>,
    %421 = vector.extract_strided_slice %5 {offsets = [0, 3072], sizes = [8, 128], strides = [1, 1]} : vector<8x6272xf32> to vector<8x128xf32>
    %422 = vector.broadcast %225 : vector<1x128xf32> to vector<8x128xf32>
    %423 = arith.mulf %421, %422 : vector<8x128xf32>
    %424 = vector.broadcast %228 : vector<1x128xf32> to vector<8x128xf32>
    %425 = arith.addf %423, %424 : vector<8x128xf32>
    %cst_66 = arith.constant 0.000000e+00 : f32
    %426 = vector.broadcast %cst_66 : f32 to vector<8x128xf32>
    %427 = arith.maximumf %425, %426 : vector<8x128xf32>
    %c0_67 = arith.constant 0 : index
    %c3072 = arith.constant 3072 : index
    %428 = vector.load %arg6[%c0_67, %c3072] : memref<8x6272xf32, #tpu.memory_space<vmem>>, vector<8x128xf32>
    tpu.vector_store %arg6[%c0_67, %c3072], %427 {strides = array<i32>} : memref<8x6272xf32, #tpu.memory_space<vmem>>, vector<8x128xf32>,
    %429 = vector.extract_strided_slice %5 {offsets = [0, 3200], sizes = [8, 128], strides = [1, 1]} : vector<8x6272xf32> to vector<8x128xf32>
    %430 = vector.broadcast %225 : vector<1x128xf32> to vector<8x128xf32>
    %431 = arith.mulf %429, %430 : vector<8x128xf32>
    %432 = vector.broadcast %228 : vector<1x128xf32> to vector<8x128xf32>
    %433 = arith.addf %431, %432 : vector<8x128xf32>
    %cst_68 = arith.constant 0.000000e+00 : f32
    %434 = vector.broadcast %cst_68 : f32 to vector<8x128xf32>
    %435 = arith.maximumf %433, %434 : vector<8x128xf32>
    %c0_69 = arith.constant 0 : index
    %c3200 = arith.constant 3200 : index
    %436 = vector.load %arg6[%c0_69, %c3200] : memref<8x6272xf32, #tpu.memory_space<vmem>>, vector<8x128xf32>
    tpu.vector_store %arg6[%c0_69, %c3200], %435 {strides = array<i32>} : memref<8x6272xf32, #tpu.memory_space<vmem>>, vector<8x128xf32>,
    %437 = vector.extract_strided_slice %5 {offsets = [0, 3328], sizes = [8, 128], strides = [1, 1]} : vector<8x6272xf32> to vector<8x128xf32>
    %438 = vector.broadcast %225 : vector<1x128xf32> to vector<8x128xf32>
    %439 = arith.mulf %437, %438 : vector<8x128xf32>
    %440 = vector.broadcast %228 : vector<1x128xf32> to vector<8x128xf32>
    %441 = arith.addf %439, %440 : vector<8x128xf32>
    %cst_70 = arith.constant 0.000000e+00 : f32
    %442 = vector.broadcast %cst_70 : f32 to vector<8x128xf32>
    %443 = arith.maximumf %441, %442 : vector<8x128xf32>
    %c0_71 = arith.constant 0 : index
    %c3328 = arith.constant 3328 : index
    %444 = vector.load %arg6[%c0_71, %c3328] : memref<8x6272xf32, #tpu.memory_space<vmem>>, vector<8x128xf32>
    tpu.vector_store %arg6[%c0_71, %c3328], %443 {strides = array<i32>} : memref<8x6272xf32, #tpu.memory_space<vmem>>, vector<8x128xf32>,
    %445 = vector.extract_strided_slice %5 {offsets = [0, 3456], sizes = [8, 128], strides = [1, 1]} : vector<8x6272xf32> to vector<8x128xf32>
    %446 = vector.broadcast %225 : vector<1x128xf32> to vector<8x128xf32>
    %447 = arith.mulf %445, %446 : vector<8x128xf32>
    %448 = vector.broadcast %228 : vector<1x128xf32> to vector<8x128xf32>
    %449 = arith.addf %447, %448 : vector<8x128xf32>
    %cst_72 = arith.constant 0.000000e+00 : f32
    %450 = vector.broadcast %cst_72 : f32 to vector<8x128xf32>
    %451 = arith.maximumf %449, %450 : vector<8x128xf32>
    %c0_73 = arith.constant 0 : index
    %c3456 = arith.constant 3456 : index
    %452 = vector.load %arg6[%c0_73, %c3456] : memref<8x6272xf32, #tpu.memory_space<vmem>>, vector<8x128xf32>
    tpu.vector_store %arg6[%c0_73, %c3456], %451 {strides = array<i32>} : memref<8x6272xf32, #tpu.memory_space<vmem>>, vector<8x128xf32>,
    %453 = vector.extract_strided_slice %5 {offsets = [0, 3584], sizes = [8, 128], strides = [1, 1]} : vector<8x6272xf32> to vector<8x128xf32>
    %454 = vector.broadcast %225 : vector<1x128xf32> to vector<8x128xf32>
    %455 = arith.mulf %453, %454 : vector<8x128xf32>
    %456 = vector.broadcast %228 : vector<1x128xf32> to vector<8x128xf32>
    %457 = arith.addf %455, %456 : vector<8x128xf32>
    %cst_74 = arith.constant 0.000000e+00 : f32
    %458 = vector.broadcast %cst_74 : f32 to vector<8x128xf32>
    %459 = arith.maximumf %457, %458 : vector<8x128xf32>
    %c0_75 = arith.constant 0 : index
    %c3584 = arith.constant 3584 : index
    %460 = vector.load %arg6[%c0_75, %c3584] : memref<8x6272xf32, #tpu.memory_space<vmem>>, vector<8x128xf32>
    tpu.vector_store %arg6[%c0_75, %c3584], %459 {strides = array<i32>} : memref<8x6272xf32, #tpu.memory_space<vmem>>, vector<8x128xf32>,
    %461 = vector.extract_strided_slice %5 {offsets = [0, 3712], sizes = [8, 128], strides = [1, 1]} : vector<8x6272xf32> to vector<8x128xf32>
    %462 = vector.broadcast %225 : vector<1x128xf32> to vector<8x128xf32>
    %463 = arith.mulf %461, %462 : vector<8x128xf32>
    %464 = vector.broadcast %228 : vector<1x128xf32> to vector<8x128xf32>
    %465 = arith.addf %463, %464 : vector<8x128xf32>
    %cst_76 = arith.constant 0.000000e+00 : f32
    %466 = vector.broadcast %cst_76 : f32 to vector<8x128xf32>
    %467 = arith.maximumf %465, %466 : vector<8x128xf32>
    %c0_77 = arith.constant 0 : index
    %c3712 = arith.constant 3712 : index
    %468 = vector.load %arg6[%c0_77, %c3712] : memref<8x6272xf32, #tpu.memory_space<vmem>>, vector<8x128xf32>
    tpu.vector_store %arg6[%c0_77, %c3712], %467 {strides = array<i32>} : memref<8x6272xf32, #tpu.memory_space<vmem>>, vector<8x128xf32>,
    %469 = vector.extract_strided_slice %5 {offsets = [0, 3840], sizes = [8, 128], strides = [1, 1]} : vector<8x6272xf32> to vector<8x128xf32>
    %470 = vector.broadcast %225 : vector<1x128xf32> to vector<8x128xf32>
    %471 = arith.mulf %469, %470 : vector<8x128xf32>
    %472 = vector.broadcast %228 : vector<1x128xf32> to vector<8x128xf32>
    %473 = arith.addf %471, %472 : vector<8x128xf32>
    %cst_78 = arith.constant 0.000000e+00 : f32
    %474 = vector.broadcast %cst_78 : f32 to vector<8x128xf32>
    %475 = arith.maximumf %473, %474 : vector<8x128xf32>
    %c0_79 = arith.constant 0 : index
    %c3840 = arith.constant 3840 : index
    %476 = vector.load %arg6[%c0_79, %c3840] : memref<8x6272xf32, #tpu.memory_space<vmem>>, vector<8x128xf32>
    tpu.vector_store %arg6[%c0_79, %c3840], %475 {strides = array<i32>} : memref<8x6272xf32, #tpu.memory_space<vmem>>, vector<8x128xf32>,
    %477 = vector.extract_strided_slice %5 {offsets = [0, 3968], sizes = [8, 128], strides = [1, 1]} : vector<8x6272xf32> to vector<8x128xf32>
    %478 = vector.broadcast %225 : vector<1x128xf32> to vector<8x128xf32>
    %479 = arith.mulf %477, %478 : vector<8x128xf32>
    %480 = vector.broadcast %228 : vector<1x128xf32> to vector<8x128xf32>
    %481 = arith.addf %479, %480 : vector<8x128xf32>
    %cst_80 = arith.constant 0.000000e+00 : f32
    %482 = vector.broadcast %cst_80 : f32 to vector<8x128xf32>
    %483 = arith.maximumf %481, %482 : vector<8x128xf32>
    %c0_81 = arith.constant 0 : index
    %c3968 = arith.constant 3968 : index
    %484 = vector.load %arg6[%c0_81, %c3968] : memref<8x6272xf32, #tpu.memory_space<vmem>>, vector<8x128xf32>
    tpu.vector_store %arg6[%c0_81, %c3968], %483 {strides = array<i32>} : memref<8x6272xf32, #tpu.memory_space<vmem>>, vector<8x128xf32>,
    %485 = vector.extract_strided_slice %5 {offsets = [0, 4096], sizes = [8, 128], strides = [1, 1]} : vector<8x6272xf32> to vector<8x128xf32>
    %486 = vector.broadcast %225 : vector<1x128xf32> to vector<8x128xf32>
    %487 = arith.mulf %485, %486 : vector<8x128xf32>
    %488 = vector.broadcast %228 : vector<1x128xf32> to vector<8x128xf32>
    %489 = arith.addf %487, %488 : vector<8x128xf32>
    %cst_82 = arith.constant 0.000000e+00 : f32
    %490 = vector.broadcast %cst_82 : f32 to vector<8x128xf32>
    %491 = arith.maximumf %489, %490 : vector<8x128xf32>
    %c0_83 = arith.constant 0 : index
    %c4096 = arith.constant 4096 : index
    %492 = vector.load %arg6[%c0_83, %c4096] : memref<8x6272xf32, #tpu.memory_space<vmem>>, vector<8x128xf32>
    tpu.vector_store %arg6[%c0_83, %c4096], %491 {strides = array<i32>} : memref<8x6272xf32, #tpu.memory_space<vmem>>, vector<8x128xf32>,
    %493 = vector.extract_strided_slice %5 {offsets = [0, 4224], sizes = [8, 128], strides = [1, 1]} : vector<8x6272xf32> to vector<8x128xf32>
    %494 = vector.broadcast %225 : vector<1x128xf32> to vector<8x128xf32>
    %495 = arith.mulf %493, %494 : vector<8x128xf32>
    %496 = vector.broadcast %228 : vector<1x128xf32> to vector<8x128xf32>
    %497 = arith.addf %495, %496 : vector<8x128xf32>
    %cst_84 = arith.constant 0.000000e+00 : f32
    %498 = vector.broadcast %cst_84 : f32 to vector<8x128xf32>
    %499 = arith.maximumf %497, %498 : vector<8x128xf32>
    %c0_85 = arith.constant 0 : index
    %c4224 = arith.constant 4224 : index
    %500 = vector.load %arg6[%c0_85, %c4224] : memref<8x6272xf32, #tpu.memory_space<vmem>>, vector<8x128xf32>
    tpu.vector_store %arg6[%c0_85, %c4224], %499 {strides = array<i32>} : memref<8x6272xf32, #tpu.memory_space<vmem>>, vector<8x128xf32>,
    %501 = vector.extract_strided_slice %5 {offsets = [0, 4352], sizes = [8, 128], strides = [1, 1]} : vector<8x6272xf32> to vector<8x128xf32>
    %502 = vector.broadcast %225 : vector<1x128xf32> to vector<8x128xf32>
    %503 = arith.mulf %501, %502 : vector<8x128xf32>
    %504 = vector.broadcast %228 : vector<1x128xf32> to vector<8x128xf32>
    %505 = arith.addf %503, %504 : vector<8x128xf32>
    %cst_86 = arith.constant 0.000000e+00 : f32
    %506 = vector.broadcast %cst_86 : f32 to vector<8x128xf32>
    %507 = arith.maximumf %505, %506 : vector<8x128xf32>
    %c0_87 = arith.constant 0 : index
    %c4352 = arith.constant 4352 : index
    %508 = vector.load %arg6[%c0_87, %c4352] : memref<8x6272xf32, #tpu.memory_space<vmem>>, vector<8x128xf32>
    tpu.vector_store %arg6[%c0_87, %c4352], %507 {strides = array<i32>} : memref<8x6272xf32, #tpu.memory_space<vmem>>, vector<8x128xf32>,
    %509 = vector.extract_strided_slice %5 {offsets = [0, 4480], sizes = [8, 128], strides = [1, 1]} : vector<8x6272xf32> to vector<8x128xf32>
    %510 = vector.broadcast %225 : vector<1x128xf32> to vector<8x128xf32>
    %511 = arith.mulf %509, %510 : vector<8x128xf32>
    %512 = vector.broadcast %228 : vector<1x128xf32> to vector<8x128xf32>
    %513 = arith.addf %511, %512 : vector<8x128xf32>
    %cst_88 = arith.constant 0.000000e+00 : f32
    %514 = vector.broadcast %cst_88 : f32 to vector<8x128xf32>
    %515 = arith.maximumf %513, %514 : vector<8x128xf32>
    %c0_89 = arith.constant 0 : index
    %c4480 = arith.constant 4480 : index
    %516 = vector.load %arg6[%c0_89, %c4480] : memref<8x6272xf32, #tpu.memory_space<vmem>>, vector<8x128xf32>
    tpu.vector_store %arg6[%c0_89, %c4480], %515 {strides = array<i32>} : memref<8x6272xf32, #tpu.memory_space<vmem>>, vector<8x128xf32>,
    %517 = vector.extract_strided_slice %5 {offsets = [0, 4608], sizes = [8, 128], strides = [1, 1]} : vector<8x6272xf32> to vector<8x128xf32>
    %518 = vector.broadcast %225 : vector<1x128xf32> to vector<8x128xf32>
    %519 = arith.mulf %517, %518 : vector<8x128xf32>
    %520 = vector.broadcast %228 : vector<1x128xf32> to vector<8x128xf32>
    %521 = arith.addf %519, %520 : vector<8x128xf32>
    %cst_90 = arith.constant 0.000000e+00 : f32
    %522 = vector.broadcast %cst_90 : f32 to vector<8x128xf32>
    %523 = arith.maximumf %521, %522 : vector<8x128xf32>
    %c0_91 = arith.constant 0 : index
    %c4608 = arith.constant 4608 : index
    %524 = vector.load %arg6[%c0_91, %c4608] : memref<8x6272xf32, #tpu.memory_space<vmem>>, vector<8x128xf32>
    tpu.vector_store %arg6[%c0_91, %c4608], %523 {strides = array<i32>} : memref<8x6272xf32, #tpu.memory_space<vmem>>, vector<8x128xf32>,
    %525 = vector.extract_strided_slice %5 {offsets = [0, 4736], sizes = [8, 128], strides = [1, 1]} : vector<8x6272xf32> to vector<8x128xf32>
    %526 = vector.broadcast %225 : vector<1x128xf32> to vector<8x128xf32>
    %527 = arith.mulf %525, %526 : vector<8x128xf32>
    %528 = vector.broadcast %228 : vector<1x128xf32> to vector<8x128xf32>
    %529 = arith.addf %527, %528 : vector<8x128xf32>
    %cst_92 = arith.constant 0.000000e+00 : f32
    %530 = vector.broadcast %cst_92 : f32 to vector<8x128xf32>
    %531 = arith.maximumf %529, %530 : vector<8x128xf32>
    %c0_93 = arith.constant 0 : index
    %c4736 = arith.constant 4736 : index
    %532 = vector.load %arg6[%c0_93, %c4736] : memref<8x6272xf32, #tpu.memory_space<vmem>>, vector<8x128xf32>
    tpu.vector_store %arg6[%c0_93, %c4736], %531 {strides = array<i32>} : memref<8x6272xf32, #tpu.memory_space<vmem>>, vector<8x128xf32>,
    %533 = vector.extract_strided_slice %5 {offsets = [0, 4864], sizes = [8, 128], strides = [1, 1]} : vector<8x6272xf32> to vector<8x128xf32>
    %534 = vector.broadcast %225 : vector<1x128xf32> to vector<8x128xf32>
    %535 = arith.mulf %533, %534 : vector<8x128xf32>
    %536 = vector.broadcast %228 : vector<1x128xf32> to vector<8x128xf32>
    %537 = arith.addf %535, %536 : vector<8x128xf32>
    %cst_94 = arith.constant 0.000000e+00 : f32
    %538 = vector.broadcast %cst_94 : f32 to vector<8x128xf32>
    %539 = arith.maximumf %537, %538 : vector<8x128xf32>
    %c0_95 = arith.constant 0 : index
    %c4864 = arith.constant 4864 : index
    %540 = vector.load %arg6[%c0_95, %c4864] : memref<8x6272xf32, #tpu.memory_space<vmem>>, vector<8x128xf32>
    tpu.vector_store %arg6[%c0_95, %c4864], %539 {strides = array<i32>} : memref<8x6272xf32, #tpu.memory_space<vmem>>, vector<8x128xf32>,
    %541 = vector.extract_strided_slice %5 {offsets = [0, 4992], sizes = [8, 128], strides = [1, 1]} : vector<8x6272xf32> to vector<8x128xf32>
    %542 = vector.broadcast %225 : vector<1x128xf32> to vector<8x128xf32>
    %543 = arith.mulf %541, %542 : vector<8x128xf32>
    %544 = vector.broadcast %228 : vector<1x128xf32> to vector<8x128xf32>
    %545 = arith.addf %543, %544 : vector<8x128xf32>
    %cst_96 = arith.constant 0.000000e+00 : f32
    %546 = vector.broadcast %cst_96 : f32 to vector<8x128xf32>
    %547 = arith.maximumf %545, %546 : vector<8x128xf32>
    %c0_97 = arith.constant 0 : index
    %c4992 = arith.constant 4992 : index
    %548 = vector.load %arg6[%c0_97, %c4992] : memref<8x6272xf32, #tpu.memory_space<vmem>>, vector<8x128xf32>
    tpu.vector_store %arg6[%c0_97, %c4992], %547 {strides = array<i32>} : memref<8x6272xf32, #tpu.memory_space<vmem>>, vector<8x128xf32>,
    %549 = vector.extract_strided_slice %5 {offsets = [0, 5120], sizes = [8, 128], strides = [1, 1]} : vector<8x6272xf32> to vector<8x128xf32>
    %550 = vector.broadcast %225 : vector<1x128xf32> to vector<8x128xf32>
    %551 = arith.mulf %549, %550 : vector<8x128xf32>
    %552 = vector.broadcast %228 : vector<1x128xf32> to vector<8x128xf32>
    %553 = arith.addf %551, %552 : vector<8x128xf32>
    %cst_98 = arith.constant 0.000000e+00 : f32
    %554 = vector.broadcast %cst_98 : f32 to vector<8x128xf32>
    %555 = arith.maximumf %553, %554 : vector<8x128xf32>
    %c0_99 = arith.constant 0 : index
    %c5120 = arith.constant 5120 : index
    %556 = vector.load %arg6[%c0_99, %c5120] : memref<8x6272xf32, #tpu.memory_space<vmem>>, vector<8x128xf32>
    tpu.vector_store %arg6[%c0_99, %c5120], %555 {strides = array<i32>} : memref<8x6272xf32, #tpu.memory_space<vmem>>, vector<8x128xf32>,
    %557 = vector.extract_strided_slice %5 {offsets = [0, 5248], sizes = [8, 128], strides = [1, 1]} : vector<8x6272xf32> to vector<8x128xf32>
    %558 = vector.broadcast %225 : vector<1x128xf32> to vector<8x128xf32>
    %559 = arith.mulf %557, %558 : vector<8x128xf32>
    %560 = vector.broadcast %228 : vector<1x128xf32> to vector<8x128xf32>
    %561 = arith.addf %559, %560 : vector<8x128xf32>
    %cst_100 = arith.constant 0.000000e+00 : f32
    %562 = vector.broadcast %cst_100 : f32 to vector<8x128xf32>
    %563 = arith.maximumf %561, %562 : vector<8x128xf32>
    %c0_101 = arith.constant 0 : index
    %c5248 = arith.constant 5248 : index
    %564 = vector.load %arg6[%c0_101, %c5248] : memref<8x6272xf32, #tpu.memory_space<vmem>>, vector<8x128xf32>
    tpu.vector_store %arg6[%c0_101, %c5248], %563 {strides = array<i32>} : memref<8x6272xf32, #tpu.memory_space<vmem>>, vector<8x128xf32>,
    %565 = vector.extract_strided_slice %5 {offsets = [0, 5376], sizes = [8, 128], strides = [1, 1]} : vector<8x6272xf32> to vector<8x128xf32>
    %566 = vector.broadcast %225 : vector<1x128xf32> to vector<8x128xf32>
    %567 = arith.mulf %565, %566 : vector<8x128xf32>
    %568 = vector.broadcast %228 : vector<1x128xf32> to vector<8x128xf32>
    %569 = arith.addf %567, %568 : vector<8x128xf32>
    %cst_102 = arith.constant 0.000000e+00 : f32
    %570 = vector.broadcast %cst_102 : f32 to vector<8x128xf32>
    %571 = arith.maximumf %569, %570 : vector<8x128xf32>
    %c0_103 = arith.constant 0 : index
    %c5376 = arith.constant 5376 : index
    %572 = vector.load %arg6[%c0_103, %c5376] : memref<8x6272xf32, #tpu.memory_space<vmem>>, vector<8x128xf32>
    tpu.vector_store %arg6[%c0_103, %c5376], %571 {strides = array<i32>} : memref<8x6272xf32, #tpu.memory_space<vmem>>, vector<8x128xf32>,
    %573 = vector.extract_strided_slice %5 {offsets = [0, 5504], sizes = [8, 128], strides = [1, 1]} : vector<8x6272xf32> to vector<8x128xf32>
    %574 = vector.broadcast %225 : vector<1x128xf32> to vector<8x128xf32>
    %575 = arith.mulf %573, %574 : vector<8x128xf32>
    %576 = vector.broadcast %228 : vector<1x128xf32> to vector<8x128xf32>
    %577 = arith.addf %575, %576 : vector<8x128xf32>
    %cst_104 = arith.constant 0.000000e+00 : f32
    %578 = vector.broadcast %cst_104 : f32 to vector<8x128xf32>
    %579 = arith.maximumf %577, %578 : vector<8x128xf32>
    %c0_105 = arith.constant 0 : index
    %c5504 = arith.constant 5504 : index
    %580 = vector.load %arg6[%c0_105, %c5504] : memref<8x6272xf32, #tpu.memory_space<vmem>>, vector<8x128xf32>
    tpu.vector_store %arg6[%c0_105, %c5504], %579 {strides = array<i32>} : memref<8x6272xf32, #tpu.memory_space<vmem>>, vector<8x128xf32>,
    %581 = vector.extract_strided_slice %5 {offsets = [0, 5632], sizes = [8, 128], strides = [1, 1]} : vector<8x6272xf32> to vector<8x128xf32>
    %582 = vector.broadcast %225 : vector<1x128xf32> to vector<8x128xf32>
    %583 = arith.mulf %581, %582 : vector<8x128xf32>
    %584 = vector.broadcast %228 : vector<1x128xf32> to vector<8x128xf32>
    %585 = arith.addf %583, %584 : vector<8x128xf32>
    %cst_106 = arith.constant 0.000000e+00 : f32
    %586 = vector.broadcast %cst_106 : f32 to vector<8x128xf32>
    %587 = arith.maximumf %585, %586 : vector<8x128xf32>
    %c0_107 = arith.constant 0 : index
    %c5632 = arith.constant 5632 : index
    %588 = vector.load %arg6[%c0_107, %c5632] : memref<8x6272xf32, #tpu.memory_space<vmem>>, vector<8x128xf32>
    tpu.vector_store %arg6[%c0_107, %c5632], %587 {strides = array<i32>} : memref<8x6272xf32, #tpu.memory_space<vmem>>, vector<8x128xf32>,
    %589 = vector.extract_strided_slice %5 {offsets = [0, 5760], sizes = [8, 128], strides = [1, 1]} : vector<8x6272xf32> to vector<8x128xf32>
    %590 = vector.broadcast %225 : vector<1x128xf32> to vector<8x128xf32>
    %591 = arith.mulf %589, %590 : vector<8x128xf32>
    %592 = vector.broadcast %228 : vector<1x128xf32> to vector<8x128xf32>
    %593 = arith.addf %591, %592 : vector<8x128xf32>
    %cst_108 = arith.constant 0.000000e+00 : f32
    %594 = vector.broadcast %cst_108 : f32 to vector<8x128xf32>
    %595 = arith.maximumf %593, %594 : vector<8x128xf32>
    %c0_109 = arith.constant 0 : index
    %c5760 = arith.constant 5760 : index
    %596 = vector.load %arg6[%c0_109, %c5760] : memref<8x6272xf32, #tpu.memory_space<vmem>>, vector<8x128xf32>
    tpu.vector_store %arg6[%c0_109, %c5760], %595 {strides = array<i32>} : memref<8x6272xf32, #tpu.memory_space<vmem>>, vector<8x128xf32>,
    %597 = vector.extract_strided_slice %5 {offsets = [0, 5888], sizes = [8, 128], strides = [1, 1]} : vector<8x6272xf32> to vector<8x128xf32>
    %598 = vector.broadcast %225 : vector<1x128xf32> to vector<8x128xf32>
    %599 = arith.mulf %597, %598 : vector<8x128xf32>
    %600 = vector.broadcast %228 : vector<1x128xf32> to vector<8x128xf32>
    %601 = arith.addf %599, %600 : vector<8x128xf32>
    %cst_110 = arith.constant 0.000000e+00 : f32
    %602 = vector.broadcast %cst_110 : f32 to vector<8x128xf32>
    %603 = arith.maximumf %601, %602 : vector<8x128xf32>
    %c0_111 = arith.constant 0 : index
    %c5888 = arith.constant 5888 : index
    %604 = vector.load %arg6[%c0_111, %c5888] : memref<8x6272xf32, #tpu.memory_space<vmem>>, vector<8x128xf32>
    tpu.vector_store %arg6[%c0_111, %c5888], %603 {strides = array<i32>} : memref<8x6272xf32, #tpu.memory_space<vmem>>, vector<8x128xf32>,
    %605 = vector.extract_strided_slice %5 {offsets = [0, 6016], sizes = [8, 128], strides = [1, 1]} : vector<8x6272xf32> to vector<8x128xf32>
    %606 = vector.broadcast %225 : vector<1x128xf32> to vector<8x128xf32>
    %607 = arith.mulf %605, %606 : vector<8x128xf32>
    %608 = vector.broadcast %228 : vector<1x128xf32> to vector<8x128xf32>
    %609 = arith.addf %607, %608 : vector<8x128xf32>
    %cst_112 = arith.constant 0.000000e+00 : f32
    %610 = vector.broadcast %cst_112 : f32 to vector<8x128xf32>
    %611 = arith.maximumf %609, %610 : vector<8x128xf32>
    %c0_113 = arith.constant 0 : index
    %c6016 = arith.constant 6016 : index
    %612 = vector.load %arg6[%c0_113, %c6016] : memref<8x6272xf32, #tpu.memory_space<vmem>>, vector<8x128xf32>
    tpu.vector_store %arg6[%c0_113, %c6016], %611 {strides = array<i32>} : memref<8x6272xf32, #tpu.memory_space<vmem>>, vector<8x128xf32>,
    %613 = vector.extract_strided_slice %5 {offsets = [0, 6144], sizes = [8, 128], strides = [1, 1]} : vector<8x6272xf32> to vector<8x128xf32>
    %614 = vector.broadcast %225 : vector<1x128xf32> to vector<8x128xf32>
    %615 = arith.mulf %613, %614 : vector<8x128xf32>
    %616 = vector.broadcast %228 : vector<1x128xf32> to vector<8x128xf32>
    %617 = arith.addf %615, %616 : vector<8x128xf32>
    %cst_114 = arith.constant 0.000000e+00 : f32
    %618 = vector.broadcast %cst_114 : f32 to vector<8x128xf32>
    %619 = arith.maximumf %617, %618 : vector<8x128xf32>
    %c0_115 = arith.constant 0 : index
    %c6144 = arith.constant 6144 : index
    %620 = vector.load %arg6[%c0_115, %c6144] : memref<8x6272xf32, #tpu.memory_space<vmem>>, vector<8x128xf32>
    tpu.vector_store %arg6[%c0_115, %c6144], %619 {strides = array<i32>} : memref<8x6272xf32, #tpu.memory_space<vmem>>, vector<8x128xf32>,
    return
  }
  func.func @transform_0(%arg0: i32) -> (i32, i32) {
    %c0_i32 = arith.constant 0 : i32
    %c0_i32_0 = arith.constant 0 : i32
    %c0_i32_1 = arith.constant 0 : i32
    return %c0_i32, %c0_i32_0 : i32, i32
  }
  func.func @transform_1(%arg0: i32) -> (i32, i32) {
    %c0_i32 = arith.constant 0 : i32
    %c0_i32_0 = arith.constant 0 : i32
    %c0_i32_1 = arith.constant 0 : i32
    return %c0_i32, %c0_i32_0 : i32, i32
  }
  func.func @transform_2(%arg0: i32) -> (i32, i32) {
    %c0_i32 = arith.constant 0 : i32
    %c0_i32_0 = arith.constant 0 : i32
    %c0_i32_1 = arith.constant 0 : i32
    return %c0_i32, %c0_i32_0 : i32, i32
  }
  func.func @transform_3(%arg0: i32) -> (i32, i32) {
    %c0_i32 = arith.constant 0 : i32
    %c0_i32_0 = arith.constant 0 : i32
    %c0_i32_1 = arith.constant 0 : i32
    return %c0_i32, %c0_i32_0 : i32, i32
  }
  func.func @transform_4(%arg0: i32) -> (i32, i32) {
    %c0_i32 = arith.constant 0 : i32
    %c0_i32_0 = arith.constant 0 : i32
    %c0_i32_1 = arith.constant 0 : i32
    return %c0_i32, %c0_i32_0 : i32, i32
  }
  func.func @transform_5(%arg0: i32) -> (i32, i32) {
    %c0_i32 = arith.constant 0 : i32
    %c0_i32_0 = arith.constant 0 : i32
    %c0_i32_1 = arith.constant 0 : i32
    return %c0_i32, %c0_i32_0 : i32, i32
  }
}

module attributes {stable_mosaic.version = 11 : i64} {
  func.func @_mm_bias_bn_relu_kernel(%arg0: i32, %arg1: memref<392x2048xf32, #tpu.memory_space<vmem>>, %arg2: memref<2048x64xf32, #tpu.memory_space<vmem>>, %arg3: memref<1x64xf32, #tpu.memory_space<vmem>>, %arg4: memref<1x64xf32, #tpu.memory_space<vmem>>, %arg5: memref<1x64xf32, #tpu.memory_space<vmem>>, %arg6: memref<392x64xf32, #tpu.memory_space<vmem>>) attributes {dimension_semantics = [#tpu.dimension_semantics<arbitrary>], iteration_bounds = array<i64: 1>, scalar_prefetch = 0 : i64, scratch_operands = 0 : i64, tpu.core_type = #tpu.core_type<tc>, window_params = [{pipeline_mode = #tpu.pipeline_mode<synchronous>, transform_indices = @transform_0, window_bounds = array<i64: 392, 2048>}, {pipeline_mode = #tpu.pipeline_mode<synchronous>, transform_indices = @transform_1, window_bounds = array<i64: 2048, 64>}, {pipeline_mode = #tpu.pipeline_mode<synchronous>, transform_indices = @transform_2, window_bounds = array<i64: 1, 64>}, {pipeline_mode = #tpu.pipeline_mode<synchronous>, transform_indices = @transform_3, window_bounds = array<i64: 1, 64>}, {pipeline_mode = #tpu.pipeline_mode<synchronous>, transform_indices = @transform_4, window_bounds = array<i64: 1, 64>}, {pipeline_mode = #tpu.pipeline_mode<synchronous>, transform_indices = @transform_5, window_bounds = array<i64: 392, 64>}]} {
    %c0 = arith.constant 0 : index
    %c0_0 = arith.constant 0 : index
    %0 = vector.load %arg1[%c0, %c0_0] : memref<392x2048xf32, #tpu.memory_space<vmem>>, vector<392x2048xf32>
    %c0_1 = arith.constant 0 : index
    %c0_2 = arith.constant 0 : index
    %1 = vector.load %arg2[%c0_1, %c0_2] : memref<2048x64xf32, #tpu.memory_space<vmem>>, vector<2048x64xf32>
    %cst = arith.constant dense<0.000000e+00> : vector<392x64xf32>
    %2 = tpu.matmul %0, %1, %cst {dimension_numbers = #tpu.dot_dimension_numbers<[1], [0], [0], [1], [0, 0, 1, 1], [], []>} : vector<392x2048xf32>, vector<2048x64xf32>, vector<392x64xf32> -> vector<392x64xf32>
    %c0_3 = arith.constant 0 : index
    %c0_4 = arith.constant 0 : index
    %3 = vector.load %arg3[%c0_3, %c0_4] : memref<1x64xf32, #tpu.memory_space<vmem>>, vector<1x64xf32>
    %4 = vector.broadcast %3 : vector<1x64xf32> to vector<392x64xf32>
    %5 = arith.addf %2, %4 : vector<392x64xf32>
    %cst_5 = arith.constant dense<0.000000e+00> : vector<64xf32>
    %6 = vector.multi_reduction <add>, %5, %cst_5 [0] : vector<392x64xf32> to vector<64xf32>
    %7 = vector.shape_cast %6 : vector<64xf32> to vector<1x64xf32>
    %cst_6 = arith.constant 3.920000e+02 : f32
    %8 = vector.broadcast %cst_6 : f32 to vector<1x64xf32>
    %9 = arith.divf %7, %8 : vector<1x64xf32>
    %10 = vector.broadcast %9 : vector<1x64xf32> to vector<392x64xf32>
    %11 = arith.subf %5, %10 : vector<392x64xf32>
    %12 = arith.mulf %11, %11 : vector<392x64xf32>
    %cst_7 = arith.constant dense<0.000000e+00> : vector<64xf32>
    %13 = vector.multi_reduction <add>, %12, %cst_7 [0] : vector<392x64xf32> to vector<64xf32>
    %14 = vector.shape_cast %13 : vector<64xf32> to vector<1x64xf32>
    %cst_8 = arith.constant 3.920000e+02 : f32
    %15 = vector.broadcast %cst_8 : f32 to vector<1x64xf32>
    %16 = arith.divf %14, %15 : vector<1x64xf32>
    %c0_9 = arith.constant 0 : index
    %c0_10 = arith.constant 0 : index
    %17 = vector.load %arg4[%c0_9, %c0_10] : memref<1x64xf32, #tpu.memory_space<vmem>>, vector<1x64xf32>
    %cst_11 = arith.constant 9.99999974E-6 : f32
    %18 = vector.broadcast %cst_11 : f32 to vector<1x64xf32>
    %19 = arith.addf %16, %18 : vector<1x64xf32>
    %20 = math.rsqrt %19 : vector<1x64xf32>
    %21 = arith.mulf %17, %20 : vector<1x64xf32>
    %22 = vector.broadcast %9 : vector<1x64xf32> to vector<392x64xf32>
    %23 = arith.subf %5, %22 : vector<392x64xf32>
    %24 = vector.broadcast %21 : vector<1x64xf32> to vector<392x64xf32>
    %25 = arith.mulf %23, %24 : vector<392x64xf32>
    %c0_12 = arith.constant 0 : index
    %c0_13 = arith.constant 0 : index
    %26 = vector.load %arg5[%c0_12, %c0_13] : memref<1x64xf32, #tpu.memory_space<vmem>>, vector<1x64xf32>
    %27 = vector.broadcast %26 : vector<1x64xf32> to vector<392x64xf32>
    %28 = arith.addf %25, %27 : vector<392x64xf32>
    %cst_14 = arith.constant 0.000000e+00 : f32
    %29 = vector.broadcast %cst_14 : f32 to vector<392x64xf32>
    %30 = arith.maximumf %28, %29 : vector<392x64xf32>
    %c0_15 = arith.constant 0 : index
    %c0_16 = arith.constant 0 : index
    %31 = vector.load %arg6[%c0_15, %c0_16] : memref<392x64xf32, #tpu.memory_space<vmem>>, vector<392x64xf32>
    tpu.vector_store %arg6[%c0_15, %c0_16], %30 {strides = array<i32>} : memref<392x64xf32, #tpu.memory_space<vmem>>, vector<392x64xf32>,
    return
  }
  func.func @transform_0(%arg0: i32) -> (i32, i32) {
    %c0_i32 = arith.constant 0 : i32
    %c0_i32_0 = arith.constant 0 : i32
    %c0_i32_1 = arith.constant 0 : i32
    return %c0_i32, %c0_i32_0 : i32, i32
  }
  func.func @transform_1(%arg0: i32) -> (i32, i32) {
    %c0_i32 = arith.constant 0 : i32
    %c0_i32_0 = arith.constant 0 : i32
    %c0_i32_1 = arith.constant 0 : i32
    return %c0_i32, %c0_i32_0 : i32, i32
  }
  func.func @transform_2(%arg0: i32) -> (i32, i32) {
    %c0_i32 = arith.constant 0 : i32
    %c0_i32_0 = arith.constant 0 : i32
    %c0_i32_1 = arith.constant 0 : i32
    return %c0_i32, %c0_i32_0 : i32, i32
  }
  func.func @transform_3(%arg0: i32) -> (i32, i32) {
    %c0_i32 = arith.constant 0 : i32
    %c0_i32_0 = arith.constant 0 : i32
    %c0_i32_1 = arith.constant 0 : i32
    return %c0_i32, %c0_i32_0 : i32, i32
  }
  func.func @transform_4(%arg0: i32) -> (i32, i32) {
    %c0_i32 = arith.constant 0 : i32
    %c0_i32_0 = arith.constant 0 : i32
    %c0_i32_1 = arith.constant 0 : i32
    return %c0_i32, %c0_i32_0 : i32, i32
  }
  func.func @transform_5(%arg0: i32) -> (i32, i32) {
    %c0_i32 = arith.constant 0 : i32
    %c0_i32_0 = arith.constant 0 : i32
    %c0_i32_1 = arith.constant 0 : i32
    return %c0_i32, %c0_i32_0 : i32, i32
  }
}

module attributes {stable_mosaic.version = 11 : i64} {
  func.func @_rowdot_bias_tanh_kernel(%arg0: i32, %arg1: memref<784x1024xf32, #tpu.memory_space<vmem>>, %arg2: memref<1x1024xf32, #tpu.memory_space<vmem>>, %arg3: memref<1x1xf32, #tpu.memory_space<vmem>>, %arg4: memref<784x1xf32, #tpu.memory_space<vmem>>) attributes {dimension_semantics = [#tpu.dimension_semantics<parallel>], iteration_bounds = array<i64: 2>, scalar_prefetch = 0 : i64, scratch_operands = 0 : i64, tpu.core_type = #tpu.core_type<tc>, window_params = [{transform_indices = @transform_0, window_bounds = array<i64: 784, 1024>}, {pipeline_mode = #tpu.pipeline_mode<synchronous>, transform_indices = @transform_1, window_bounds = array<i64: 1, 1024>}, {pipeline_mode = #tpu.pipeline_mode<synchronous>, transform_indices = @transform_2, window_bounds = array<i64: 1, 1>}, {transform_indices = @transform_3, window_bounds = array<i64: 784, 1>}]} {
    %c0 = arith.constant 0 : index
    %c0_0 = arith.constant 0 : index
    %0 = vector.load %arg1[%c0, %c0_0] : memref<784x1024xf32, #tpu.memory_space<vmem>>, vector<784x1024xf32>
    %c0_1 = arith.constant 0 : index
    %c0_2 = arith.constant 0 : index
    %1 = vector.load %arg2[%c0_1, %c0_2] : memref<1x1024xf32, #tpu.memory_space<vmem>>, vector<1x1024xf32>
    %2 = vector.broadcast %1 : vector<1x1024xf32> to vector<784x1024xf32>
    %3 = arith.mulf %0, %2 : vector<784x1024xf32>
    %cst = arith.constant dense<0.000000e+00> : vector<784xf32>
    %4 = vector.multi_reduction <add>, %3, %cst [1] : vector<784x1024xf32> to vector<784xf32>
    %5 = vector.shape_cast %4 : vector<784xf32> to vector<784x1xf32>
    %c0_3 = arith.constant 0 : index
    %c0_4 = arith.constant 0 : index
    %6 = vector.load %arg3[%c0_3, %c0_4] : memref<1x1xf32, #tpu.memory_space<vmem>>, vector<1x1xf32>
    %7 = vector.broadcast %6 : vector<1x1xf32> to vector<784x1xf32>
    %8 = arith.addf %5, %7 : vector<784x1xf32>
    %9 = math.tanh %8 : vector<784x1xf32>
    %c0_5 = arith.constant 0 : index
    %c0_6 = arith.constant 0 : index
    %10 = vector.load %arg4[%c0_5, %c0_6] : memref<784x1xf32, #tpu.memory_space<vmem>>, vector<784x1xf32>
    tpu.vector_store %arg4[%c0_5, %c0_6], %9 {strides = array<i32>} : memref<784x1xf32, #tpu.memory_space<vmem>>, vector<784x1xf32>,
    return
  }
  func.func @transform_0(%arg0: i32) -> (i32, i32) {
    %c0_i32 = arith.constant 0 : i32
    %c0_i32_0 = arith.constant 0 : i32
    return %arg0, %c0_i32 : i32, i32
  }
  func.func @transform_1(%arg0: i32) -> (i32, i32) {
    %c0_i32 = arith.constant 0 : i32
    %c0_i32_0 = arith.constant 0 : i32
    %c0_i32_1 = arith.constant 0 : i32
    return %c0_i32, %c0_i32_0 : i32, i32
  }
  func.func @transform_2(%arg0: i32) -> (i32, i32) {
    %c0_i32 = arith.constant 0 : i32
    %c0_i32_0 = arith.constant 0 : i32
    %c0_i32_1 = arith.constant 0 : i32
    return %c0_i32, %c0_i32_0 : i32, i32
  }
  func.func @transform_3(%arg0: i32) -> (i32, i32) {
    %c0_i32 = arith.constant 0 : i32
    %c0_i32_0 = arith.constant 0 : i32
    return %arg0, %c0_i32 : i32, i32
  }
}

</mosaic_0001>

<llo_original>
// kernel: generator_forward.3
$region0: #{generator_forward.3}
  #allocation0 [shape = 'u32[]', space=smem, size = 0x4, offset = 0x4, fixed_abs, tag = 'smem constant byte address 0x4 - core index']
  #allocation1 [shape = 'u32[72,128]{1,0:T(1,128)}', space=vmem, size = 0x9000, scoped, tag = 'internal scratch']
  %s0 = inlined_call_operand.vmem [shape: f32[8,100], index: 0, kind: input, shape index: {}]
  %s1 = inlined_call_operand.vmem [shape: f32[100,6272], index: 1, kind: input, shape index: {}]
  %s2 = inlined_call_operand.vmem [shape: f32[1,6272], index: 2, kind: input, shape index: {}]
  %s3 = inlined_call_operand.vmem [shape: f32[1,128], index: 3, kind: input, shape index: {}]
  %s4 = inlined_call_operand.vmem [shape: f32[1,128], index: 4, kind: input, shape index: {}]
  %s5 = inlined_call_operand.vmem [shape: f32[8,6272], index: 5, kind: output, shape index: {}]
  %s6 = sld [smem:[#allocation0]]
  $region30: #{generator_forward.3} parent=0
    _
  %s8 = ssub.s32 1, %s6
  %s9 = scalar_select 0, %s8, %s6
  // Predicated region
  $region2: #{generator_forward.3} parent=0 // pred_check
    _
  $region3: #{generator_forward.3} parent=0 // pred_check_branch
    %11 = sbr.rel (0) target = $region5
  $region4: #{generator_forward.3} parent=0 // pred_region
    _
  $region5: #{generator_forward.3} parent=0 // pred_fallthru
    _
  // Predicated region
  $region6: #{generator_forward.3} parent=0 // pred_check
    _
  $region7: #{generator_forward.3} parent=0 // pred_check_branch
    %13 = sbr.rel (0) target = $region9
  $region8: #{generator_forward.3} parent=0 // pred_region
    _
  $region9: #{generator_forward.3} parent=0 // pred_fallthru
    _
  // Predicated region
  $region10: #{generator_forward.3} parent=0 // pred_check
    _
  $region11: #{generator_forward.3} parent=0 // pred_check_branch
    %15 = sbr.rel (0) target = $region13
  $region12: #{generator_forward.3} parent=0 // pred_region
    _
  $region13: #{generator_forward.3} parent=0 // pred_fallthru
    _
  // Predicated region
  $region14: #{generator_forward.3} parent=0 // pred_check
    _
  $region15: #{generator_forward.3} parent=0 // pred_check_branch
    %17 = sbr.rel (0) target = $region17
  $region16: #{generator_forward.3} parent=0 // pred_region
    _
  $region17: #{generator_forward.3} parent=0 // pred_fallthru
    _
  // Predicated region
  $region18: #{generator_forward.3} parent=0 // pred_check
    _
  $region19: #{generator_forward.3} parent=0 // pred_check_branch
    %19 = sbr.rel (0) target = $region21
  $region20: #{generator_forward.3} parent=0 // pred_region
    _
  $region21: #{generator_forward.3} parent=0 // pred_fallthru
    _
  %v20 = vld [vmem:[%s0] sm:$0xff]
  %v21 = vld [vmem:[%s1] sm:$0xff]
  %v22 = vld [vmem:[%s1 + $0x8] sm:$0xff]
  %v23 = vld [vmem:[%s1 + $0x10] sm:$0xff]
  %v24 = vld [vmem:[%s1 + $0x18] sm:$0xff]
  %v25 = vld [vmem:[%s1 + $0x20] sm:$0xff]
  %v26 = vld [vmem:[%s1 + $0x28] sm:$0xff]
  %v27 = vld [vmem:[%s1 + $0x30] sm:$0xff]
  %v28 = vld [vmem:[%s1 + $0x38] sm:$0xff]
  %v29 = vld [vmem:[%s1 + $0x40] sm:$0xff]
  %v30 = vld [vmem:[%s1 + $0x48] sm:$0xff]
  %v31 = vld [vmem:[%s1 + $0x50] sm:$0xff]
  %v32 = vld [vmem:[%s1 + $0x58] sm:$0xff]
  %v33 = vld [vmem:[%s1 + $0x60] sm:$0xff]
  %v34 = vld [vmem:[%s1 + $0x68] sm:$0xff]
  %v35 = vld [vmem:[%s1 + $0x70] sm:$0xff]
  %v36 = vld [vmem:[%s1 + $0x78] sm:$0xff]
  %v37 = vld [vmem:[%s1 + $0x80] sm:$0xff]
  %v38 = vld [vmem:[%s1 + $0x88] sm:$0xff]
  %v39 = vld [vmem:[%s1 + $0x90] sm:$0xff]
  %v40 = vld [vmem:[%s1 + $0x98] sm:$0xff]
  %v41 = vld [vmem:[%s1 + $0xa0] sm:$0xff]
  %v42 = vld [vmem:[%s1 + $0xa8] sm:$0xff]
  %v43 = vld [vmem:[%s1 + $0xb0] sm:$0xff]
  %v44 = vld [vmem:[%s1 + $0xb8] sm:$0xff]
  %v45 = vld [vmem:[%s1 + $0xc0] sm:$0xff]
  %v46 = vld [vmem:[%s1 + $0xc8] sm:$0xff]
  %v47 = vld [vmem:[%s1 + $0xd0] sm:$0xff]
  %v48 = vld [vmem:[%s1 + $0xd8] sm:$0xff]
  %v49 = vld [vmem:[%s1 + $0xe0] sm:$0xff]
  %v50 = vld [vmem:[%s1 + $0xe8] sm:$0xff]
  %v51 = vld [vmem:[%s1 + $0xf0] sm:$0xff]
  %v52 = vld [vmem:[%s1 + $0xf8] sm:$0xff]
  %v53 = vld [vmem:[%s1 + $0x100] sm:$0xff]
  %v54 = vld [vmem:[%s1 + $0x108] sm:$0xff]
  %v55 = vld [vmem:[%s1 + $0x110] sm:$0xff]
  %v56 = vld [vmem:[%s1 + $0x118] sm:$0xff]
  %v57 = vld [vmem:[%s1 + $0x120] sm:$0xff]
  %v58 = vld [vmem:[%s1 + $0x128] sm:$0xff]
  %v59 = vld [vmem:[%s1 + $0x130] sm:$0xff]
  %v60 = vld [vmem:[%s1 + $0x138] sm:$0xff]
  %v61 = vld [vmem:[%s1 + $0x140] sm:$0xff]
  %v62 = vld [vmem:[%s1 + $0x148] sm:$0xff]
  %v63 = vld [vmem:[%s1 + $0x150] sm:$0xff]
  %v64 = vld [vmem:[%s1 + $0x158] sm:$0xff]
  %v65 = vld [vmem:[%s1 + $0x160] sm:$0xff]
  %v66 = vld [vmem:[%s1 + $0x168] sm:$0xff]
  %v67 = vld [vmem:[%s1 + $0x170] sm:$0xff]
  %v68 = vld [vmem:[%s1 + $0x178] sm:$0xff]
  %v69 = vld [vmem:[%s1 + $0x180] sm:$0xff]
  %v70 = vld [vmem:[%s1 + $0x188] sm:$0xff]
  %v71 = vld [vmem:[%s1 + $0x190] sm:$0xff]
  %v72 = vld [vmem:[%s1 + $0x198] sm:$0xff]
  %v73 = vld [vmem:[%s1 + $0x1a0] sm:$0xff]
  %v74 = vld [vmem:[%s1 + $0x1a8] sm:$0xff]
  %v75 = vld [vmem:[%s1 + $0x1b0] sm:$0xff]
  %v76 = vld [vmem:[%s1 + $0x1b8] sm:$0xff]
  %v77 = vld [vmem:[%s1 + $0x1c0] sm:$0xff]
  %v78 = vld [vmem:[%s1 + $0x1c8] sm:$0xff]
  %v79 = vld [vmem:[%s1 + $0x1d0] sm:$0xff]
  %v80 = vld [vmem:[%s1 + $0x1d8] sm:$0xff]
  %v81 = vld [vmem:[%s1 + $0x1e0] sm:$0xff]
  %v82 = vld [vmem:[%s1 + $0x1e8] sm:$0xff]
  %v83 = vld [vmem:[%s1 + $0x1f0] sm:$0xff]
  %v84 = vld [vmem:[%s1 + $0x1f8] sm:$0xff]
  %v85 = vld [vmem:[%s1 + $0x200] sm:$0xff]
  %v86 = vld [vmem:[%s1 + $0x208] sm:$0xff]
  %v87 = vld [vmem:[%s1 + $0x210] sm:$0xff]
  %v88 = vld [vmem:[%s1 + $0x218] sm:$0xff]
  %v89 = vld [vmem:[%s1 + $0x220] sm:$0xff]
  %v90 = vld [vmem:[%s1 + $0x228] sm:$0xff]
  %v91 = vld [vmem:[%s1 + $0x230] sm:$0xff]
  %v92 = vld [vmem:[%s1 + $0x238] sm:$0xff]
  %v93 = vld [vmem:[%s1 + $0x240] sm:$0xff]
  %v94 = vld [vmem:[%s1 + $0x248] sm:$0xff]
  %v95 = vld [vmem:[%s1 + $0x250] sm:$0xff]
  %v96 = vld [vmem:[%s1 + $0x258] sm:$0xff]
  %v97 = vld [vmem:[%s1 + $0x260] sm:$0xff]
  %v98 = vld [vmem:[%s1 + $0x268] sm:$0xff]
  %v99 = vld [vmem:[%s1 + $0x270] sm:$0xff]
  %v100 = vld [vmem:[%s1 + $0x278] sm:$0xff]
  %v101 = vld [vmem:[%s1 + $0x280] sm:$0xff]
  %v102 = vld [vmem:[%s1 + $0x288] sm:$0xff]
  %v103 = vld [vmem:[%s1 + $0x290] sm:$0xff]
  %v104 = vld [vmem:[%s1 + $0x298] sm:$0xff]
  %v105 = vld [vmem:[%s1 + $0x2a0] sm:$0xff]
  %v106 = vld [vmem:[%s1 + $0x2a8] sm:$0xff]
  %v107 = vld [vmem:[%s1 + $0x2b0] sm:$0xff]
  %v108 = vld [vmem:[%s1 + $0x2b8] sm:$0xff]
  %v109 = vld [vmem:[%s1 + $0x2c0] sm:$0xff]
  %v110 = vld [vmem:[%s1 + $0x2c8] sm:$0xff]
  %v111 = vld [vmem:[%s1 + $0x2d0] sm:$0xff]
  %v112 = vld [vmem:[%s1 + $0x2d8] sm:$0xff]
  %v113 = vld [vmem:[%s1 + $0x2e0] sm:$0xff]
  %v114 = vld [vmem:[%s1 + $0x2e8] sm:$0xff]
  %v115 = vld [vmem:[%s1 + $0x2f0] sm:$0xff]
  %v116 = vld [vmem:[%s1 + $0x2f8] sm:$0xff]
  %v117 = vld [vmem:[%s1 + $0x300] sm:$0xff]
  %v118 = vld [vmem:[%s1 + $0x308] sm:$0xff]
  %v119 = vld [vmem:[%s1 + $0x310] sm:$0xff]
  %v120 = vld [vmem:[%s1 + $0x318] sm:$0xff]
  %v121 = vld [vmem:[%s1 + $0x320] sm:$0xff]
  %v122 = vld [vmem:[%s1 + $0x328] sm:$0xff]
  %v123 = vld [vmem:[%s1 + $0x330] sm:$0xff]
  %v124 = vld [vmem:[%s1 + $0x338] sm:$0xff]
  %v125 = vld [vmem:[%s1 + $0x340] sm:$0xff]
  %v126 = vld [vmem:[%s1 + $0x348] sm:$0xff]
  %v127 = vld [vmem:[%s1 + $0x350] sm:$0xff]
  %v128 = vld [vmem:[%s1 + $0x358] sm:$0xff]
  %v129 = vld [vmem:[%s1 + $0x360] sm:$0xff]
  %v130 = vld [vmem:[%s1 + $0x368] sm:$0xff]
  %v131 = vld [vmem:[%s1 + $0x370] sm:$0xff]
  %v132 = vld [vmem:[%s1 + $0x378] sm:$0xff]
  %v133 = vld [vmem:[%s1 + $0x380] sm:$0xff]
  %v134 = vld [vmem:[%s1 + $0x388] sm:$0xff]
  %v135 = vld [vmem:[%s1 + $0x390] sm:$0xff]
  %v136 = vld [vmem:[%s1 + $0x398] sm:$0xff]
  %v137 = vld [vmem:[%s1 + $0x3a0] sm:$0xff]
  %v138 = vld [vmem:[%s1 + $0x3a8] sm:$0xff]
  %v139 = vld [vmem:[%s1 + $0x3b0] sm:$0xff]
  %v140 = vld [vmem:[%s1 + $0x3b8] sm:$0xff]
  %v141 = vld [vmem:[%s1 + $0x3c0] sm:$0xff]
  %v142 = vld [vmem:[%s1 + $0x3c8] sm:$0xff]
  %v143 = vld [vmem:[%s1 + $0x3d0] sm:$0xff]
  %v144 = vld [vmem:[%s1 + $0x3d8] sm:$0xff]
  %v145 = vld [vmem:[%s1 + $0x3e0] sm:$0xff]
  %v146 = vld [vmem:[%s1 + $0x3e8] sm:$0xff]
  %v147 = vld [vmem:[%s1 + $0x3f0] sm:$0xff]
  %v148 = vld [vmem:[%s1 + $0x3f8] sm:$0xff]
  %v149 = vld [vmem:[%s1 + $0x400] sm:$0xff]
  %v150 = vld [vmem:[%s1 + $0x408] sm:$0xff]
  %v151 = vld [vmem:[%s1 + $0x410] sm:$0xff]
  %v152 = vld [vmem:[%s1 + $0x418] sm:$0xff]
  %v153 = vld [vmem:[%s1 + $0x420] sm:$0xff]
  %v154 = vld [vmem:[%s1 + $0x428] sm:$0xff]
  %v155 = vld [vmem:[%s1 + $0x430] sm:$0xff]
  %v156 = vld [vmem:[%s1 + $0x438] sm:$0xff]
  %v157 = vld [vmem:[%s1 + $0x440] sm:$0xff]
  %v158 = vld [vmem:[%s1 + $0x448] sm:$0xff]
  %v159 = vld [vmem:[%s1 + $0x450] sm:$0xff]
  %v160 = vld [vmem:[%s1 + $0x458] sm:$0xff]
  %v161 = vld [vmem:[%s1 + $0x460] sm:$0xff]
  %v162 = vld [vmem:[%s1 + $0x468] sm:$0xff]
  %v163 = vld [vmem:[%s1 + $0x470] sm:$0xff]
  %v164 = vld [vmem:[%s1 + $0x478] sm:$0xff]
  %v165 = vld [vmem:[%s1 + $0x480] sm:$0xff]
  %v166 = vld [vmem:[%s1 + $0x488] sm:$0xff]
  %v167 = vld [vmem:[%s1 + $0x490] sm:$0xff]
  %v168 = vld [vmem:[%s1 + $0x498] sm:$0xff]
  %v169 = vld [vmem:[%s1 + $0x4a0] sm:$0xff]
  %v170 = vld [vmem:[%s1 + $0x4a8] sm:$0xff]
  %v171 = vld [vmem:[%s1 + $0x4b0] sm:$0xff]
  %v172 = vld [vmem:[%s1 + $0x4b8] sm:$0xff]
  %v173 = vld [vmem:[%s1 + $0x4c0] sm:$0xff]
  %v174 = vld [vmem:[%s1 + $0x4c8] sm:$0xff]
  %v175 = vld [vmem:[%s1 + $0x4d0] sm:$0xff]
  %v176 = vld [vmem:[%s1 + $0x4d8] sm:$0xff]
  %v177 = vld [vmem:[%s1 + $0x4e0] sm:$0xff]
  %v178 = vld [vmem:[%s1 + $0x4e8] sm:$0xff]
  %v179 = vld [vmem:[%s1 + $0x4f0] sm:$0xff]
  %v180 = vld [vmem:[%s1 + $0x4f8] sm:$0xff]
  %v181 = vld [vmem:[%s1 + $0x500] sm:$0xff]
  %v182 = vld [vmem:[%s1 + $0x508] sm:$0xff]
  %v183 = vld [vmem:[%s1 + $0x510] sm:$0xff]
  %v184 = vld [vmem:[%s1 + $0x518] sm:$0xff]
  %v185 = vld [vmem:[%s1 + $0x520] sm:$0xff]
  %v186 = vld [vmem:[%s1 + $0x528] sm:$0xff]
  %v187 = vld [vmem:[%s1 + $0x530] sm:$0xff]
  %v188 = vld [vmem:[%s1 + $0x538] sm:$0xff]
  %v189 = vld [vmem:[%s1 + $0x540] sm:$0xff]
  %v190 = vld [vmem:[%s1 + $0x548] sm:$0xff]
  %v191 = vld [vmem:[%s1 + $0x550] sm:$0xff]
  %v192 = vld [vmem:[%s1 + $0x558] sm:$0xff]
  %v193 = vld [vmem:[%s1 + $0x560] sm:$0xff]
  %v194 = vld [vmem:[%s1 + $0x568] sm:$0xff]
  %v195 = vld [vmem:[%s1 + $0x570] sm:$0xff]
  %v196 = vld [vmem:[%s1 + $0x578] sm:$0xff]
  %v197 = vld [vmem:[%s1 + $0x580] sm:$0xff]
  %v198 = vld [vmem:[%s1 + $0x588] sm:$0xff]
  %v199 = vld [vmem:[%s1 + $0x590] sm:$0xff]
  %v200 = vld [vmem:[%s1 + $0x598] sm:$0xff]
  %v201 = vld [vmem:[%s1 + $0x5a0] sm:$0xff]
  %v202 = vld [vmem:[%s1 + $0x5a8] sm:$0xff]
  %v203 = vld [vmem:[%s1 + $0x5b0] sm:$0xff]
  %v204 = vld [vmem:[%s1 + $0x5b8] sm:$0xff]
  %v205 = vld [vmem:[%s1 + $0x5c0] sm:$0xff]
  %v206 = vld [vmem:[%s1 + $0x5c8] sm:$0xff]
  %v207 = vld [vmem:[%s1 + $0x5d0] sm:$0xff]
  %v208 = vld [vmem:[%s1 + $0x5d8] sm:$0xff]
  %v209 = vld [vmem:[%s1 + $0x5e0] sm:$0xff]
  %v210 = vld [vmem:[%s1 + $0x5e8] sm:$0xff]
  %v211 = vld [vmem:[%s1 + $0x5f0] sm:$0xff]
  %v212 = vld [vmem:[%s1 + $0x5f8] sm:$0xff]
  %v213 = vld [vmem:[%s1 + $0x600] sm:$0xff]
  %v214 = vld [vmem:[%s1 + $0x608] sm:$0xff]
  %v215 = vld [vmem:[%s1 + $0x610] sm:$0xff]
  %v216 = vld [vmem:[%s1 + $0x618] sm:$0xff]
  %v217 = vld [vmem:[%s1 + $0x620] sm:$0xff]
  %v218 = vld [vmem:[%s1 + $0x628] sm:$0xff]
  %v219 = vld [vmem:[%s1 + $0x630] sm:$0xff]
  %v220 = vld [vmem:[%s1 + $0x638] sm:$0xff]
  %v221 = vld [vmem:[%s1 + $0x640] sm:$0xff]
  %v222 = vld [vmem:[%s1 + $0x648] sm:$0xff]
  %v223 = vld [vmem:[%s1 + $0x650] sm:$0xff]
  %v224 = vld [vmem:[%s1 + $0x658] sm:$0xff]
  %v225 = vld [vmem:[%s1 + $0x660] sm:$0xff]
  %v226 = vld [vmem:[%s1 + $0x668] sm:$0xff]
  %v227 = vld [vmem:[%s1 + $0x670] sm:$0xff]
  %v228 = vld [vmem:[%s1 + $0x678] sm:$0xff]
  %v229 = vld [vmem:[%s1 + $0x680] sm:$0xff]
  %v230 = vld [vmem:[%s1 + $0x688] sm:$0xff]
  %v231 = vld [vmem:[%s1 + $0x690] sm:$0xff]
  %v232 = vld [vmem:[%s1 + $0x698] sm:$0xff]
  %v233 = vld [vmem:[%s1 + $0x6a0] sm:$0xff]
  %v234 = vld [vmem:[%s1 + $0x6a8] sm:$0xff]
  %v235 = vld [vmem:[%s1 + $0x6b0] sm:$0xff]
  %v236 = vld [vmem:[%s1 + $0x6b8] sm:$0xff]
  %v237 = vld [vmem:[%s1 + $0x6c0] sm:$0xff]
  %v238 = vld [vmem:[%s1 + $0x6c8] sm:$0xff]
  %v239 = vld [vmem:[%s1 + $0x6d0] sm:$0xff]
  %v240 = vld [vmem:[%s1 + $0x6d8] sm:$0xff]
  %v241 = vld [vmem:[%s1 + $0x6e0] sm:$0xff]
  %v242 = vld [vmem:[%s1 + $0x6e8] sm:$0xff]
  %v243 = vld [vmem:[%s1 + $0x6f0] sm:$0xff]
  %v244 = vld [vmem:[%s1 + $0x6f8] sm:$0xff]
  %v245 = vld [vmem:[%s1 + $0x700] sm:$0xff]
  %v246 = vld [vmem:[%s1 + $0x708] sm:$0xff]
  %v247 = vld [vmem:[%s1 + $0x710] sm:$0xff]
  %v248 = vld [vmem:[%s1 + $0x718] sm:$0xff]
  %v249 = vld [vmem:[%s1 + $0x720] sm:$0xff]
  %v250 = vld [vmem:[%s1 + $0x728] sm:$0xff]
  %v251 = vld [vmem:[%s1 + $0x730] sm:$0xff]
  %v252 = vld [vmem:[%s1 + $0x738] sm:$0xff]
  %v253 = vld [vmem:[%s1 + $0x740] sm:$0xff]
  %v254 = vld [vmem:[%s1 + $0x748] sm:$0xff]
  %v255 = vld [vmem:[%s1 + $0x750] sm:$0xff]
  %v256 = vld [vmem:[%s1 + $0x758] sm:$0xff]
  %v257 = vld [vmem:[%s1 + $0x760] sm:$0xff]
  %v258 = vld [vmem:[%s1 + $0x768] sm:$0xff]
  %v259 = vld [vmem:[%s1 + $0x770] sm:$0xff]
  %v260 = vld [vmem:[%s1 + $0x778] sm:$0xff]
  %v261 = vld [vmem:[%s1 + $0x780] sm:$0xff]
  %v262 = vld [vmem:[%s1 + $0x788] sm:$0xff]
  %v263 = vld [vmem:[%s1 + $0x790] sm:$0xff]
  %v264 = vld [vmem:[%s1 + $0x798] sm:$0xff]
  %v265 = vld [vmem:[%s1 + $0x7a0] sm:$0xff]
  %v266 = vld [vmem:[%s1 + $0x7a8] sm:$0xff]
  %v267 = vld [vmem:[%s1 + $0x7b0] sm:$0xff]
  %v268 = vld [vmem:[%s1 + $0x7b8] sm:$0xff]
  %v269 = vld [vmem:[%s1 + $0x7c0] sm:$0xff]
  %v270 = vld [vmem:[%s1 + $0x7c8] sm:$0xff]
  %v271 = vld [vmem:[%s1 + $0x7d0] sm:$0xff]
  %v272 = vld [vmem:[%s1 + $0x7d8] sm:$0xff]
  %v273 = vld [vmem:[%s1 + $0x7e0] sm:$0xff]
  %v274 = vld [vmem:[%s1 + $0x7e8] sm:$0xff]
  %v275 = vld [vmem:[%s1 + $0x7f0] sm:$0xff]
  %v276 = vld [vmem:[%s1 + $0x7f8] sm:$0xff]
  %v277 = vld [vmem:[%s1 + $0x800] sm:$0xff]
  %v278 = vld [vmem:[%s1 + $0x808] sm:$0xff]
  %v279 = vld [vmem:[%s1 + $0x810] sm:$0xff]
  %v280 = vld [vmem:[%s1 + $0x818] sm:$0xff]
  %v281 = vld [vmem:[%s1 + $0x820] sm:$0xff]
  %v282 = vld [vmem:[%s1 + $0x828] sm:$0xff]
  %v283 = vld [vmem:[%s1 + $0x830] sm:$0xff]
  %v284 = vld [vmem:[%s1 + $0x838] sm:$0xff]
  %v285 = vld [vmem:[%s1 + $0x840] sm:$0xff]
  %v286 = vld [vmem:[%s1 + $0x848] sm:$0xff]
  %v287 = vld [vmem:[%s1 + $0x850] sm:$0xff]
  %v288 = vld [vmem:[%s1 + $0x858] sm:$0xff]
  %v289 = vld [vmem:[%s1 + $0x860] sm:$0xff]
  %v290 = vld [vmem:[%s1 + $0x868] sm:$0xff]
  %v291 = vld [vmem:[%s1 + $0x870] sm:$0xff]
  %v292 = vld [vmem:[%s1 + $0x878] sm:$0xff]
  %v293 = vld [vmem:[%s1 + $0x880] sm:$0xff]
  %v294 = vld [vmem:[%s1 + $0x888] sm:$0xff]
  %v295 = vld [vmem:[%s1 + $0x890] sm:$0xff]
  %v296 = vld [vmem:[%s1 + $0x898] sm:$0xff]
  %v297 = vld [vmem:[%s1 + $0x8a0] sm:$0xff]
  %v298 = vld [vmem:[%s1 + $0x8a8] sm:$0xff]
  %v299 = vld [vmem:[%s1 + $0x8b0] sm:$0xff]
  %v300 = vld [vmem:[%s1 + $0x8b8] sm:$0xff]
  %v301 = vld [vmem:[%s1 + $0x8c0] sm:$0xff]
  %v302 = vld [vmem:[%s1 + $0x8c8] sm:$0xff]
  %v303 = vld [vmem:[%s1 + $0x8d0] sm:$0xff]
  %v304 = vld [vmem:[%s1 + $0x8d8] sm:$0xff]
  %v305 = vld [vmem:[%s1 + $0x8e0] sm:$0xff]
  %v306 = vld [vmem:[%s1 + $0x8e8] sm:$0xff]
  %v307 = vld [vmem:[%s1 + $0x8f0] sm:$0xff]
  %v308 = vld [vmem:[%s1 + $0x8f8] sm:$0xff]
  %v309 = vld [vmem:[%s1 + $0x900] sm:$0xff]
  %v310 = vld [vmem:[%s1 + $0x908] sm:$0xff]
  %v311 = vld [vmem:[%s1 + $0x910] sm:$0xff]
  %v312 = vld [vmem:[%s1 + $0x918] sm:$0xff]
  %v313 = vld [vmem:[%s1 + $0x920] sm:$0xff]
  %v314 = vld [vmem:[%s1 + $0x928] sm:$0xff]
  %v315 = vld [vmem:[%s1 + $0x930] sm:$0xff]
  %v316 = vld [vmem:[%s1 + $0x938] sm:$0xff]
  %v317 = vld [vmem:[%s1 + $0x940] sm:$0xff]
  %v318 = vld [vmem:[%s1 + $0x948] sm:$0xff]
  %v319 = vld [vmem:[%s1 + $0x950] sm:$0xff]
  %v320 = vld [vmem:[%s1 + $0x958] sm:$0xff]
  %v321 = vld [vmem:[%s1 + $0x960] sm:$0xff]
  %v322 = vld [vmem:[%s1 + $0x968] sm:$0xff]
  %v323 = vld [vmem:[%s1 + $0x970] sm:$0xff]
  %v324 = vld [vmem:[%s1 + $0x978] sm:$0xff]
  %v325 = vld [vmem:[%s1 + $0x980] sm:$0xff]
  %v326 = vld [vmem:[%s1 + $0x988] sm:$0xff]
  %v327 = vld [vmem:[%s1 + $0x990] sm:$0xff]
  %v328 = vld [vmem:[%s1 + $0x998] sm:$0xff]
  %v329 = vld [vmem:[%s1 + $0x9a0] sm:$0xff]
  %v330 = vld [vmem:[%s1 + $0x9a8] sm:$0xff]
  %v331 = vld [vmem:[%s1 + $0x9b0] sm:$0xff]
  %v332 = vld [vmem:[%s1 + $0x9b8] sm:$0xff]
  %v333 = vld [vmem:[%s1 + $0x9c0] sm:$0xff]
  %v334 = vld [vmem:[%s1 + $0x9c8] sm:$0xff]
  %v335 = vld [vmem:[%s1 + $0x9d0] sm:$0xff]
  %v336 = vld [vmem:[%s1 + $0x9d8] sm:$0xff]
  %v337 = vld [vmem:[%s1 + $0x9e0] sm:$0xff]
  %v338 = vld [vmem:[%s1 + $0x9e8] sm:$0xff]
  %v339 = vld [vmem:[%s1 + $0x9f0] sm:$0xff]
  %v340 = vld [vmem:[%s1 + $0x9f8] sm:$0xff]
  %v341 = vld [vmem:[%s1 + $0xa00] sm:$0xff]
  %v342 = vld [vmem:[%s1 + $0xa08] sm:$0xff]
  %v343 = vld [vmem:[%s1 + $0xa10] sm:$0xff]
  %v344 = vld [vmem:[%s1 + $0xa18] sm:$0xff]
  %v345 = vld [vmem:[%s1 + $0xa20] sm:$0xff]
  %v346 = vld [vmem:[%s1 + $0xa28] sm:$0xff]
  %v347 = vld [vmem:[%s1 + $0xa30] sm:$0xff]
  %v348 = vld [vmem:[%s1 + $0xa38] sm:$0xff]
  %v349 = vld [vmem:[%s1 + $0xa40] sm:$0xff]
  %v350 = vld [vmem:[%s1 + $0xa48] sm:$0xff]
  %v351 = vld [vmem:[%s1 + $0xa50] sm:$0xff]
  %v352 = vld [vmem:[%s1 + $0xa58] sm:$0xff]
  %v353 = vld [vmem:[%s1 + $0xa60] sm:$0xff]
  %v354 = vld [vmem:[%s1 + $0xa68] sm:$0xff]
  %v355 = vld [vmem:[%s1 + $0xa70] sm:$0xff]
  %v356 = vld [vmem:[%s1 + $0xa78] sm:$0xff]
  %v357 = vld [vmem:[%s1 + $0xa80] sm:$0xff]
  %v358 = vld [vmem:[%s1 + $0xa88] sm:$0xff]
  %v359 = vld [vmem:[%s1 + $0xa90] sm:$0xff]
  %v360 = vld [vmem:[%s1 + $0xa98] sm:$0xff]
  %v361 = vld [vmem:[%s1 + $0xaa0] sm:$0xff]
  %v362 = vld [vmem:[%s1 + $0xaa8] sm:$0xff]
  %v363 = vld [vmem:[%s1 + $0xab0] sm:$0xff]
  %v364 = vld [vmem:[%s1 + $0xab8] sm:$0xff]
  %v365 = vld [vmem:[%s1 + $0xac0] sm:$0xff]
  %v366 = vld [vmem:[%s1 + $0xac8] sm:$0xff]
  %v367 = vld [vmem:[%s1 + $0xad0] sm:$0xff]
  %v368 = vld [vmem:[%s1 + $0xad8] sm:$0xff]
  %v369 = vld [vmem:[%s1 + $0xae0] sm:$0xff]
  %v370 = vld [vmem:[%s1 + $0xae8] sm:$0xff]
  %v371 = vld [vmem:[%s1 + $0xaf0] sm:$0xff]
  %v372 = vld [vmem:[%s1 + $0xaf8] sm:$0xff]
  %v373 = vld [vmem:[%s1 + $0xb00] sm:$0xff]
  %v374 = vld [vmem:[%s1 + $0xb08] sm:$0xff]
  %v375 = vld [vmem:[%s1 + $0xb10] sm:$0xff]
  %v376 = vld [vmem:[%s1 + $0xb18] sm:$0xff]
  %v377 = vld [vmem:[%s1 + $0xb20] sm:$0xff]
  %v378 = vld [vmem:[%s1 + $0xb28] sm:$0xff]
  %v379 = vld [vmem:[%s1 + $0xb30] sm:$0xff]
  %v380 = vld [vmem:[%s1 + $0xb38] sm:$0xff]
  %v381 = vld [vmem:[%s1 + $0xb40] sm:$0xff]
  %v382 = vld [vmem:[%s1 + $0xb48] sm:$0xff]
  %v383 = vld [vmem:[%s1 + $0xb50] sm:$0xff]
  %v384 = vld [vmem:[%s1 + $0xb58] sm:$0xff]
  %v385 = vld [vmem:[%s1 + $0xb60] sm:$0xff]
  %v386 = vld [vmem:[%s1 + $0xb68] sm:$0xff]
  %v387 = vld [vmem:[%s1 + $0xb70] sm:$0xff]
  %v388 = vld [vmem:[%s1 + $0xb78] sm:$0xff]
  %v389 = vld [vmem:[%s1 + $0xb80] sm:$0xff]
  %v390 = vld [vmem:[%s1 + $0xb88] sm:$0xff]
  %v391 = vld [vmem:[%s1 + $0xb90] sm:$0xff]
  %v392 = vld [vmem:[%s1 + $0xb98] sm:$0xff]
  %v393 = vld [vmem:[%s1 + $0xba0] sm:$0xff]
  %v394 = vld [vmem:[%s1 + $0xba8] sm:$0xff]
  %v395 = vld [vmem:[%s1 + $0xbb0] sm:$0xff]
  %v396 = vld [vmem:[%s1 + $0xbb8] sm:$0xff]
  %v397 = vld [vmem:[%s1 + $0xbc0] sm:$0xff]
  %v398 = vld [vmem:[%s1 + $0xbc8] sm:$0xff]
  %v399 = vld [vmem:[%s1 + $0xbd0] sm:$0xff]
  %v400 = vld [vmem:[%s1 + $0xbd8] sm:$0xff]
  %v401 = vld [vmem:[%s1 + $0xbe0] sm:$0xff]
  %v402 = vld [vmem:[%s1 + $0xbe8] sm:$0xff]
  %v403 = vld [vmem:[%s1 + $0xbf0] sm:$0xff]
  %v404 = vld [vmem:[%s1 + $0xbf8] sm:$0xff]
  %v405 = vld [vmem:[%s1 + $0xc00] sm:$0xff]
  %v406 = vld [vmem:[%s1 + $0xc08] sm:$0xff]
  %v407 = vld [vmem:[%s1 + $0xc10] sm:$0xff]
  %v408 = vld [vmem:[%s1 + $0xc18] sm:$0xff]
  %v409 = vld [vmem:[%s1 + $0xc20] sm:$0xff]
  %v410 = vld [vmem:[%s1 + $0xc28] sm:$0xff]
  %v411 = vld [vmem:[%s1 + $0xc30] sm:$0xff]
  %v412 = vld [vmem:[%s1 + $0xc38] sm:$0xff]
  %v413 = vld [vmem:[%s1 + $0xc40] sm:$0xff]
  %v414 = vld [vmem:[%s1 + $0xc48] sm:$0xff]
  %v415 = vld [vmem:[%s1 + $0xc50] sm:$0xff]
  %v416 = vld [vmem:[%s1 + $0xc58] sm:$0xff]
  %v417 = vld [vmem:[%s1 + $0xc60] sm:$0xff]
  %v418 = vld [vmem:[%s1 + $0xc68] sm:$0xff]
  %v419 = vld [vmem:[%s1 + $0xc70] sm:$0xff]
  %v420 = vld [vmem:[%s1 + $0xc78] sm:$0xff]
  %v421 = vld [vmem:[%s1 + $0xc80] sm:$0xff]
  %v422 = vld [vmem:[%s1 + $0xc88] sm:$0xff]
  %v423 = vld [vmem:[%s1 + $0xc90] sm:$0xff]
  %v424 = vld [vmem:[%s1 + $0xc98] sm:$0xff]
  %v425 = vld [vmem:[%s1 + $0xca0] sm:$0xff]
  %v426 = vld [vmem:[%s1 + $0xca8] sm:$0xff]
  %v427 = vld [vmem:[%s1 + $0xcb0] sm:$0xff]
  %v428 = vld [vmem:[%s1 + $0xcb8] sm:$0xff]
  %v429 = vld [vmem:[%s1 + $0xcc0] sm:$0xff]
  %v430 = vld [vmem:[%s1 + $0xcc8] sm:$0xff]
  %v431 = vld [vmem:[%s1 + $0xcd0] sm:$0xff]
  %v432 = vld [vmem:[%s1 + $0xcd8] sm:$0xff]
  %v433 = vld [vmem:[%s1 + $0xce0] sm:$0xff]
  %v434 = vld [vmem:[%s1 + $0xce8] sm:$0xff]
  %v435 = vld [vmem:[%s1 + $0xcf0] sm:$0xff]
  %v436 = vld [vmem:[%s1 + $0xcf8] sm:$0xff]
  %v437 = vld [vmem:[%s1 + $0xd00] sm:$0xff]
  %v438 = vld [vmem:[%s1 + $0xd08] sm:$0xff]
  %v439 = vld [vmem:[%s1 + $0xd10] sm:$0xff]
  %v440 = vld [vmem:[%s1 + $0xd18] sm:$0xff]
  %v441 = vld [vmem:[%s1 + $0xd20] sm:$0xff]
  %v442 = vld [vmem:[%s1 + $0xd28] sm:$0xff]
  %v443 = vld [vmem:[%s1 + $0xd30] sm:$0xff]
  %v444 = vld [vmem:[%s1 + $0xd38] sm:$0xff]
  %v445 = vld [vmem:[%s1 + $0xd40] sm:$0xff]
  %v446 = vld [vmem:[%s1 + $0xd48] sm:$0xff]
  %v447 = vld [vmem:[%s1 + $0xd50] sm:$0xff]
  %v448 = vld [vmem:[%s1 + $0xd58] sm:$0xff]
  %v449 = vld [vmem:[%s1 + $0xd60] sm:$0xff]
  %v450 = vld [vmem:[%s1 + $0xd68] sm:$0xff]
  %v451 = vld [vmem:[%s1 + $0xd70] sm:$0xff]
  %v452 = vld [vmem:[%s1 + $0xd78] sm:$0xff]
  %v453 = vld [vmem:[%s1 + $0xd80] sm:$0xff]
  %v454 = vld [vmem:[%s1 + $0xd88] sm:$0xff]
  %v455 = vld [vmem:[%s1 + $0xd90] sm:$0xff]
  %v456 = vld [vmem:[%s1 + $0xd98] sm:$0xff]
  %v457 = vld [vmem:[%s1 + $0xda0] sm:$0xff]
  %v458 = vld [vmem:[%s1 + $0xda8] sm:$0xff]
  %v459 = vld [vmem:[%s1 + $0xdb0] sm:$0xff]
  %v460 = vld [vmem:[%s1 + $0xdb8] sm:$0xff]
  %v461 = vld [vmem:[%s1 + $0xdc0] sm:$0xff]
  %v462 = vld [vmem:[%s1 + $0xdc8] sm:$0xff]
  %v463 = vld [vmem:[%s1 + $0xdd0] sm:$0xff]
  %v464 = vld [vmem:[%s1 + $0xdd8] sm:$0xff]
  %v465 = vld [vmem:[%s1 + $0xde0] sm:$0xff]
  %v466 = vld [vmem:[%s1 + $0xde8] sm:$0xff]
  %v467 = vld [vmem:[%s1 + $0xdf0] sm:$0xff]
  %v468 = vld [vmem:[%s1 + $0xdf8] sm:$0xff]
  %v469 = vld [vmem:[%s1 + $0xe00] sm:$0xff]
  %v470 = vld [vmem:[%s1 + $0xe08] sm:$0xff]
  %v471 = vld [vmem:[%s1 + $0xe10] sm:$0xff]
  %v472 = vld [vmem:[%s1 + $0xe18] sm:$0xff]
  %v473 = vld [vmem:[%s1 + $0xe20] sm:$0xff]
  %v474 = vld [vmem:[%s1 + $0xe28] sm:$0xff]
  %v475 = vld [vmem:[%s1 + $0xe30] sm:$0xff]
  %v476 = vld [vmem:[%s1 + $0xe38] sm:$0xff]
  %v477 = vld [vmem:[%s1 + $0xe40] sm:$0xff]
  %v478 = vld [vmem:[%s1 + $0xe48] sm:$0xff]
  %v479 = vld [vmem:[%s1 + $0xe50] sm:$0xff]
  %v480 = vld [vmem:[%s1 + $0xe58] sm:$0xff]
  %v481 = vld [vmem:[%s1 + $0xe60] sm:$0xff]
  %v482 = vld [vmem:[%s1 + $0xe68] sm:$0xff]
  %v483 = vld [vmem:[%s1 + $0xe70] sm:$0xff]
  %v484 = vld [vmem:[%s1 + $0xe78] sm:$0xff]
  %v485 = vld [vmem:[%s1 + $0xe80] sm:$0xff]
  %v486 = vld [vmem:[%s1 + $0xe88] sm:$0xff]
  %v487 = vld [vmem:[%s1 + $0xe90] sm:$0xff]
  %v488 = vld [vmem:[%s1 + $0xe98] sm:$0xff]
  %v489 = vld [vmem:[%s1 + $0xea0] sm:$0xff]
  %v490 = vld [vmem:[%s1 + $0xea8] sm:$0xff]
  %v491 = vld [vmem:[%s1 + $0xeb0] sm:$0xff]
  %v492 = vld [vmem:[%s1 + $0xeb8] sm:$0xff]
  %v493 = vld [vmem:[%s1 + $0xec0] sm:$0xff]
  %v494 = vld [vmem:[%s1 + $0xec8] sm:$0xff]
  %v495 = vld [vmem:[%s1 + $0xed0] sm:$0xff]
  %v496 = vld [vmem:[%s1 + $0xed8] sm:$0xff]
  %v497 = vld [vmem:[%s1 + $0xee0] sm:$0xff]
  %v498 = vld [vmem:[%s1 + $0xee8] sm:$0xff]
  %v499 = vld [vmem:[%s1 + $0xef0] sm:$0xff]
  %v500 = vld [vmem:[%s1 + $0xef8] sm:$0xff]
  %v501 = vld [vmem:[%s1 + $0xf00] sm:$0xff]
  %v502 = vld [vmem:[%s1 + $0xf08] sm:$0xff]
  %v503 = vld [vmem:[%s1 + $0xf10] sm:$0xff]
  %v504 = vld [vmem:[%s1 + $0xf18] sm:$0xff]
  %v505 = vld [vmem:[%s1 + $0xf20] sm:$0xff]
  %v506 = vld [vmem:[%s1 + $0xf28] sm:$0xff]
  %v507 = vld [vmem:[%s1 + $0xf30] sm:$0xff]
  %v508 = vld [vmem:[%s1 + $0xf38] sm:$0xff]
  %v509 = vld [vmem:[%s1 + $0xf40] sm:$0xff]
  %v510 = vld [vmem:[%s1 + $0xf48] sm:$0xff]
  %v511 = vld [vmem:[%s1 + $0xf50] sm:$0xff]
  %v512 = vld [vmem:[%s1 + $0xf58] sm:$0xff]
  %v513 = vld [vmem:[%s1 + $0xf60] sm:$0xff]
  %v514 = vld [vmem:[%s1 + $0xf68] sm:$0xff]
  %v515 = vld [vmem:[%s1 + $0xf70] sm:$0xff]
  %v516 = vld [vmem:[%s1 + $0xf78] sm:$0xff]
  %v517 = vld [vmem:[%s1 + $0xf80] sm:$0xff]
  %v518 = vld [vmem:[%s1 + $0xf88] sm:$0xff]
  %v519 = vld [vmem:[%s1 + $0xf90] sm:$0xff]
  %v520 = vld [vmem:[%s1 + $0xf98] sm:$0xff]
  %v521 = vld [vmem:[%s1 + $0xfa0] sm:$0xff]
  %v522 = vld [vmem:[%s1 + $0xfa8] sm:$0xff]
  %v523 = vld [vmem:[%s1 + $0xfb0] sm:$0xff]
  %v524 = vld [vmem:[%s1 + $0xfb8] sm:$0xff]
  %v525 = vld [vmem:[%s1 + $0xfc0] sm:$0xff]
  %v526 = vld [vmem:[%s1 + $0xfc8] sm:$0xff]
  %v527 = vld [vmem:[%s1 + $0xfd0] sm:$0xff]
  %v528 = vld [vmem:[%s1 + $0xfd8] sm:$0xff]
  %v529 = vld [vmem:[%s1 + $0xfe0] sm:$0xff]
  %v530 = vld [vmem:[%s1 + $0xfe8] sm:$0xff]
  %v531 = vld [vmem:[%s1 + $0xff0] sm:$0xff]
  %v532 = vld [vmem:[%s1 + $0xff8] sm:$0xff]
  %v533 = vld [vmem:[%s1 + $0x1000] sm:$0xff]
  %v534 = vld [vmem:[%s1 + $0x1008] sm:$0xff]
  %v535 = vld [vmem:[%s1 + $0x1010] sm:$0xff]
  %v536 = vld [vmem:[%s1 + $0x1018] sm:$0xff]
  %v537 = vld [vmem:[%s1 + $0x1020] sm:$0xff]
  %v538 = vld [vmem:[%s1 + $0x1028] sm:$0xff]
  %v539 = vld [vmem:[%s1 + $0x1030] sm:$0xff]
  %v540 = vld [vmem:[%s1 + $0x1038] sm:$0xff]
  %v541 = vld [vmem:[%s1 + $0x1040] sm:$0xff]
  %v542 = vld [vmem:[%s1 + $0x1048] sm:$0xff]
  %v543 = vld [vmem:[%s1 + $0x1050] sm:$0xff]
  %v544 = vld [vmem:[%s1 + $0x1058] sm:$0xff]
  %v545 = vld [vmem:[%s1 + $0x1060] sm:$0xff]
  %v546 = vld [vmem:[%s1 + $0x1068] sm:$0xff]
  %v547 = vld [vmem:[%s1 + $0x1070] sm:$0xff]
  %v548 = vld [vmem:[%s1 + $0x1078] sm:$0xff]
  %v549 = vld [vmem:[%s1 + $0x1080] sm:$0xff]
  %v550 = vld [vmem:[%s1 + $0x1088] sm:$0xff]
  %v551 = vld [vmem:[%s1 + $0x1090] sm:$0xff]
  %v552 = vld [vmem:[%s1 + $0x1098] sm:$0xff]
  %v553 = vld [vmem:[%s1 + $0x10a0] sm:$0xff]
  %v554 = vld [vmem:[%s1 + $0x10a8] sm:$0xff]
  %v555 = vld [vmem:[%s1 + $0x10b0] sm:$0xff]
  %v556 = vld [vmem:[%s1 + $0x10b8] sm:$0xff]
  %v557 = vld [vmem:[%s1 + $0x10c0] sm:$0xff]
  %v558 = vld [vmem:[%s1 + $0x10c8] sm:$0xff]
  %v559 = vld [vmem:[%s1 + $0x10d0] sm:$0xff]
  %v560 = vld [vmem:[%s1 + $0x10d8] sm:$0xff]
  %v561 = vld [vmem:[%s1 + $0x10e0] sm:$0xff]
  %v562 = vld [vmem:[%s1 + $0x10e8] sm:$0xff]
  %v563 = vld [vmem:[%s1 + $0x10f0] sm:$0xff]
  %v564 = vld [vmem:[%s1 + $0x10f8] sm:$0xff]
  %v565 = vld [vmem:[%s1 + $0x1100] sm:$0xff]
  %v566 = vld [vmem:[%s1 + $0x1108] sm:$0xff]
  %v567 = vld [vmem:[%s1 + $0x1110] sm:$0xff]
  %v568 = vld [vmem:[%s1 + $0x1118] sm:$0xff]
  %v569 = vld [vmem:[%s1 + $0x1120] sm:$0xff]
  %v570 = vld [vmem:[%s1 + $0x1128] sm:$0xff]
  %v571 = vld [vmem:[%s1 + $0x1130] sm:$0xff]
  %v572 = vld [vmem:[%s1 + $0x1138] sm:$0xff]
  %v573 = vld [vmem:[%s1 + $0x1140] sm:$0xff]
  %v574 = vld [vmem:[%s1 + $0x1148] sm:$0xff]
  %v575 = vld [vmem:[%s1 + $0x1150] sm:$0xff]
  %v576 = vld [vmem:[%s1 + $0x1158] sm:$0xff]
  %v577 = vld [vmem:[%s1 + $0x1160] sm:$0xff]
  %v578 = vld [vmem:[%s1 + $0x1168] sm:$0xff]
  %v579 = vld [vmem:[%s1 + $0x1170] sm:$0xff]
  %v580 = vld [vmem:[%s1 + $0x1178] sm:$0xff]
  %v581 = vld [vmem:[%s1 + $0x1180] sm:$0xff]
  %v582 = vld [vmem:[%s1 + $0x1188] sm:$0xff]
  %v583 = vld [vmem:[%s1 + $0x1190] sm:$0xff]
  %v584 = vld [vmem:[%s1 + $0x1198] sm:$0xff]
  %v585 = vld [vmem:[%s1 + $0x11a0] sm:$0xff]
  %v586 = vld [vmem:[%s1 + $0x11a8] sm:$0xff]
  %v587 = vld [vmem:[%s1 + $0x11b0] sm:$0xff]
  %v588 = vld [vmem:[%s1 + $0x11b8] sm:$0xff]
  %v589 = vld [vmem:[%s1 + $0x11c0] sm:$0xff]
  %v590 = vld [vmem:[%s1 + $0x11c8] sm:$0xff]
  %v591 = vld [vmem:[%s1 + $0x11d0] sm:$0xff]
  %v592 = vld [vmem:[%s1 + $0x11d8] sm:$0xff]
  %v593 = vld [vmem:[%s1 + $0x11e0] sm:$0xff]
  %v594 = vld [vmem:[%s1 + $0x11e8] sm:$0xff]
  %v595 = vld [vmem:[%s1 + $0x11f0] sm:$0xff]
  %v596 = vld [vmem:[%s1 + $0x11f8] sm:$0xff]
  %v597 = vld [vmem:[%s1 + $0x1200] sm:$0xff]
  %v598 = vld [vmem:[%s1 + $0x1208] sm:$0xff]
  %v599 = vld [vmem:[%s1 + $0x1210] sm:$0xff]
  %v600 = vld [vmem:[%s1 + $0x1218] sm:$0xff]
  %v601 = vld [vmem:[%s1 + $0x1220] sm:$0xff]
  %v602 = vld [vmem:[%s1 + $0x1228] sm:$0xff]
  %v603 = vld [vmem:[%s1 + $0x1230] sm:$0xff]
  %v604 = vld [vmem:[%s1 + $0x1238] sm:$0xff]
  %v605 = vld [vmem:[%s1 + $0x1240] sm:$0xff]
  %v606 = vld [vmem:[%s1 + $0x1248] sm:$0xff]
  %v607 = vld [vmem:[%s1 + $0x1250] sm:$0xff]
  %v608 = vld [vmem:[%s1 + $0x1258] sm:$0xff]
  %v609 = vld [vmem:[%s1 + $0x1260] sm:$0xf]
  %v610 = vld [vmem:[%s1 + $0x1268] sm:$0xf]
  %v611 = vld [vmem:[%s1 + $0x1270] sm:$0xf]
  %v612 = vld [vmem:[%s1 + $0x1278] sm:$0xf]
  %v613 = vld [vmem:[%s1 + $0x1280] sm:$0xf]
  %v614 = vld [vmem:[%s1 + $0x1288] sm:$0xf]
  %v615 = vld [vmem:[%s1 + $0x1290] sm:$0xf]
  %v616 = vld [vmem:[%s1 + $0x1298] sm:$0xf]
  %v617 = vld [vmem:[%s1 + $0x12a0] sm:$0xf]
  %v618 = vld [vmem:[%s1 + $0x12a8] sm:$0xf]
  %v619 = vld [vmem:[%s1 + $0x12b0] sm:$0xf]
  %v620 = vld [vmem:[%s1 + $0x12b8] sm:$0xf]
  %v621 = vld [vmem:[%s1 + $0x12c0] sm:$0xf]
  %v622 = vld [vmem:[%s1 + $0x12c8] sm:$0xf]
  %v623 = vld [vmem:[%s1 + $0x12d0] sm:$0xf]
  %v624 = vld [vmem:[%s1 + $0x12d8] sm:$0xf]
  %v625 = vld [vmem:[%s1 + $0x12e0] sm:$0xf]
  %v626 = vld [vmem:[%s1 + $0x12e8] sm:$0xf]
  %v627 = vld [vmem:[%s1 + $0x12f0] sm:$0xf]
  %v628 = vld [vmem:[%s1 + $0x12f8] sm:$0xf]
  %v629 = vld [vmem:[%s1 + $0x1300] sm:$0xf]
  %v630 = vld [vmem:[%s1 + $0x1308] sm:$0xf]
  %v631 = vld [vmem:[%s1 + $0x1310] sm:$0xf]
  %v632 = vld [vmem:[%s1 + $0x1318] sm:$0xf]
  %v633 = vld [vmem:[%s1 + $0x1320] sm:$0xf]
  %v634 = vld [vmem:[%s1 + $0x1328] sm:$0xf]
  %v635 = vld [vmem:[%s1 + $0x1330] sm:$0xf]
  %v636 = vld [vmem:[%s1 + $0x1338] sm:$0xf]
  %v637 = vld [vmem:[%s1 + $0x1340] sm:$0xf]
  %v638 = vld [vmem:[%s1 + $0x1348] sm:$0xf]
  %v639 = vld [vmem:[%s1 + $0x1350] sm:$0xf]
  %v640 = vld [vmem:[%s1 + $0x1358] sm:$0xf]
  %v641 = vld [vmem:[%s1 + $0x1360] sm:$0xf]
  %v642 = vld [vmem:[%s1 + $0x1368] sm:$0xf]
  %v643 = vld [vmem:[%s1 + $0x1370] sm:$0xf]
  %v644 = vld [vmem:[%s1 + $0x1378] sm:$0xf]
  %v645 = vld [vmem:[%s1 + $0x1380] sm:$0xf]
  %v646 = vld [vmem:[%s1 + $0x1388] sm:$0xf]
  %v647 = vld [vmem:[%s1 + $0x1390] sm:$0xf]
  %v648 = vld [vmem:[%s1 + $0x1398] sm:$0xf]
  %v649 = vld [vmem:[%s1 + $0x13a0] sm:$0xf]
  %v650 = vld [vmem:[%s1 + $0x13a8] sm:$0xf]
  %v651 = vld [vmem:[%s1 + $0x13b0] sm:$0xf]
  %v652 = vld [vmem:[%s1 + $0x13b8] sm:$0xf]
  %v653 = vld [vmem:[%s1 + $0x13c0] sm:$0xf]
  %v654 = vld [vmem:[%s1 + $0x13c8] sm:$0xf]
  %v655 = vld [vmem:[%s1 + $0x13d0] sm:$0xf]
  %v656 = vld [vmem:[%s1 + $0x13d8] sm:$0xf]
  %v657 = vld [vmem:[%s1 + $0x13e0] sm:$0xf]
  %v658 = vld [vmem:[%s2] sm:$0xff]
  %v659 = vld [vmem:[%s2 + $0x8] sm:$0xff]
  %v660 = vld [vmem:[%s2 + $0x10] sm:$0xff]
  %v661 = vld [vmem:[%s2 + $0x18] sm:$0xff]
  %v662 = vld [vmem:[%s2 + $0x20] sm:$0xff]
  %v663 = vld [vmem:[%s2 + $0x28] sm:$0xff]
  %v664 = vld [vmem:[%s2 + $0x30] sm:$0x1]
  %v672 = vperm.slane %v658, 0
  %v673 = vperm.slane %v658, 1
  %v674 = vperm.slane %v658, 2
  %v675 = vperm.slane %v658, 3
  %v676 = vperm.slane %v658, 4
  %v677 = vperm.slane %v658, 5
  %v678 = vperm.slane %v658, 6
  %v679 = vperm.slane %v658, 7
  %v680 = vperm.slane %v659, 0
  %v681 = vperm.slane %v659, 1
  %v682 = vperm.slane %v659, 2
  %v683 = vperm.slane %v659, 3
  %v684 = vperm.slane %v659, 4
  %v685 = vperm.slane %v659, 5
  %v686 = vperm.slane %v659, 6
  %v687 = vperm.slane %v659, 7
  %v688 = vperm.slane %v660, 0
  %v689 = vperm.slane %v660, 1
  %v690 = vperm.slane %v660, 2
  %v691 = vperm.slane %v660, 3
  %v692 = vperm.slane %v660, 4
  %v693 = vperm.slane %v660, 5
  %v694 = vperm.slane %v660, 6
  %v695 = vperm.slane %v660, 7
  %v696 = vperm.slane %v661, 0
  %v697 = vperm.slane %v661, 1
  %v698 = vperm.slane %v661, 2
  %v699 = vperm.slane %v661, 3
  %v700 = vperm.slane %v661, 4
  %v701 = vperm.slane %v661, 5
  %v702 = vperm.slane %v661, 6
  %v703 = vperm.slane %v661, 7
  %v704 = vperm.slane %v662, 0
  %v705 = vperm.slane %v662, 1
  %v706 = vperm.slane %v662, 2
  %v707 = vperm.slane %v662, 3
  %v708 = vperm.slane %v662, 4
  %v709 = vperm.slane %v662, 5
  %v710 = vperm.slane %v662, 6
  %v711 = vperm.slane %v662, 7
  %v712 = vperm.slane %v663, 0
  %v713 = vperm.slane %v663, 1
  %v714 = vperm.slane %v663, 2
  %v715 = vperm.slane %v663, 3
  %v716 = vperm.slane %v663, 4
  %v717 = vperm.slane %v663, 5
  %v718 = vperm.slane %v663, 6
  %v719 = vperm.slane %v663, 7
  %v720 = vperm.slane %v664, 0
  %vm770 = vcmask 818176
  %v772 = vsel %vm770, %v20, 0
  %vm774 = vcmask 1043456
  %v776 = vsel %vm774, %v609, 0
  %v779 = vsel %vm774, %v610, 0
  %v782 = vsel %vm774, %v611, 0
  %v785 = vsel %vm774, %v612, 0
  %v788 = vsel %vm774, %v613, 0
  %v791 = vsel %vm774, %v614, 0
  %v794 = vsel %vm774, %v615, 0
  %v797 = vsel %vm774, %v616, 0
  %v800 = vsel %vm774, %v617, 0
  %v803 = vsel %vm774, %v618, 0
  %v806 = vsel %vm774, %v619, 0
  %v809 = vsel %vm774, %v620, 0
  %v812 = vsel %vm774, %v621, 0
  %v815 = vsel %vm774, %v622, 0
  %v818 = vsel %vm774, %v623, 0
  %v821 = vsel %vm774, %v624, 0
  %v824 = vsel %vm774, %v625, 0
  %v827 = vsel %vm774, %v626, 0
  %v830 = vsel %vm774, %v627, 0
  %v833 = vsel %vm774, %v628, 0
  %v836 = vsel %vm774, %v629, 0
  %v839 = vsel %vm774, %v630, 0
  %v842 = vsel %vm774, %v631, 0
  %v845 = vsel %vm774, %v632, 0
  %v848 = vsel %vm774, %v633, 0
  %v851 = vsel %vm774, %v634, 0
  %v854 = vsel %vm774, %v635, 0
  %v857 = vsel %vm774, %v636, 0
  %v860 = vsel %vm774, %v637, 0
  %v863 = vsel %vm774, %v638, 0
  %v866 = vsel %vm774, %v639, 0
  %v869 = vsel %vm774, %v640, 0
  %v872 = vsel %vm774, %v641, 0
  %v875 = vsel %vm774, %v642, 0
  %v878 = vsel %vm774, %v643, 0
  %v881 = vsel %vm774, %v644, 0
  %v884 = vsel %vm774, %v645, 0
  %v887 = vsel %vm774, %v646, 0
  %v890 = vsel %vm774, %v647, 0
  %v893 = vsel %vm774, %v648, 0
  %v896 = vsel %vm774, %v649, 0
  %v899 = vsel %vm774, %v650, 0
  %v902 = vsel %vm774, %v651, 0
  %v905 = vsel %vm774, %v652, 0
  %v908 = vsel %vm774, %v653, 0
  %v911 = vsel %vm774, %v654, 0
  %v914 = vsel %vm774, %v655, 0
  %v917 = vsel %vm774, %v656, 0
  %v920 = vsel %vm774, %v657, 0
  %922 = vmatpush.msra.mxu0 0.0
  %923 = vmatpush.msra.mxu0 0.0
  %924 = vmatpush.msra.mxu0 0.0
  %925 = vmatpush.msra.mxu0 %v776
  %926 = vmatpush.msra.mxu0 %v560
  %927 = vmatpush.msra.mxu0 %v511
  %928 = vmatpush.msra.mxu0 %v462
  %929 = vmatpush.msra.mxu0 %v413
  %930 = vmatpush.msra.mxu0 %v364
  %931 = vmatpush.msra.mxu0 %v315
  %932 = vmatpush.msra.mxu0 %v266
  %933 = vmatpush.msra.mxu0 %v217
  %934 = vmatpush.msra.mxu0 %v168
  %935 = vmatpush.msra.mxu0 %v119
  %936 = vmatpush.msra.mxu0 %v70
  %937 = vmatpush.msra.mxu0 %v21
  %938 = vmatmul.f32.gmra.mxu0 %v772
  %v939 = vpop.f32.mrf.mxu0
  %v940 = vadd.f32 %v672, %v939
  %941 = vdwg.mxu0
  %942 = vmatpush.msra.mxu0 0.0
  %943 = vmatpush.msra.mxu0 0.0
  %944 = vmatpush.msra.mxu0 0.0
  %945 = vmatpush.msra.mxu0 %v779
  %946 = vmatpush.msra.mxu0 %v561
  %947 = vmatpush.msra.mxu0 %v512
  %948 = vmatpush.msra.mxu0 %v463
  %949 = vmatpush.msra.mxu0 %v414
  %950 = vmatpush.msra.mxu0 %v365
  %951 = vmatpush.msra.mxu0 %v316
  %952 = vmatpush.msra.mxu0 %v267
  %953 = vmatpush.msra.mxu0 %v218
  %954 = vmatpush.msra.mxu0 %v169
  %955 = vmatpush.msra.mxu0 %v120
  %956 = vmatpush.msra.mxu0 %v71
  %957 = vmatpush.msra.mxu0 %v22
  %958 = vmatmul.f32.gmra.mxu0 %v772
  %v959 = vpop.f32.mrf.mxu0
  %v960 = vadd.f32 %v673, %v959
  %961 = vdwg.mxu0
  %962 = vmatpush.msra.mxu0 0.0
  %963 = vmatpush.msra.mxu0 0.0
  %964 = vmatpush.msra.mxu0 0.0
  %965 = vmatpush.msra.mxu0 %v782
  %966 = vmatpush.msra.mxu0 %v562
  %967 = vmatpush.msra.mxu0 %v513
  %968 = vmatpush.msra.mxu0 %v464
  %969 = vmatpush.msra.mxu0 %v415
  %970 = vmatpush.msra.mxu0 %v366
  %971 = vmatpush.msra.mxu0 %v317
  %972 = vmatpush.msra.mxu0 %v268
  %973 = vmatpush.msra.mxu0 %v219
  %974 = vmatpush.msra.mxu0 %v170
  %975 = vmatpush.msra.mxu0 %v121
  %976 = vmatpush.msra.mxu0 %v72
  %977 = vmatpush.msra.mxu0 %v23
  %978 = vmatmul.f32.gmra.mxu0 %v772
  %v979 = vpop.f32.mrf.mxu0
  %v980 = vadd.f32 %v674, %v979
  %981 = vdwg.mxu0
  %982 = vmatpush.msra.mxu0 0.0
  %983 = vmatpush.msra.mxu0 0.0
  %984 = vmatpush.msra.mxu0 0.0
  %985 = vmatpush.msra.mxu0 %v785
  %986 = vmatpush.msra.mxu0 %v563
  %987 = vmatpush.msra.mxu0 %v514
  %988 = vmatpush.msra.mxu0 %v465
  %989 = vmatpush.msra.mxu0 %v416
  %990 = vmatpush.msra.mxu0 %v367
  %991 = vmatpush.msra.mxu0 %v318
  %992 = vmatpush.msra.mxu0 %v269
  %993 = vmatpush.msra.mxu0 %v220
  %994 = vmatpush.msra.mxu0 %v171
  %995 = vmatpush.msra.mxu0 %v122
  %996 = vmatpush.msra.mxu0 %v73
  %997 = vmatpush.msra.mxu0 %v24
  %998 = vmatmul.f32.gmra.mxu0 %v772
  %v999 = vpop.f32.mrf.mxu0
  %v1000 = vadd.f32 %v675, %v999
  %1001 = vdwg.mxu0
  %1002 = vmatpush.msra.mxu0 0.0
  %1003 = vmatpush.msra.mxu0 0.0
  %1004 = vmatpush.msra.mxu0 0.0
  %1005 = vmatpush.msra.mxu0 %v788
  %1006 = vmatpush.msra.mxu0 %v564
  %1007 = vmatpush.msra.mxu0 %v515
  %1008 = vmatpush.msra.mxu0 %v466
  %1009 = vmatpush.msra.mxu0 %v417
  %1010 = vmatpush.msra.mxu0 %v368
  %1011 = vmatpush.msra.mxu0 %v319
  %1012 = vmatpush.msra.mxu0 %v270
  %1013 = vmatpush.msra.mxu0 %v221
  %1014 = vmatpush.msra.mxu0 %v172
  %1015 = vmatpush.msra.mxu0 %v123
  %1016 = vmatpush.msra.mxu0 %v74
  %1017 = vmatpush.msra.mxu0 %v25
  %1018 = vmatmul.f32.gmra.mxu0 %v772
  %v1019 = vpop.f32.mrf.mxu0
  %v1020 = vadd.f32 %v676, %v1019
  %1021 = vdwg.mxu0
  %1022 = vmatpush.msra.mxu0 0.0
  %1023 = vmatpush.msra.mxu0 0.0
  %1024 = vmatpush.msra.mxu0 0.0
  %1025 = vmatpush.msra.mxu0 %v791
  %1026 = vmatpush.msra.mxu0 %v565
  %1027 = vmatpush.msra.mxu0 %v516
  %1028 = vmatpush.msra.mxu0 %v467
  %1029 = vmatpush.msra.mxu0 %v418
  %1030 = vmatpush.msra.mxu0 %v369
  %1031 = vmatpush.msra.mxu0 %v320
  %1032 = vmatpush.msra.mxu0 %v271
  %1033 = vmatpush.msra.mxu0 %v222
  %1034 = vmatpush.msra.mxu0 %v173
  %1035 = vmatpush.msra.mxu0 %v124
  %1036 = vmatpush.msra.mxu0 %v75
  %1037 = vmatpush.msra.mxu0 %v26
  %1038 = vmatmul.f32.gmra.mxu0 %v772
  %v1039 = vpop.f32.mrf.mxu0
  %v1040 = vadd.f32 %v677, %v1039
  %1041 = vdwg.mxu0
  %1042 = vmatpush.msra.mxu0 0.0
  %1043 = vmatpush.msra.mxu0 0.0
  %1044 = vmatpush.msra.mxu0 0.0
  %1045 = vmatpush.msra.mxu0 %v794
  %1046 = vmatpush.msra.mxu0 %v566
  %1047 = vmatpush.msra.mxu0 %v517
  %1048 = vmatpush.msra.mxu0 %v468
  %1049 = vmatpush.msra.mxu0 %v419
  %1050 = vmatpush.msra.mxu0 %v370
  %1051 = vmatpush.msra.mxu0 %v321
  %1052 = vmatpush.msra.mxu0 %v272
  %1053 = vmatpush.msra.mxu0 %v223
  %1054 = vmatpush.msra.mxu0 %v174
  %1055 = vmatpush.msra.mxu0 %v125
  %1056 = vmatpush.msra.mxu0 %v76
  %1057 = vmatpush.msra.mxu0 %v27
  %1058 = vmatmul.f32.gmra.mxu0 %v772
  %v1059 = vpop.f32.mrf.mxu0
  %v1060 = vadd.f32 %v678, %v1059
  %1061 = vdwg.mxu0
  %1062 = vmatpush.msra.mxu0 0.0
  %1063 = vmatpush.msra.mxu0 0.0
  %1064 = vmatpush.msra.mxu0 0.0
  %1065 = vmatpush.msra.mxu0 %v797
  %1066 = vmatpush.msra.mxu0 %v567
  %1067 = vmatpush.msra.mxu0 %v518
  %1068 = vmatpush.msra.mxu0 %v469
  %1069 = vmatpush.msra.mxu0 %v420
  %1070 = vmatpush.msra.mxu0 %v371
  %1071 = vmatpush.msra.mxu0 %v322
  %1072 = vmatpush.msra.mxu0 %v273
  %1073 = vmatpush.msra.mxu0 %v224
  %1074 = vmatpush.msra.mxu0 %v175
  %1075 = vmatpush.msra.mxu0 %v126
  %1076 = vmatpush.msra.mxu0 %v77
  %1077 = vmatpush.msra.mxu0 %v28
  %1078 = vmatmul.f32.gmra.mxu0 %v772
  %v1079 = vpop.f32.mrf.mxu0
  %v1080 = vadd.f32 %v679, %v1079
  %1081 = vdwg.mxu0
  %1082 = vmatpush.msra.mxu0 0.0
  %1083 = vmatpush.msra.mxu0 0.0
  %1084 = vmatpush.msra.mxu0 0.0
  %1085 = vmatpush.msra.mxu0 %v800
  %1086 = vmatpush.msra.mxu0 %v568
  %1087 = vmatpush.msra.mxu0 %v519
  %1088 = vmatpush.msra.mxu0 %v470
  %1089 = vmatpush.msra.mxu0 %v421
  %1090 = vmatpush.msra.mxu0 %v372
  %1091 = vmatpush.msra.mxu0 %v323
  %1092 = vmatpush.msra.mxu0 %v274
  %1093 = vmatpush.msra.mxu0 %v225
  %1094 = vmatpush.msra.mxu0 %v176
  %1095 = vmatpush.msra.mxu0 %v127
  %1096 = vmatpush.msra.mxu0 %v78
  %1097 = vmatpush.msra.mxu0 %v29
  %1098 = vmatmul.f32.gmra.mxu0 %v772
  %v1099 = vpop.f32.mrf.mxu0
  %v1100 = vadd.f32 %v680, %v1099
  %1101 = vdwg.mxu0
  %1102 = vmatpush.msra.mxu0 0.0
  %1103 = vmatpush.msra.mxu0 0.0
  %1104 = vmatpush.msra.mxu0 0.0
  %1105 = vmatpush.msra.mxu0 %v803
  %1106 = vmatpush.msra.mxu0 %v569
  %1107 = vmatpush.msra.mxu0 %v520
  %1108 = vmatpush.msra.mxu0 %v471
  %1109 = vmatpush.msra.mxu0 %v422
  %1110 = vmatpush.msra.mxu0 %v373
  %1111 = vmatpush.msra.mxu0 %v324
  %1112 = vmatpush.msra.mxu0 %v275
  %1113 = vmatpush.msra.mxu0 %v226
  %1114 = vmatpush.msra.mxu0 %v177
  %1115 = vmatpush.msra.mxu0 %v128
  %1116 = vmatpush.msra.mxu0 %v79
  %1117 = vmatpush.msra.mxu0 %v30
  %1118 = vmatmul.f32.gmra.mxu0 %v772
  %v1119 = vpop.f32.mrf.mxu0
  %v1120 = vadd.f32 %v681, %v1119
  %1121 = vdwg.mxu0
  %1122 = vmatpush.msra.mxu0 0.0
  %1123 = vmatpush.msra.mxu0 0.0
  %1124 = vmatpush.msra.mxu0 0.0
  %1125 = vmatpush.msra.mxu0 %v806
  %1126 = vmatpush.msra.mxu0 %v570
  %1127 = vmatpush.msra.mxu0 %v521
  %1128 = vmatpush.msra.mxu0 %v472
  %1129 = vmatpush.msra.mxu0 %v423
  %1130 = vmatpush.msra.mxu0 %v374
  %1131 = vmatpush.msra.mxu0 %v325
  %1132 = vmatpush.msra.mxu0 %v276
  %1133 = vmatpush.msra.mxu0 %v227
  %1134 = vmatpush.msra.mxu0 %v178
  %1135 = vmatpush.msra.mxu0 %v129
  %1136 = vmatpush.msra.mxu0 %v80
  %1137 = vmatpush.msra.mxu0 %v31
  %1138 = vmatmul.f32.gmra.mxu0 %v772
  %v1139 = vpop.f32.mrf.mxu0
  %v1140 = vadd.f32 %v682, %v1139
  %1141 = vdwg.mxu0
  %1142 = vmatpush.msra.mxu0 0.0
  %1143 = vmatpush.msra.mxu0 0.0
  %1144 = vmatpush.msra.mxu0 0.0
  %1145 = vmatpush.msra.mxu0 %v809
  %1146 = vmatpush.msra.mxu0 %v571
  %1147 = vmatpush.msra.mxu0 %v522
  %1148 = vmatpush.msra.mxu0 %v473
  %1149 = vmatpush.msra.mxu0 %v424
  %1150 = vmatpush.msra.mxu0 %v375
  %1151 = vmatpush.msra.mxu0 %v326
  %1152 = vmatpush.msra.mxu0 %v277
  %1153 = vmatpush.msra.mxu0 %v228
  %1154 = vmatpush.msra.mxu0 %v179
  %1155 = vmatpush.msra.mxu0 %v130
  %1156 = vmatpush.msra.mxu0 %v81
  %1157 = vmatpush.msra.mxu0 %v32
  %1158 = vmatmul.f32.gmra.mxu0 %v772
  %v1159 = vpop.f32.mrf.mxu0
  %v1160 = vadd.f32 %v683, %v1159
  %1161 = vdwg.mxu0
  %1162 = vmatpush.msra.mxu0 0.0
  %1163 = vmatpush.msra.mxu0 0.0
  %1164 = vmatpush.msra.mxu0 0.0
  %1165 = vmatpush.msra.mxu0 %v812
  %1166 = vmatpush.msra.mxu0 %v572
  %1167 = vmatpush.msra.mxu0 %v523
  %1168 = vmatpush.msra.mxu0 %v474
  %1169 = vmatpush.msra.mxu0 %v425
  %1170 = vmatpush.msra.mxu0 %v376
  %1171 = vmatpush.msra.mxu0 %v327
  %1172 = vmatpush.msra.mxu0 %v278
  %1173 = vmatpush.msra.mxu0 %v229
  %1174 = vmatpush.msra.mxu0 %v180
  %1175 = vmatpush.msra.mxu0 %v131
  %1176 = vmatpush.msra.mxu0 %v82
  %1177 = vmatpush.msra.mxu0 %v33
  %1178 = vmatmul.f32.gmra.mxu0 %v772
  %v1179 = vpop.f32.mrf.mxu0
  %v1180 = vadd.f32 %v684, %v1179
  %1181 = vdwg.mxu0
  %1182 = vmatpush.msra.mxu0 0.0
  %1183 = vmatpush.msra.mxu0 0.0
  %1184 = vmatpush.msra.mxu0 0.0
  %1185 = vmatpush.msra.mxu0 %v815
  %1186 = vmatpush.msra.mxu0 %v573
  %1187 = vmatpush.msra.mxu0 %v524
  %1188 = vmatpush.msra.mxu0 %v475
  %1189 = vmatpush.msra.mxu0 %v426
  %1190 = vmatpush.msra.mxu0 %v377
  %1191 = vmatpush.msra.mxu0 %v328
  %1192 = vmatpush.msra.mxu0 %v279
  %1193 = vmatpush.msra.mxu0 %v230
  %1194 = vmatpush.msra.mxu0 %v181
  %1195 = vmatpush.msra.mxu0 %v132
  %1196 = vmatpush.msra.mxu0 %v83
  %1197 = vmatpush.msra.mxu0 %v34
  %1198 = vmatmul.f32.gmra.mxu0 %v772
  %v1199 = vpop.f32.mrf.mxu0
  %v1200 = vadd.f32 %v685, %v1199
  %1201 = vdwg.mxu0
  %1202 = vmatpush.msra.mxu0 0.0
  %1203 = vmatpush.msra.mxu0 0.0
  %1204 = vmatpush.msra.mxu0 0.0
  %1205 = vmatpush.msra.mxu0 %v818
  %1206 = vmatpush.msra.mxu0 %v574
  %1207 = vmatpush.msra.mxu0 %v525
  %1208 = vmatpush.msra.mxu0 %v476
  %1209 = vmatpush.msra.mxu0 %v427
  %1210 = vmatpush.msra.mxu0 %v378
  %1211 = vmatpush.msra.mxu0 %v329
  %1212 = vmatpush.msra.mxu0 %v280
  %1213 = vmatpush.msra.mxu0 %v231
  %1214 = vmatpush.msra.mxu0 %v182
  %1215 = vmatpush.msra.mxu0 %v133
  %1216 = vmatpush.msra.mxu0 %v84
  %1217 = vmatpush.msra.mxu0 %v35
  %1218 = vmatmul.f32.gmra.mxu0 %v772
  %v1219 = vpop.f32.mrf.mxu0
  %v1220 = vadd.f32 %v686, %v1219
  %1221 = vdwg.mxu0
  %1222 = vmatpush.msra.mxu0 0.0
  %1223 = vmatpush.msra.mxu0 0.0
  %1224 = vmatpush.msra.mxu0 0.0
  %1225 = vmatpush.msra.mxu0 %v821
  %1226 = vmatpush.msra.mxu0 %v575
  %1227 = vmatpush.msra.mxu0 %v526
  %1228 = vmatpush.msra.mxu0 %v477
  %1229 = vmatpush.msra.mxu0 %v428
  %1230 = vmatpush.msra.mxu0 %v379
  %1231 = vmatpush.msra.mxu0 %v330
  %1232 = vmatpush.msra.mxu0 %v281
  %1233 = vmatpush.msra.mxu0 %v232
  %1234 = vmatpush.msra.mxu0 %v183
  %1235 = vmatpush.msra.mxu0 %v134
  %1236 = vmatpush.msra.mxu0 %v85
  %1237 = vmatpush.msra.mxu0 %v36
  %1238 = vmatmul.f32.gmra.mxu0 %v772
  %v1239 = vpop.f32.mrf.mxu0
  %v1240 = vadd.f32 %v687, %v1239
  %1241 = vdwg.mxu0
  %1242 = vmatpush.msra.mxu0 0.0
  %1243 = vmatpush.msra.mxu0 0.0
  %1244 = vmatpush.msra.mxu0 0.0
  %1245 = vmatpush.msra.mxu0 %v824
  %1246 = vmatpush.msra.mxu0 %v576
  %1247 = vmatpush.msra.mxu0 %v527
  %1248 = vmatpush.msra.mxu0 %v478
  %1249 = vmatpush.msra.mxu0 %v429
  %1250 = vmatpush.msra.mxu0 %v380
  %1251 = vmatpush.msra.mxu0 %v331
  %1252 = vmatpush.msra.mxu0 %v282
  %1253 = vmatpush.msra.mxu0 %v233
  %1254 = vmatpush.msra.mxu0 %v184
  %1255 = vmatpush.msra.mxu0 %v135
  %1256 = vmatpush.msra.mxu0 %v86
  %1257 = vmatpush.msra.mxu0 %v37
  %1258 = vmatmul.f32.gmra.mxu0 %v772
  %v1259 = vpop.f32.mrf.mxu0
  %v1260 = vadd.f32 %v688, %v1259
  %1261 = vdwg.mxu0
  %1262 = vmatpush.msra.mxu0 0.0
  %1263 = vmatpush.msra.mxu0 0.0
  %1264 = vmatpush.msra.mxu0 0.0
  %1265 = vmatpush.msra.mxu0 %v827
  %1266 = vmatpush.msra.mxu0 %v577
  %1267 = vmatpush.msra.mxu0 %v528
  %1268 = vmatpush.msra.mxu0 %v479
  %1269 = vmatpush.msra.mxu0 %v430
  %1270 = vmatpush.msra.mxu0 %v381
  %1271 = vmatpush.msra.mxu0 %v332
  %1272 = vmatpush.msra.mxu0 %v283
  %1273 = vmatpush.msra.mxu0 %v234
  %1274 = vmatpush.msra.mxu0 %v185
  %1275 = vmatpush.msra.mxu0 %v136
  %1276 = vmatpush.msra.mxu0 %v87
  %1277 = vmatpush.msra.mxu0 %v38
  %1278 = vmatmul.f32.gmra.mxu0 %v772
  %v1279 = vpop.f32.mrf.mxu0
  %v1280 = vadd.f32 %v689, %v1279
  %1281 = vdwg.mxu0
  %1282 = vmatpush.msra.mxu0 0.0
  %1283 = vmatpush.msra.mxu0 0.0
  %1284 = vmatpush.msra.mxu0 0.0
  %1285 = vmatpush.msra.mxu0 %v830
  %1286 = vmatpush.msra.mxu0 %v578
  %1287 = vmatpush.msra.mxu0 %v529
  %1288 = vmatpush.msra.mxu0 %v480
  %1289 = vmatpush.msra.mxu0 %v431
  %1290 = vmatpush.msra.mxu0 %v382
  %1291 = vmatpush.msra.mxu0 %v333
  %1292 = vmatpush.msra.mxu0 %v284
  %1293 = vmatpush.msra.mxu0 %v235
  %1294 = vmatpush.msra.mxu0 %v186
  %1295 = vmatpush.msra.mxu0 %v137
  %1296 = vmatpush.msra.mxu0 %v88
  %1297 = vmatpush.msra.mxu0 %v39
  %1298 = vmatmul.f32.gmra.mxu0 %v772
  %v1299 = vpop.f32.mrf.mxu0
  %v1300 = vadd.f32 %v690, %v1299
  %1301 = vdwg.mxu0
  %1302 = vmatpush.msra.mxu0 0.0
  %1303 = vmatpush.msra.mxu0 0.0
  %1304 = vmatpush.msra.mxu0 0.0
  %1305 = vmatpush.msra.mxu0 %v833
  %1306 = vmatpush.msra.mxu0 %v579
  %1307 = vmatpush.msra.mxu0 %v530
  %1308 = vmatpush.msra.mxu0 %v481
  %1309 = vmatpush.msra.mxu0 %v432
  %1310 = vmatpush.msra.mxu0 %v383
  %1311 = vmatpush.msra.mxu0 %v334
  %1312 = vmatpush.msra.mxu0 %v285
  %1313 = vmatpush.msra.mxu0 %v236
  %1314 = vmatpush.msra.mxu0 %v187
  %1315 = vmatpush.msra.mxu0 %v138
  %1316 = vmatpush.msra.mxu0 %v89
  %1317 = vmatpush.msra.mxu0 %v40
  %1318 = vmatmul.f32.gmra.mxu0 %v772
  %v1319 = vpop.f32.mrf.mxu0
  %v1320 = vadd.f32 %v691, %v1319
  %1321 = vdwg.mxu0
  %1322 = vmatpush.msra.mxu0 0.0
  %1323 = vmatpush.msra.mxu0 0.0
  %1324 = vmatpush.msra.mxu0 0.0
  %1325 = vmatpush.msra.mxu0 %v836
  %1326 = vmatpush.msra.mxu0 %v580
  %1327 = vmatpush.msra.mxu0 %v531
  %1328 = vmatpush.msra.mxu0 %v482
  %1329 = vmatpush.msra.mxu0 %v433
  %1330 = vmatpush.msra.mxu0 %v384
  %1331 = vmatpush.msra.mxu0 %v335
  %1332 = vmatpush.msra.mxu0 %v286
  %1333 = vmatpush.msra.mxu0 %v237
  %1334 = vmatpush.msra.mxu0 %v188
  %1335 = vmatpush.msra.mxu0 %v139
  %1336 = vmatpush.msra.mxu0 %v90
  %1337 = vmatpush.msra.mxu0 %v41
  %1338 = vmatmul.f32.gmra.mxu0 %v772
  %v1339 = vpop.f32.mrf.mxu0
  %v1340 = vadd.f32 %v692, %v1339
  %1341 = vdwg.mxu0
  %1342 = vmatpush.msra.mxu0 0.0
  %1343 = vmatpush.msra.mxu0 0.0
  %1344 = vmatpush.msra.mxu0 0.0
  %1345 = vmatpush.msra.mxu0 %v839
  %1346 = vmatpush.msra.mxu0 %v581
  %1347 = vmatpush.msra.mxu0 %v532
  %1348 = vmatpush.msra.mxu0 %v483
  %1349 = vmatpush.msra.mxu0 %v434
  %1350 = vmatpush.msra.mxu0 %v385
  %1351 = vmatpush.msra.mxu0 %v336
  %1352 = vmatpush.msra.mxu0 %v287
  %1353 = vmatpush.msra.mxu0 %v238
  %1354 = vmatpush.msra.mxu0 %v189
  %1355 = vmatpush.msra.mxu0 %v140
  %1356 = vmatpush.msra.mxu0 %v91
  %1357 = vmatpush.msra.mxu0 %v42
  %1358 = vmatmul.f32.gmra.mxu0 %v772
  %v1359 = vpop.f32.mrf.mxu0
  %v1360 = vadd.f32 %v693, %v1359
  %1361 = vdwg.mxu0
  %1362 = vmatpush.msra.mxu0 0.0
  %1363 = vmatpush.msra.mxu0 0.0
  %1364 = vmatpush.msra.mxu0 0.0
  %1365 = vmatpush.msra.mxu0 %v842
  %1366 = vmatpush.msra.mxu0 %v582
  %1367 = vmatpush.msra.mxu0 %v533
  %1368 = vmatpush.msra.mxu0 %v484
  %1369 = vmatpush.msra.mxu0 %v435
  %1370 = vmatpush.msra.mxu0 %v386
  %1371 = vmatpush.msra.mxu0 %v337
  %1372 = vmatpush.msra.mxu0 %v288
  %1373 = vmatpush.msra.mxu0 %v239
  %1374 = vmatpush.msra.mxu0 %v190
  %1375 = vmatpush.msra.mxu0 %v141
  %1376 = vmatpush.msra.mxu0 %v92
  %1377 = vmatpush.msra.mxu0 %v43
  %1378 = vmatmul.f32.gmra.mxu0 %v772
  %v1379 = vpop.f32.mrf.mxu0
  %v1380 = vadd.f32 %v694, %v1379
  %1381 = vdwg.mxu0
  %1382 = vmatpush.msra.mxu0 0.0
  %1383 = vmatpush.msra.mxu0 0.0
  %1384 = vmatpush.msra.mxu0 0.0
  %1385 = vmatpush.msra.mxu0 %v845
  %1386 = vmatpush.msra.mxu0 %v583
  %1387 = vmatpush.msra.mxu0 %v534
  %1388 = vmatpush.msra.mxu0 %v485
  %1389 = vmatpush.msra.mxu0 %v436
  %1390 = vmatpush.msra.mxu0 %v387
  %1391 = vmatpush.msra.mxu0 %v338
  %1392 = vmatpush.msra.mxu0 %v289
  %1393 = vmatpush.msra.mxu0 %v240
  %1394 = vmatpush.msra.mxu0 %v191
  %1395 = vmatpush.msra.mxu0 %v142
  %1396 = vmatpush.msra.mxu0 %v93
  %1397 = vmatpush.msra.mxu0 %v44
  %1398 = vmatmul.f32.gmra.mxu0 %v772
  %v1399 = vpop.f32.mrf.mxu0
  %v1400 = vadd.f32 %v695, %v1399
  %1401 = vdwg.mxu0
  %1402 = vmatpush.msra.mxu0 0.0
  %1403 = vmatpush.msra.mxu0 0.0
  %1404 = vmatpush.msra.mxu0 0.0
  %1405 = vmatpush.msra.mxu0 %v848
  %1406 = vmatpush.msra.mxu0 %v584
  %1407 = vmatpush.msra.mxu0 %v535
  %1408 = vmatpush.msra.mxu0 %v486
  %1409 = vmatpush.msra.mxu0 %v437
  %1410 = vmatpush.msra.mxu0 %v388
  %1411 = vmatpush.msra.mxu0 %v339
  %1412 = vmatpush.msra.mxu0 %v290
  %1413 = vmatpush.msra.mxu0 %v241
  %1414 = vmatpush.msra.mxu0 %v192
  %1415 = vmatpush.msra.mxu0 %v143
  %1416 = vmatpush.msra.mxu0 %v94
  %1417 = vmatpush.msra.mxu0 %v45
  %1418 = vmatmul.f32.gmra.mxu0 %v772
  %v1419 = vpop.f32.mrf.mxu0
  %v1420 = vadd.f32 %v696, %v1419
  %1421 = vdwg.mxu0
  %1422 = vmatpush.msra.mxu0 0.0
  %1423 = vmatpush.msra.mxu0 0.0
  %1424 = vmatpush.msra.mxu0 0.0
  %1425 = vmatpush.msra.mxu0 %v851
  %1426 = vmatpush.msra.mxu0 %v585
  %1427 = vmatpush.msra.mxu0 %v536
  %1428 = vmatpush.msra.mxu0 %v487
  %1429 = vmatpush.msra.mxu0 %v438
  %1430 = vmatpush.msra.mxu0 %v389
  %1431 = vmatpush.msra.mxu0 %v340
  %1432 = vmatpush.msra.mxu0 %v291
  %1433 = vmatpush.msra.mxu0 %v242
  %1434 = vmatpush.msra.mxu0 %v193
  %1435 = vmatpush.msra.mxu0 %v144
  %1436 = vmatpush.msra.mxu0 %v95
  %1437 = vmatpush.msra.mxu0 %v46
  %1438 = vmatmul.f32.gmra.mxu0 %v772
  %v1439 = vpop.f32.mrf.mxu0
  %v1440 = vadd.f32 %v697, %v1439
  %1441 = vdwg.mxu0
  %1442 = vmatpush.msra.mxu0 0.0
  %1443 = vmatpush.msra.mxu0 0.0
  %1444 = vmatpush.msra.mxu0 0.0
  %1445 = vmatpush.msra.mxu0 %v854
  %1446 = vmatpush.msra.mxu0 %v586
  %1447 = vmatpush.msra.mxu0 %v537
  %1448 = vmatpush.msra.mxu0 %v488
  %1449 = vmatpush.msra.mxu0 %v439
  %1450 = vmatpush.msra.mxu0 %v390
  %1451 = vmatpush.msra.mxu0 %v341
  %1452 = vmatpush.msra.mxu0 %v292
  %1453 = vmatpush.msra.mxu0 %v243
  %1454 = vmatpush.msra.mxu0 %v194
  %1455 = vmatpush.msra.mxu0 %v145
  %1456 = vmatpush.msra.mxu0 %v96
  %1457 = vmatpush.msra.mxu0 %v47
  %1458 = vmatmul.f32.gmra.mxu0 %v772
  %v1459 = vpop.f32.mrf.mxu0
  %v1460 = vadd.f32 %v698, %v1459
  %1461 = vdwg.mxu0
  %1462 = vmatpush.msra.mxu0 0.0
  %1463 = vmatpush.msra.mxu0 0.0
  %1464 = vmatpush.msra.mxu0 0.0
  %1465 = vmatpush.msra.mxu0 %v857
  %1466 = vmatpush.msra.mxu0 %v587
  %1467 = vmatpush.msra.mxu0 %v538
  %1468 = vmatpush.msra.mxu0 %v489
  %1469 = vmatpush.msra.mxu0 %v440
  %1470 = vmatpush.msra.mxu0 %v391
  %1471 = vmatpush.msra.mxu0 %v342
  %1472 = vmatpush.msra.mxu0 %v293
  %1473 = vmatpush.msra.mxu0 %v244
  %1474 = vmatpush.msra.mxu0 %v195
  %1475 = vmatpush.msra.mxu0 %v146
  %1476 = vmatpush.msra.mxu0 %v97
  %1477 = vmatpush.msra.mxu0 %v48
  %1478 = vmatmul.f32.gmra.mxu0 %v772
  %v1479 = vpop.f32.mrf.mxu0
  %v1480 = vadd.f32 %v699, %v1479
  %1481 = vdwg.mxu0
  %1482 = vmatpush.msra.mxu0 0.0
  %1483 = vmatpush.msra.mxu0 0.0
  %1484 = vmatpush.msra.mxu0 0.0
  %1485 = vmatpush.msra.mxu0 %v860
  %1486 = vmatpush.msra.mxu0 %v588
  %1487 = vmatpush.msra.mxu0 %v539
  %1488 = vmatpush.msra.mxu0 %v490
  %1489 = vmatpush.msra.mxu0 %v441
  %1490 = vmatpush.msra.mxu0 %v392
  %1491 = vmatpush.msra.mxu0 %v343
  %1492 = vmatpush.msra.mxu0 %v294
  %1493 = vmatpush.msra.mxu0 %v245
  %1494 = vmatpush.msra.mxu0 %v196
  %1495 = vmatpush.msra.mxu0 %v147
  %1496 = vmatpush.msra.mxu0 %v98
  %1497 = vmatpush.msra.mxu0 %v49
  %1498 = vmatmul.f32.gmra.mxu0 %v772
  %v1499 = vpop.f32.mrf.mxu0
  %v1500 = vadd.f32 %v700, %v1499
  %1501 = vdwg.mxu0
  %1502 = vmatpush.msra.mxu0 0.0
  %1503 = vmatpush.msra.mxu0 0.0
  %1504 = vmatpush.msra.mxu0 0.0
  %1505 = vmatpush.msra.mxu0 %v863
  %1506 = vmatpush.msra.mxu0 %v589
  %1507 = vmatpush.msra.mxu0 %v540
  %1508 = vmatpush.msra.mxu0 %v491
  %1509 = vmatpush.msra.mxu0 %v442
  %1510 = vmatpush.msra.mxu0 %v393
  %1511 = vmatpush.msra.mxu0 %v344
  %1512 = vmatpush.msra.mxu0 %v295
  %1513 = vmatpush.msra.mxu0 %v246
  %1514 = vmatpush.msra.mxu0 %v197
  %1515 = vmatpush.msra.mxu0 %v148
  %1516 = vmatpush.msra.mxu0 %v99
  %1517 = vmatpush.msra.mxu0 %v50
  %1518 = vmatmul.f32.gmra.mxu0 %v772
  %v1519 = vpop.f32.mrf.mxu0
  %v1520 = vadd.f32 %v701, %v1519
  %1521 = vdwg.mxu0
  %1522 = vmatpush.msra.mxu0 0.0
  %1523 = vmatpush.msra.mxu0 0.0
  %1524 = vmatpush.msra.mxu0 0.0
  %1525 = vmatpush.msra.mxu0 %v866
  %1526 = vmatpush.msra.mxu0 %v590
  %1527 = vmatpush.msra.mxu0 %v541
  %1528 = vmatpush.msra.mxu0 %v492
  %1529 = vmatpush.msra.mxu0 %v443
  %1530 = vmatpush.msra.mxu0 %v394
  %1531 = vmatpush.msra.mxu0 %v345
  %1532 = vmatpush.msra.mxu0 %v296
  %1533 = vmatpush.msra.mxu0 %v247
  %1534 = vmatpush.msra.mxu0 %v198
  %1535 = vmatpush.msra.mxu0 %v149
  %1536 = vmatpush.msra.mxu0 %v100
  %1537 = vmatpush.msra.mxu0 %v51
  %1538 = vmatmul.f32.gmra.mxu0 %v772
  %v1539 = vpop.f32.mrf.mxu0
  %v1540 = vadd.f32 %v702, %v1539
  %1541 = vdwg.mxu0
  %1542 = vmatpush.msra.mxu0 0.0
  %1543 = vmatpush.msra.mxu0 0.0
  %1544 = vmatpush.msra.mxu0 0.0
  %1545 = vmatpush.msra.mxu0 %v869
  %1546 = vmatpush.msra.mxu0 %v591
  %1547 = vmatpush.msra.mxu0 %v542
  %1548 = vmatpush.msra.mxu0 %v493
  %1549 = vmatpush.msra.mxu0 %v444
  %1550 = vmatpush.msra.mxu0 %v395
  %1551 = vmatpush.msra.mxu0 %v346
  %1552 = vmatpush.msra.mxu0 %v297
  %1553 = vmatpush.msra.mxu0 %v248
  %1554 = vmatpush.msra.mxu0 %v199
  %1555 = vmatpush.msra.mxu0 %v150
  %1556 = vmatpush.msra.mxu0 %v101
  %1557 = vmatpush.msra.mxu0 %v52
  %1558 = vmatmul.f32.gmra.mxu0 %v772
  %v1559 = vpop.f32.mrf.mxu0
  %v1560 = vadd.f32 %v703, %v1559
  %1561 = vdwg.mxu0
  %1562 = vmatpush.msra.mxu0 0.0
  %1563 = vmatpush.msra.mxu0 0.0
  %1564 = vmatpush.msra.mxu0 0.0
  %1565 = vmatpush.msra.mxu0 %v872
  %1566 = vmatpush.msra.mxu0 %v592
  %1567 = vmatpush.msra.mxu0 %v543
  %1568 = vmatpush.msra.mxu0 %v494
  %1569 = vmatpush.msra.mxu0 %v445
  %1570 = vmatpush.msra.mxu0 %v396
  %1571 = vmatpush.msra.mxu0 %v347
  %1572 = vmatpush.msra.mxu0 %v298
  %1573 = vmatpush.msra.mxu0 %v249
  %1574 = vmatpush.msra.mxu0 %v200
  %1575 = vmatpush.msra.mxu0 %v151
  %1576 = vmatpush.msra.mxu0 %v102
  %1577 = vmatpush.msra.mxu0 %v53
  %1578 = vmatmul.f32.gmra.mxu0 %v772
  %v1579 = vpop.f32.mrf.mxu0
  %v1580 = vadd.f32 %v704, %v1579
  %1581 = vdwg.mxu0
  %1582 = vmatpush.msra.mxu0 0.0
  %1583 = vmatpush.msra.mxu0 0.0
  %1584 = vmatpush.msra.mxu0 0.0
  %1585 = vmatpush.msra.mxu0 %v875
  %1586 = vmatpush.msra.mxu0 %v593
  %1587 = vmatpush.msra.mxu0 %v544
  %1588 = vmatpush.msra.mxu0 %v495
  %1589 = vmatpush.msra.mxu0 %v446
  %1590 = vmatpush.msra.mxu0 %v397
  %1591 = vmatpush.msra.mxu0 %v348
  %1592 = vmatpush.msra.mxu0 %v299
  %1593 = vmatpush.msra.mxu0 %v250
  %1594 = vmatpush.msra.mxu0 %v201
  %1595 = vmatpush.msra.mxu0 %v152
  %1596 = vmatpush.msra.mxu0 %v103
  %1597 = vmatpush.msra.mxu0 %v54
  %1598 = vmatmul.f32.gmra.mxu0 %v772
  %v1599 = vpop.f32.mrf.mxu0
  %v1600 = vadd.f32 %v705, %v1599
  %1601 = vdwg.mxu0
  %1602 = vmatpush.msra.mxu0 0.0
  %1603 = vmatpush.msra.mxu0 0.0
  %1604 = vmatpush.msra.mxu0 0.0
  %1605 = vmatpush.msra.mxu0 %v878
  %1606 = vmatpush.msra.mxu0 %v594
  %1607 = vmatpush.msra.mxu0 %v545
  %1608 = vmatpush.msra.mxu0 %v496
  %1609 = vmatpush.msra.mxu0 %v447
  %1610 = vmatpush.msra.mxu0 %v398
  %1611 = vmatpush.msra.mxu0 %v349
  %1612 = vmatpush.msra.mxu0 %v300
  %1613 = vmatpush.msra.mxu0 %v251
  %1614 = vmatpush.msra.mxu0 %v202
  %1615 = vmatpush.msra.mxu0 %v153
  %1616 = vmatpush.msra.mxu0 %v104
  %1617 = vmatpush.msra.mxu0 %v55
  %1618 = vmatmul.f32.gmra.mxu0 %v772
  %v1619 = vpop.f32.mrf.mxu0
  %v1620 = vadd.f32 %v706, %v1619
  %1621 = vdwg.mxu0
  %1622 = vmatpush.msra.mxu0 0.0
  %1623 = vmatpush.msra.mxu0 0.0
  %1624 = vmatpush.msra.mxu0 0.0
  %1625 = vmatpush.msra.mxu0 %v881
  %1626 = vmatpush.msra.mxu0 %v595
  %1627 = vmatpush.msra.mxu0 %v546
  %1628 = vmatpush.msra.mxu0 %v497
  %1629 = vmatpush.msra.mxu0 %v448
  %1630 = vmatpush.msra.mxu0 %v399
  %1631 = vmatpush.msra.mxu0 %v350
  %1632 = vmatpush.msra.mxu0 %v301
  %1633 = vmatpush.msra.mxu0 %v252
  %1634 = vmatpush.msra.mxu0 %v203
  %1635 = vmatpush.msra.mxu0 %v154
  %1636 = vmatpush.msra.mxu0 %v105
  %1637 = vmatpush.msra.mxu0 %v56
  %1638 = vmatmul.f32.gmra.mxu0 %v772
  %v1639 = vpop.f32.mrf.mxu0
  %v1640 = vadd.f32 %v707, %v1639
  %1641 = vdwg.mxu0
  %1642 = vmatpush.msra.mxu0 0.0
  %1643 = vmatpush.msra.mxu0 0.0
  %1644 = vmatpush.msra.mxu0 0.0
  %1645 = vmatpush.msra.mxu0 %v884
  %1646 = vmatpush.msra.mxu0 %v596
  %1647 = vmatpush.msra.mxu0 %v547
  %1648 = vmatpush.msra.mxu0 %v498
  %1649 = vmatpush.msra.mxu0 %v449
  %1650 = vmatpush.msra.mxu0 %v400
  %1651 = vmatpush.msra.mxu0 %v351
  %1652 = vmatpush.msra.mxu0 %v302
  %1653 = vmatpush.msra.mxu0 %v253
  %1654 = vmatpush.msra.mxu0 %v204
  %1655 = vmatpush.msra.mxu0 %v155
  %1656 = vmatpush.msra.mxu0 %v106
  %1657 = vmatpush.msra.mxu0 %v57
  %1658 = vmatmul.f32.gmra.mxu0 %v772
  %v1659 = vpop.f32.mrf.mxu0
  %v1660 = vadd.f32 %v708, %v1659
  %1661 = vdwg.mxu0
  %1662 = vmatpush.msra.mxu0 0.0
  %1663 = vmatpush.msra.mxu0 0.0
  %1664 = vmatpush.msra.mxu0 0.0
  %1665 = vmatpush.msra.mxu0 %v887
  %1666 = vmatpush.msra.mxu0 %v597
  %1667 = vmatpush.msra.mxu0 %v548
  %1668 = vmatpush.msra.mxu0 %v499
  %1669 = vmatpush.msra.mxu0 %v450
  %1670 = vmatpush.msra.mxu0 %v401
  %1671 = vmatpush.msra.mxu0 %v352
  %1672 = vmatpush.msra.mxu0 %v303
  %1673 = vmatpush.msra.mxu0 %v254
  %1674 = vmatpush.msra.mxu0 %v205
  %1675 = vmatpush.msra.mxu0 %v156
  %1676 = vmatpush.msra.mxu0 %v107
  %1677 = vmatpush.msra.mxu0 %v58
  %1678 = vmatmul.f32.gmra.mxu0 %v772
  %v1679 = vpop.f32.mrf.mxu0
  %v1680 = vadd.f32 %v709, %v1679
  %1681 = vdwg.mxu0
  %1682 = vmatpush.msra.mxu0 0.0
  %1683 = vmatpush.msra.mxu0 0.0
  %1684 = vmatpush.msra.mxu0 0.0
  %1685 = vmatpush.msra.mxu0 %v890
  %1686 = vmatpush.msra.mxu0 %v598
  %1687 = vmatpush.msra.mxu0 %v549
  %1688 = vmatpush.msra.mxu0 %v500
  %1689 = vmatpush.msra.mxu0 %v451
  %1690 = vmatpush.msra.mxu0 %v402
  %1691 = vmatpush.msra.mxu0 %v353
  %1692 = vmatpush.msra.mxu0 %v304
  %1693 = vmatpush.msra.mxu0 %v255
  %1694 = vmatpush.msra.mxu0 %v206
  %1695 = vmatpush.msra.mxu0 %v157
  %1696 = vmatpush.msra.mxu0 %v108
  %1697 = vmatpush.msra.mxu0 %v59
  %1698 = vmatmul.f32.gmra.mxu0 %v772
  %v1699 = vpop.f32.mrf.mxu0
  %v1700 = vadd.f32 %v710, %v1699
  %1701 = vdwg.mxu0
  %1702 = vmatpush.msra.mxu0 0.0
  %1703 = vmatpush.msra.mxu0 0.0
  %1704 = vmatpush.msra.mxu0 0.0
  %1705 = vmatpush.msra.mxu0 %v893
  %1706 = vmatpush.msra.mxu0 %v599
  %1707 = vmatpush.msra.mxu0 %v550
  %1708 = vmatpush.msra.mxu0 %v501
  %1709 = vmatpush.msra.mxu0 %v452
  %1710 = vmatpush.msra.mxu0 %v403
  %1711 = vmatpush.msra.mxu0 %v354
  %1712 = vmatpush.msra.mxu0 %v305
  %1713 = vmatpush.msra.mxu0 %v256
  %1714 = vmatpush.msra.mxu0 %v207
  %1715 = vmatpush.msra.mxu0 %v158
  %1716 = vmatpush.msra.mxu0 %v109
  %1717 = vmatpush.msra.mxu0 %v60
  %1718 = vmatmul.f32.gmra.mxu0 %v772
  %v1719 = vpop.f32.mrf.mxu0
  %v1720 = vadd.f32 %v711, %v1719
  %1721 = vdwg.mxu0
  %1722 = vmatpush.msra.mxu0 0.0
  %1723 = vmatpush.msra.mxu0 0.0
  %1724 = vmatpush.msra.mxu0 0.0
  %1725 = vmatpush.msra.mxu0 %v896
  %1726 = vmatpush.msra.mxu0 %v600
  %1727 = vmatpush.msra.mxu0 %v551
  %1728 = vmatpush.msra.mxu0 %v502
  %1729 = vmatpush.msra.mxu0 %v453
  %1730 = vmatpush.msra.mxu0 %v404
  %1731 = vmatpush.msra.mxu0 %v355
  %1732 = vmatpush.msra.mxu0 %v306
  %1733 = vmatpush.msra.mxu0 %v257
  %1734 = vmatpush.msra.mxu0 %v208
  %1735 = vmatpush.msra.mxu0 %v159
  %1736 = vmatpush.msra.mxu0 %v110
  %1737 = vmatpush.msra.mxu0 %v61
  %1738 = vmatmul.f32.gmra.mxu0 %v772
  %v1739 = vpop.f32.mrf.mxu0
  %v1740 = vadd.f32 %v712, %v1739
  %1741 = vdwg.mxu0
  %1742 = vmatpush.msra.mxu0 0.0
  %1743 = vmatpush.msra.mxu0 0.0
  %1744 = vmatpush.msra.mxu0 0.0
  %1745 = vmatpush.msra.mxu0 %v899
  %1746 = vmatpush.msra.mxu0 %v601
  %1747 = vmatpush.msra.mxu0 %v552
  %1748 = vmatpush.msra.mxu0 %v503
  %1749 = vmatpush.msra.mxu0 %v454
  %1750 = vmatpush.msra.mxu0 %v405
  %1751 = vmatpush.msra.mxu0 %v356
  %1752 = vmatpush.msra.mxu0 %v307
  %1753 = vmatpush.msra.mxu0 %v258
  %1754 = vmatpush.msra.mxu0 %v209
  %1755 = vmatpush.msra.mxu0 %v160
  %1756 = vmatpush.msra.mxu0 %v111
  %1757 = vmatpush.msra.mxu0 %v62
  %1758 = vmatmul.f32.gmra.mxu0 %v772
  %v1759 = vpop.f32.mrf.mxu0
  %v1760 = vadd.f32 %v713, %v1759
  %1761 = vdwg.mxu0
  %1762 = vmatpush.msra.mxu0 0.0
  %1763 = vmatpush.msra.mxu0 0.0
  %1764 = vmatpush.msra.mxu0 0.0
  %1765 = vmatpush.msra.mxu0 %v902
  %1766 = vmatpush.msra.mxu0 %v602
  %1767 = vmatpush.msra.mxu0 %v553
  %1768 = vmatpush.msra.mxu0 %v504
  %1769 = vmatpush.msra.mxu0 %v455
  %1770 = vmatpush.msra.mxu0 %v406
  %1771 = vmatpush.msra.mxu0 %v357
  %1772 = vmatpush.msra.mxu0 %v308
  %1773 = vmatpush.msra.mxu0 %v259
  %1774 = vmatpush.msra.mxu0 %v210
  %1775 = vmatpush.msra.mxu0 %v161
  %1776 = vmatpush.msra.mxu0 %v112
  %1777 = vmatpush.msra.mxu0 %v63
  %1778 = vmatmul.f32.gmra.mxu0 %v772
  %v1779 = vpop.f32.mrf.mxu0
  %v1780 = vadd.f32 %v714, %v1779
  %1781 = vdwg.mxu0
  %1782 = vmatpush.msra.mxu0 0.0
  %1783 = vmatpush.msra.mxu0 0.0
  %1784 = vmatpush.msra.mxu0 0.0
  %1785 = vmatpush.msra.mxu0 %v905
  %1786 = vmatpush.msra.mxu0 %v603
  %1787 = vmatpush.msra.mxu0 %v554
  %1788 = vmatpush.msra.mxu0 %v505
  %1789 = vmatpush.msra.mxu0 %v456
  %1790 = vmatpush.msra.mxu0 %v407
  %1791 = vmatpush.msra.mxu0 %v358
  %1792 = vmatpush.msra.mxu0 %v309
  %1793 = vmatpush.msra.mxu0 %v260
  %1794 = vmatpush.msra.mxu0 %v211
  %1795 = vmatpush.msra.mxu0 %v162
  %1796 = vmatpush.msra.mxu0 %v113
  %1797 = vmatpush.msra.mxu0 %v64
  %1798 = vmatmul.f32.gmra.mxu0 %v772
  %v1799 = vpop.f32.mrf.mxu0
  %v1800 = vadd.f32 %v715, %v1799
  %1801 = vdwg.mxu0
  %1802 = vmatpush.msra.mxu0 0.0
  %1803 = vmatpush.msra.mxu0 0.0
  %1804 = vmatpush.msra.mxu0 0.0
  %1805 = vmatpush.msra.mxu0 %v908
  %1806 = vmatpush.msra.mxu0 %v604
  %1807 = vmatpush.msra.mxu0 %v555
  %1808 = vmatpush.msra.mxu0 %v506
  %1809 = vmatpush.msra.mxu0 %v457
  %1810 = vmatpush.msra.mxu0 %v408
  %1811 = vmatpush.msra.mxu0 %v359
  %1812 = vmatpush.msra.mxu0 %v310
  %1813 = vmatpush.msra.mxu0 %v261
  %1814 = vmatpush.msra.mxu0 %v212
  %1815 = vmatpush.msra.mxu0 %v163
  %1816 = vmatpush.msra.mxu0 %v114
  %1817 = vmatpush.msra.mxu0 %v65
  %1818 = vmatmul.f32.gmra.mxu0 %v772
  %v1819 = vpop.f32.mrf.mxu0
  %v1820 = vadd.f32 %v716, %v1819
  %1821 = vdwg.mxu0
  %1822 = vmatpush.msra.mxu0 0.0
  %1823 = vmatpush.msra.mxu0 0.0
  %1824 = vmatpush.msra.mxu0 0.0
  %1825 = vmatpush.msra.mxu0 %v911
  %1826 = vmatpush.msra.mxu0 %v605
  %1827 = vmatpush.msra.mxu0 %v556
  %1828 = vmatpush.msra.mxu0 %v507
  %1829 = vmatpush.msra.mxu0 %v458
  %1830 = vmatpush.msra.mxu0 %v409
  %1831 = vmatpush.msra.mxu0 %v360
  %1832 = vmatpush.msra.mxu0 %v311
  %1833 = vmatpush.msra.mxu0 %v262
  %1834 = vmatpush.msra.mxu0 %v213
  %1835 = vmatpush.msra.mxu0 %v164
  %1836 = vmatpush.msra.mxu0 %v115
  %1837 = vmatpush.msra.mxu0 %v66
  %1838 = vmatmul.f32.gmra.mxu0 %v772
  %v1839 = vpop.f32.mrf.mxu0
  %v1840 = vadd.f32 %v717, %v1839
  %1841 = vdwg.mxu0
  %1842 = vmatpush.msra.mxu0 0.0
  %1843 = vmatpush.msra.mxu0 0.0
  %1844 = vmatpush.msra.mxu0 0.0
  %1845 = vmatpush.msra.mxu0 %v914
  %1846 = vmatpush.msra.mxu0 %v606
  %1847 = vmatpush.msra.mxu0 %v557
  %1848 = vmatpush.msra.mxu0 %v508
  %1849 = vmatpush.msra.mxu0 %v459
  %1850 = vmatpush.msra.mxu0 %v410
  %1851 = vmatpush.msra.mxu0 %v361
  %1852 = vmatpush.msra.mxu0 %v312
  %1853 = vmatpush.msra.mxu0 %v263
  %1854 = vmatpush.msra.mxu0 %v214
  %1855 = vmatpush.msra.mxu0 %v165
  %1856 = vmatpush.msra.mxu0 %v116
  %1857 = vmatpush.msra.mxu0 %v67
  %1858 = vmatmul.f32.gmra.mxu0 %v772
  %v1859 = vpop.f32.mrf.mxu0
  %v1860 = vadd.f32 %v718, %v1859
  %1861 = vdwg.mxu0
  %1862 = vmatpush.msra.mxu0 0.0
  %1863 = vmatpush.msra.mxu0 0.0
  %1864 = vmatpush.msra.mxu0 0.0
  %1865 = vmatpush.msra.mxu0 %v917
  %1866 = vmatpush.msra.mxu0 %v607
  %1867 = vmatpush.msra.mxu0 %v558
  %1868 = vmatpush.msra.mxu0 %v509
  %1869 = vmatpush.msra.mxu0 %v460
  %1870 = vmatpush.msra.mxu0 %v411
  %1871 = vmatpush.msra.mxu0 %v362
  %1872 = vmatpush.msra.mxu0 %v313
  %1873 = vmatpush.msra.mxu0 %v264
  %1874 = vmatpush.msra.mxu0 %v215
  %1875 = vmatpush.msra.mxu0 %v166
  %1876 = vmatpush.msra.mxu0 %v117
  %1877 = vmatpush.msra.mxu0 %v68
  %1878 = vmatmul.f32.gmra.mxu0 %v772
  %v1879 = vpop.f32.mrf.mxu0
  %v1880 = vadd.f32 %v719, %v1879
  %1881 = vdwg.mxu0
  %1882 = vmatpush.msra.mxu0 0.0
  %1883 = vmatpush.msra.mxu0 0.0
  %1884 = vmatpush.msra.mxu0 0.0
  %1885 = vmatpush.msra.mxu0 %v920
  %1886 = vmatpush.msra.mxu0 %v608
  %1887 = vmatpush.msra.mxu0 %v559
  %1888 = vmatpush.msra.mxu0 %v510
  %1889 = vmatpush.msra.mxu0 %v461
  %1890 = vmatpush.msra.mxu0 %v412
  %1891 = vmatpush.msra.mxu0 %v363
  %1892 = vmatpush.msra.mxu0 %v314
  %1893 = vmatpush.msra.mxu0 %v265
  %1894 = vmatpush.msra.mxu0 %v216
  %1895 = vmatpush.msra.mxu0 %v167
  %1896 = vmatpush.msra.mxu0 %v118
  %1897 = vmatpush.msra.mxu0 %v69
  %1898 = vmatmul.f32.gmra.mxu0 %v772
  %v1899 = vpop.f32.mrf.mxu0
  %v1900 = vadd.f32 %v720, %v1899
  %1901 = vdwg.mxu0
  %v1902 = vlaneseq
  %v1903 = vshrl.u32 %v1902, 7
  %vm1904 = vcmp.lt.s32.totalorder %v1903, 2
  %v1905 = vsel %vm1904, 1, 0
  %vm1906 = vcmp.eq.s32.totalorder %v1905, 1
  %v1907 = vsel %vm1906, %v940, 0.0
  %v1908 = vsel %vm1906, %v960, 0.0
  %v1909 = vsel %vm1906, %v980, 0.0
  %v1910 = vsel %vm1906, %v1000, 0.0
  %v1911 = vsel %vm1906, %v1020, 0.0
  %v1912 = vsel %vm1906, %v1040, 0.0
  %v1913 = vsel %vm1906, %v1060, 0.0
  %v1914 = vsel %vm1906, %v1080, 0.0
  %v1915 = vsel %vm1906, %v1100, 0.0
  %v1916 = vsel %vm1906, %v1120, 0.0
  %v1917 = vsel %vm1906, %v1140, 0.0
  %v1918 = vsel %vm1906, %v1160, 0.0
  %v1919 = vsel %vm1906, %v1180, 0.0
  %v1920 = vsel %vm1906, %v1200, 0.0
  %v1921 = vsel %vm1906, %v1220, 0.0
  %v1922 = vsel %vm1906, %v1240, 0.0
  %v1923 = vsel %vm1906, %v1260, 0.0
  %v1924 = vsel %vm1906, %v1280, 0.0
  %v1925 = vsel %vm1906, %v1300, 0.0
  %v1926 = vsel %vm1906, %v1320, 0.0
  %v1927 = vsel %vm1906, %v1340, 0.0
  %v1928 = vsel %vm1906, %v1360, 0.0
  %v1929 = vsel %vm1906, %v1380, 0.0
  %v1930 = vsel %vm1906, %v1400, 0.0
  %v1931 = vsel %vm1906, %v1420, 0.0
  %v1932 = vsel %vm1906, %v1440, 0.0
  %v1933 = vsel %vm1906, %v1460, 0.0
  %v1934 = vsel %vm1906, %v1480, 0.0
  %v1935 = vsel %vm1906, %v1500, 0.0
  %v1936 = vsel %vm1906, %v1520, 0.0
  %v1937 = vsel %vm1906, %v1540, 0.0
  %v1938 = vsel %vm1906, %v1560, 0.0
  %v1939 = vsel %vm1906, %v1580, 0.0
  %v1940 = vsel %vm1906, %v1600, 0.0
  %v1941 = vsel %vm1906, %v1620, 0.0
  %v1942 = vsel %vm1906, %v1640, 0.0
  %v1943 = vsel %vm1906, %v1660, 0.0
  %v1944 = vsel %vm1906, %v1680, 0.0
  %v1945 = vsel %vm1906, %v1700, 0.0
  %v1946 = vsel %vm1906, %v1720, 0.0
  %v1947 = vsel %vm1906, %v1740, 0.0
  %v1948 = vsel %vm1906, %v1760, 0.0
  %v1949 = vsel %vm1906, %v1780, 0.0
  %v1950 = vsel %vm1906, %v1800, 0.0
  %v1951 = vsel %vm1906, %v1820, 0.0
  %v1952 = vsel %vm1906, %v1840, 0.0
  %v1953 = vsel %vm1906, %v1860, 0.0
  %v1954 = vsel %vm1906, %v1880, 0.0
  %v1955 = vsel %vm1906, %v1900, 0.0
  %v1956 = vadd.f32 %v1907, 0.0
  %v1957 = vmul.f32 %v1907, %v1907
  %v1958 = vadd.f32 %v1957, 0.0
  %v1959 = vadd.f32 %v1956, %v1908
  %v1960 = vmul.f32 %v1908, %v1908
  %v1961 = vadd.f32 %v1958, %v1960
  %v1962 = vadd.f32 %v1959, %v1909
  %v1963 = vmul.f32 %v1909, %v1909
  %v1964 = vadd.f32 %v1961, %v1963
  %v1965 = vadd.f32 %v1962, %v1910
  %v1966 = vmul.f32 %v1910, %v1910
  %v1967 = vadd.f32 %v1964, %v1966
  %v1968 = vadd.f32 %v1965, %v1911
  %v1969 = vmul.f32 %v1911, %v1911
  %v1970 = vadd.f32 %v1967, %v1969
  %v1971 = vadd.f32 %v1968, %v1912
  %v1972 = vmul.f32 %v1912, %v1912
  %v1973 = vadd.f32 %v1970, %v1972
  %v1974 = vadd.f32 %v1971, %v1913
  %v1975 = vmul.f32 %v1913, %v1913
  %v1976 = vadd.f32 %v1973, %v1975
  %v1977 = vadd.f32 %v1974, %v1914
  %v1978 = vmul.f32 %v1914, %v1914
  %v1979 = vadd.f32 %v1976, %v1978
  %v1980 = vadd.f32 %v1977, %v1915
  %v1981 = vmul.f32 %v1915, %v1915
  %v1982 = vadd.f32 %v1979, %v1981
  %v1983 = vadd.f32 %v1980, %v1916
  %v1984 = vmul.f32 %v1916, %v1916
  %v1985 = vadd.f32 %v1982, %v1984
  %v1986 = vadd.f32 %v1983, %v1917
  %v1987 = vmul.f32 %v1917, %v1917
  %v1988 = vadd.f32 %v1985, %v1987
  %v1989 = vadd.f32 %v1986, %v1918
  %v1990 = vmul.f32 %v1918, %v1918
  %v1991 = vadd.f32 %v1988, %v1990
  %v1992 = vadd.f32 %v1989, %v1919
  %v1993 = vmul.f32 %v1919, %v1919
  %v1994 = vadd.f32 %v1991, %v1993
  %v1995 = vadd.f32 %v1992, %v1920
  %v1996 = vmul.f32 %v1920, %v1920
  %v1997 = vadd.f32 %v1994, %v1996
  %v1998 = vadd.f32 %v1995, %v1921
  %v1999 = vmul.f32 %v1921, %v1921
  %v2000 = vadd.f32 %v1997, %v1999
  %v2001 = vadd.f32 %v1998, %v1922
  %v2002 = vmul.f32 %v1922, %v1922
  %v2003 = vadd.f32 %v2000, %v2002
  %v2004 = vadd.f32 %v2001, %v1923
  %v2005 = vmul.f32 %v1923, %v1923
  %v2006 = vadd.f32 %v2003, %v2005
  %v2007 = vadd.f32 %v2004, %v1924
  %v2008 = vmul.f32 %v1924, %v1924
  %v2009 = vadd.f32 %v2006, %v2008
  %v2010 = vadd.f32 %v2007, %v1925
  %v2011 = vmul.f32 %v1925, %v1925
  %v2012 = vadd.f32 %v2009, %v2011
  %v2013 = vadd.f32 %v2010, %v1926
  %v2014 = vmul.f32 %v1926, %v1926
  %v2015 = vadd.f32 %v2012, %v2014
  %v2016 = vadd.f32 %v2013, %v1927
  %v2017 = vmul.f32 %v1927, %v1927
  %v2018 = vadd.f32 %v2015, %v2017
  %v2019 = vadd.f32 %v2016, %v1928
  %v2020 = vmul.f32 %v1928, %v1928
  %v2021 = vadd.f32 %v2018, %v2020
  %v2022 = vadd.f32 %v2019, %v1929
  %v2023 = vmul.f32 %v1929, %v1929
  %v2024 = vadd.f32 %v2021, %v2023
  %v2025 = vadd.f32 %v2022, %v1930
  %v2026 = vmul.f32 %v1930, %v1930
  %v2027 = vadd.f32 %v2024, %v2026
  %v2028 = vadd.f32 %v2025, %v1931
  %v2029 = vmul.f32 %v1931, %v1931
  %v2030 = vadd.f32 %v2027, %v2029
  %v2031 = vadd.f32 %v2028, %v1932
  %v2032 = vmul.f32 %v1932, %v1932
  %v2033 = vadd.f32 %v2030, %v2032
  %v2034 = vadd.f32 %v2031, %v1933
  %v2035 = vmul.f32 %v1933, %v1933
  %v2036 = vadd.f32 %v2033, %v2035
  %v2037 = vadd.f32 %v2034, %v1934
  %v2038 = vmul.f32 %v1934, %v1934
  %v2039 = vadd.f32 %v2036, %v2038
  %v2040 = vadd.f32 %v2037, %v1935
  %v2041 = vmul.f32 %v1935, %v1935
  %v2042 = vadd.f32 %v2039, %v2041
  %v2043 = vadd.f32 %v2040, %v1936
  %v2044 = vmul.f32 %v1936, %v1936
  %v2045 = vadd.f32 %v2042, %v2044
  %v2046 = vadd.f32 %v2043, %v1937
  %v2047 = vmul.f32 %v1937, %v1937
  %v2048 = vadd.f32 %v2045, %v2047
  %v2049 = vadd.f32 %v2046, %v1938
  %v2050 = vmul.f32 %v1938, %v1938
  %v2051 = vadd.f32 %v2048, %v2050
  %v2052 = vadd.f32 %v2049, %v1939
  %v2053 = vmul.f32 %v1939, %v1939
  %v2054 = vadd.f32 %v2051, %v2053
  %v2055 = vadd.f32 %v2052, %v1940
  %v2056 = vmul.f32 %v1940, %v1940
  %v2057 = vadd.f32 %v2054, %v2056
  %v2058 = vadd.f32 %v2055, %v1941
  %v2059 = vmul.f32 %v1941, %v1941
  %v2060 = vadd.f32 %v2057, %v2059
  %v2061 = vadd.f32 %v2058, %v1942
  %v2062 = vmul.f32 %v1942, %v1942
  %v2063 = vadd.f32 %v2060, %v2062
  %v2064 = vadd.f32 %v2061, %v1943
  %v2065 = vmul.f32 %v1943, %v1943
  %v2066 = vadd.f32 %v2063, %v2065
  %v2067 = vadd.f32 %v2064, %v1944
  %v2068 = vmul.f32 %v1944, %v1944
  %v2069 = vadd.f32 %v2066, %v2068
  %v2070 = vadd.f32 %v2067, %v1945
  %v2071 = vmul.f32 %v1945, %v1945
  %v2072 = vadd.f32 %v2069, %v2071
  %v2073 = vadd.f32 %v2070, %v1946
  %v2074 = vmul.f32 %v1946, %v1946
  %v2075 = vadd.f32 %v2072, %v2074
  %v2076 = vadd.f32 %v2073, %v1947
  %v2077 = vmul.f32 %v1947, %v1947
  %v2078 = vadd.f32 %v2075, %v2077
  %v2079 = vadd.f32 %v2076, %v1948
  %v2080 = vmul.f32 %v1948, %v1948
  %v2081 = vadd.f32 %v2078, %v2080
  %v2082 = vadd.f32 %v2079, %v1949
  %v2083 = vmul.f32 %v1949, %v1949
  %v2084 = vadd.f32 %v2081, %v2083
  %v2085 = vadd.f32 %v2082, %v1950
  %v2086 = vmul.f32 %v1950, %v1950
  %v2087 = vadd.f32 %v2084, %v2086
  %v2088 = vadd.f32 %v2085, %v1951
  %v2089 = vmul.f32 %v1951, %v1951
  %v2090 = vadd.f32 %v2087, %v2089
  %v2091 = vadd.f32 %v2088, %v1952
  %v2092 = vmul.f32 %v1952, %v1952
  %v2093 = vadd.f32 %v2090, %v2092
  %v2094 = vadd.f32 %v2091, %v1953
  %v2095 = vmul.f32 %v1953, %v1953
  %v2096 = vadd.f32 %v2093, %v2095
  %v2097 = vadd.f32 %v2094, %v1954
  %v2098 = vmul.f32 %v1954, %v1954
  %v2099 = vadd.f32 %v2096, %v2098
  %v2100 = vadd.f32 %v2097, %v1955
  %v2101 = vmul.f32 %v1955, %v1955
  %v2102 = vadd.f32 %v2099, %v2101
  %v2103 = vrot.slane %v2100, 4
  %v2104 = vadd.f32 %v2100, %v2103
  %v2105 = vrot.slane %v2104, 2
  %v2106 = vadd.f32 %v2104, %v2105
  %v2107 = vrot.slane %v2106, 1
  %v2108 = vadd.f32 %v2106, %v2107
  %v2109 = vrot.slane %v2102, 4
  %v2110 = vadd.f32 %v2102, %v2109
  %v2111 = vrot.slane %v2110, 2
  %v2112 = vadd.f32 %v2110, %v2111
  %v2113 = vrot.slane %v2112, 1
  %v2114 = vadd.f32 %v2112, %v2113
  %v2115 = vrcp.pop 98.0
  %v2116 = vmul.f32 98.0, %v2115
  %v2117 = vsub.f32 1.0, %v2116
  %v2118 = vmul.f32 %v2115, %v2117
  %v2119 = vadd.f32 %v2115, %v2118
  %vm2120 = vweird.f32 %v2115
  %v2121 = vsel %vm2120, %v2115, %v2119
  %v2122 = vmul.f32 %v2108, %v2121
  %v2123 = vmul.f32 %v2114, %v2121
  %v2124 = vmul.f32 %v2122, %v2122
  %v2125 = vsub.f32 %v2123, %v2124
  %v2126 = vld [vmem:[%s3] sm:$0x1]
  %v2127 = vadd.f32 %v2125, 1e-05
  %v2128 = vrsqrt.pop %v2127
  %v2129 = vmul.f32 %v2128, %v2127
  %v2130 = vmul.f32 %v2129, %v2128
  %v2131 = vmul.f32 0.5, %v2130
  %v2132 = vsub.f32 1.5, %v2131
  %v2133 = vmul.f32 %v2128, %v2132
  %vm2134 = vweird.f32 %v2127
  %vm2135 = vweird.f32 %v2128
  %vm2136 = vmor %vm2134, %vm2135
  %v2137 = vsel %vm2136, %v2128, %v2133
  %v2138 = vmul.f32 %v2126, %v2137
  %v2139 = vld [vmem:[%s4] sm:$0x1]
  %v2140 = vmul.f32 %v2122, %v2138
  %v2141 = vsub.f32 %v2139, %v2140
  %v2143 = vperm.slane %v2138, 0
  %v2145 = vmul.f32 %v940, %v2143
  %v2147 = vperm.slane %v2141, 0
  %v2149 = vadd.f32 %v2145, %v2147
  %v2150 = vmax.f32 %v2149, 0.0
  %2151 = vst [vmem:[%s5] sm:$0xff] %v2150
  %v2152 = vmul.f32 %v960, %v2143
  %v2153 = vadd.f32 %v2152, %v2147
  %v2154 = vmax.f32 %v2153, 0.0
  %2155 = vst [vmem:[%s5 + $0x8] sm:$0xff] %v2154
  %v2156 = vmul.f32 %v980, %v2143
  %v2157 = vadd.f32 %v2156, %v2147
  %v2158 = vmax.f32 %v2157, 0.0
  %2159 = vst [vmem:[%s5 + $0x10] sm:$0xff] %v2158
  %v2160 = vmul.f32 %v1000, %v2143
  %v2161 = vadd.f32 %v2160, %v2147
  %v2162 = vmax.f32 %v2161, 0.0
  %2163 = vst [vmem:[%s5 + $0x18] sm:$0xff] %v2162
  %v2164 = vmul.f32 %v1020, %v2143
  %v2165 = vadd.f32 %v2164, %v2147
  %v2166 = vmax.f32 %v2165, 0.0
  %2167 = vst [vmem:[%s5 + $0x20] sm:$0xff] %v2166
  %v2168 = vmul.f32 %v1040, %v2143
  %v2169 = vadd.f32 %v2168, %v2147
  %v2170 = vmax.f32 %v2169, 0.0
  %2171 = vst [vmem:[%s5 + $0x28] sm:$0xff] %v2170
  %v2172 = vmul.f32 %v1060, %v2143
  %v2173 = vadd.f32 %v2172, %v2147
  %v2174 = vmax.f32 %v2173, 0.0
  %2175 = vst [vmem:[%s5 + $0x30] sm:$0xff] %v2174
  %v2176 = vmul.f32 %v1080, %v2143
  %v2177 = vadd.f32 %v2176, %v2147
  %v2178 = vmax.f32 %v2177, 0.0
  %2179 = vst [vmem:[%s5 + $0x38] sm:$0xff] %v2178
  %v2180 = vmul.f32 %v1100, %v2143
  %v2181 = vadd.f32 %v2180, %v2147
  %v2182 = vmax.f32 %v2181, 0.0
  %2183 = vst [vmem:[%s5 + $0x40] sm:$0xff] %v2182
  %v2184 = vmul.f32 %v1120, %v2143
  %v2185 = vadd.f32 %v2184, %v2147
  %v2186 = vmax.f32 %v2185, 0.0
  %2187 = vst [vmem:[%s5 + $0x48] sm:$0xff] %v2186
  %v2188 = vmul.f32 %v1140, %v2143
  %v2189 = vadd.f32 %v2188, %v2147
  %v2190 = vmax.f32 %v2189, 0.0
  %2191 = vst [vmem:[%s5 + $0x50] sm:$0xff] %v2190
  %v2192 = vmul.f32 %v1160, %v2143
  %v2193 = vadd.f32 %v2192, %v2147
  %v2194 = vmax.f32 %v2193, 0.0
  %2195 = vst [vmem:[%s5 + $0x58] sm:$0xff] %v2194
  %v2196 = vmul.f32 %v1180, %v2143
  %v2197 = vadd.f32 %v2196, %v2147
  %v2198 = vmax.f32 %v2197, 0.0
  %2199 = vst [vmem:[%s5 + $0x60] sm:$0xff] %v2198
  %v2200 = vmul.f32 %v1200, %v2143
  %v2201 = vadd.f32 %v2200, %v2147
  %v2202 = vmax.f32 %v2201, 0.0
  %2203 = vst [vmem:[%s5 + $0x68] sm:$0xff] %v2202
  %v2204 = vmul.f32 %v1220, %v2143
  %v2205 = vadd.f32 %v2204, %v2147
  %v2206 = vmax.f32 %v2205, 0.0
  %2207 = vst [vmem:[%s5 + $0x70] sm:$0xff] %v2206
  %v2208 = vmul.f32 %v1240, %v2143
  %v2209 = vadd.f32 %v2208, %v2147
  %v2210 = vmax.f32 %v2209, 0.0
  %2211 = vst [vmem:[%s5 + $0x78] sm:$0xff] %v2210
  %v2212 = vmul.f32 %v1260, %v2143
  %v2213 = vadd.f32 %v2212, %v2147
  %v2214 = vmax.f32 %v2213, 0.0
  %2215 = vst [vmem:[%s5 + $0x80] sm:$0xff] %v2214
  %v2216 = vmul.f32 %v1280, %v2143
  %v2217 = vadd.f32 %v2216, %v2147
  %v2218 = vmax.f32 %v2217, 0.0
  %2219 = vst [vmem:[%s5 + $0x88] sm:$0xff] %v2218
  %v2220 = vmul.f32 %v1300, %v2143
  %v2221 = vadd.f32 %v2220, %v2147
  %v2222 = vmax.f32 %v2221, 0.0
  %2223 = vst [vmem:[%s5 + $0x90] sm:$0xff] %v2222
  %v2224 = vmul.f32 %v1320, %v2143
  %v2225 = vadd.f32 %v2224, %v2147
  %v2226 = vmax.f32 %v2225, 0.0
  %2227 = vst [vmem:[%s5 + $0x98] sm:$0xff] %v2226
  %v2228 = vmul.f32 %v1340, %v2143
  %v2229 = vadd.f32 %v2228, %v2147
  %v2230 = vmax.f32 %v2229, 0.0
  %2231 = vst [vmem:[%s5 + $0xa0] sm:$0xff] %v2230
  %v2232 = vmul.f32 %v1360, %v2143
  %v2233 = vadd.f32 %v2232, %v2147
  %v2234 = vmax.f32 %v2233, 0.0
  %2235 = vst [vmem:[%s5 + $0xa8] sm:$0xff] %v2234
  %v2236 = vmul.f32 %v1380, %v2143
  %v2237 = vadd.f32 %v2236, %v2147
  %v2238 = vmax.f32 %v2237, 0.0
  %2239 = vst [vmem:[%s5 + $0xb0] sm:$0xff] %v2238
  %v2240 = vmul.f32 %v1400, %v2143
  %v2241 = vadd.f32 %v2240, %v2147
  %v2242 = vmax.f32 %v2241, 0.0
  %2243 = vst [vmem:[%s5 + $0xb8] sm:$0xff] %v2242
  %v2244 = vmul.f32 %v1420, %v2143
  %v2245 = vadd.f32 %v2244, %v2147
  %v2246 = vmax.f32 %v2245, 0.0
  %2247 = vst [vmem:[%s5 + $0xc0] sm:$0xff] %v2246
  %v2248 = vmul.f32 %v1440, %v2143
  %v2249 = vadd.f32 %v2248, %v2147
  %v2250 = vmax.f32 %v2249, 0.0
  %2251 = vst [vmem:[%s5 + $0xc8] sm:$0xff] %v2250
  %v2252 = vmul.f32 %v1460, %v2143
  %v2253 = vadd.f32 %v2252, %v2147
  %v2254 = vmax.f32 %v2253, 0.0
  %2255 = vst [vmem:[%s5 + $0xd0] sm:$0xff] %v2254
  %v2256 = vmul.f32 %v1480, %v2143
  %v2257 = vadd.f32 %v2256, %v2147
  %v2258 = vmax.f32 %v2257, 0.0
  %2259 = vst [vmem:[%s5 + $0xd8] sm:$0xff] %v2258
  %v2260 = vmul.f32 %v1500, %v2143
  %v2261 = vadd.f32 %v2260, %v2147
  %v2262 = vmax.f32 %v2261, 0.0
  %2263 = vst [vmem:[%s5 + $0xe0] sm:$0xff] %v2262
  %v2264 = vmul.f32 %v1520, %v2143
  %v2265 = vadd.f32 %v2264, %v2147
  %v2266 = vmax.f32 %v2265, 0.0
  %2267 = vst [vmem:[%s5 + $0xe8] sm:$0xff] %v2266
  %v2268 = vmul.f32 %v1540, %v2143
  %v2269 = vadd.f32 %v2268, %v2147
  %v2270 = vmax.f32 %v2269, 0.0
  %2271 = vst [vmem:[%s5 + $0xf0] sm:$0xff] %v2270
  %v2272 = vmul.f32 %v1560, %v2143
  %v2273 = vadd.f32 %v2272, %v2147
  %v2274 = vmax.f32 %v2273, 0.0
  %2275 = vst [vmem:[%s5 + $0xf8] sm:$0xff] %v2274
  %v2276 = vmul.f32 %v1580, %v2143
  %v2277 = vadd.f32 %v2276, %v2147
  %v2278 = vmax.f32 %v2277, 0.0
  %2279 = vst [vmem:[%s5 + $0x100] sm:$0xff] %v2278
  %v2280 = vmul.f32 %v1600, %v2143
  %v2281 = vadd.f32 %v2280, %v2147
  %v2282 = vmax.f32 %v2281, 0.0
  %2283 = vst [vmem:[%s5 + $0x108] sm:$0xff] %v2282
  %v2284 = vmul.f32 %v1620, %v2143
  %v2285 = vadd.f32 %v2284, %v2147
  %v2286 = vmax.f32 %v2285, 0.0
  %2287 = vst [vmem:[%s5 + $0x110] sm:$0xff] %v2286
  %v2288 = vmul.f32 %v1640, %v2143
  %v2289 = vadd.f32 %v2288, %v2147
  %v2290 = vmax.f32 %v2289, 0.0
  %2291 = vst [vmem:[%s5 + $0x118] sm:$0xff] %v2290
  %v2292 = vmul.f32 %v1660, %v2143
  %v2293 = vadd.f32 %v2292, %v2147
  %v2294 = vmax.f32 %v2293, 0.0
  %2295 = vst [vmem:[%s5 + $0x120] sm:$0xff] %v2294
  %v2296 = vmul.f32 %v1680, %v2143
  %v2297 = vadd.f32 %v2296, %v2147
  %v2298 = vmax.f32 %v2297, 0.0
  %2299 = vst [vmem:[%s5 + $0x128] sm:$0xff] %v2298
  %v2300 = vmul.f32 %v1700, %v2143
  %v2301 = vadd.f32 %v2300, %v2147
  %v2302 = vmax.f32 %v2301, 0.0
  %2303 = vst [vmem:[%s5 + $0x130] sm:$0xff] %v2302
  %v2304 = vmul.f32 %v1720, %v2143
  %v2305 = vadd.f32 %v2304, %v2147
  %v2306 = vmax.f32 %v2305, 0.0
  %2307 = vst [vmem:[%s5 + $0x138] sm:$0xff] %v2306
  %v2308 = vmul.f32 %v1740, %v2143
  %v2309 = vadd.f32 %v2308, %v2147
  %v2310 = vmax.f32 %v2309, 0.0
  %2311 = vst [vmem:[%s5 + $0x140] sm:$0xff] %v2310
  %v2312 = vmul.f32 %v1760, %v2143
  %v2313 = vadd.f32 %v2312, %v2147
  %v2314 = vmax.f32 %v2313, 0.0
  %2315 = vst [vmem:[%s5 + $0x148] sm:$0xff] %v2314
  %v2316 = vmul.f32 %v1780, %v2143
  %v2317 = vadd.f32 %v2316, %v2147
  %v2318 = vmax.f32 %v2317, 0.0
  %2319 = vst [vmem:[%s5 + $0x150] sm:$0xff] %v2318
  %v2320 = vmul.f32 %v1800, %v2143
  %v2321 = vadd.f32 %v2320, %v2147
  %v2322 = vmax.f32 %v2321, 0.0
  %2323 = vst [vmem:[%s5 + $0x158] sm:$0xff] %v2322
  %v2324 = vmul.f32 %v1820, %v2143
  %v2325 = vadd.f32 %v2324, %v2147
  %v2326 = vmax.f32 %v2325, 0.0
  %2327 = vst [vmem:[%s5 + $0x160] sm:$0xff] %v2326
  %v2328 = vmul.f32 %v1840, %v2143
  %v2329 = vadd.f32 %v2328, %v2147
  %v2330 = vmax.f32 %v2329, 0.0
  %2331 = vst [vmem:[%s5 + $0x168] sm:$0xff] %v2330
  %v2332 = vmul.f32 %v1860, %v2143
  %v2333 = vadd.f32 %v2332, %v2147
  %v2334 = vmax.f32 %v2333, 0.0
  %2335 = vst [vmem:[%s5 + $0x170] sm:$0xff] %v2334
  %v2336 = vmul.f32 %v1880, %v2143
  %v2337 = vadd.f32 %v2336, %v2147
  %v2338 = vmax.f32 %v2337, 0.0
  %2339 = vst [vmem:[%s5 + $0x178] sm:$0xff] %v2338
  %v2340 = vmul.f32 %v1900, %v2143
  %v2341 = vadd.f32 %v2340, %v2147
  %v2342 = vmax.f32 %v2341, 0.0
  %2343 = vst [vmem:[%s5 + $0x180] sm:$0xff] %v2342
  // Predicated region
  $region22: #{generator_forward.3} parent=0 // pred_check
    _
  $region23: #{generator_forward.3} parent=0 // pred_check_branch
    %2345 = sbr.rel (0) target = $region25
  $region24: #{generator_forward.3} parent=0 // pred_region
    _
  $region25: #{generator_forward.3} parent=0 // pred_fallthru
    _
  // Predicated region
  $region26: #{generator_forward.3} parent=0 // pred_check
    _
  $region27: #{generator_forward.3} parent=0 // pred_check_branch
    %2347 = sbr.rel (0) target = $region29
  $region28: #{generator_forward.3} parent=0 // pred_region
    _
  $region29: #{generator_forward.3} parent=0 // pred_fallthru
    _

// kernel: generator_forward.4
$region0: #{generator_forward.4}
  #allocation0 [shape = 'u32[]', space=smem, size = 0x4, offset = 0x4, fixed_abs, tag = 'smem constant byte address 0x4 - core index']
  #allocation1 [shape = 'u32[72,128]{1,0:T(1,128)}', space=vmem, size = 0x9000, scoped, tag = 'internal scratch']
  %s0 = inlined_call_operand.vmem [shape: f32[392,2048], index: 0, kind: input, shape index: {}]
  %s1 = inlined_call_operand.vmem [shape: f32[2048,64], index: 1, kind: input, shape index: {}]
  %s2 = inlined_call_operand.vmem [shape: f32[1,64], index: 2, kind: input, shape index: {}]
  %s3 = inlined_call_operand.vmem [shape: f32[1,64], index: 3, kind: input, shape index: {}]
  %s4 = inlined_call_operand.vmem [shape: f32[1,64], index: 4, kind: input, shape index: {}]
  %s5 = inlined_call_operand.vmem [shape: f32[392,64], index: 5, kind: output, shape index: {}]
  %s6 = sld [smem:[#allocation0]]
  $region30: #{generator_forward.4} parent=0
    _
  %s8 = ssub.s32 1, %s6
  %s9 = scalar_select 0, %s8, %s6
  // Predicated region
  $region2: #{generator_forward.4} parent=0 // pred_check
    _
  $region3: #{generator_forward.4} parent=0 // pred_check_branch
    %11 = sbr.rel (0) target = $region5
  $region4: #{generator_forward.4} parent=0 // pred_region
    _
  $region5: #{generator_forward.4} parent=0 // pred_fallthru
    _
  // Predicated region
  $region6: #{generator_forward.4} parent=0 // pred_check
    _
  $region7: #{generator_forward.4} parent=0 // pred_check_branch
    %13 = sbr.rel (0) target = $region9
  $region8: #{generator_forward.4} parent=0 // pred_region
    _
  $region9: #{generator_forward.4} parent=0 // pred_fallthru
    _
  // Predicated region
  $region10: #{generator_forward.4} parent=0 // pred_check
    _
  $region11: #{generator_forward.4} parent=0 // pred_check_branch
    %15 = sbr.rel (0) target = $region13
  $region12: #{generator_forward.4} parent=0 // pred_region
    _
  $region13: #{generator_forward.4} parent=0 // pred_fallthru
    _
  // Predicated region
  $region14: #{generator_forward.4} parent=0 // pred_check
    _
  $region15: #{generator_forward.4} parent=0 // pred_check_branch
    %17 = sbr.rel (0) target = $region17
  $region16: #{generator_forward.4} parent=0 // pred_region
    _
  $region17: #{generator_forward.4} parent=0 // pred_fallthru
    _
  // Predicated region
  $region18: #{generator_forward.4} parent=0 // pred_check
    _
  $region19: #{generator_forward.4} parent=0 // pred_check_branch
    %19 = sbr.rel (0) target = $region21
  $region20: #{generator_forward.4} parent=0 // pred_region
    _
  $region21: #{generator_forward.4} parent=0 // pred_fallthru
    _
  %v20 = vld [vmem:[%s0] sm:$0xff]
  %v21 = vld [vmem:[%s0 + $0x8] sm:$0xff]
  %v22 = vld [vmem:[%s0 + $0x10] sm:$0xff]
  %v23 = vld [vmem:[%s0 + $0x18] sm:$0xff]
  %v24 = vld [vmem:[%s0 + $0x20] sm:$0xff]
  %v25 = vld [vmem:[%s0 + $0x28] sm:$0xff]
  %v26 = vld [vmem:[%s0 + $0x30] sm:$0xff]
  %v27 = vld [vmem:[%s0 + $0x38] sm:$0xff]
  %v28 = vld [vmem:[%s0 + $0x40] sm:$0xff]
  %v29 = vld [vmem:[%s0 + $0x48] sm:$0xff]
  %v30 = vld [vmem:[%s0 + $0x50] sm:$0xff]
  %v31 = vld [vmem:[%s0 + $0x58] sm:$0xff]
  %v32 = vld [vmem:[%s0 + $0x60] sm:$0xff]
  %v33 = vld [vmem:[%s0 + $0x68] sm:$0xff]
  %v34 = vld [vmem:[%s0 + $0x70] sm:$0xff]
  %v35 = vld [vmem:[%s0 + $0x78] sm:$0xff]
  %v36 = vld [vmem:[%s0 + $0x80] sm:$0xff]
  %v37 = vld [vmem:[%s0 + $0x88] sm:$0xff]
  %v38 = vld [vmem:[%s0 + $0x90] sm:$0xff]
  %v39 = vld [vmem:[%s0 + $0x98] sm:$0xff]
  %v40 = vld [vmem:[%s0 + $0xa0] sm:$0xff]
  %v41 = vld [vmem:[%s0 + $0xa8] sm:$0xff]
  %v42 = vld [vmem:[%s0 + $0xb0] sm:$0xff]
  %v43 = vld [vmem:[%s0 + $0xb8] sm:$0xff]
  %v44 = vld [vmem:[%s0 + $0xc0] sm:$0xff]
  %v45 = vld [vmem:[%s0 + $0xc8] sm:$0xff]
  %v46 = vld [vmem:[%s0 + $0xd0] sm:$0xff]
  %v47 = vld [vmem:[%s0 + $0xd8] sm:$0xff]
  %v48 = vld [vmem:[%s0 + $0xe0] sm:$0xff]
  %v49 = vld [vmem:[%s0 + $0xe8] sm:$0xff]
  %v50 = vld [vmem:[%s0 + $0xf0] sm:$0xff]
  %v51 = vld [vmem:[%s0 + $0xf8] sm:$0xff]
  %v52 = vld [vmem:[%s0 + $0x100] sm:$0xff]
  %v53 = vld [vmem:[%s0 + $0x108] sm:$0xff]
  %v54 = vld [vmem:[%s0 + $0x110] sm:$0xff]
  %v55 = vld [vmem:[%s0 + $0x118] sm:$0xff]
  %v56 = vld [vmem:[%s0 + $0x120] sm:$0xff]
  %v57 = vld [vmem:[%s0 + $0x128] sm:$0xff]
  %v58 = vld [vmem:[%s0 + $0x130] sm:$0xff]
  %v59 = vld [vmem:[%s0 + $0x138] sm:$0xff]
  %v60 = vld [vmem:[%s0 + $0x140] sm:$0xff]
  %v61 = vld [vmem:[%s0 + $0x148] sm:$0xff]
  %v62 = vld [vmem:[%s0 + $0x150] sm:$0xff]
  %v63 = vld [vmem:[%s0 + $0x158] sm:$0xff]
  %v64 = vld [vmem:[%s0 + $0x160] sm:$0xff]
  %v65 = vld [vmem:[%s0 + $0x168] sm:$0xff]
  %v66 = vld [vmem:[%s0 + $0x170] sm:$0xff]
  %v67 = vld [vmem:[%s0 + $0x178] sm:$0xff]
  %v68 = vld [vmem:[%s0 + $0x180] sm:$0xff]
  %v69 = vld [vmem:[%s0 + $0x188] sm:$0xff]
  %v70 = vld [vmem:[%s0 + $0x190] sm:$0xff]
  %v71 = vld [vmem:[%s0 + $0x198] sm:$0xff]
  %v72 = vld [vmem:[%s0 + $0x1a0] sm:$0xff]
  %v73 = vld [vmem:[%s0 + $0x1a8] sm:$0xff]
  %v74 = vld [vmem:[%s0 + $0x1b0] sm:$0xff]
  %v75 = vld [vmem:[%s0 + $0x1b8] sm:$0xff]
  %v76 = vld [vmem:[%s0 + $0x1c0] sm:$0xff]
  %v77 = vld [vmem:[%s0 + $0x1c8] sm:$0xff]
  %v78 = vld [vmem:[%s0 + $0x1d0] sm:$0xff]
  %v79 = vld [vmem:[%s0 + $0x1d8] sm:$0xff]
  %v80 = vld [vmem:[%s0 + $0x1e0] sm:$0xff]
  %v81 = vld [vmem:[%s0 + $0x1e8] sm:$0xff]
  %v82 = vld [vmem:[%s0 + $0x1f0] sm:$0xff]
  %v83 = vld [vmem:[%s0 + $0x1f8] sm:$0xff]
  %v84 = vld [vmem:[%s0 + $0x200] sm:$0xff]
  %v85 = vld [vmem:[%s0 + $0x208] sm:$0xff]
  %v86 = vld [vmem:[%s0 + $0x210] sm:$0xff]
  %v87 = vld [vmem:[%s0 + $0x218] sm:$0xff]
  %v88 = vld [vmem:[%s0 + $0x220] sm:$0xff]
  %v89 = vld [vmem:[%s0 + $0x228] sm:$0xff]
  %v90 = vld [vmem:[%s0 + $0x230] sm:$0xff]
  %v91 = vld [vmem:[%s0 + $0x238] sm:$0xff]
  %v92 = vld [vmem:[%s0 + $0x240] sm:$0xff]
  %v93 = vld [vmem:[%s0 + $0x248] sm:$0xff]
  %v94 = vld [vmem:[%s0 + $0x250] sm:$0xff]
  %v95 = vld [vmem:[%s0 + $0x258] sm:$0xff]
  %v96 = vld [vmem:[%s0 + $0x260] sm:$0xff]
  %v97 = vld [vmem:[%s0 + $0x268] sm:$0xff]
  %v98 = vld [vmem:[%s0 + $0x270] sm:$0xff]
  %v99 = vld [vmem:[%s0 + $0x278] sm:$0xff]
  %v100 = vld [vmem:[%s0 + $0x280] sm:$0xff]
  %v101 = vld [vmem:[%s0 + $0x288] sm:$0xff]
  %v102 = vld [vmem:[%s0 + $0x290] sm:$0xff]
  %v103 = vld [vmem:[%s0 + $0x298] sm:$0xff]
  %v104 = vld [vmem:[%s0 + $0x2a0] sm:$0xff]
  %v105 = vld [vmem:[%s0 + $0x2a8] sm:$0xff]
  %v106 = vld [vmem:[%s0 + $0x2b0] sm:$0xff]
  %v107 = vld [vmem:[%s0 + $0x2b8] sm:$0xff]
  %v108 = vld [vmem:[%s0 + $0x2c0] sm:$0xff]
  %v109 = vld [vmem:[%s0 + $0x2c8] sm:$0xff]
  %v110 = vld [vmem:[%s0 + $0x2d0] sm:$0xff]
  %v111 = vld [vmem:[%s0 + $0x2d8] sm:$0xff]
  %v112 = vld [vmem:[%s0 + $0x2e0] sm:$0xff]
  %v113 = vld [vmem:[%s0 + $0x2e8] sm:$0xff]
  %v114 = vld [vmem:[%s0 + $0x2f0] sm:$0xff]
  %v115 = vld [vmem:[%s0 + $0x2f8] sm:$0xff]
  %v116 = vld [vmem:[%s0 + $0x300] sm:$0xff]
  %v117 = vld [vmem:[%s0 + $0x308] sm:$0xff]
  %v118 = vld [vmem:[%s0 + $0x310] sm:$0xff]
  %v119 = vld [vmem:[%s0 + $0x318] sm:$0xff]
  %v120 = vld [vmem:[%s0 + $0x320] sm:$0xff]
  %v121 = vld [vmem:[%s0 + $0x328] sm:$0xff]
  %v122 = vld [vmem:[%s0 + $0x330] sm:$0xff]
  %v123 = vld [vmem:[%s0 + $0x338] sm:$0xff]
  %v124 = vld [vmem:[%s0 + $0x340] sm:$0xff]
  %v125 = vld [vmem:[%s0 + $0x348] sm:$0xff]
  %v126 = vld [vmem:[%s0 + $0x350] sm:$0xff]
  %v127 = vld [vmem:[%s0 + $0x358] sm:$0xff]
  %v128 = vld [vmem:[%s0 + $0x360] sm:$0xff]
  %v129 = vld [vmem:[%s0 + $0x368] sm:$0xff]
  %v130 = vld [vmem:[%s0 + $0x370] sm:$0xff]
  %v131 = vld [vmem:[%s0 + $0x378] sm:$0xff]
  %v132 = vld [vmem:[%s0 + $0x380] sm:$0xff]
  %v133 = vld [vmem:[%s0 + $0x388] sm:$0xff]
  %v134 = vld [vmem:[%s0 + $0x390] sm:$0xff]
  %v135 = vld [vmem:[%s0 + $0x398] sm:$0xff]
  %v136 = vld [vmem:[%s0 + $0x3a0] sm:$0xff]
  %v137 = vld [vmem:[%s0 + $0x3a8] sm:$0xff]
  %v138 = vld [vmem:[%s0 + $0x3b0] sm:$0xff]
  %v139 = vld [vmem:[%s0 + $0x3b8] sm:$0xff]
  %v140 = vld [vmem:[%s0 + $0x3c0] sm:$0xff]
  %v141 = vld [vmem:[%s0 + $0x3c8] sm:$0xff]
  %v142 = vld [vmem:[%s0 + $0x3d0] sm:$0xff]
  %v143 = vld [vmem:[%s0 + $0x3d8] sm:$0xff]
  %v144 = vld [vmem:[%s0 + $0x3e0] sm:$0xff]
  %v145 = vld [vmem:[%s0 + $0x3e8] sm:$0xff]
  %v146 = vld [vmem:[%s0 + $0x3f0] sm:$0xff]
  %v147 = vld [vmem:[%s0 + $0x3f8] sm:$0xff]
  %v148 = vld [vmem:[%s0 + $0x400] sm:$0xff]
  %v149 = vld [vmem:[%s0 + $0x408] sm:$0xff]
  %v150 = vld [vmem:[%s0 + $0x410] sm:$0xff]
  %v151 = vld [vmem:[%s0 + $0x418] sm:$0xff]
  %v152 = vld [vmem:[%s0 + $0x420] sm:$0xff]
  %v153 = vld [vmem:[%s0 + $0x428] sm:$0xff]
  %v154 = vld [vmem:[%s0 + $0x430] sm:$0xff]
  %v155 = vld [vmem:[%s0 + $0x438] sm:$0xff]
  %v156 = vld [vmem:[%s0 + $0x440] sm:$0xff]
  %v157 = vld [vmem:[%s0 + $0x448] sm:$0xff]
  %v158 = vld [vmem:[%s0 + $0x450] sm:$0xff]
  %v159 = vld [vmem:[%s0 + $0x458] sm:$0xff]
  %v160 = vld [vmem:[%s0 + $0x460] sm:$0xff]
  %v161 = vld [vmem:[%s0 + $0x468] sm:$0xff]
  %v162 = vld [vmem:[%s0 + $0x470] sm:$0xff]
  %v163 = vld [vmem:[%s0 + $0x478] sm:$0xff]
  %v164 = vld [vmem:[%s0 + $0x480] sm:$0xff]
  %v165 = vld [vmem:[%s0 + $0x488] sm:$0xff]
  %v166 = vld [vmem:[%s0 + $0x490] sm:$0xff]
  %v167 = vld [vmem:[%s0 + $0x498] sm:$0xff]
  %v168 = vld [vmem:[%s0 + $0x4a0] sm:$0xff]
  %v169 = vld [vmem:[%s0 + $0x4a8] sm:$0xff]
  %v170 = vld [vmem:[%s0 + $0x4b0] sm:$0xff]
  %v171 = vld [vmem:[%s0 + $0x4b8] sm:$0xff]
  %v172 = vld [vmem:[%s0 + $0x4c0] sm:$0xff]
  %v173 = vld [vmem:[%s0 + $0x4c8] sm:$0xff]
  %v174 = vld [vmem:[%s0 + $0x4d0] sm:$0xff]
  %v175 = vld [vmem:[%s0 + $0x4d8] sm:$0xff]
  %v176 = vld [vmem:[%s0 + $0x4e0] sm:$0xff]
  %v177 = vld [vmem:[%s0 + $0x4e8] sm:$0xff]
  %v178 = vld [vmem:[%s0 + $0x4f0] sm:$0xff]
  %v179 = vld [vmem:[%s0 + $0x4f8] sm:$0xff]
  %v180 = vld [vmem:[%s0 + $0x500] sm:$0xff]
  %v181 = vld [vmem:[%s0 + $0x508] sm:$0xff]
  %v182 = vld [vmem:[%s0 + $0x510] sm:$0xff]
  %v183 = vld [vmem:[%s0 + $0x518] sm:$0xff]
  %v184 = vld [vmem:[%s0 + $0x520] sm:$0xff]
  %v185 = vld [vmem:[%s0 + $0x528] sm:$0xff]
  %v186 = vld [vmem:[%s0 + $0x530] sm:$0xff]
  %v187 = vld [vmem:[%s0 + $0x538] sm:$0xff]
  %v188 = vld [vmem:[%s0 + $0x540] sm:$0xff]
  %v189 = vld [vmem:[%s0 + $0x548] sm:$0xff]
  %v190 = vld [vmem:[%s0 + $0x550] sm:$0xff]
  %v191 = vld [vmem:[%s0 + $0x558] sm:$0xff]
  %v192 = vld [vmem:[%s0 + $0x560] sm:$0xff]
  %v193 = vld [vmem:[%s0 + $0x568] sm:$0xff]
  %v194 = vld [vmem:[%s0 + $0x570] sm:$0xff]
  %v195 = vld [vmem:[%s0 + $0x578] sm:$0xff]
  %v196 = vld [vmem:[%s0 + $0x580] sm:$0xff]
  %v197 = vld [vmem:[%s0 + $0x588] sm:$0xff]
  %v198 = vld [vmem:[%s0 + $0x590] sm:$0xff]
  %v199 = vld [vmem:[%s0 + $0x598] sm:$0xff]
  %v200 = vld [vmem:[%s0 + $0x5a0] sm:$0xff]
  %v201 = vld [vmem:[%s0 + $0x5a8] sm:$0xff]
  %v202 = vld [vmem:[%s0 + $0x5b0] sm:$0xff]
  %v203 = vld [vmem:[%s0 + $0x5b8] sm:$0xff]
  %v204 = vld [vmem:[%s0 + $0x5c0] sm:$0xff]
  %v205 = vld [vmem:[%s0 + $0x5c8] sm:$0xff]
  %v206 = vld [vmem:[%s0 + $0x5d0] sm:$0xff]
  %v207 = vld [vmem:[%s0 + $0x5d8] sm:$0xff]
  %v208 = vld [vmem:[%s0 + $0x5e0] sm:$0xff]
  %v209 = vld [vmem:[%s0 + $0x5e8] sm:$0xff]
  %v210 = vld [vmem:[%s0 + $0x5f0] sm:$0xff]
  %v211 = vld [vmem:[%s0 + $0x5f8] sm:$0xff]
  %v212 = vld [vmem:[%s0 + $0x600] sm:$0xff]
  %v213 = vld [vmem:[%s0 + $0x608] sm:$0xff]
  %v214 = vld [vmem:[%s0 + $0x610] sm:$0xff]
  %v215 = vld [vmem:[%s0 + $0x618] sm:$0xff]
  %v216 = vld [vmem:[%s0 + $0x620] sm:$0xff]
  %v217 = vld [vmem:[%s0 + $0x628] sm:$0xff]
  %v218 = vld [vmem:[%s0 + $0x630] sm:$0xff]
  %v219 = vld [vmem:[%s0 + $0x638] sm:$0xff]
  %v220 = vld [vmem:[%s0 + $0x640] sm:$0xff]
  %v221 = vld [vmem:[%s0 + $0x648] sm:$0xff]
  %v222 = vld [vmem:[%s0 + $0x650] sm:$0xff]
  %v223 = vld [vmem:[%s0 + $0x658] sm:$0xff]
  %v224 = vld [vmem:[%s0 + $0x660] sm:$0xff]
  %v225 = vld [vmem:[%s0 + $0x668] sm:$0xff]
  %v226 = vld [vmem:[%s0 + $0x670] sm:$0xff]
  %v227 = vld [vmem:[%s0 + $0x678] sm:$0xff]
  %v228 = vld [vmem:[%s0 + $0x680] sm:$0xff]
  %v229 = vld [vmem:[%s0 + $0x688] sm:$0xff]
  %v230 = vld [vmem:[%s0 + $0x690] sm:$0xff]
  %v231 = vld [vmem:[%s0 + $0x698] sm:$0xff]
  %v232 = vld [vmem:[%s0 + $0x6a0] sm:$0xff]
  %v233 = vld [vmem:[%s0 + $0x6a8] sm:$0xff]
  %v234 = vld [vmem:[%s0 + $0x6b0] sm:$0xff]
  %v235 = vld [vmem:[%s0 + $0x6b8] sm:$0xff]
  %v236 = vld [vmem:[%s0 + $0x6c0] sm:$0xff]
  %v237 = vld [vmem:[%s0 + $0x6c8] sm:$0xff]
  %v238 = vld [vmem:[%s0 + $0x6d0] sm:$0xff]
  %v239 = vld [vmem:[%s0 + $0x6d8] sm:$0xff]
  %v240 = vld [vmem:[%s0 + $0x6e0] sm:$0xff]
  %v241 = vld [vmem:[%s0 + $0x6e8] sm:$0xff]
  %v242 = vld [vmem:[%s0 + $0x6f0] sm:$0xff]
  %v243 = vld [vmem:[%s0 + $0x6f8] sm:$0xff]
  %v244 = vld [vmem:[%s0 + $0x700] sm:$0xff]
  %v245 = vld [vmem:[%s0 + $0x708] sm:$0xff]
  %v246 = vld [vmem:[%s0 + $0x710] sm:$0xff]
  %v247 = vld [vmem:[%s0 + $0x718] sm:$0xff]
  %v248 = vld [vmem:[%s0 + $0x720] sm:$0xff]
  %v249 = vld [vmem:[%s0 + $0x728] sm:$0xff]
  %v250 = vld [vmem:[%s0 + $0x730] sm:$0xff]
  %v251 = vld [vmem:[%s0 + $0x738] sm:$0xff]
  %v252 = vld [vmem:[%s0 + $0x740] sm:$0xff]
  %v253 = vld [vmem:[%s0 + $0x748] sm:$0xff]
  %v254 = vld [vmem:[%s0 + $0x750] sm:$0xff]
  %v255 = vld [vmem:[%s0 + $0x758] sm:$0xff]
  %v256 = vld [vmem:[%s0 + $0x760] sm:$0xff]
  %v257 = vld [vmem:[%s0 + $0x768] sm:$0xff]
  %v258 = vld [vmem:[%s0 + $0x770] sm:$0xff]
  %v259 = vld [vmem:[%s0 + $0x778] sm:$0xff]
  %v260 = vld [vmem:[%s0 + $0x780] sm:$0xff]
  %v261 = vld [vmem:[%s0 + $0x788] sm:$0xff]
  %v262 = vld [vmem:[%s0 + $0x790] sm:$0xff]
  %v263 = vld [vmem:[%s0 + $0x798] sm:$0xff]
  %v264 = vld [vmem:[%s0 + $0x7a0] sm:$0xff]
  %v265 = vld [vmem:[%s0 + $0x7a8] sm:$0xff]
  %v266 = vld [vmem:[%s0 + $0x7b0] sm:$0xff]
  %v267 = vld [vmem:[%s0 + $0x7b8] sm:$0xff]
  %v268 = vld [vmem:[%s0 + $0x7c0] sm:$0xff]
  %v269 = vld [vmem:[%s0 + $0x7c8] sm:$0xff]
  %v270 = vld [vmem:[%s0 + $0x7d0] sm:$0xff]
  %v271 = vld [vmem:[%s0 + $0x7d8] sm:$0xff]
  %v272 = vld [vmem:[%s0 + $0x7e0] sm:$0xff]
  %v273 = vld [vmem:[%s0 + $0x7e8] sm:$0xff]
  %v274 = vld [vmem:[%s0 + $0x7f0] sm:$0xff]
  %v275 = vld [vmem:[%s0 + $0x7f8] sm:$0xff]
  %v276 = vld [vmem:[%s0 + $0x800] sm:$0xff]
  %v277 = vld [vmem:[%s0 + $0x808] sm:$0xff]
  %v278 = vld [vmem:[%s0 + $0x810] sm:$0xff]
  %v279 = vld [vmem:[%s0 + $0x818] sm:$0xff]
  %v280 = vld [vmem:[%s0 + $0x820] sm:$0xff]
  %v281 = vld [vmem:[%s0 + $0x828] sm:$0xff]
  %v282 = vld [vmem:[%s0 + $0x830] sm:$0xff]
  %v283 = vld [vmem:[%s0 + $0x838] sm:$0xff]
  %v284 = vld [vmem:[%s0 + $0x840] sm:$0xff]
  %v285 = vld [vmem:[%s0 + $0x848] sm:$0xff]
  %v286 = vld [vmem:[%s0 + $0x850] sm:$0xff]
  %v287 = vld [vmem:[%s0 + $0x858] sm:$0xff]
  %v288 = vld [vmem:[%s0 + $0x860] sm:$0xff]
  %v289 = vld [vmem:[%s0 + $0x868] sm:$0xff]
  %v290 = vld [vmem:[%s0 + $0x870] sm:$0xff]
  %v291 = vld [vmem:[%s0 + $0x878] sm:$0xff]
  %v292 = vld [vmem:[%s0 + $0x880] sm:$0xff]
  %v293 = vld [vmem:[%s0 + $0x888] sm:$0xff]
  %v294 = vld [vmem:[%s0 + $0x890] sm:$0xff]
  %v295 = vld [vmem:[%s0 + $0x898] sm:$0xff]
  %v296 = vld [vmem:[%s0 + $0x8a0] sm:$0xff]
  %v297 = vld [vmem:[%s0 + $0x8a8] sm:$0xff]
  %v298 = vld [vmem:[%s0 + $0x8b0] sm:$0xff]
  %v299 = vld [vmem:[%s0 + $0x8b8] sm:$0xff]
  %v300 = vld [vmem:[%s0 + $0x8c0] sm:$0xff]
  %v301 = vld [vmem:[%s0 + $0x8c8] sm:$0xff]
  %v302 = vld [vmem:[%s0 + $0x8d0] sm:$0xff]
  %v303 = vld [vmem:[%s0 + $0x8d8] sm:$0xff]
  %v304 = vld [vmem:[%s0 + $0x8e0] sm:$0xff]
  %v305 = vld [vmem:[%s0 + $0x8e8] sm:$0xff]
  %v306 = vld [vmem:[%s0 + $0x8f0] sm:$0xff]
  %v307 = vld [vmem:[%s0 + $0x8f8] sm:$0xff]
  %v308 = vld [vmem:[%s0 + $0x900] sm:$0xff]
  %v309 = vld [vmem:[%s0 + $0x908] sm:$0xff]
  %v310 = vld [vmem:[%s0 + $0x910] sm:$0xff]
  %v311 = vld [vmem:[%s0 + $0x918] sm:$0xff]
  %v312 = vld [vmem:[%s0 + $0x920] sm:$0xff]
  %v313 = vld [vmem:[%s0 + $0x928] sm:$0xff]
  %v314 = vld [vmem:[%s0 + $0x930] sm:$0xff]
  %v315 = vld [vmem:[%s0 + $0x938] sm:$0xff]
  %v316 = vld [vmem:[%s0 + $0x940] sm:$0xff]
  %v317 = vld [vmem:[%s0 + $0x948] sm:$0xff]
  %v318 = vld [vmem:[%s0 + $0x950] sm:$0xff]
  %v319 = vld [vmem:[%s0 + $0x958] sm:$0xff]
  %v320 = vld [vmem:[%s0 + $0x960] sm:$0xff]
  %v321 = vld [vmem:[%s0 + $0x968] sm:$0xff]
  %v322 = vld [vmem:[%s0 + $0x970] sm:$0xff]
  %v323 = vld [vmem:[%s0 + $0x978] sm:$0xff]
  %v324 = vld [vmem:[%s0 + $0x980] sm:$0xff]
  %v325 = vld [vmem:[%s0 + $0x988] sm:$0xff]
  %v326 = vld [vmem:[%s0 + $0x990] sm:$0xff]
  %v327 = vld [vmem:[%s0 + $0x998] sm:$0xff]
  %v328 = vld [vmem:[%s0 + $0x9a0] sm:$0xff]
  %v329 = vld [vmem:[%s0 + $0x9a8] sm:$0xff]
  %v330 = vld [vmem:[%s0 + $0x9b0] sm:$0xff]
  %v331 = vld [vmem:[%s0 + $0x9b8] sm:$0xff]
  %v332 = vld [vmem:[%s0 + $0x9c0] sm:$0xff]
  %v333 = vld [vmem:[%s0 + $0x9c8] sm:$0xff]
  %v334 = vld [vmem:[%s0 + $0x9d0] sm:$0xff]
  %v335 = vld [vmem:[%s0 + $0x9d8] sm:$0xff]
  %v336 = vld [vmem:[%s0 + $0x9e0] sm:$0xff]
  %v337 = vld [vmem:[%s0 + $0x9e8] sm:$0xff]
  %v338 = vld [vmem:[%s0 + $0x9f0] sm:$0xff]
  %v339 = vld [vmem:[%s0 + $0x9f8] sm:$0xff]
  %v340 = vld [vmem:[%s0 + $0xa00] sm:$0xff]
  %v341 = vld [vmem:[%s0 + $0xa08] sm:$0xff]
  %v342 = vld [vmem:[%s0 + $0xa10] sm:$0xff]
  %v343 = vld [vmem:[%s0 + $0xa18] sm:$0xff]
  %v344 = vld [vmem:[%s0 + $0xa20] sm:$0xff]
  %v345 = vld [vmem:[%s0 + $0xa28] sm:$0xff]
  %v346 = vld [vmem:[%s0 + $0xa30] sm:$0xff]
  %v347 = vld [vmem:[%s0 + $0xa38] sm:$0xff]
  %v348 = vld [vmem:[%s0 + $0xa40] sm:$0xff]
  %v349 = vld [vmem:[%s0 + $0xa48] sm:$0xff]
  %v350 = vld [vmem:[%s0 + $0xa50] sm:$0xff]
  %v351 = vld [vmem:[%s0 + $0xa58] sm:$0xff]
  %v352 = vld [vmem:[%s0 + $0xa60] sm:$0xff]
  %v353 = vld [vmem:[%s0 + $0xa68] sm:$0xff]
  %v354 = vld [vmem:[%s0 + $0xa70] sm:$0xff]
  %v355 = vld [vmem:[%s0 + $0xa78] sm:$0xff]
  %v356 = vld [vmem:[%s0 + $0xa80] sm:$0xff]
  %v357 = vld [vmem:[%s0 + $0xa88] sm:$0xff]
  %v358 = vld [vmem:[%s0 + $0xa90] sm:$0xff]
  %v359 = vld [vmem:[%s0 + $0xa98] sm:$0xff]
  %v360 = vld [vmem:[%s0 + $0xaa0] sm:$0xff]
  %v361 = vld [vmem:[%s0 + $0xaa8] sm:$0xff]
  %v362 = vld [vmem:[%s0 + $0xab0] sm:$0xff]
  %v363 = vld [vmem:[%s0 + $0xab8] sm:$0xff]
  %v364 = vld [vmem:[%s0 + $0xac0] sm:$0xff]
  %v365 = vld [vmem:[%s0 + $0xac8] sm:$0xff]
  %v366 = vld [vmem:[%s0 + $0xad0] sm:$0xff]
  %v367 = vld [vmem:[%s0 + $0xad8] sm:$0xff]
  %v368 = vld [vmem:[%s0 + $0xae0] sm:$0xff]
  %v369 = vld [vmem:[%s0 + $0xae8] sm:$0xff]
  %v370 = vld [vmem:[%s0 + $0xaf0] sm:$0xff]
  %v371 = vld [vmem:[%s0 + $0xaf8] sm:$0xff]
  %v372 = vld [vmem:[%s0 + $0xb00] sm:$0xff]
  %v373 = vld [vmem:[%s0 + $0xb08] sm:$0xff]
  %v374 = vld [vmem:[%s0 + $0xb10] sm:$0xff]
  %v375 = vld [vmem:[%s0 + $0xb18] sm:$0xff]
  %v376 = vld [vmem:[%s0 + $0xb20] sm:$0xff]
  %v377 = vld [vmem:[%s0 + $0xb28] sm:$0xff]
  %v378 = vld [vmem:[%s0 + $0xb30] sm:$0xff]
  %v379 = vld [vmem:[%s0 + $0xb38] sm:$0xff]
  %v380 = vld [vmem:[%s0 + $0xb40] sm:$0xff]
  %v381 = vld [vmem:[%s0 + $0xb48] sm:$0xff]
  %v382 = vld [vmem:[%s0 + $0xb50] sm:$0xff]
  %v383 = vld [vmem:[%s0 + $0xb58] sm:$0xff]
  %v384 = vld [vmem:[%s0 + $0xb60] sm:$0xff]
  %v385 = vld [vmem:[%s0 + $0xb68] sm:$0xff]
  %v386 = vld [vmem:[%s0 + $0xb70] sm:$0xff]
  %v387 = vld [vmem:[%s0 + $0xb78] sm:$0xff]
  %v388 = vld [vmem:[%s0 + $0xb80] sm:$0xff]
  %v389 = vld [vmem:[%s0 + $0xb88] sm:$0xff]
  %v390 = vld [vmem:[%s0 + $0xb90] sm:$0xff]
  %v391 = vld [vmem:[%s0 + $0xb98] sm:$0xff]
  %v392 = vld [vmem:[%s0 + $0xba0] sm:$0xff]
  %v393 = vld [vmem:[%s0 + $0xba8] sm:$0xff]
  %v394 = vld [vmem:[%s0 + $0xbb0] sm:$0xff]
  %v395 = vld [vmem:[%s0 + $0xbb8] sm:$0xff]
  %v396 = vld [vmem:[%s0 + $0xbc0] sm:$0xff]
  %v397 = vld [vmem:[%s0 + $0xbc8] sm:$0xff]
  %v398 = vld [vmem:[%s0 + $0xbd0] sm:$0xff]
  %v399 = vld [vmem:[%s0 + $0xbd8] sm:$0xff]
  %v400 = vld [vmem:[%s0 + $0xbe0] sm:$0xff]
  %v401 = vld [vmem:[%s0 + $0xbe8] sm:$0xff]
  %v402 = vld [vmem:[%s0 + $0xbf0] sm:$0xff]
  %v403 = vld [vmem:[%s0 + $0xbf8] sm:$0xff]
  %v404 = vld [vmem:[%s0 + $0xc00] sm:$0xff]
  %v405 = vld [vmem:[%s0 + $0xc08] sm:$0xff]
  %v406 = vld [vmem:[%s0 + $0xc10] sm:$0xff]
  %v407 = vld [vmem:[%s0 + $0xc18] sm:$0xff]
  %v408 = vld [vmem:[%s0 + $0xc20] sm:$0xff]
  %v409 = vld [vmem:[%s0 + $0xc28] sm:$0xff]
  %v410 = vld [vmem:[%s0 + $0xc30] sm:$0xff]
  %v411 = vld [vmem:[%s0 + $0xc38] sm:$0xff]
  %v412 = vld [vmem:[%s0 + $0xc40] sm:$0xff]
  %v413 = vld [vmem:[%s0 + $0xc48] sm:$0xff]
  %v414 = vld [vmem:[%s0 + $0xc50] sm:$0xff]
  %v415 = vld [vmem:[%s0 + $0xc58] sm:$0xff]
  %v416 = vld [vmem:[%s0 + $0xc60] sm:$0xff]
  %v417 = vld [vmem:[%s0 + $0xc68] sm:$0xff]
  %v418 = vld [vmem:[%s0 + $0xc70] sm:$0xff]
  %v419 = vld [vmem:[%s0 + $0xc78] sm:$0xff]
  %v420 = vld [vmem:[%s0 + $0xc80] sm:$0xff]
  %v421 = vld [vmem:[%s0 + $0xc88] sm:$0xff]
  %v422 = vld [vmem:[%s0 + $0xc90] sm:$0xff]
  %v423 = vld [vmem:[%s0 + $0xc98] sm:$0xff]
  %v424 = vld [vmem:[%s0 + $0xca0] sm:$0xff]
  %v425 = vld [vmem:[%s0 + $0xca8] sm:$0xff]
  %v426 = vld [vmem:[%s0 + $0xcb0] sm:$0xff]
  %v427 = vld [vmem:[%s0 + $0xcb8] sm:$0xff]
  %v428 = vld [vmem:[%s0 + $0xcc0] sm:$0xff]
  %v429 = vld [vmem:[%s0 + $0xcc8] sm:$0xff]
  %v430 = vld [vmem:[%s0 + $0xcd0] sm:$0xff]
  %v431 = vld [vmem:[%s0 + $0xcd8] sm:$0xff]
  %v432 = vld [vmem:[%s0 + $0xce0] sm:$0xff]
  %v433 = vld [vmem:[%s0 + $0xce8] sm:$0xff]
  %v434 = vld [vmem:[%s0 + $0xcf0] sm:$0xff]
  %v435 = vld [vmem:[%s0 + $0xcf8] sm:$0xff]
  %v436 = vld [vmem:[%s0 + $0xd00] sm:$0xff]
  %v437 = vld [vmem:[%s0 + $0xd08] sm:$0xff]
  %v438 = vld [vmem:[%s0 + $0xd10] sm:$0xff]
  %v439 = vld [vmem:[%s0 + $0xd18] sm:$0xff]
  %v440 = vld [vmem:[%s0 + $0xd20] sm:$0xff]
  %v441 = vld [vmem:[%s0 + $0xd28] sm:$0xff]
  %v442 = vld [vmem:[%s0 + $0xd30] sm:$0xff]
  %v443 = vld [vmem:[%s0 + $0xd38] sm:$0xff]
  %v444 = vld [vmem:[%s0 + $0xd40] sm:$0xff]
  %v445 = vld [vmem:[%s0 + $0xd48] sm:$0xff]
  %v446 = vld [vmem:[%s0 + $0xd50] sm:$0xff]
  %v447 = vld [vmem:[%s0 + $0xd58] sm:$0xff]
  %v448 = vld [vmem:[%s0 + $0xd60] sm:$0xff]
  %v449 = vld [vmem:[%s0 + $0xd68] sm:$0xff]
  %v450 = vld [vmem:[%s0 + $0xd70] sm:$0xff]
  %v451 = vld [vmem:[%s0 + $0xd78] sm:$0xff]
  %v452 = vld [vmem:[%s0 + $0xd80] sm:$0xff]
  %v453 = vld [vmem:[%s0 + $0xd88] sm:$0xff]
  %v454 = vld [vmem:[%s0 + $0xd90] sm:$0xff]
  %v455 = vld [vmem:[%s0 + $0xd98] sm:$0xff]
  %v456 = vld [vmem:[%s0 + $0xda0] sm:$0xff]
  %v457 = vld [vmem:[%s0 + $0xda8] sm:$0xff]
  %v458 = vld [vmem:[%s0 + $0xdb0] sm:$0xff]
  %v459 = vld [vmem:[%s0 + $0xdb8] sm:$0xff]
  %v460 = vld [vmem:[%s0 + $0xdc0] sm:$0xff]
  %v461 = vld [vmem:[%s0 + $0xdc8] sm:$0xff]
  %v462 = vld [vmem:[%s0 + $0xdd0] sm:$0xff]
  %v463 = vld [vmem:[%s0 + $0xdd8] sm:$0xff]
  %v464 = vld [vmem:[%s0 + $0xde0] sm:$0xff]
  %v465 = vld [vmem:[%s0 + $0xde8] sm:$0xff]
  %v466 = vld [vmem:[%s0 + $0xdf0] sm:$0xff]
  %v467 = vld [vmem:[%s0 + $0xdf8] sm:$0xff]
  %v468 = vld [vmem:[%s0 + $0xe00] sm:$0xff]
  %v469 = vld [vmem:[%s0 + $0xe08] sm:$0xff]
  %v470 = vld [vmem:[%s0 + $0xe10] sm:$0xff]
  %v471 = vld [vmem:[%s0 + $0xe18] sm:$0xff]
  %v472 = vld [vmem:[%s0 + $0xe20] sm:$0xff]
  %v473 = vld [vmem:[%s0 + $0xe28] sm:$0xff]
  %v474 = vld [vmem:[%s0 + $0xe30] sm:$0xff]
  %v475 = vld [vmem:[%s0 + $0xe38] sm:$0xff]
  %v476 = vld [vmem:[%s0 + $0xe40] sm:$0xff]
  %v477 = vld [vmem:[%s0 + $0xe48] sm:$0xff]
  %v478 = vld [vmem:[%s0 + $0xe50] sm:$0xff]
  %v479 = vld [vmem:[%s0 + $0xe58] sm:$0xff]
  %v480 = vld [vmem:[%s0 + $0xe60] sm:$0xff]
  %v481 = vld [vmem:[%s0 + $0xe68] sm:$0xff]
  %v482 = vld [vmem:[%s0 + $0xe70] sm:$0xff]
  %v483 = vld [vmem:[%s0 + $0xe78] sm:$0xff]
  %v484 = vld [vmem:[%s0 + $0xe80] sm:$0xff]
  %v485 = vld [vmem:[%s0 + $0xe88] sm:$0xff]
  %v486 = vld [vmem:[%s0 + $0xe90] sm:$0xff]
  %v487 = vld [vmem:[%s0 + $0xe98] sm:$0xff]
  %v488 = vld [vmem:[%s0 + $0xea0] sm:$0xff]
  %v489 = vld [vmem:[%s0 + $0xea8] sm:$0xff]
  %v490 = vld [vmem:[%s0 + $0xeb0] sm:$0xff]
  %v491 = vld [vmem:[%s0 + $0xeb8] sm:$0xff]
  %v492 = vld [vmem:[%s0 + $0xec0] sm:$0xff]
  %v493 = vld [vmem:[%s0 + $0xec8] sm:$0xff]
  %v494 = vld [vmem:[%s0 + $0xed0] sm:$0xff]
  %v495 = vld [vmem:[%s0 + $0xed8] sm:$0xff]
  %v496 = vld [vmem:[%s0 + $0xee0] sm:$0xff]
  %v497 = vld [vmem:[%s0 + $0xee8] sm:$0xff]
  %v498 = vld [vmem:[%s0 + $0xef0] sm:$0xff]
  %v499 = vld [vmem:[%s0 + $0xef8] sm:$0xff]
  %v500 = vld [vmem:[%s0 + $0xf00] sm:$0xff]
  %v501 = vld [vmem:[%s0 + $0xf08] sm:$0xff]
  %v502 = vld [vmem:[%s0 + $0xf10] sm:$0xff]
  %v503 = vld [vmem:[%s0 + $0xf18] sm:$0xff]
  %v504 = vld [vmem:[%s0 + $0xf20] sm:$0xff]
  %v505 = vld [vmem:[%s0 + $0xf28] sm:$0xff]
  %v506 = vld [vmem:[%s0 + $0xf30] sm:$0xff]
  %v507 = vld [vmem:[%s0 + $0xf38] sm:$0xff]
  %v508 = vld [vmem:[%s0 + $0xf40] sm:$0xff]
  %v509 = vld [vmem:[%s0 + $0xf48] sm:$0xff]
  %v510 = vld [vmem:[%s0 + $0xf50] sm:$0xff]
  %v511 = vld [vmem:[%s0 + $0xf58] sm:$0xff]
  %v512 = vld [vmem:[%s0 + $0xf60] sm:$0xff]
  %v513 = vld [vmem:[%s0 + $0xf68] sm:$0xff]
  %v514 = vld [vmem:[%s0 + $0xf70] sm:$0xff]
  %v515 = vld [vmem:[%s0 + $0xf78] sm:$0xff]
  %v516 = vld [vmem:[%s0 + $0xf80] sm:$0xff]
  %v517 = vld [vmem:[%s0 + $0xf88] sm:$0xff]
  %v518 = vld [vmem:[%s0 + $0xf90] sm:$0xff]
  %v519 = vld [vmem:[%s0 + $0xf98] sm:$0xff]
  %v520 = vld [vmem:[%s0 + $0xfa0] sm:$0xff]
  %v521 = vld [vmem:[%s0 + $0xfa8] sm:$0xff]
  %v522 = vld [vmem:[%s0 + $0xfb0] sm:$0xff]
  %v523 = vld [vmem:[%s0 + $0xfb8] sm:$0xff]
  %v524 = vld [vmem:[%s0 + $0xfc0] sm:$0xff]
  %v525 = vld [vmem:[%s0 + $0xfc8] sm:$0xff]
  %v526 = vld [vmem:[%s0 + $0xfd0] sm:$0xff]
  %v527 = vld [vmem:[%s0 + $0xfd8] sm:$0xff]
  %v528 = vld [vmem:[%s0 + $0xfe0] sm:$0xff]
  %v529 = vld [vmem:[%s0 + $0xfe8] sm:$0xff]
  %v530 = vld [vmem:[%s0 + $0xff0] sm:$0xff]
  %v531 = vld [vmem:[%s0 + $0xff8] sm:$0xff]
  %v532 = vld [vmem:[%s0 + $0x1000] sm:$0xff]
  %v533 = vld [vmem:[%s0 + $0x1008] sm:$0xff]
  %v534 = vld [vmem:[%s0 + $0x1010] sm:$0xff]
  %v535 = vld [vmem:[%s0 + $0x1018] sm:$0xff]
  %v536 = vld [vmem:[%s0 + $0x1020] sm:$0xff]
  %v537 = vld [vmem:[%s0 + $0x1028] sm:$0xff]
  %v538 = vld [vmem:[%s0 + $0x1030] sm:$0xff]
  %v539 = vld [vmem:[%s0 + $0x1038] sm:$0xff]
  %v540 = vld [vmem:[%s0 + $0x1040] sm:$0xff]
  %v541 = vld [vmem:[%s0 + $0x1048] sm:$0xff]
  %v542 = vld [vmem:[%s0 + $0x1050] sm:$0xff]
  %v543 = vld [vmem:[%s0 + $0x1058] sm:$0xff]
  %v544 = vld [vmem:[%s0 + $0x1060] sm:$0xff]
  %v545 = vld [vmem:[%s0 + $0x1068] sm:$0xff]
  %v546 = vld [vmem:[%s0 + $0x1070] sm:$0xff]
  %v547 = vld [vmem:[%s0 + $0x1078] sm:$0xff]
  %v548 = vld [vmem:[%s0 + $0x1080] sm:$0xff]
  %v549 = vld [vmem:[%s0 + $0x1088] sm:$0xff]
  %v550 = vld [vmem:[%s0 + $0x1090] sm:$0xff]
  %v551 = vld [vmem:[%s0 + $0x1098] sm:$0xff]
  %v552 = vld [vmem:[%s0 + $0x10a0] sm:$0xff]
  %v553 = vld [vmem:[%s0 + $0x10a8] sm:$0xff]
  %v554 = vld [vmem:[%s0 + $0x10b0] sm:$0xff]
  %v555 = vld [vmem:[%s0 + $0x10b8] sm:$0xff]
  %v556 = vld [vmem:[%s0 + $0x10c0] sm:$0xff]
  %v557 = vld [vmem:[%s0 + $0x10c8] sm:$0xff]
  %v558 = vld [vmem:[%s0 + $0x10d0] sm:$0xff]
  %v559 = vld [vmem:[%s0 + $0x10d8] sm:$0xff]
  %v560 = vld [vmem:[%s0 + $0x10e0] sm:$0xff]
  %v561 = vld [vmem:[%s0 + $0x10e8] sm:$0xff]
  %v562 = vld [vmem:[%s0 + $0x10f0] sm:$0xff]
  %v563 = vld [vmem:[%s0 + $0x10f8] sm:$0xff]
  %v564 = vld [vmem:[%s0 + $0x1100] sm:$0xff]
  %v565 = vld [vmem:[%s0 + $0x1108] sm:$0xff]
  %v566 = vld [vmem:[%s0 + $0x1110] sm:$0xff]
  %v567 = vld [vmem:[%s0 + $0x1118] sm:$0xff]
  %v568 = vld [vmem:[%s0 + $0x1120] sm:$0xff]
  %v569 = vld [vmem:[%s0 + $0x1128] sm:$0xff]
  %v570 = vld [vmem:[%s0 + $0x1130] sm:$0xff]
  %v571 = vld [vmem:[%s0 + $0x1138] sm:$0xff]
  %v572 = vld [vmem:[%s0 + $0x1140] sm:$0xff]
  %v573 = vld [vmem:[%s0 + $0x1148] sm:$0xff]
  %v574 = vld [vmem:[%s0 + $0x1150] sm:$0xff]
  %v575 = vld [vmem:[%s0 + $0x1158] sm:$0xff]
  %v576 = vld [vmem:[%s0 + $0x1160] sm:$0xff]
  %v577 = vld [vmem:[%s0 + $0x1168] sm:$0xff]
  %v578 = vld [vmem:[%s0 + $0x1170] sm:$0xff]
  %v579 = vld [vmem:[%s0 + $0x1178] sm:$0xff]
  %v580 = vld [vmem:[%s0 + $0x1180] sm:$0xff]
  %v581 = vld [vmem:[%s0 + $0x1188] sm:$0xff]
  %v582 = vld [vmem:[%s0 + $0x1190] sm:$0xff]
  %v583 = vld [vmem:[%s0 + $0x1198] sm:$0xff]
  %v584 = vld [vmem:[%s0 + $0x11a0] sm:$0xff]
  %v585 = vld [vmem:[%s0 + $0x11a8] sm:$0xff]
  %v586 = vld [vmem:[%s0 + $0x11b0] sm:$0xff]
  %v587 = vld [vmem:[%s0 + $0x11b8] sm:$0xff]
  %v588 = vld [vmem:[%s0 + $0x11c0] sm:$0xff]
  %v589 = vld [vmem:[%s0 + $0x11c8] sm:$0xff]
  %v590 = vld [vmem:[%s0 + $0x11d0] sm:$0xff]
  %v591 = vld [vmem:[%s0 + $0x11d8] sm:$0xff]
  %v592 = vld [vmem:[%s0 + $0x11e0] sm:$0xff]
  %v593 = vld [vmem:[%s0 + $0x11e8] sm:$0xff]
  %v594 = vld [vmem:[%s0 + $0x11f0] sm:$0xff]
  %v595 = vld [vmem:[%s0 + $0x11f8] sm:$0xff]
  %v596 = vld [vmem:[%s0 + $0x1200] sm:$0xff]
  %v597 = vld [vmem:[%s0 + $0x1208] sm:$0xff]
  %v598 = vld [vmem:[%s0 + $0x1210] sm:$0xff]
  %v599 = vld [vmem:[%s0 + $0x1218] sm:$0xff]
  %v600 = vld [vmem:[%s0 + $0x1220] sm:$0xff]
  %v601 = vld [vmem:[%s0 + $0x1228] sm:$0xff]
  %v602 = vld [vmem:[%s0 + $0x1230] sm:$0xff]
  %v603 = vld [vmem:[%s0 + $0x1238] sm:$0xff]
  %v604 = vld [vmem:[%s0 + $0x1240] sm:$0xff]
  %v605 = vld [vmem:[%s0 + $0x1248] sm:$0xff]
  %v606 = vld [vmem:[%s0 + $0x1250] sm:$0xff]
  %v607 = vld [vmem:[%s0 + $0x1258] sm:$0xff]
  %v608 = vld [vmem:[%s0 + $0x1260] sm:$0xff]
  %v609 = vld [vmem:[%s0 + $0x1268] sm:$0xff]
  %v610 = vld [vmem:[%s0 + $0x1270] sm:$0xff]
  %v611 = vld [vmem:[%s0 + $0x1278] sm:$0xff]
  %v612 = vld [vmem:[%s0 + $0x1280] sm:$0xff]
  %v613 = vld [vmem:[%s0 + $0x1288] sm:$0xff]
  %v614 = vld [vmem:[%s0 + $0x1290] sm:$0xff]
  %v615 = vld [vmem:[%s0 + $0x1298] sm:$0xff]
  %v616 = vld [vmem:[%s0 + $0x12a0] sm:$0xff]
  %v617 = vld [vmem:[%s0 + $0x12a8] sm:$0xff]
  %v618 = vld [vmem:[%s0 + $0x12b0] sm:$0xff]
  %v619 = vld [vmem:[%s0 + $0x12b8] sm:$0xff]
  %v620 = vld [vmem:[%s0 + $0x12c0] sm:$0xff]
  %v621 = vld [vmem:[%s0 + $0x12c8] sm:$0xff]
  %v622 = vld [vmem:[%s0 + $0x12d0] sm:$0xff]
  %v623 = vld [vmem:[%s0 + $0x12d8] sm:$0xff]
  %v624 = vld [vmem:[%s0 + $0x12e0] sm:$0xff]
  %v625 = vld [vmem:[%s0 + $0x12e8] sm:$0xff]
  %v626 = vld [vmem:[%s0 + $0x12f0] sm:$0xff]
  %v627 = vld [vmem:[%s0 + $0x12f8] sm:$0xff]
  %v628 = vld [vmem:[%s0 + $0x1300] sm:$0xff]
  %v629 = vld [vmem:[%s0 + $0x1308] sm:$0xff]
  %v630 = vld [vmem:[%s0 + $0x1310] sm:$0xff]
  %v631 = vld [vmem:[%s0 + $0x1318] sm:$0xff]
  %v632 = vld [vmem:[%s0 + $0x1320] sm:$0xff]
  %v633 = vld [vmem:[%s0 + $0x1328] sm:$0xff]
  %v634 = vld [vmem:[%s0 + $0x1330] sm:$0xff]
  %v635 = vld [vmem:[%s0 + $0x1338] sm:$0xff]
  %v636 = vld [vmem:[%s0 + $0x1340] sm:$0xff]
  %v637 = vld [vmem:[%s0 + $0x1348] sm:$0xff]
  %v638 = vld [vmem:[%s0 + $0x1350] sm:$0xff]
  %v639 = vld [vmem:[%s0 + $0x1358] sm:$0xff]
  %v640 = vld [vmem:[%s0 + $0x1360] sm:$0xff]
  %v641 = vld [vmem:[%s0 + $0x1368] sm:$0xff]
  %v642 = vld [vmem:[%s0 + $0x1370] sm:$0xff]
  %v643 = vld [vmem:[%s0 + $0x1378] sm:$0xff]
  %v644 = vld [vmem:[%s0 + $0x1380] sm:$0xff]
  %v645 = vld [vmem:[%s0 + $0x1388] sm:$0xff]
  %v646 = vld [vmem:[%s0 + $0x1390] sm:$0xff]
  %v647 = vld [vmem:[%s0 + $0x1398] sm:$0xff]
  %v648 = vld [vmem:[%s0 + $0x13a0] sm:$0xff]
  %v649 = vld [vmem:[%s0 + $0x13a8] sm:$0xff]
  %v650 = vld [vmem:[%s0 + $0x13b0] sm:$0xff]
  %v651 = vld [vmem:[%s0 + $0x13b8] sm:$0xff]
  %v652 = vld [vmem:[%s0 + $0x13c0] sm:$0xff]
  %v653 = vld [vmem:[%s0 + $0x13c8] sm:$0xff]
  %v654 = vld [vmem:[%s0 + $0x13d0] sm:$0xff]
  %v655 = vld [vmem:[%s0 + $0x13d8] sm:$0xff]
  %v656 = vld [vmem:[%s0 + $0x13e0] sm:$0xff]
  %v657 = vld [vmem:[%s0 + $0x13e8] sm:$0xff]
  %v658 = vld [vmem:[%s0 + $0x13f0] sm:$0xff]
  %v659 = vld [vmem:[%s0 + $0x13f8] sm:$0xff]
  %v660 = vld [vmem:[%s0 + $0x1400] sm:$0xff]
  %v661 = vld [vmem:[%s0 + $0x1408] sm:$0xff]
  %v662 = vld [vmem:[%s0 + $0x1410] sm:$0xff]
  %v663 = vld [vmem:[%s0 + $0x1418] sm:$0xff]
  %v664 = vld [vmem:[%s0 + $0x1420] sm:$0xff]
  %v665 = vld [vmem:[%s0 + $0x1428] sm:$0xff]
  %v666 = vld [vmem:[%s0 + $0x1430] sm:$0xff]
  %v667 = vld [vmem:[%s0 + $0x1438] sm:$0xff]
  %v668 = vld [vmem:[%s0 + $0x1440] sm:$0xff]
  %v669 = vld [vmem:[%s0 + $0x1448] sm:$0xff]
  %v670 = vld [vmem:[%s0 + $0x1450] sm:$0xff]
  %v671 = vld [vmem:[%s0 + $0x1458] sm:$0xff]
  %v672 = vld [vmem:[%s0 + $0x1460] sm:$0xff]
  %v673 = vld [vmem:[%s0 + $0x1468] sm:$0xff]
  %v674 = vld [vmem:[%s0 + $0x1470] sm:$0xff]
  %v675 = vld [vmem:[%s0 + $0x1478] sm:$0xff]
  %v676 = vld [vmem:[%s0 + $0x1480] sm:$0xff]
  %v677 = vld [vmem:[%s0 + $0x1488] sm:$0xff]
  %v678 = vld [vmem:[%s0 + $0x1490] sm:$0xff]
  %v679 = vld [vmem:[%s0 + $0x1498] sm:$0xff]
  %v680 = vld [vmem:[%s0 + $0x14a0] sm:$0xff]
  %v681 = vld [vmem:[%s0 + $0x14a8] sm:$0xff]
  %v682 = vld [vmem:[%s0 + $0x14b0] sm:$0xff]
  %v683 = vld [vmem:[%s0 + $0x14b8] sm:$0xff]
  %v684 = vld [vmem:[%s0 + $0x14c0] sm:$0xff]
  %v685 = vld [vmem:[%s0 + $0x14c8] sm:$0xff]
  %v686 = vld [vmem:[%s0 + $0x14d0] sm:$0xff]
  %v687 = vld [vmem:[%s0 + $0x14d8] sm:$0xff]
  %v688 = vld [vmem:[%s0 + $0x14e0] sm:$0xff]
  %v689 = vld [vmem:[%s0 + $0x14e8] sm:$0xff]
  %v690 = vld [vmem:[%s0 + $0x14f0] sm:$0xff]
  %v691 = vld [vmem:[%s0 + $0x14f8] sm:$0xff]
  %v692 = vld [vmem:[%s0 + $0x1500] sm:$0xff]
  %v693 = vld [vmem:[%s0 + $0x1508] sm:$0xff]
  %v694 = vld [vmem:[%s0 + $0x1510] sm:$0xff]
  %v695 = vld [vmem:[%s0 + $0x1518] sm:$0xff]
  %v696 = vld [vmem:[%s0 + $0x1520] sm:$0xff]
  %v697 = vld [vmem:[%s0 + $0x1528] sm:$0xff]
  %v698 = vld [vmem:[%s0 + $0x1530] sm:$0xff]
  %v699 = vld [vmem:[%s0 + $0x1538] sm:$0xff]
  %v700 = vld [vmem:[%s0 + $0x1540] sm:$0xff]
  %v701 = vld [vmem:[%s0 + $0x1548] sm:$0xff]
  %v702 = vld [vmem:[%s0 + $0x1550] sm:$0xff]
  %v703 = vld [vmem:[%s0 + $0x1558] sm:$0xff]
  %v704 = vld [vmem:[%s0 + $0x1560] sm:$0xff]
  %v705 = vld [vmem:[%s0 + $0x1568] sm:$0xff]
  %v706 = vld [vmem:[%s0 + $0x1570] sm:$0xff]
  %v707 = vld [vmem:[%s0 + $0x1578] sm:$0xff]
  %v708 = vld [vmem:[%s0 + $0x1580] sm:$0xff]
  %v709 = vld [vmem:[%s0 + $0x1588] sm:$0xff]
  %v710 = vld [vmem:[%s0 + $0x1590] sm:$0xff]
  %v711 = vld [vmem:[%s0 + $0x1598] sm:$0xff]
  %v712 = vld [vmem:[%s0 + $0x15a0] sm:$0xff]
  %v713 = vld [vmem:[%s0 + $0x15a8] sm:$0xff]
  %v714 = vld [vmem:[%s0 + $0x15b0] sm:$0xff]
  %v715 = vld [vmem:[%s0 + $0x15b8] sm:$0xff]
  %v716 = vld [vmem:[%s0 + $0x15c0] sm:$0xff]
  %v717 = vld [vmem:[%s0 + $0x15c8] sm:$0xff]
  %v718 = vld [vmem:[%s0 + $0x15d0] sm:$0xff]
  %v719 = vld [vmem:[%s0 + $0x15d8] sm:$0xff]
  %v720 = vld [vmem:[%s0 + $0x15e0] sm:$0xff]
  %v721 = vld [vmem:[%s0 + $0x15e8] sm:$0xff]
  %v722 = vld [vmem:[%s0 + $0x15f0] sm:$0xff]
  %v723 = vld [vmem:[%s0 + $0x15f8] sm:$0xff]
  %v724 = vld [vmem:[%s0 + $0x1600] sm:$0xff]
  %v725 = vld [vmem:[%s0 + $0x1608] sm:$0xff]
  %v726 = vld [vmem:[%s0 + $0x1610] sm:$0xff]
  %v727 = vld [vmem:[%s0 + $0x1618] sm:$0xff]
  %v728 = vld [vmem:[%s0 + $0x1620] sm:$0xff]
  %v729 = vld [vmem:[%s0 + $0x1628] sm:$0xff]
  %v730 = vld [vmem:[%s0 + $0x1630] sm:$0xff]
  %v731 = vld [vmem:[%s0 + $0x1638] sm:$0xff]
  %v732 = vld [vmem:[%s0 + $0x1640] sm:$0xff]
  %v733 = vld [vmem:[%s0 + $0x1648] sm:$0xff]
  %v734 = vld [vmem:[%s0 + $0x1650] sm:$0xff]
  %v735 = vld [vmem:[%s0 + $0x1658] sm:$0xff]
  %v736 = vld [vmem:[%s0 + $0x1660] sm:$0xff]
  %v737 = vld [vmem:[%s0 + $0x1668] sm:$0xff]
  %v738 = vld [vmem:[%s0 + $0x1670] sm:$0xff]
  %v739 = vld [vmem:[%s0 + $0x1678] sm:$0xff]
  %v740 = vld [vmem:[%s0 + $0x1680] sm:$0xff]
  %v741 = vld [vmem:[%s0 + $0x1688] sm:$0xff]
  %v742 = vld [vmem:[%s0 + $0x1690] sm:$0xff]
  %v743 = vld [vmem:[%s0 + $0x1698] sm:$0xff]
  %v744 = vld [vmem:[%s0 + $0x16a0] sm:$0xff]
  %v745 = vld [vmem:[%s0 + $0x16a8] sm:$0xff]
  %v746 = vld [vmem:[%s0 + $0x16b0] sm:$0xff]
  %v747 = vld [vmem:[%s0 + $0x16b8] sm:$0xff]
  %v748 = vld [vmem:[%s0 + $0x16c0] sm:$0xff]
  %v749 = vld [vmem:[%s0 + $0x16c8] sm:$0xff]
  %v750 = vld [vmem:[%s0 + $0x16d0] sm:$0xff]
  %v751 = vld [vmem:[%s0 + $0x16d8] sm:$0xff]
  %v752 = vld [vmem:[%s0 + $0x16e0] sm:$0xff]
  %v753 = vld [vmem:[%s0 + $0x16e8] sm:$0xff]
  %v754 = vld [vmem:[%s0 + $0x16f0] sm:$0xff]
  %v755 = vld [vmem:[%s0 + $0x16f8] sm:$0xff]
  %v756 = vld [vmem:[%s0 + $0x1700] sm:$0xff]
  %v757 = vld [vmem:[%s0 + $0x1708] sm:$0xff]
  %v758 = vld [vmem:[%s0 + $0x1710] sm:$0xff]
  %v759 = vld [vmem:[%s0 + $0x1718] sm:$0xff]
  %v760 = vld [vmem:[%s0 + $0x1720] sm:$0xff]
  %v761 = vld [vmem:[%s0 + $0x1728] sm:$0xff]
  %v762 = vld [vmem:[%s0 + $0x1730] sm:$0xff]
  %v763 = vld [vmem:[%s0 + $0x1738] sm:$0xff]
  %v764 = vld [vmem:[%s0 + $0x1740] sm:$0xff]
  %v765 = vld [vmem:[%s0 + $0x1748] sm:$0xff]
  %v766 = vld [vmem:[%s0 + $0x1750] sm:$0xff]
  %v767 = vld [vmem:[%s0 + $0x1758] sm:$0xff]
  %v768 = vld [vmem:[%s0 + $0x1760] sm:$0xff]
  %v769 = vld [vmem:[%s0 + $0x1768] sm:$0xff]
  %v770 = vld [vmem:[%s0 + $0x1770] sm:$0xff]
  %v771 = vld [vmem:[%s0 + $0x1778] sm:$0xff]
  %v772 = vld [vmem:[%s0 + $0x1780] sm:$0xff]
  %v773 = vld [vmem:[%s0 + $0x1788] sm:$0xff]
  %v774 = vld [vmem:[%s0 + $0x1790] sm:$0xff]
  %v775 = vld [vmem:[%s0 + $0x1798] sm:$0xff]
  %v776 = vld [vmem:[%s0 + $0x17a0] sm:$0xff]
  %v777 = vld [vmem:[%s0 + $0x17a8] sm:$0xff]
  %v778 = vld [vmem:[%s0 + $0x17b0] sm:$0xff]
  %v779 = vld [vmem:[%s0 + $0x17b8] sm:$0xff]
  %v780 = vld [vmem:[%s0 + $0x17c0] sm:$0xff]
  %v781 = vld [vmem:[%s0 + $0x17c8] sm:$0xff]
  %v782 = vld [vmem:[%s0 + $0x17d0] sm:$0xff]
  %v783 = vld [vmem:[%s0 + $0x17d8] sm:$0xff]
  %v784 = vld [vmem:[%s0 + $0x17e0] sm:$0xff]
  %v785 = vld [vmem:[%s0 + $0x17e8] sm:$0xff]
  %v786 = vld [vmem:[%s0 + $0x17f0] sm:$0xff]
  %v787 = vld [vmem:[%s0 + $0x17f8] sm:$0xff]
  %v788 = vld [vmem:[%s0 + $0x1800] sm:$0xff]
  %v789 = vld [vmem:[%s0 + $0x1808] sm:$0xff]
  %v790 = vld [vmem:[%s0 + $0x1810] sm:$0xff]
  %v791 = vld [vmem:[%s0 + $0x1818] sm:$0xff]
  %v792 = vld [vmem:[%s0 + $0x1820] sm:$0xff]
  %v793 = vld [vmem:[%s0 + $0x1828] sm:$0xff]
  %v794 = vld [vmem:[%s0 + $0x1830] sm:$0xff]
  %v795 = vld [vmem:[%s0 + $0x1838] sm:$0xff]
  %v796 = vld [vmem:[%s0 + $0x1840] sm:$0xff]
  %v797 = vld [vmem:[%s0 + $0x1848] sm:$0xff]
  %v798 = vld [vmem:[%s0 + $0x1850] sm:$0xff]
  %v799 = vld [vmem:[%s0 + $0x1858] sm:$0xff]
  %v800 = vld [vmem:[%s0 + $0x1860] sm:$0xff]
  %v801 = vld [vmem:[%s0 + $0x1868] sm:$0xff]
  %v802 = vld [vmem:[%s0 + $0x1870] sm:$0xff]
  %v803 = vld [vmem:[%s0 + $0x1878] sm:$0xff]
  %v804 = vld [vmem:[%s1] sm:$0xff]
  %v805 = vld [vmem:[%s1 + $0x8] sm:$0xff]
  %v806 = vld [vmem:[%s1 + $0x10] sm:$0xff]
  %v807 = vld [vmem:[%s1 + $0x18] sm:$0xff]
  %v808 = vld [vmem:[%s1 + $0x20] sm:$0xff]
  %v809 = vld [vmem:[%s1 + $0x28] sm:$0xff]
  %v810 = vld [vmem:[%s1 + $0x30] sm:$0xff]
  %v811 = vld [vmem:[%s1 + $0x38] sm:$0xff]
  %v812 = vld [vmem:[%s1 + $0x40] sm:$0xff]
  %v813 = vld [vmem:[%s1 + $0x48] sm:$0xff]
  %v814 = vld [vmem:[%s1 + $0x50] sm:$0xff]
  %v815 = vld [vmem:[%s1 + $0x58] sm:$0xff]
  %v816 = vld [vmem:[%s1 + $0x60] sm:$0xff]
  %v817 = vld [vmem:[%s1 + $0x68] sm:$0xff]
  %v818 = vld [vmem:[%s1 + $0x70] sm:$0xff]
  %v819 = vld [vmem:[%s1 + $0x78] sm:$0xff]
  %v820 = vld [vmem:[%s1 + $0x80] sm:$0xff]
  %v821 = vld [vmem:[%s1 + $0x88] sm:$0xff]
  %v822 = vld [vmem:[%s1 + $0x90] sm:$0xff]
  %v823 = vld [vmem:[%s1 + $0x98] sm:$0xff]
  %v824 = vld [vmem:[%s1 + $0xa0] sm:$0xff]
  %v825 = vld [vmem:[%s1 + $0xa8] sm:$0xff]
  %v826 = vld [vmem:[%s1 + $0xb0] sm:$0xff]
  %v827 = vld [vmem:[%s1 + $0xb8] sm:$0xff]
  %v828 = vld [vmem:[%s1 + $0xc0] sm:$0xff]
  %v829 = vld [vmem:[%s1 + $0xc8] sm:$0xff]
  %v830 = vld [vmem:[%s1 + $0xd0] sm:$0xff]
  %v831 = vld [vmem:[%s1 + $0xd8] sm:$0xff]
  %v832 = vld [vmem:[%s1 + $0xe0] sm:$0xff]
  %v833 = vld [vmem:[%s1 + $0xe8] sm:$0xff]
  %v834 = vld [vmem:[%s1 + $0xf0] sm:$0xff]
  %v835 = vld [vmem:[%s1 + $0xf8] sm:$0xff]
  %v836 = vld [vmem:[%s1 + $0x100] sm:$0xff]
  %v837 = vld [vmem:[%s1 + $0x108] sm:$0xff]
  %v838 = vld [vmem:[%s1 + $0x110] sm:$0xff]
  %v839 = vld [vmem:[%s1 + $0x118] sm:$0xff]
  %v840 = vld [vmem:[%s1 + $0x120] sm:$0xff]
  %v841 = vld [vmem:[%s1 + $0x128] sm:$0xff]
  %v842 = vld [vmem:[%s1 + $0x130] sm:$0xff]
  %v843 = vld [vmem:[%s1 + $0x138] sm:$0xff]
  %v844 = vld [vmem:[%s1 + $0x140] sm:$0xff]
  %v845 = vld [vmem:[%s1 + $0x148] sm:$0xff]
  %v846 = vld [vmem:[%s1 + $0x150] sm:$0xff]
  %v847 = vld [vmem:[%s1 + $0x158] sm:$0xff]
  %v848 = vld [vmem:[%s1 + $0x160] sm:$0xff]
  %v849 = vld [vmem:[%s1 + $0x168] sm:$0xff]
  %v850 = vld [vmem:[%s1 + $0x170] sm:$0xff]
  %v851 = vld [vmem:[%s1 + $0x178] sm:$0xff]
  %v852 = vld [vmem:[%s1 + $0x180] sm:$0xff]
  %v853 = vld [vmem:[%s1 + $0x188] sm:$0xff]
  %v854 = vld [vmem:[%s1 + $0x190] sm:$0xff]
  %v855 = vld [vmem:[%s1 + $0x198] sm:$0xff]
  %v856 = vld [vmem:[%s1 + $0x1a0] sm:$0xff]
  %v857 = vld [vmem:[%s1 + $0x1a8] sm:$0xff]
  %v858 = vld [vmem:[%s1 + $0x1b0] sm:$0xff]
  %v859 = vld [vmem:[%s1 + $0x1b8] sm:$0xff]
  %v860 = vld [vmem:[%s1 + $0x1c0] sm:$0xff]
  %v861 = vld [vmem:[%s1 + $0x1c8] sm:$0xff]
  %v862 = vld [vmem:[%s1 + $0x1d0] sm:$0xff]
  %v863 = vld [vmem:[%s1 + $0x1d8] sm:$0xff]
  %v864 = vld [vmem:[%s1 + $0x1e0] sm:$0xff]
  %v865 = vld [vmem:[%s1 + $0x1e8] sm:$0xff]
  %v866 = vld [vmem:[%s1 + $0x1f0] sm:$0xff]
  %v867 = vld [vmem:[%s1 + $0x1f8] sm:$0xff]
  %v868 = vld [vmem:[%s1 + $0x200] sm:$0xff]
  %v869 = vld [vmem:[%s1 + $0x208] sm:$0xff]
  %v870 = vld [vmem:[%s1 + $0x210] sm:$0xff]
  %v871 = vld [vmem:[%s1 + $0x218] sm:$0xff]
  %v872 = vld [vmem:[%s1 + $0x220] sm:$0xff]
  %v873 = vld [vmem:[%s1 + $0x228] sm:$0xff]
  %v874 = vld [vmem:[%s1 + $0x230] sm:$0xff]
  %v875 = vld [vmem:[%s1 + $0x238] sm:$0xff]
  %v876 = vld [vmem:[%s1 + $0x240] sm:$0xff]
  %v877 = vld [vmem:[%s1 + $0x248] sm:$0xff]
  %v878 = vld [vmem:[%s1 + $0x250] sm:$0xff]
  %v879 = vld [vmem:[%s1 + $0x258] sm:$0xff]
  %v880 = vld [vmem:[%s1 + $0x260] sm:$0xff]
  %v881 = vld [vmem:[%s1 + $0x268] sm:$0xff]
  %v882 = vld [vmem:[%s1 + $0x270] sm:$0xff]
  %v883 = vld [vmem:[%s1 + $0x278] sm:$0xff]
  %v884 = vld [vmem:[%s1 + $0x280] sm:$0xff]
  %v885 = vld [vmem:[%s1 + $0x288] sm:$0xff]
  %v886 = vld [vmem:[%s1 + $0x290] sm:$0xff]
  %v887 = vld [vmem:[%s1 + $0x298] sm:$0xff]
  %v888 = vld [vmem:[%s1 + $0x2a0] sm:$0xff]
  %v889 = vld [vmem:[%s1 + $0x2a8] sm:$0xff]
  %v890 = vld [vmem:[%s1 + $0x2b0] sm:$0xff]
  %v891 = vld [vmem:[%s1 + $0x2b8] sm:$0xff]
  %v892 = vld [vmem:[%s1 + $0x2c0] sm:$0xff]
  %v893 = vld [vmem:[%s1 + $0x2c8] sm:$0xff]
  %v894 = vld [vmem:[%s1 + $0x2d0] sm:$0xff]
  %v895 = vld [vmem:[%s1 + $0x2d8] sm:$0xff]
  %v896 = vld [vmem:[%s1 + $0x2e0] sm:$0xff]
  %v897 = vld [vmem:[%s1 + $0x2e8] sm:$0xff]
  %v898 = vld [vmem:[%s1 + $0x2f0] sm:$0xff]
  %v899 = vld [vmem:[%s1 + $0x2f8] sm:$0xff]
  %v900 = vld [vmem:[%s1 + $0x300] sm:$0xff]
  %v901 = vld [vmem:[%s1 + $0x308] sm:$0xff]
  %v902 = vld [vmem:[%s1 + $0x310] sm:$0xff]
  %v903 = vld [vmem:[%s1 + $0x318] sm:$0xff]
  %v904 = vld [vmem:[%s1 + $0x320] sm:$0xff]
  %v905 = vld [vmem:[%s1 + $0x328] sm:$0xff]
  %v906 = vld [vmem:[%s1 + $0x330] sm:$0xff]
  %v907 = vld [vmem:[%s1 + $0x338] sm:$0xff]
  %v908 = vld [vmem:[%s1 + $0x340] sm:$0xff]
  %v909 = vld [vmem:[%s1 + $0x348] sm:$0xff]
  %v910 = vld [vmem:[%s1 + $0x350] sm:$0xff]
  %v911 = vld [vmem:[%s1 + $0x358] sm:$0xff]
  %v912 = vld [vmem:[%s1 + $0x360] sm:$0xff]
  %v913 = vld [vmem:[%s1 + $0x368] sm:$0xff]
  %v914 = vld [vmem:[%s1 + $0x370] sm:$0xff]
  %v915 = vld [vmem:[%s1 + $0x378] sm:$0xff]
  %v916 = vld [vmem:[%s1 + $0x380] sm:$0xff]
  %v917 = vld [vmem:[%s1 + $0x388] sm:$0xff]
  %v918 = vld [vmem:[%s1 + $0x390] sm:$0xff]
  %v919 = vld [vmem:[%s1 + $0x398] sm:$0xff]
  %v920 = vld [vmem:[%s1 + $0x3a0] sm:$0xff]
  %v921 = vld [vmem:[%s1 + $0x3a8] sm:$0xff]
  %v922 = vld [vmem:[%s1 + $0x3b0] sm:$0xff]
  %v923 = vld [vmem:[%s1 + $0x3b8] sm:$0xff]
  %v924 = vld [vmem:[%s1 + $0x3c0] sm:$0xff]
  %v925 = vld [vmem:[%s1 + $0x3c8] sm:$0xff]
  %v926 = vld [vmem:[%s1 + $0x3d0] sm:$0xff]
  %v927 = vld [vmem:[%s1 + $0x3d8] sm:$0xff]
  %v928 = vld [vmem:[%s1 + $0x3e0] sm:$0xff]
  %v929 = vld [vmem:[%s1 + $0x3e8] sm:$0xff]
  %v930 = vld [vmem:[%s1 + $0x3f0] sm:$0xff]
  %v931 = vld [vmem:[%s1 + $0x3f8] sm:$0xff]
  %v932 = vld [vmem:[%s1 + $0x400] sm:$0xff]
  %v933 = vld [vmem:[%s1 + $0x408] sm:$0xff]
  %v934 = vld [vmem:[%s1 + $0x410] sm:$0xff]
  %v935 = vld [vmem:[%s1 + $0x418] sm:$0xff]
  %v936 = vld [vmem:[%s1 + $0x420] sm:$0xff]
  %v937 = vld [vmem:[%s1 + $0x428] sm:$0xff]
  %v938 = vld [vmem:[%s1 + $0x430] sm:$0xff]
  %v939 = vld [vmem:[%s1 + $0x438] sm:$0xff]
  %v940 = vld [vmem:[%s1 + $0x440] sm:$0xff]
  %v941 = vld [vmem:[%s1 + $0x448] sm:$0xff]
  %v942 = vld [vmem:[%s1 + $0x450] sm:$0xff]
  %v943 = vld [vmem:[%s1 + $0x458] sm:$0xff]
  %v944 = vld [vmem:[%s1 + $0x460] sm:$0xff]
  %v945 = vld [vmem:[%s1 + $0x468] sm:$0xff]
  %v946 = vld [vmem:[%s1 + $0x470] sm:$0xff]
  %v947 = vld [vmem:[%s1 + $0x478] sm:$0xff]
  %v948 = vld [vmem:[%s1 + $0x480] sm:$0xff]
  %v949 = vld [vmem:[%s1 + $0x488] sm:$0xff]
  %v950 = vld [vmem:[%s1 + $0x490] sm:$0xff]
  %v951 = vld [vmem:[%s1 + $0x498] sm:$0xff]
  %v952 = vld [vmem:[%s1 + $0x4a0] sm:$0xff]
  %v953 = vld [vmem:[%s1 + $0x4a8] sm:$0xff]
  %v954 = vld [vmem:[%s1 + $0x4b0] sm:$0xff]
  %v955 = vld [vmem:[%s1 + $0x4b8] sm:$0xff]
  %v956 = vld [vmem:[%s1 + $0x4c0] sm:$0xff]
  %v957 = vld [vmem:[%s1 + $0x4c8] sm:$0xff]
  %v958 = vld [vmem:[%s1 + $0x4d0] sm:$0xff]
  %v959 = vld [vmem:[%s1 + $0x4d8] sm:$0xff]
  %v960 = vld [vmem:[%s1 + $0x4e0] sm:$0xff]
  %v961 = vld [vmem:[%s1 + $0x4e8] sm:$0xff]
  %v962 = vld [vmem:[%s1 + $0x4f0] sm:$0xff]
  %v963 = vld [vmem:[%s1 + $0x4f8] sm:$0xff]
  %v964 = vld [vmem:[%s1 + $0x500] sm:$0xff]
  %v965 = vld [vmem:[%s1 + $0x508] sm:$0xff]
  %v966 = vld [vmem:[%s1 + $0x510] sm:$0xff]
  %v967 = vld [vmem:[%s1 + $0x518] sm:$0xff]
  %v968 = vld [vmem:[%s1 + $0x520] sm:$0xff]
  %v969 = vld [vmem:[%s1 + $0x528] sm:$0xff]
  %v970 = vld [vmem:[%s1 + $0x530] sm:$0xff]
  %v971 = vld [vmem:[%s1 + $0x538] sm:$0xff]
  %v972 = vld [vmem:[%s1 + $0x540] sm:$0xff]
  %v973 = vld [vmem:[%s1 + $0x548] sm:$0xff]
  %v974 = vld [vmem:[%s1 + $0x550] sm:$0xff]
  %v975 = vld [vmem:[%s1 + $0x558] sm:$0xff]
  %v976 = vld [vmem:[%s1 + $0x560] sm:$0xff]
  %v977 = vld [vmem:[%s1 + $0x568] sm:$0xff]
  %v978 = vld [vmem:[%s1 + $0x570] sm:$0xff]
  %v979 = vld [vmem:[%s1 + $0x578] sm:$0xff]
  %v980 = vld [vmem:[%s1 + $0x580] sm:$0xff]
  %v981 = vld [vmem:[%s1 + $0x588] sm:$0xff]
  %v982 = vld [vmem:[%s1 + $0x590] sm:$0xff]
  %v983 = vld [vmem:[%s1 + $0x598] sm:$0xff]
  %v984 = vld [vmem:[%s1 + $0x5a0] sm:$0xff]
  %v985 = vld [vmem:[%s1 + $0x5a8] sm:$0xff]
  %v986 = vld [vmem:[%s1 + $0x5b0] sm:$0xff]
  %v987 = vld [vmem:[%s1 + $0x5b8] sm:$0xff]
  %v988 = vld [vmem:[%s1 + $0x5c0] sm:$0xff]
  %v989 = vld [vmem:[%s1 + $0x5c8] sm:$0xff]
  %v990 = vld [vmem:[%s1 + $0x5d0] sm:$0xff]
  %v991 = vld [vmem:[%s1 + $0x5d8] sm:$0xff]
  %v992 = vld [vmem:[%s1 + $0x5e0] sm:$0xff]
  %v993 = vld [vmem:[%s1 + $0x5e8] sm:$0xff]
  %v994 = vld [vmem:[%s1 + $0x5f0] sm:$0xff]
  %v995 = vld [vmem:[%s1 + $0x5f8] sm:$0xff]
  %v996 = vld [vmem:[%s1 + $0x600] sm:$0xff]
  %v997 = vld [vmem:[%s1 + $0x608] sm:$0xff]
  %v998 = vld [vmem:[%s1 + $0x610] sm:$0xff]
  %v999 = vld [vmem:[%s1 + $0x618] sm:$0xff]
  %v1000 = vld [vmem:[%s1 + $0x620] sm:$0xff]
  %v1001 = vld [vmem:[%s1 + $0x628] sm:$0xff]
  %v1002 = vld [vmem:[%s1 + $0x630] sm:$0xff]
  %v1003 = vld [vmem:[%s1 + $0x638] sm:$0xff]
  %v1004 = vld [vmem:[%s1 + $0x640] sm:$0xff]
  %v1005 = vld [vmem:[%s1 + $0x648] sm:$0xff]
  %v1006 = vld [vmem:[%s1 + $0x650] sm:$0xff]
  %v1007 = vld [vmem:[%s1 + $0x658] sm:$0xff]
  %v1008 = vld [vmem:[%s1 + $0x660] sm:$0xff]
  %v1009 = vld [vmem:[%s1 + $0x668] sm:$0xff]
  %v1010 = vld [vmem:[%s1 + $0x670] sm:$0xff]
  %v1011 = vld [vmem:[%s1 + $0x678] sm:$0xff]
  %v1012 = vld [vmem:[%s1 + $0x680] sm:$0xff]
  %v1013 = vld [vmem:[%s1 + $0x688] sm:$0xff]
  %v1014 = vld [vmem:[%s1 + $0x690] sm:$0xff]
  %v1015 = vld [vmem:[%s1 + $0x698] sm:$0xff]
  %v1016 = vld [vmem:[%s1 + $0x6a0] sm:$0xff]
  %v1017 = vld [vmem:[%s1 + $0x6a8] sm:$0xff]
  %v1018 = vld [vmem:[%s1 + $0x6b0] sm:$0xff]
  %v1019 = vld [vmem:[%s1 + $0x6b8] sm:$0xff]
  %v1020 = vld [vmem:[%s1 + $0x6c0] sm:$0xff]
  %v1021 = vld [vmem:[%s1 + $0x6c8] sm:$0xff]
  %v1022 = vld [vmem:[%s1 + $0x6d0] sm:$0xff]
  %v1023 = vld [vmem:[%s1 + $0x6d8] sm:$0xff]
  %v1024 = vld [vmem:[%s1 + $0x6e0] sm:$0xff]
  %v1025 = vld [vmem:[%s1 + $0x6e8] sm:$0xff]
  %v1026 = vld [vmem:[%s1 + $0x6f0] sm:$0xff]
  %v1027 = vld [vmem:[%s1 + $0x6f8] sm:$0xff]
  %v1028 = vld [vmem:[%s1 + $0x700] sm:$0xff]
  %v1029 = vld [vmem:[%s1 + $0x708] sm:$0xff]
  %v1030 = vld [vmem:[%s1 + $0x710] sm:$0xff]
  %v1031 = vld [vmem:[%s1 + $0x718] sm:$0xff]
  %v1032 = vld [vmem:[%s1 + $0x720] sm:$0xff]
  %v1033 = vld [vmem:[%s1 + $0x728] sm:$0xff]
  %v1034 = vld [vmem:[%s1 + $0x730] sm:$0xff]
  %v1035 = vld [vmem:[%s1 + $0x738] sm:$0xff]
  %v1036 = vld [vmem:[%s1 + $0x740] sm:$0xff]
  %v1037 = vld [vmem:[%s1 + $0x748] sm:$0xff]
  %v1038 = vld [vmem:[%s1 + $0x750] sm:$0xff]
  %v1039 = vld [vmem:[%s1 + $0x758] sm:$0xff]
  %v1040 = vld [vmem:[%s1 + $0x760] sm:$0xff]
  %v1041 = vld [vmem:[%s1 + $0x768] sm:$0xff]
  %v1042 = vld [vmem:[%s1 + $0x770] sm:$0xff]
  %v1043 = vld [vmem:[%s1 + $0x778] sm:$0xff]
  %v1044 = vld [vmem:[%s1 + $0x780] sm:$0xff]
  %v1045 = vld [vmem:[%s1 + $0x788] sm:$0xff]
  %v1046 = vld [vmem:[%s1 + $0x790] sm:$0xff]
  %v1047 = vld [vmem:[%s1 + $0x798] sm:$0xff]
  %v1048 = vld [vmem:[%s1 + $0x7a0] sm:$0xff]
  %v1049 = vld [vmem:[%s1 + $0x7a8] sm:$0xff]
  %v1050 = vld [vmem:[%s1 + $0x7b0] sm:$0xff]
  %v1051 = vld [vmem:[%s1 + $0x7b8] sm:$0xff]
  %v1052 = vld [vmem:[%s1 + $0x7c0] sm:$0xff]
  %v1053 = vld [vmem:[%s1 + $0x7c8] sm:$0xff]
  %v1054 = vld [vmem:[%s1 + $0x7d0] sm:$0xff]
  %v1055 = vld [vmem:[%s1 + $0x7d8] sm:$0xff]
  %v1056 = vld [vmem:[%s1 + $0x7e0] sm:$0xff]
  %v1057 = vld [vmem:[%s1 + $0x7e8] sm:$0xff]
  %v1058 = vld [vmem:[%s1 + $0x7f0] sm:$0xff]
  %v1059 = vld [vmem:[%s1 + $0x7f8] sm:$0xff]
  %v1060 = vld [vmem:[%s2] sm:$0x1]
  %v1062 = vperm.slane %v1060, 0
  %1064 = vmatpush.msra.mxu0 %v819
  %1065 = vmatpush.msra.mxu0 %v818
  %1066 = vmatpush.msra.mxu0 %v817
  %1067 = vmatpush.msra.mxu0 %v816
  %1068 = vmatpush.msra.mxu0 %v815
  %1069 = vmatpush.msra.mxu0 %v814
  %1070 = vmatpush.msra.mxu0 %v813
  %1071 = vmatpush.msra.mxu0 %v812
  %1072 = vmatpush.msra.mxu0 %v811
  %1073 = vmatpush.msra.mxu0 %v810
  %1074 = vmatpush.msra.mxu0 %v809
  %1075 = vmatpush.msra.mxu0 %v808
  %1076 = vmatpush.msra.mxu0 %v807
  %1077 = vmatpush.msra.mxu0 %v806
  %1078 = vmatpush.msra.mxu0 %v805
  %1079 = vmatpush.msra.mxu0 %v804
  %1080 = vmatmul.f32.gmra.mxu0 %v20
  %v1081 = vpop.f32.mrf.mxu0
  %v1082 = vadd.f32 %v1062, %v1081
  %1083 = vmatmul.f32.gmra.mxu0 %v36
  %v1084 = vpop.f32.mrf.mxu0
  %v1085 = vadd.f32 %v1062, %v1084
  %1086 = vmatmul.f32.gmra.mxu0 %v52
  %v1087 = vpop.f32.mrf.mxu0
  %v1088 = vadd.f32 %v1062, %v1087
  %1089 = vmatmul.f32.gmra.mxu0 %v68
  %v1090 = vpop.f32.mrf.mxu0
  %v1091 = vadd.f32 %v1062, %v1090
  %1092 = vmatmul.f32.gmra.mxu0 %v84
  %v1093 = vpop.f32.mrf.mxu0
  %v1094 = vadd.f32 %v1062, %v1093
  %1095 = vmatmul.f32.gmra.mxu0 %v100
  %v1096 = vpop.f32.mrf.mxu0
  %v1097 = vadd.f32 %v1062, %v1096
  %1098 = vmatmul.f32.gmra.mxu0 %v116
  %v1099 = vpop.f32.mrf.mxu0
  %v1100 = vadd.f32 %v1062, %v1099
  %1101 = vmatmul.f32.gmra.mxu0 %v132
  %v1102 = vpop.f32.mrf.mxu0
  %v1103 = vadd.f32 %v1062, %v1102
  %1104 = vmatmul.f32.gmra.mxu0 %v148
  %v1105 = vpop.f32.mrf.mxu0
  %v1106 = vadd.f32 %v1062, %v1105
  %1107 = vmatmul.f32.gmra.mxu0 %v164
  %v1108 = vpop.f32.mrf.mxu0
  %v1109 = vadd.f32 %v1062, %v1108
  %1110 = vmatmul.f32.gmra.mxu0 %v180
  %v1111 = vpop.f32.mrf.mxu0
  %v1112 = vadd.f32 %v1062, %v1111
  %1113 = vmatmul.f32.gmra.mxu0 %v196
  %v1114 = vpop.f32.mrf.mxu0
  %v1115 = vadd.f32 %v1062, %v1114
  %1116 = vmatmul.f32.gmra.mxu0 %v212
  %v1117 = vpop.f32.mrf.mxu0
  %v1118 = vadd.f32 %v1062, %v1117
  %1119 = vmatmul.f32.gmra.mxu0 %v228
  %v1120 = vpop.f32.mrf.mxu0
  %v1121 = vadd.f32 %v1062, %v1120
  %1122 = vmatmul.f32.gmra.mxu0 %v244
  %v1123 = vpop.f32.mrf.mxu0
  %v1124 = vadd.f32 %v1062, %v1123
  %1125 = vmatmul.f32.gmra.mxu0 %v260
  %v1126 = vpop.f32.mrf.mxu0
  %v1127 = vadd.f32 %v1062, %v1126
  %1128 = vmatmul.f32.gmra.mxu0 %v276
  %v1129 = vpop.f32.mrf.mxu0
  %v1130 = vadd.f32 %v1062, %v1129
  %1131 = vmatmul.f32.gmra.mxu0 %v292
  %v1132 = vpop.f32.mrf.mxu0
  %v1133 = vadd.f32 %v1062, %v1132
  %1134 = vmatmul.f32.gmra.mxu0 %v308
  %v1135 = vpop.f32.mrf.mxu0
  %v1136 = vadd.f32 %v1062, %v1135
  %1137 = vmatmul.f32.gmra.mxu0 %v324
  %v1138 = vpop.f32.mrf.mxu0
  %v1139 = vadd.f32 %v1062, %v1138
  %1140 = vmatmul.f32.gmra.mxu0 %v340
  %v1141 = vpop.f32.mrf.mxu0
  %v1142 = vadd.f32 %v1062, %v1141
  %1143 = vmatmul.f32.gmra.mxu0 %v356
  %v1144 = vpop.f32.mrf.mxu0
  %v1145 = vadd.f32 %v1062, %v1144
  %1146 = vmatmul.f32.gmra.mxu0 %v372
  %v1147 = vpop.f32.mrf.mxu0
  %v1148 = vadd.f32 %v1062, %v1147
  %1149 = vmatmul.f32.gmra.mxu0 %v388
  %v1150 = vpop.f32.mrf.mxu0
  %v1151 = vadd.f32 %v1062, %v1150
  %1152 = vmatmul.f32.gmra.mxu0 %v404
  %v1153 = vpop.f32.mrf.mxu0
  %v1154 = vadd.f32 %v1062, %v1153
  %1155 = vmatmul.f32.gmra.mxu0 %v420
  %v1156 = vpop.f32.mrf.mxu0
  %v1157 = vadd.f32 %v1062, %v1156
  %1158 = vmatmul.f32.gmra.mxu0 %v436
  %v1159 = vpop.f32.mrf.mxu0
  %v1160 = vadd.f32 %v1062, %v1159
  %1161 = vmatmul.f32.gmra.mxu0 %v452
  %v1162 = vpop.f32.mrf.mxu0
  %v1163 = vadd.f32 %v1062, %v1162
  %1164 = vmatmul.f32.gmra.mxu0 %v468
  %v1165 = vpop.f32.mrf.mxu0
  %v1166 = vadd.f32 %v1062, %v1165
  %1167 = vmatmul.f32.gmra.mxu0 %v484
  %v1168 = vpop.f32.mrf.mxu0
  %v1169 = vadd.f32 %v1062, %v1168
  %1170 = vmatmul.f32.gmra.mxu0 %v500
  %v1171 = vpop.f32.mrf.mxu0
  %v1172 = vadd.f32 %v1062, %v1171
  %1173 = vmatmul.f32.gmra.mxu0 %v516
  %v1174 = vpop.f32.mrf.mxu0
  %v1175 = vadd.f32 %v1062, %v1174
  %1176 = vmatmul.f32.gmra.mxu0 %v532
  %v1177 = vpop.f32.mrf.mxu0
  %v1178 = vadd.f32 %v1062, %v1177
  %1179 = vmatmul.f32.gmra.mxu0 %v548
  %v1180 = vpop.f32.mrf.mxu0
  %v1181 = vadd.f32 %v1062, %v1180
  %1182 = vmatmul.f32.gmra.mxu0 %v564
  %v1183 = vpop.f32.mrf.mxu0
  %v1184 = vadd.f32 %v1062, %v1183
  %1185 = vmatmul.f32.gmra.mxu0 %v580
  %v1186 = vpop.f32.mrf.mxu0
  %v1187 = vadd.f32 %v1062, %v1186
  %1188 = vmatmul.f32.gmra.mxu0 %v596
  %v1189 = vpop.f32.mrf.mxu0
  %v1190 = vadd.f32 %v1062, %v1189
  %1191 = vmatmul.f32.gmra.mxu0 %v612
  %v1192 = vpop.f32.mrf.mxu0
  %v1193 = vadd.f32 %v1062, %v1192
  %1194 = vmatmul.f32.gmra.mxu0 %v628
  %v1195 = vpop.f32.mrf.mxu0
  %v1196 = vadd.f32 %v1062, %v1195
  %1197 = vmatmul.f32.gmra.mxu0 %v644
  %v1198 = vpop.f32.mrf.mxu0
  %v1199 = vadd.f32 %v1062, %v1198
  %1200 = vmatmul.f32.gmra.mxu0 %v660
  %v1201 = vpop.f32.mrf.mxu0
  %v1202 = vadd.f32 %v1062, %v1201
  %1203 = vmatmul.f32.gmra.mxu0 %v676
  %v1204 = vpop.f32.mrf.mxu0
  %v1205 = vadd.f32 %v1062, %v1204
  %1206 = vmatmul.f32.gmra.mxu0 %v692
  %v1207 = vpop.f32.mrf.mxu0
  %v1208 = vadd.f32 %v1062, %v1207
  %1209 = vmatmul.f32.gmra.mxu0 %v708
  %v1210 = vpop.f32.mrf.mxu0
  %v1211 = vadd.f32 %v1062, %v1210
  %1212 = vmatmul.f32.gmra.mxu0 %v724
  %v1213 = vpop.f32.mrf.mxu0
  %v1214 = vadd.f32 %v1062, %v1213
  %1215 = vmatmul.f32.gmra.mxu0 %v740
  %v1216 = vpop.f32.mrf.mxu0
  %v1217 = vadd.f32 %v1062, %v1216
  %1218 = vmatmul.f32.gmra.mxu0 %v756
  %v1219 = vpop.f32.mrf.mxu0
  %v1220 = vadd.f32 %v1062, %v1219
  %1221 = vmatmul.f32.gmra.mxu0 %v772
  %v1222 = vpop.f32.mrf.mxu0
  %v1223 = vadd.f32 %v1062, %v1222
  %1224 = vmatmul.f32.gmra.mxu0 %v788
  %v1225 = vpop.f32.mrf.mxu0
  %v1226 = vadd.f32 %v1062, %v1225
  %1227 = vdwg.mxu0
  %1228 = vmatpush.msra.mxu0 %v835
  %1229 = vmatpush.msra.mxu0 %v834
  %1230 = vmatpush.msra.mxu0 %v833
  %1231 = vmatpush.msra.mxu0 %v832
  %1232 = vmatpush.msra.mxu0 %v831
  %1233 = vmatpush.msra.mxu0 %v830
  %1234 = vmatpush.msra.mxu0 %v829
  %1235 = vmatpush.msra.mxu0 %v828
  %1236 = vmatpush.msra.mxu0 %v827
  %1237 = vmatpush.msra.mxu0 %v826
  %1238 = vmatpush.msra.mxu0 %v825
  %1239 = vmatpush.msra.mxu0 %v824
  %1240 = vmatpush.msra.mxu0 %v823
  %1241 = vmatpush.msra.mxu0 %v822
  %1242 = vmatpush.msra.mxu0 %v821
  %1243 = vmatpush.msra.mxu0 %v820
  %1244 = vmatmul.f32.gmra.mxu0 %v21
  %v1245 = vpop.f32.mrf.mxu0
  %v1246 = vadd.f32 %v1082, %v1245
  %1247 = vmatmul.f32.gmra.mxu0 %v37
  %v1248 = vpop.f32.mrf.mxu0
  %v1249 = vadd.f32 %v1085, %v1248
  %1250 = vmatmul.f32.gmra.mxu0 %v53
  %v1251 = vpop.f32.mrf.mxu0
  %v1252 = vadd.f32 %v1088, %v1251
  %1253 = vmatmul.f32.gmra.mxu0 %v69
  %v1254 = vpop.f32.mrf.mxu0
  %v1255 = vadd.f32 %v1091, %v1254
  %1256 = vmatmul.f32.gmra.mxu0 %v85
  %v1257 = vpop.f32.mrf.mxu0
  %v1258 = vadd.f32 %v1094, %v1257
  %1259 = vmatmul.f32.gmra.mxu0 %v101
  %v1260 = vpop.f32.mrf.mxu0
  %v1261 = vadd.f32 %v1097, %v1260
  %1262 = vmatmul.f32.gmra.mxu0 %v117
  %v1263 = vpop.f32.mrf.mxu0
  %v1264 = vadd.f32 %v1100, %v1263
  %1265 = vmatmul.f32.gmra.mxu0 %v133
  %v1266 = vpop.f32.mrf.mxu0
  %v1267 = vadd.f32 %v1103, %v1266
  %1268 = vmatmul.f32.gmra.mxu0 %v149
  %v1269 = vpop.f32.mrf.mxu0
  %v1270 = vadd.f32 %v1106, %v1269
  %1271 = vmatmul.f32.gmra.mxu0 %v165
  %v1272 = vpop.f32.mrf.mxu0
  %v1273 = vadd.f32 %v1109, %v1272
  %1274 = vmatmul.f32.gmra.mxu0 %v181
  %v1275 = vpop.f32.mrf.mxu0
  %v1276 = vadd.f32 %v1112, %v1275
  %1277 = vmatmul.f32.gmra.mxu0 %v197
  %v1278 = vpop.f32.mrf.mxu0
  %v1279 = vadd.f32 %v1115, %v1278
  %1280 = vmatmul.f32.gmra.mxu0 %v213
  %v1281 = vpop.f32.mrf.mxu0
  %v1282 = vadd.f32 %v1118, %v1281
  %1283 = vmatmul.f32.gmra.mxu0 %v229
  %v1284 = vpop.f32.mrf.mxu0
  %v1285 = vadd.f32 %v1121, %v1284
  %1286 = vmatmul.f32.gmra.mxu0 %v245
  %v1287 = vpop.f32.mrf.mxu0
  %v1288 = vadd.f32 %v1124, %v1287
  %1289 = vmatmul.f32.gmra.mxu0 %v261
  %v1290 = vpop.f32.mrf.mxu0
  %v1291 = vadd.f32 %v1127, %v1290
  %1292 = vmatmul.f32.gmra.mxu0 %v277
  %v1293 = vpop.f32.mrf.mxu0
  %v1294 = vadd.f32 %v1130, %v1293
  %1295 = vmatmul.f32.gmra.mxu0 %v293
  %v1296 = vpop.f32.mrf.mxu0
  %v1297 = vadd.f32 %v1133, %v1296
  %1298 = vmatmul.f32.gmra.mxu0 %v309
  %v1299 = vpop.f32.mrf.mxu0
  %v1300 = vadd.f32 %v1136, %v1299
  %1301 = vmatmul.f32.gmra.mxu0 %v325
  %v1302 = vpop.f32.mrf.mxu0
  %v1303 = vadd.f32 %v1139, %v1302
  %1304 = vmatmul.f32.gmra.mxu0 %v341
  %v1305 = vpop.f32.mrf.mxu0
  %v1306 = vadd.f32 %v1142, %v1305
  %1307 = vmatmul.f32.gmra.mxu0 %v357
  %v1308 = vpop.f32.mrf.mxu0
  %v1309 = vadd.f32 %v1145, %v1308
  %1310 = vmatmul.f32.gmra.mxu0 %v373
  %v1311 = vpop.f32.mrf.mxu0
  %v1312 = vadd.f32 %v1148, %v1311
  %1313 = vmatmul.f32.gmra.mxu0 %v389
  %v1314 = vpop.f32.mrf.mxu0
  %v1315 = vadd.f32 %v1151, %v1314
  %1316 = vmatmul.f32.gmra.mxu0 %v405
  %v1317 = vpop.f32.mrf.mxu0
  %v1318 = vadd.f32 %v1154, %v1317
  %1319 = vmatmul.f32.gmra.mxu0 %v421
  %v1320 = vpop.f32.mrf.mxu0
  %v1321 = vadd.f32 %v1157, %v1320
  %1322 = vmatmul.f32.gmra.mxu0 %v437
  %v1323 = vpop.f32.mrf.mxu0
  %v1324 = vadd.f32 %v1160, %v1323
  %1325 = vmatmul.f32.gmra.mxu0 %v453
  %v1326 = vpop.f32.mrf.mxu0
  %v1327 = vadd.f32 %v1163, %v1326
  %1328 = vmatmul.f32.gmra.mxu0 %v469
  %v1329 = vpop.f32.mrf.mxu0
  %v1330 = vadd.f32 %v1166, %v1329
  %1331 = vmatmul.f32.gmra.mxu0 %v485
  %v1332 = vpop.f32.mrf.mxu0
  %v1333 = vadd.f32 %v1169, %v1332
  %1334 = vmatmul.f32.gmra.mxu0 %v501
  %v1335 = vpop.f32.mrf.mxu0
  %v1336 = vadd.f32 %v1172, %v1335
  %1337 = vmatmul.f32.gmra.mxu0 %v517
  %v1338 = vpop.f32.mrf.mxu0
  %v1339 = vadd.f32 %v1175, %v1338
  %1340 = vmatmul.f32.gmra.mxu0 %v533
  %v1341 = vpop.f32.mrf.mxu0
  %v1342 = vadd.f32 %v1178, %v1341
  %1343 = vmatmul.f32.gmra.mxu0 %v549
  %v1344 = vpop.f32.mrf.mxu0
  %v1345 = vadd.f32 %v1181, %v1344
  %1346 = vmatmul.f32.gmra.mxu0 %v565
  %v1347 = vpop.f32.mrf.mxu0
  %v1348 = vadd.f32 %v1184, %v1347
  %1349 = vmatmul.f32.gmra.mxu0 %v581
  %v1350 = vpop.f32.mrf.mxu0
  %v1351 = vadd.f32 %v1187, %v1350
  %1352 = vmatmul.f32.gmra.mxu0 %v597
  %v1353 = vpop.f32.mrf.mxu0
  %v1354 = vadd.f32 %v1190, %v1353
  %1355 = vmatmul.f32.gmra.mxu0 %v613
  %v1356 = vpop.f32.mrf.mxu0
  %v1357 = vadd.f32 %v1193, %v1356
  %1358 = vmatmul.f32.gmra.mxu0 %v629
  %v1359 = vpop.f32.mrf.mxu0
  %v1360 = vadd.f32 %v1196, %v1359
  %1361 = vmatmul.f32.gmra.mxu0 %v645
  %v1362 = vpop.f32.mrf.mxu0
  %v1363 = vadd.f32 %v1199, %v1362
  %1364 = vmatmul.f32.gmra.mxu0 %v661
  %v1365 = vpop.f32.mrf.mxu0
  %v1366 = vadd.f32 %v1202, %v1365
  %1367 = vmatmul.f32.gmra.mxu0 %v677
  %v1368 = vpop.f32.mrf.mxu0
  %v1369 = vadd.f32 %v1205, %v1368
  %1370 = vmatmul.f32.gmra.mxu0 %v693
  %v1371 = vpop.f32.mrf.mxu0
  %v1372 = vadd.f32 %v1208, %v1371
  %1373 = vmatmul.f32.gmra.mxu0 %v709
  %v1374 = vpop.f32.mrf.mxu0
  %v1375 = vadd.f32 %v1211, %v1374
  %1376 = vmatmul.f32.gmra.mxu0 %v725
  %v1377 = vpop.f32.mrf.mxu0
  %v1378 = vadd.f32 %v1214, %v1377
  %1379 = vmatmul.f32.gmra.mxu0 %v741
  %v1380 = vpop.f32.mrf.mxu0
  %v1381 = vadd.f32 %v1217, %v1380
  %1382 = vmatmul.f32.gmra.mxu0 %v757
  %v1383 = vpop.f32.mrf.mxu0
  %v1384 = vadd.f32 %v1220, %v1383
  %1385 = vmatmul.f32.gmra.mxu0 %v773
  %v1386 = vpop.f32.mrf.mxu0
  %v1387 = vadd.f32 %v1223, %v1386
  %1388 = vmatmul.f32.gmra.mxu0 %v789
  %v1389 = vpop.f32.mrf.mxu0
  %v1390 = vadd.f32 %v1226, %v1389
  %1391 = vdwg.mxu0
  %1392 = vmatpush.msra.mxu0 %v851
  %1393 = vmatpush.msra.mxu0 %v850
  %1394 = vmatpush.msra.mxu0 %v849
  %1395 = vmatpush.msra.mxu0 %v848
  %1396 = vmatpush.msra.mxu0 %v847
  %1397 = vmatpush.msra.mxu0 %v846
  %1398 = vmatpush.msra.mxu0 %v845
  %1399 = vmatpush.msra.mxu0 %v844
  %1400 = vmatpush.msra.mxu0 %v843
  %1401 = vmatpush.msra.mxu0 %v842
  %1402 = vmatpush.msra.mxu0 %v841
  %1403 = vmatpush.msra.mxu0 %v840
  %1404 = vmatpush.msra.mxu0 %v839
  %1405 = vmatpush.msra.mxu0 %v838
  %1406 = vmatpush.msra.mxu0 %v837
  %1407 = vmatpush.msra.mxu0 %v836
  %1408 = vmatmul.f32.gmra.mxu0 %v22
  %v1409 = vpop.f32.mrf.mxu0
  %v1410 = vadd.f32 %v1246, %v1409
  %1411 = vmatmul.f32.gmra.mxu0 %v38
  %v1412 = vpop.f32.mrf.mxu0
  %v1413 = vadd.f32 %v1249, %v1412
  %1414 = vmatmul.f32.gmra.mxu0 %v54
  %v1415 = vpop.f32.mrf.mxu0
  %v1416 = vadd.f32 %v1252, %v1415
  %1417 = vmatmul.f32.gmra.mxu0 %v70
  %v1418 = vpop.f32.mrf.mxu0
  %v1419 = vadd.f32 %v1255, %v1418
  %1420 = vmatmul.f32.gmra.mxu0 %v86
  %v1421 = vpop.f32.mrf.mxu0
  %v1422 = vadd.f32 %v1258, %v1421
  %1423 = vmatmul.f32.gmra.mxu0 %v102
  %v1424 = vpop.f32.mrf.mxu0
  %v1425 = vadd.f32 %v1261, %v1424
  %1426 = vmatmul.f32.gmra.mxu0 %v118
  %v1427 = vpop.f32.mrf.mxu0
  %v1428 = vadd.f32 %v1264, %v1427
  %1429 = vmatmul.f32.gmra.mxu0 %v134
  %v1430 = vpop.f32.mrf.mxu0
  %v1431 = vadd.f32 %v1267, %v1430
  %1432 = vmatmul.f32.gmra.mxu0 %v150
  %v1433 = vpop.f32.mrf.mxu0
  %v1434 = vadd.f32 %v1270, %v1433
  %1435 = vmatmul.f32.gmra.mxu0 %v166
  %v1436 = vpop.f32.mrf.mxu0
  %v1437 = vadd.f32 %v1273, %v1436
  %1438 = vmatmul.f32.gmra.mxu0 %v182
  %v1439 = vpop.f32.mrf.mxu0
  %v1440 = vadd.f32 %v1276, %v1439
  %1441 = vmatmul.f32.gmra.mxu0 %v198
  %v1442 = vpop.f32.mrf.mxu0
  %v1443 = vadd.f32 %v1279, %v1442
  %1444 = vmatmul.f32.gmra.mxu0 %v214
  %v1445 = vpop.f32.mrf.mxu0
  %v1446 = vadd.f32 %v1282, %v1445
  %1447 = vmatmul.f32.gmra.mxu0 %v230
  %v1448 = vpop.f32.mrf.mxu0
  %v1449 = vadd.f32 %v1285, %v1448
  %1450 = vmatmul.f32.gmra.mxu0 %v246
  %v1451 = vpop.f32.mrf.mxu0
  %v1452 = vadd.f32 %v1288, %v1451
  %1453 = vmatmul.f32.gmra.mxu0 %v262
  %v1454 = vpop.f32.mrf.mxu0
  %v1455 = vadd.f32 %v1291, %v1454
  %1456 = vmatmul.f32.gmra.mxu0 %v278
  %v1457 = vpop.f32.mrf.mxu0
  %v1458 = vadd.f32 %v1294, %v1457
  %1459 = vmatmul.f32.gmra.mxu0 %v294
  %v1460 = vpop.f32.mrf.mxu0
  %v1461 = vadd.f32 %v1297, %v1460
  %1462 = vmatmul.f32.gmra.mxu0 %v310
  %v1463 = vpop.f32.mrf.mxu0
  %v1464 = vadd.f32 %v1300, %v1463
  %1465 = vmatmul.f32.gmra.mxu0 %v326
  %v1466 = vpop.f32.mrf.mxu0
  %v1467 = vadd.f32 %v1303, %v1466
  %1468 = vmatmul.f32.gmra.mxu0 %v342
  %v1469 = vpop.f32.mrf.mxu0
  %v1470 = vadd.f32 %v1306, %v1469
  %1471 = vmatmul.f32.gmra.mxu0 %v358
  %v1472 = vpop.f32.mrf.mxu0
  %v1473 = vadd.f32 %v1309, %v1472
  %1474 = vmatmul.f32.gmra.mxu0 %v374
  %v1475 = vpop.f32.mrf.mxu0
  %v1476 = vadd.f32 %v1312, %v1475
  %1477 = vmatmul.f32.gmra.mxu0 %v390
  %v1478 = vpop.f32.mrf.mxu0
  %v1479 = vadd.f32 %v1315, %v1478
  %1480 = vmatmul.f32.gmra.mxu0 %v406
  %v1481 = vpop.f32.mrf.mxu0
  %v1482 = vadd.f32 %v1318, %v1481
  %1483 = vmatmul.f32.gmra.mxu0 %v422
  %v1484 = vpop.f32.mrf.mxu0
  %v1485 = vadd.f32 %v1321, %v1484
  %1486 = vmatmul.f32.gmra.mxu0 %v438
  %v1487 = vpop.f32.mrf.mxu0
  %v1488 = vadd.f32 %v1324, %v1487
  %1489 = vmatmul.f32.gmra.mxu0 %v454
  %v1490 = vpop.f32.mrf.mxu0
  %v1491 = vadd.f32 %v1327, %v1490
  %1492 = vmatmul.f32.gmra.mxu0 %v470
  %v1493 = vpop.f32.mrf.mxu0
  %v1494 = vadd.f32 %v1330, %v1493
  %1495 = vmatmul.f32.gmra.mxu0 %v486
  %v1496 = vpop.f32.mrf.mxu0
  %v1497 = vadd.f32 %v1333, %v1496
  %1498 = vmatmul.f32.gmra.mxu0 %v502
  %v1499 = vpop.f32.mrf.mxu0
  %v1500 = vadd.f32 %v1336, %v1499
  %1501 = vmatmul.f32.gmra.mxu0 %v518
  %v1502 = vpop.f32.mrf.mxu0
  %v1503 = vadd.f32 %v1339, %v1502
  %1504 = vmatmul.f32.gmra.mxu0 %v534
  %v1505 = vpop.f32.mrf.mxu0
  %v1506 = vadd.f32 %v1342, %v1505
  %1507 = vmatmul.f32.gmra.mxu0 %v550
  %v1508 = vpop.f32.mrf.mxu0
  %v1509 = vadd.f32 %v1345, %v1508
  %1510 = vmatmul.f32.gmra.mxu0 %v566
  %v1511 = vpop.f32.mrf.mxu0
  %v1512 = vadd.f32 %v1348, %v1511
  %1513 = vmatmul.f32.gmra.mxu0 %v582
  %v1514 = vpop.f32.mrf.mxu0
  %v1515 = vadd.f32 %v1351, %v1514
  %1516 = vmatmul.f32.gmra.mxu0 %v598
  %v1517 = vpop.f32.mrf.mxu0
  %v1518 = vadd.f32 %v1354, %v1517
  %1519 = vmatmul.f32.gmra.mxu0 %v614
  %v1520 = vpop.f32.mrf.mxu0
  %v1521 = vadd.f32 %v1357, %v1520
  %1522 = vmatmul.f32.gmra.mxu0 %v630
  %v1523 = vpop.f32.mrf.mxu0
  %v1524 = vadd.f32 %v1360, %v1523
  %1525 = vmatmul.f32.gmra.mxu0 %v646
  %v1526 = vpop.f32.mrf.mxu0
  %v1527 = vadd.f32 %v1363, %v1526
  %1528 = vmatmul.f32.gmra.mxu0 %v662
  %v1529 = vpop.f32.mrf.mxu0
  %v1530 = vadd.f32 %v1366, %v1529
  %1531 = vmatmul.f32.gmra.mxu0 %v678
  %v1532 = vpop.f32.mrf.mxu0
  %v1533 = vadd.f32 %v1369, %v1532
  %1534 = vmatmul.f32.gmra.mxu0 %v694
  %v1535 = vpop.f32.mrf.mxu0
  %v1536 = vadd.f32 %v1372, %v1535
  %1537 = vmatmul.f32.gmra.mxu0 %v710
  %v1538 = vpop.f32.mrf.mxu0
  %v1539 = vadd.f32 %v1375, %v1538
  %1540 = vmatmul.f32.gmra.mxu0 %v726
  %v1541 = vpop.f32.mrf.mxu0
  %v1542 = vadd.f32 %v1378, %v1541
  %1543 = vmatmul.f32.gmra.mxu0 %v742
  %v1544 = vpop.f32.mrf.mxu0
  %v1545 = vadd.f32 %v1381, %v1544
  %1546 = vmatmul.f32.gmra.mxu0 %v758
  %v1547 = vpop.f32.mrf.mxu0
  %v1548 = vadd.f32 %v1384, %v1547
  %1549 = vmatmul.f32.gmra.mxu0 %v774
  %v1550 = vpop.f32.mrf.mxu0
  %v1551 = vadd.f32 %v1387, %v1550
  %1552 = vmatmul.f32.gmra.mxu0 %v790
  %v1553 = vpop.f32.mrf.mxu0
  %v1554 = vadd.f32 %v1390, %v1553
  %1555 = vdwg.mxu0
  %1556 = vmatpush.msra.mxu0 %v867
  %1557 = vmatpush.msra.mxu0 %v866
  %1558 = vmatpush.msra.mxu0 %v865
  %1559 = vmatpush.msra.mxu0 %v864
  %1560 = vmatpush.msra.mxu0 %v863
  %1561 = vmatpush.msra.mxu0 %v862
  %1562 = vmatpush.msra.mxu0 %v861
  %1563 = vmatpush.msra.mxu0 %v860
  %1564 = vmatpush.msra.mxu0 %v859
  %1565 = vmatpush.msra.mxu0 %v858
  %1566 = vmatpush.msra.mxu0 %v857
  %1567 = vmatpush.msra.mxu0 %v856
  %1568 = vmatpush.msra.mxu0 %v855
  %1569 = vmatpush.msra.mxu0 %v854
  %1570 = vmatpush.msra.mxu0 %v853
  %1571 = vmatpush.msra.mxu0 %v852
  %1572 = vmatmul.f32.gmra.mxu0 %v23
  %v1573 = vpop.f32.mrf.mxu0
  %v1574 = vadd.f32 %v1410, %v1573
  %1575 = vmatmul.f32.gmra.mxu0 %v39
  %v1576 = vpop.f32.mrf.mxu0
  %v1577 = vadd.f32 %v1413, %v1576
  %1578 = vmatmul.f32.gmra.mxu0 %v55
  %v1579 = vpop.f32.mrf.mxu0
  %v1580 = vadd.f32 %v1416, %v1579
  %1581 = vmatmul.f32.gmra.mxu0 %v71
  %v1582 = vpop.f32.mrf.mxu0
  %v1583 = vadd.f32 %v1419, %v1582
  %1584 = vmatmul.f32.gmra.mxu0 %v87
  %v1585 = vpop.f32.mrf.mxu0
  %v1586 = vadd.f32 %v1422, %v1585
  %1587 = vmatmul.f32.gmra.mxu0 %v103
  %v1588 = vpop.f32.mrf.mxu0
  %v1589 = vadd.f32 %v1425, %v1588
  %1590 = vmatmul.f32.gmra.mxu0 %v119
  %v1591 = vpop.f32.mrf.mxu0
  %v1592 = vadd.f32 %v1428, %v1591
  %1593 = vmatmul.f32.gmra.mxu0 %v135
  %v1594 = vpop.f32.mrf.mxu0
  %v1595 = vadd.f32 %v1431, %v1594
  %1596 = vmatmul.f32.gmra.mxu0 %v151
  %v1597 = vpop.f32.mrf.mxu0
  %v1598 = vadd.f32 %v1434, %v1597
  %1599 = vmatmul.f32.gmra.mxu0 %v167
  %v1600 = vpop.f32.mrf.mxu0
  %v1601 = vadd.f32 %v1437, %v1600
  %1602 = vmatmul.f32.gmra.mxu0 %v183
  %v1603 = vpop.f32.mrf.mxu0
  %v1604 = vadd.f32 %v1440, %v1603
  %1605 = vmatmul.f32.gmra.mxu0 %v199
  %v1606 = vpop.f32.mrf.mxu0
  %v1607 = vadd.f32 %v1443, %v1606
  %1608 = vmatmul.f32.gmra.mxu0 %v215
  %v1609 = vpop.f32.mrf.mxu0
  %v1610 = vadd.f32 %v1446, %v1609
  %1611 = vmatmul.f32.gmra.mxu0 %v231
  %v1612 = vpop.f32.mrf.mxu0
  %v1613 = vadd.f32 %v1449, %v1612
  %1614 = vmatmul.f32.gmra.mxu0 %v247
  %v1615 = vpop.f32.mrf.mxu0
  %v1616 = vadd.f32 %v1452, %v1615
  %1617 = vmatmul.f32.gmra.mxu0 %v263
  %v1618 = vpop.f32.mrf.mxu0
  %v1619 = vadd.f32 %v1455, %v1618
  %1620 = vmatmul.f32.gmra.mxu0 %v279
  %v1621 = vpop.f32.mrf.mxu0
  %v1622 = vadd.f32 %v1458, %v1621
  %1623 = vmatmul.f32.gmra.mxu0 %v295
  %v1624 = vpop.f32.mrf.mxu0
  %v1625 = vadd.f32 %v1461, %v1624
  %1626 = vmatmul.f32.gmra.mxu0 %v311
  %v1627 = vpop.f32.mrf.mxu0
  %v1628 = vadd.f32 %v1464, %v1627
  %1629 = vmatmul.f32.gmra.mxu0 %v327
  %v1630 = vpop.f32.mrf.mxu0
  %v1631 = vadd.f32 %v1467, %v1630
  %1632 = vmatmul.f32.gmra.mxu0 %v343
  %v1633 = vpop.f32.mrf.mxu0
  %v1634 = vadd.f32 %v1470, %v1633
  %1635 = vmatmul.f32.gmra.mxu0 %v359
  %v1636 = vpop.f32.mrf.mxu0
  %v1637 = vadd.f32 %v1473, %v1636
  %1638 = vmatmul.f32.gmra.mxu0 %v375
  %v1639 = vpop.f32.mrf.mxu0
  %v1640 = vadd.f32 %v1476, %v1639
  %1641 = vmatmul.f32.gmra.mxu0 %v391
  %v1642 = vpop.f32.mrf.mxu0
  %v1643 = vadd.f32 %v1479, %v1642
  %1644 = vmatmul.f32.gmra.mxu0 %v407
  %v1645 = vpop.f32.mrf.mxu0
  %v1646 = vadd.f32 %v1482, %v1645
  %1647 = vmatmul.f32.gmra.mxu0 %v423
  %v1648 = vpop.f32.mrf.mxu0
  %v1649 = vadd.f32 %v1485, %v1648
  %1650 = vmatmul.f32.gmra.mxu0 %v439
  %v1651 = vpop.f32.mrf.mxu0
  %v1652 = vadd.f32 %v1488, %v1651
  %1653 = vmatmul.f32.gmra.mxu0 %v455
  %v1654 = vpop.f32.mrf.mxu0
  %v1655 = vadd.f32 %v1491, %v1654
  %1656 = vmatmul.f32.gmra.mxu0 %v471
  %v1657 = vpop.f32.mrf.mxu0
  %v1658 = vadd.f32 %v1494, %v1657
  %1659 = vmatmul.f32.gmra.mxu0 %v487
  %v1660 = vpop.f32.mrf.mxu0
  %v1661 = vadd.f32 %v1497, %v1660
  %1662 = vmatmul.f32.gmra.mxu0 %v503
  %v1663 = vpop.f32.mrf.mxu0
  %v1664 = vadd.f32 %v1500, %v1663
  %1665 = vmatmul.f32.gmra.mxu0 %v519
  %v1666 = vpop.f32.mrf.mxu0
  %v1667 = vadd.f32 %v1503, %v1666
  %1668 = vmatmul.f32.gmra.mxu0 %v535
  %v1669 = vpop.f32.mrf.mxu0
  %v1670 = vadd.f32 %v1506, %v1669
  %1671 = vmatmul.f32.gmra.mxu0 %v551
  %v1672 = vpop.f32.mrf.mxu0
  %v1673 = vadd.f32 %v1509, %v1672
  %1674 = vmatmul.f32.gmra.mxu0 %v567
  %v1675 = vpop.f32.mrf.mxu0
  %v1676 = vadd.f32 %v1512, %v1675
  %1677 = vmatmul.f32.gmra.mxu0 %v583
  %v1678 = vpop.f32.mrf.mxu0
  %v1679 = vadd.f32 %v1515, %v1678
  %1680 = vmatmul.f32.gmra.mxu0 %v599
  %v1681 = vpop.f32.mrf.mxu0
  %v1682 = vadd.f32 %v1518, %v1681
  %1683 = vmatmul.f32.gmra.mxu0 %v615
  %v1684 = vpop.f32.mrf.mxu0
  %v1685 = vadd.f32 %v1521, %v1684
  %1686 = vmatmul.f32.gmra.mxu0 %v631
  %v1687 = vpop.f32.mrf.mxu0
  %v1688 = vadd.f32 %v1524, %v1687
  %1689 = vmatmul.f32.gmra.mxu0 %v647
  %v1690 = vpop.f32.mrf.mxu0
  %v1691 = vadd.f32 %v1527, %v1690
  %1692 = vmatmul.f32.gmra.mxu0 %v663
  %v1693 = vpop.f32.mrf.mxu0
  %v1694 = vadd.f32 %v1530, %v1693
  %1695 = vmatmul.f32.gmra.mxu0 %v679
  %v1696 = vpop.f32.mrf.mxu0
  %v1697 = vadd.f32 %v1533, %v1696
  %1698 = vmatmul.f32.gmra.mxu0 %v695
  %v1699 = vpop.f32.mrf.mxu0
  %v1700 = vadd.f32 %v1536, %v1699
  %1701 = vmatmul.f32.gmra.mxu0 %v711
  %v1702 = vpop.f32.mrf.mxu0
  %v1703 = vadd.f32 %v1539, %v1702
  %1704 = vmatmul.f32.gmra.mxu0 %v727
  %v1705 = vpop.f32.mrf.mxu0
  %v1706 = vadd.f32 %v1542, %v1705
  %1707 = vmatmul.f32.gmra.mxu0 %v743
  %v1708 = vpop.f32.mrf.mxu0
  %v1709 = vadd.f32 %v1545, %v1708
  %1710 = vmatmul.f32.gmra.mxu0 %v759
  %v1711 = vpop.f32.mrf.mxu0
  %v1712 = vadd.f32 %v1548, %v1711
  %1713 = vmatmul.f32.gmra.mxu0 %v775
  %v1714 = vpop.f32.mrf.mxu0
  %v1715 = vadd.f32 %v1551, %v1714
  %1716 = vmatmul.f32.gmra.mxu0 %v791
  %v1717 = vpop.f32.mrf.mxu0
  %v1718 = vadd.f32 %v1554, %v1717
  %1719 = vdwg.mxu0
  %1720 = vmatpush.msra.mxu0 %v883
  %1721 = vmatpush.msra.mxu0 %v882
  %1722 = vmatpush.msra.mxu0 %v881
  %1723 = vmatpush.msra.mxu0 %v880
  %1724 = vmatpush.msra.mxu0 %v879
  %1725 = vmatpush.msra.mxu0 %v878
  %1726 = vmatpush.msra.mxu0 %v877
  %1727 = vmatpush.msra.mxu0 %v876
  %1728 = vmatpush.msra.mxu0 %v875
  %1729 = vmatpush.msra.mxu0 %v874
  %1730 = vmatpush.msra.mxu0 %v873
  %1731 = vmatpush.msra.mxu0 %v872
  %1732 = vmatpush.msra.mxu0 %v871
  %1733 = vmatpush.msra.mxu0 %v870
  %1734 = vmatpush.msra.mxu0 %v869
  %1735 = vmatpush.msra.mxu0 %v868
  %1736 = vmatmul.f32.gmra.mxu0 %v24
  %v1737 = vpop.f32.mrf.mxu0
  %v1738 = vadd.f32 %v1574, %v1737
  %1739 = vmatmul.f32.gmra.mxu0 %v40
  %v1740 = vpop.f32.mrf.mxu0
  %v1741 = vadd.f32 %v1577, %v1740
  %1742 = vmatmul.f32.gmra.mxu0 %v56
  %v1743 = vpop.f32.mrf.mxu0
  %v1744 = vadd.f32 %v1580, %v1743
  %1745 = vmatmul.f32.gmra.mxu0 %v72
  %v1746 = vpop.f32.mrf.mxu0
  %v1747 = vadd.f32 %v1583, %v1746
  %1748 = vmatmul.f32.gmra.mxu0 %v88
  %v1749 = vpop.f32.mrf.mxu0
  %v1750 = vadd.f32 %v1586, %v1749
  %1751 = vmatmul.f32.gmra.mxu0 %v104
  %v1752 = vpop.f32.mrf.mxu0
  %v1753 = vadd.f32 %v1589, %v1752
  %1754 = vmatmul.f32.gmra.mxu0 %v120
  %v1755 = vpop.f32.mrf.mxu0
  %v1756 = vadd.f32 %v1592, %v1755
  %1757 = vmatmul.f32.gmra.mxu0 %v136
  %v1758 = vpop.f32.mrf.mxu0
  %v1759 = vadd.f32 %v1595, %v1758
  %1760 = vmatmul.f32.gmra.mxu0 %v152
  %v1761 = vpop.f32.mrf.mxu0
  %v1762 = vadd.f32 %v1598, %v1761
  %1763 = vmatmul.f32.gmra.mxu0 %v168
  %v1764 = vpop.f32.mrf.mxu0
  %v1765 = vadd.f32 %v1601, %v1764
  %1766 = vmatmul.f32.gmra.mxu0 %v184
  %v1767 = vpop.f32.mrf.mxu0
  %v1768 = vadd.f32 %v1604, %v1767
  %1769 = vmatmul.f32.gmra.mxu0 %v200
  %v1770 = vpop.f32.mrf.mxu0
  %v1771 = vadd.f32 %v1607, %v1770
  %1772 = vmatmul.f32.gmra.mxu0 %v216
  %v1773 = vpop.f32.mrf.mxu0
  %v1774 = vadd.f32 %v1610, %v1773
  %1775 = vmatmul.f32.gmra.mxu0 %v232
  %v1776 = vpop.f32.mrf.mxu0
  %v1777 = vadd.f32 %v1613, %v1776
  %1778 = vmatmul.f32.gmra.mxu0 %v248
  %v1779 = vpop.f32.mrf.mxu0
  %v1780 = vadd.f32 %v1616, %v1779
  %1781 = vmatmul.f32.gmra.mxu0 %v264
  %v1782 = vpop.f32.mrf.mxu0
  %v1783 = vadd.f32 %v1619, %v1782
  %1784 = vmatmul.f32.gmra.mxu0 %v280
  %v1785 = vpop.f32.mrf.mxu0
  %v1786 = vadd.f32 %v1622, %v1785
  %1787 = vmatmul.f32.gmra.mxu0 %v296
  %v1788 = vpop.f32.mrf.mxu0
  %v1789 = vadd.f32 %v1625, %v1788
  %1790 = vmatmul.f32.gmra.mxu0 %v312
  %v1791 = vpop.f32.mrf.mxu0
  %v1792 = vadd.f32 %v1628, %v1791
  %1793 = vmatmul.f32.gmra.mxu0 %v328
  %v1794 = vpop.f32.mrf.mxu0
  %v1795 = vadd.f32 %v1631, %v1794
  %1796 = vmatmul.f32.gmra.mxu0 %v344
  %v1797 = vpop.f32.mrf.mxu0
  %v1798 = vadd.f32 %v1634, %v1797
  %1799 = vmatmul.f32.gmra.mxu0 %v360
  %v1800 = vpop.f32.mrf.mxu0
  %v1801 = vadd.f32 %v1637, %v1800
  %1802 = vmatmul.f32.gmra.mxu0 %v376
  %v1803 = vpop.f32.mrf.mxu0
  %v1804 = vadd.f32 %v1640, %v1803
  %1805 = vmatmul.f32.gmra.mxu0 %v392
  %v1806 = vpop.f32.mrf.mxu0
  %v1807 = vadd.f32 %v1643, %v1806
  %1808 = vmatmul.f32.gmra.mxu0 %v408
  %v1809 = vpop.f32.mrf.mxu0
  %v1810 = vadd.f32 %v1646, %v1809
  %1811 = vmatmul.f32.gmra.mxu0 %v424
  %v1812 = vpop.f32.mrf.mxu0
  %v1813 = vadd.f32 %v1649, %v1812
  %1814 = vmatmul.f32.gmra.mxu0 %v440
  %v1815 = vpop.f32.mrf.mxu0
  %v1816 = vadd.f32 %v1652, %v1815
  %1817 = vmatmul.f32.gmra.mxu0 %v456
  %v1818 = vpop.f32.mrf.mxu0
  %v1819 = vadd.f32 %v1655, %v1818
  %1820 = vmatmul.f32.gmra.mxu0 %v472
  %v1821 = vpop.f32.mrf.mxu0
  %v1822 = vadd.f32 %v1658, %v1821
  %1823 = vmatmul.f32.gmra.mxu0 %v488
  %v1824 = vpop.f32.mrf.mxu0
  %v1825 = vadd.f32 %v1661, %v1824
  %1826 = vmatmul.f32.gmra.mxu0 %v504
  %v1827 = vpop.f32.mrf.mxu0
  %v1828 = vadd.f32 %v1664, %v1827
  %1829 = vmatmul.f32.gmra.mxu0 %v520
  %v1830 = vpop.f32.mrf.mxu0
  %v1831 = vadd.f32 %v1667, %v1830
  %1832 = vmatmul.f32.gmra.mxu0 %v536
  %v1833 = vpop.f32.mrf.mxu0
  %v1834 = vadd.f32 %v1670, %v1833
  %1835 = vmatmul.f32.gmra.mxu0 %v552
  %v1836 = vpop.f32.mrf.mxu0
  %v1837 = vadd.f32 %v1673, %v1836
  %1838 = vmatmul.f32.gmra.mxu0 %v568
  %v1839 = vpop.f32.mrf.mxu0
  %v1840 = vadd.f32 %v1676, %v1839
  %1841 = vmatmul.f32.gmra.mxu0 %v584
  %v1842 = vpop.f32.mrf.mxu0
  %v1843 = vadd.f32 %v1679, %v1842
  %1844 = vmatmul.f32.gmra.mxu0 %v600
  %v1845 = vpop.f32.mrf.mxu0
  %v1846 = vadd.f32 %v1682, %v1845
  %1847 = vmatmul.f32.gmra.mxu0 %v616
  %v1848 = vpop.f32.mrf.mxu0
  %v1849 = vadd.f32 %v1685, %v1848
  %1850 = vmatmul.f32.gmra.mxu0 %v632
  %v1851 = vpop.f32.mrf.mxu0
  %v1852 = vadd.f32 %v1688, %v1851
  %1853 = vmatmul.f32.gmra.mxu0 %v648
  %v1854 = vpop.f32.mrf.mxu0
  %v1855 = vadd.f32 %v1691, %v1854
  %1856 = vmatmul.f32.gmra.mxu0 %v664
  %v1857 = vpop.f32.mrf.mxu0
  %v1858 = vadd.f32 %v1694, %v1857
  %1859 = vmatmul.f32.gmra.mxu0 %v680
  %v1860 = vpop.f32.mrf.mxu0
  %v1861 = vadd.f32 %v1697, %v1860
  %1862 = vmatmul.f32.gmra.mxu0 %v696
  %v1863 = vpop.f32.mrf.mxu0
  %v1864 = vadd.f32 %v1700, %v1863
  %1865 = vmatmul.f32.gmra.mxu0 %v712
  %v1866 = vpop.f32.mrf.mxu0
  %v1867 = vadd.f32 %v1703, %v1866
  %1868 = vmatmul.f32.gmra.mxu0 %v728
  %v1869 = vpop.f32.mrf.mxu0
  %v1870 = vadd.f32 %v1706, %v1869
  %1871 = vmatmul.f32.gmra.mxu0 %v744
  %v1872 = vpop.f32.mrf.mxu0
  %v1873 = vadd.f32 %v1709, %v1872
  %1874 = vmatmul.f32.gmra.mxu0 %v760
  %v1875 = vpop.f32.mrf.mxu0
  %v1876 = vadd.f32 %v1712, %v1875
  %1877 = vmatmul.f32.gmra.mxu0 %v776
  %v1878 = vpop.f32.mrf.mxu0
  %v1879 = vadd.f32 %v1715, %v1878
  %1880 = vmatmul.f32.gmra.mxu0 %v792
  %v1881 = vpop.f32.mrf.mxu0
  %v1882 = vadd.f32 %v1718, %v1881
  %1883 = vdwg.mxu0
  %1884 = vmatpush.msra.mxu0 %v899
  %1885 = vmatpush.msra.mxu0 %v898
  %1886 = vmatpush.msra.mxu0 %v897
  %1887 = vmatpush.msra.mxu0 %v896
  %1888 = vmatpush.msra.mxu0 %v895
  %1889 = vmatpush.msra.mxu0 %v894
  %1890 = vmatpush.msra.mxu0 %v893
  %1891 = vmatpush.msra.mxu0 %v892
  %1892 = vmatpush.msra.mxu0 %v891
  %1893 = vmatpush.msra.mxu0 %v890
  %1894 = vmatpush.msra.mxu0 %v889
  %1895 = vmatpush.msra.mxu0 %v888
  %1896 = vmatpush.msra.mxu0 %v887
  %1897 = vmatpush.msra.mxu0 %v886
  %1898 = vmatpush.msra.mxu0 %v885
  %1899 = vmatpush.msra.mxu0 %v884
  %1900 = vmatmul.f32.gmra.mxu0 %v25
  %v1901 = vpop.f32.mrf.mxu0
  %v1902 = vadd.f32 %v1738, %v1901
  %1903 = vmatmul.f32.gmra.mxu0 %v41
  %v1904 = vpop.f32.mrf.mxu0
  %v1905 = vadd.f32 %v1741, %v1904
  %1906 = vmatmul.f32.gmra.mxu0 %v57
  %v1907 = vpop.f32.mrf.mxu0
  %v1908 = vadd.f32 %v1744, %v1907
  %1909 = vmatmul.f32.gmra.mxu0 %v73
  %v1910 = vpop.f32.mrf.mxu0
  %v1911 = vadd.f32 %v1747, %v1910
  %1912 = vmatmul.f32.gmra.mxu0 %v89
  %v1913 = vpop.f32.mrf.mxu0
  %v1914 = vadd.f32 %v1750, %v1913
  %1915 = vmatmul.f32.gmra.mxu0 %v105
  %v1916 = vpop.f32.mrf.mxu0
  %v1917 = vadd.f32 %v1753, %v1916
  %1918 = vmatmul.f32.gmra.mxu0 %v121
  %v1919 = vpop.f32.mrf.mxu0
  %v1920 = vadd.f32 %v1756, %v1919
  %1921 = vmatmul.f32.gmra.mxu0 %v137
  %v1922 = vpop.f32.mrf.mxu0
  %v1923 = vadd.f32 %v1759, %v1922
  %1924 = vmatmul.f32.gmra.mxu0 %v153
  %v1925 = vpop.f32.mrf.mxu0
  %v1926 = vadd.f32 %v1762, %v1925
  %1927 = vmatmul.f32.gmra.mxu0 %v169
  %v1928 = vpop.f32.mrf.mxu0
  %v1929 = vadd.f32 %v1765, %v1928
  %1930 = vmatmul.f32.gmra.mxu0 %v185
  %v1931 = vpop.f32.mrf.mxu0
  %v1932 = vadd.f32 %v1768, %v1931
  %1933 = vmatmul.f32.gmra.mxu0 %v201
  %v1934 = vpop.f32.mrf.mxu0
  %v1935 = vadd.f32 %v1771, %v1934
  %1936 = vmatmul.f32.gmra.mxu0 %v217
  %v1937 = vpop.f32.mrf.mxu0
  %v1938 = vadd.f32 %v1774, %v1937
  %1939 = vmatmul.f32.gmra.mxu0 %v233
  %v1940 = vpop.f32.mrf.mxu0
  %v1941 = vadd.f32 %v1777, %v1940
  %1942 = vmatmul.f32.gmra.mxu0 %v249
  %v1943 = vpop.f32.mrf.mxu0
  %v1944 = vadd.f32 %v1780, %v1943
  %1945 = vmatmul.f32.gmra.mxu0 %v265
  %v1946 = vpop.f32.mrf.mxu0
  %v1947 = vadd.f32 %v1783, %v1946
  %1948 = vmatmul.f32.gmra.mxu0 %v281
  %v1949 = vpop.f32.mrf.mxu0
  %v1950 = vadd.f32 %v1786, %v1949
  %1951 = vmatmul.f32.gmra.mxu0 %v297
  %v1952 = vpop.f32.mrf.mxu0
  %v1953 = vadd.f32 %v1789, %v1952
  %1954 = vmatmul.f32.gmra.mxu0 %v313
  %v1955 = vpop.f32.mrf.mxu0
  %v1956 = vadd.f32 %v1792, %v1955
  %1957 = vmatmul.f32.gmra.mxu0 %v329
  %v1958 = vpop.f32.mrf.mxu0
  %v1959 = vadd.f32 %v1795, %v1958
  %1960 = vmatmul.f32.gmra.mxu0 %v345
  %v1961 = vpop.f32.mrf.mxu0
  %v1962 = vadd.f32 %v1798, %v1961
  %1963 = vmatmul.f32.gmra.mxu0 %v361
  %v1964 = vpop.f32.mrf.mxu0
  %v1965 = vadd.f32 %v1801, %v1964
  %1966 = vmatmul.f32.gmra.mxu0 %v377
  %v1967 = vpop.f32.mrf.mxu0
  %v1968 = vadd.f32 %v1804, %v1967
  %1969 = vmatmul.f32.gmra.mxu0 %v393
  %v1970 = vpop.f32.mrf.mxu0
  %v1971 = vadd.f32 %v1807, %v1970
  %1972 = vmatmul.f32.gmra.mxu0 %v409
  %v1973 = vpop.f32.mrf.mxu0
  %v1974 = vadd.f32 %v1810, %v1973
  %1975 = vmatmul.f32.gmra.mxu0 %v425
  %v1976 = vpop.f32.mrf.mxu0
  %v1977 = vadd.f32 %v1813, %v1976
  %1978 = vmatmul.f32.gmra.mxu0 %v441
  %v1979 = vpop.f32.mrf.mxu0
  %v1980 = vadd.f32 %v1816, %v1979
  %1981 = vmatmul.f32.gmra.mxu0 %v457
  %v1982 = vpop.f32.mrf.mxu0
  %v1983 = vadd.f32 %v1819, %v1982
  %1984 = vmatmul.f32.gmra.mxu0 %v473
  %v1985 = vpop.f32.mrf.mxu0
  %v1986 = vadd.f32 %v1822, %v1985
  %1987 = vmatmul.f32.gmra.mxu0 %v489
  %v1988 = vpop.f32.mrf.mxu0
  %v1989 = vadd.f32 %v1825, %v1988
  %1990 = vmatmul.f32.gmra.mxu0 %v505
  %v1991 = vpop.f32.mrf.mxu0
  %v1992 = vadd.f32 %v1828, %v1991
  %1993 = vmatmul.f32.gmra.mxu0 %v521
  %v1994 = vpop.f32.mrf.mxu0
  %v1995 = vadd.f32 %v1831, %v1994
  %1996 = vmatmul.f32.gmra.mxu0 %v537
  %v1997 = vpop.f32.mrf.mxu0
  %v1998 = vadd.f32 %v1834, %v1997
  %1999 = vmatmul.f32.gmra.mxu0 %v553
  %v2000 = vpop.f32.mrf.mxu0
  %v2001 = vadd.f32 %v1837, %v2000
  %2002 = vmatmul.f32.gmra.mxu0 %v569
  %v2003 = vpop.f32.mrf.mxu0
  %v2004 = vadd.f32 %v1840, %v2003
  %2005 = vmatmul.f32.gmra.mxu0 %v585
  %v2006 = vpop.f32.mrf.mxu0
  %v2007 = vadd.f32 %v1843, %v2006
  %2008 = vmatmul.f32.gmra.mxu0 %v601
  %v2009 = vpop.f32.mrf.mxu0
  %v2010 = vadd.f32 %v1846, %v2009
  %2011 = vmatmul.f32.gmra.mxu0 %v617
  %v2012 = vpop.f32.mrf.mxu0
  %v2013 = vadd.f32 %v1849, %v2012
  %2014 = vmatmul.f32.gmra.mxu0 %v633
  %v2015 = vpop.f32.mrf.mxu0
  %v2016 = vadd.f32 %v1852, %v2015
  %2017 = vmatmul.f32.gmra.mxu0 %v649
  %v2018 = vpop.f32.mrf.mxu0
  %v2019 = vadd.f32 %v1855, %v2018
  %2020 = vmatmul.f32.gmra.mxu0 %v665
  %v2021 = vpop.f32.mrf.mxu0
  %v2022 = vadd.f32 %v1858, %v2021
  %2023 = vmatmul.f32.gmra.mxu0 %v681
  %v2024 = vpop.f32.mrf.mxu0
  %v2025 = vadd.f32 %v1861, %v2024
  %2026 = vmatmul.f32.gmra.mxu0 %v697
  %v2027 = vpop.f32.mrf.mxu0
  %v2028 = vadd.f32 %v1864, %v2027
  %2029 = vmatmul.f32.gmra.mxu0 %v713
  %v2030 = vpop.f32.mrf.mxu0
  %v2031 = vadd.f32 %v1867, %v2030
  %2032 = vmatmul.f32.gmra.mxu0 %v729
  %v2033 = vpop.f32.mrf.mxu0
  %v2034 = vadd.f32 %v1870, %v2033
  %2035 = vmatmul.f32.gmra.mxu0 %v745
  %v2036 = vpop.f32.mrf.mxu0
  %v2037 = vadd.f32 %v1873, %v2036
  %2038 = vmatmul.f32.gmra.mxu0 %v761
  %v2039 = vpop.f32.mrf.mxu0
  %v2040 = vadd.f32 %v1876, %v2039
  %2041 = vmatmul.f32.gmra.mxu0 %v777
  %v2042 = vpop.f32.mrf.mxu0
  %v2043 = vadd.f32 %v1879, %v2042
  %2044 = vmatmul.f32.gmra.mxu0 %v793
  %v2045 = vpop.f32.mrf.mxu0
  %v2046 = vadd.f32 %v1882, %v2045
  %2047 = vdwg.mxu0
  %2048 = vmatpush.msra.mxu0 %v915
  %2049 = vmatpush.msra.mxu0 %v914
  %2050 = vmatpush.msra.mxu0 %v913
  %2051 = vmatpush.msra.mxu0 %v912
  %2052 = vmatpush.msra.mxu0 %v911
  %2053 = vmatpush.msra.mxu0 %v910
  %2054 = vmatpush.msra.mxu0 %v909
  %2055 = vmatpush.msra.mxu0 %v908
  %2056 = vmatpush.msra.mxu0 %v907
  %2057 = vmatpush.msra.mxu0 %v906
  %2058 = vmatpush.msra.mxu0 %v905
  %2059 = vmatpush.msra.mxu0 %v904
  %2060 = vmatpush.msra.mxu0 %v903
  %2061 = vmatpush.msra.mxu0 %v902
  %2062 = vmatpush.msra.mxu0 %v901
  %2063 = vmatpush.msra.mxu0 %v900
  %2064 = vmatmul.f32.gmra.mxu0 %v26
  %v2065 = vpop.f32.mrf.mxu0
  %v2066 = vadd.f32 %v1902, %v2065
  %2067 = vmatmul.f32.gmra.mxu0 %v42
  %v2068 = vpop.f32.mrf.mxu0
  %v2069 = vadd.f32 %v1905, %v2068
  %2070 = vmatmul.f32.gmra.mxu0 %v58
  %v2071 = vpop.f32.mrf.mxu0
  %v2072 = vadd.f32 %v1908, %v2071
  %2073 = vmatmul.f32.gmra.mxu0 %v74
  %v2074 = vpop.f32.mrf.mxu0
  %v2075 = vadd.f32 %v1911, %v2074
  %2076 = vmatmul.f32.gmra.mxu0 %v90
  %v2077 = vpop.f32.mrf.mxu0
  %v2078 = vadd.f32 %v1914, %v2077
  %2079 = vmatmul.f32.gmra.mxu0 %v106
  %v2080 = vpop.f32.mrf.mxu0
  %v2081 = vadd.f32 %v1917, %v2080
  %2082 = vmatmul.f32.gmra.mxu0 %v122
  %v2083 = vpop.f32.mrf.mxu0
  %v2084 = vadd.f32 %v1920, %v2083
  %2085 = vmatmul.f32.gmra.mxu0 %v138
  %v2086 = vpop.f32.mrf.mxu0
  %v2087 = vadd.f32 %v1923, %v2086
  %2088 = vmatmul.f32.gmra.mxu0 %v154
  %v2089 = vpop.f32.mrf.mxu0
  %v2090 = vadd.f32 %v1926, %v2089
  %2091 = vmatmul.f32.gmra.mxu0 %v170
  %v2092 = vpop.f32.mrf.mxu0
  %v2093 = vadd.f32 %v1929, %v2092
  %2094 = vmatmul.f32.gmra.mxu0 %v186
  %v2095 = vpop.f32.mrf.mxu0
  %v2096 = vadd.f32 %v1932, %v2095
  %2097 = vmatmul.f32.gmra.mxu0 %v202
  %v2098 = vpop.f32.mrf.mxu0
  %v2099 = vadd.f32 %v1935, %v2098
  %2100 = vmatmul.f32.gmra.mxu0 %v218
  %v2101 = vpop.f32.mrf.mxu0
  %v2102 = vadd.f32 %v1938, %v2101
  %2103 = vmatmul.f32.gmra.mxu0 %v234
  %v2104 = vpop.f32.mrf.mxu0
  %v2105 = vadd.f32 %v1941, %v2104
  %2106 = vmatmul.f32.gmra.mxu0 %v250
  %v2107 = vpop.f32.mrf.mxu0
  %v2108 = vadd.f32 %v1944, %v2107
  %2109 = vmatmul.f32.gmra.mxu0 %v266
  %v2110 = vpop.f32.mrf.mxu0
  %v2111 = vadd.f32 %v1947, %v2110
  %2112 = vmatmul.f32.gmra.mxu0 %v282
  %v2113 = vpop.f32.mrf.mxu0
  %v2114 = vadd.f32 %v1950, %v2113
  %2115 = vmatmul.f32.gmra.mxu0 %v298
  %v2116 = vpop.f32.mrf.mxu0
  %v2117 = vadd.f32 %v1953, %v2116
  %2118 = vmatmul.f32.gmra.mxu0 %v314
  %v2119 = vpop.f32.mrf.mxu0
  %v2120 = vadd.f32 %v1956, %v2119
  %2121 = vmatmul.f32.gmra.mxu0 %v330
  %v2122 = vpop.f32.mrf.mxu0
  %v2123 = vadd.f32 %v1959, %v2122
  %2124 = vmatmul.f32.gmra.mxu0 %v346
  %v2125 = vpop.f32.mrf.mxu0
  %v2126 = vadd.f32 %v1962, %v2125
  %2127 = vmatmul.f32.gmra.mxu0 %v362
  %v2128 = vpop.f32.mrf.mxu0
  %v2129 = vadd.f32 %v1965, %v2128
  %2130 = vmatmul.f32.gmra.mxu0 %v378
  %v2131 = vpop.f32.mrf.mxu0
  %v2132 = vadd.f32 %v1968, %v2131
  %2133 = vmatmul.f32.gmra.mxu0 %v394
  %v2134 = vpop.f32.mrf.mxu0
  %v2135 = vadd.f32 %v1971, %v2134
  %2136 = vmatmul.f32.gmra.mxu0 %v410
  %v2137 = vpop.f32.mrf.mxu0
  %v2138 = vadd.f32 %v1974, %v2137
  %2139 = vmatmul.f32.gmra.mxu0 %v426
  %v2140 = vpop.f32.mrf.mxu0
  %v2141 = vadd.f32 %v1977, %v2140
  %2142 = vmatmul.f32.gmra.mxu0 %v442
  %v2143 = vpop.f32.mrf.mxu0
  %v2144 = vadd.f32 %v1980, %v2143
  %2145 = vmatmul.f32.gmra.mxu0 %v458
  %v2146 = vpop.f32.mrf.mxu0
  %v2147 = vadd.f32 %v1983, %v2146
  %2148 = vmatmul.f32.gmra.mxu0 %v474
  %v2149 = vpop.f32.mrf.mxu0
  %v2150 = vadd.f32 %v1986, %v2149
  %2151 = vmatmul.f32.gmra.mxu0 %v490
  %v2152 = vpop.f32.mrf.mxu0
  %v2153 = vadd.f32 %v1989, %v2152
  %2154 = vmatmul.f32.gmra.mxu0 %v506
  %v2155 = vpop.f32.mrf.mxu0
  %v2156 = vadd.f32 %v1992, %v2155
  %2157 = vmatmul.f32.gmra.mxu0 %v522
  %v2158 = vpop.f32.mrf.mxu0
  %v2159 = vadd.f32 %v1995, %v2158
  %2160 = vmatmul.f32.gmra.mxu0 %v538
  %v2161 = vpop.f32.mrf.mxu0
  %v2162 = vadd.f32 %v1998, %v2161
  %2163 = vmatmul.f32.gmra.mxu0 %v554
  %v2164 = vpop.f32.mrf.mxu0
  %v2165 = vadd.f32 %v2001, %v2164
  %2166 = vmatmul.f32.gmra.mxu0 %v570
  %v2167 = vpop.f32.mrf.mxu0
  %v2168 = vadd.f32 %v2004, %v2167
  %2169 = vmatmul.f32.gmra.mxu0 %v586
  %v2170 = vpop.f32.mrf.mxu0
  %v2171 = vadd.f32 %v2007, %v2170
  %2172 = vmatmul.f32.gmra.mxu0 %v602
  %v2173 = vpop.f32.mrf.mxu0
  %v2174 = vadd.f32 %v2010, %v2173
  %2175 = vmatmul.f32.gmra.mxu0 %v618
  %v2176 = vpop.f32.mrf.mxu0
  %v2177 = vadd.f32 %v2013, %v2176
  %2178 = vmatmul.f32.gmra.mxu0 %v634
  %v2179 = vpop.f32.mrf.mxu0
  %v2180 = vadd.f32 %v2016, %v2179
  %2181 = vmatmul.f32.gmra.mxu0 %v650
  %v2182 = vpop.f32.mrf.mxu0
  %v2183 = vadd.f32 %v2019, %v2182
  %2184 = vmatmul.f32.gmra.mxu0 %v666
  %v2185 = vpop.f32.mrf.mxu0
  %v2186 = vadd.f32 %v2022, %v2185
  %2187 = vmatmul.f32.gmra.mxu0 %v682
  %v2188 = vpop.f32.mrf.mxu0
  %v2189 = vadd.f32 %v2025, %v2188
  %2190 = vmatmul.f32.gmra.mxu0 %v698
  %v2191 = vpop.f32.mrf.mxu0
  %v2192 = vadd.f32 %v2028, %v2191
  %2193 = vmatmul.f32.gmra.mxu0 %v714
  %v2194 = vpop.f32.mrf.mxu0
  %v2195 = vadd.f32 %v2031, %v2194
  %2196 = vmatmul.f32.gmra.mxu0 %v730
  %v2197 = vpop.f32.mrf.mxu0
  %v2198 = vadd.f32 %v2034, %v2197
  %2199 = vmatmul.f32.gmra.mxu0 %v746
  %v2200 = vpop.f32.mrf.mxu0
  %v2201 = vadd.f32 %v2037, %v2200
  %2202 = vmatmul.f32.gmra.mxu0 %v762
  %v2203 = vpop.f32.mrf.mxu0
  %v2204 = vadd.f32 %v2040, %v2203
  %2205 = vmatmul.f32.gmra.mxu0 %v778
  %v2206 = vpop.f32.mrf.mxu0
  %v2207 = vadd.f32 %v2043, %v2206
  %2208 = vmatmul.f32.gmra.mxu0 %v794
  %v2209 = vpop.f32.mrf.mxu0
  %v2210 = vadd.f32 %v2046, %v2209
  %2211 = vdwg.mxu0
  %2212 = vmatpush.msra.mxu0 %v931
  %2213 = vmatpush.msra.mxu0 %v930
  %2214 = vmatpush.msra.mxu0 %v929
  %2215 = vmatpush.msra.mxu0 %v928
  %2216 = vmatpush.msra.mxu0 %v927
  %2217 = vmatpush.msra.mxu0 %v926
  %2218 = vmatpush.msra.mxu0 %v925
  %2219 = vmatpush.msra.mxu0 %v924
  %2220 = vmatpush.msra.mxu0 %v923
  %2221 = vmatpush.msra.mxu0 %v922
  %2222 = vmatpush.msra.mxu0 %v921
  %2223 = vmatpush.msra.mxu0 %v920
  %2224 = vmatpush.msra.mxu0 %v919
  %2225 = vmatpush.msra.mxu0 %v918
  %2226 = vmatpush.msra.mxu0 %v917
  %2227 = vmatpush.msra.mxu0 %v916
  %2228 = vmatmul.f32.gmra.mxu0 %v27
  %v2229 = vpop.f32.mrf.mxu0
  %v2230 = vadd.f32 %v2066, %v2229
  %2231 = vmatmul.f32.gmra.mxu0 %v43
  %v2232 = vpop.f32.mrf.mxu0
  %v2233 = vadd.f32 %v2069, %v2232
  %2234 = vmatmul.f32.gmra.mxu0 %v59
  %v2235 = vpop.f32.mrf.mxu0
  %v2236 = vadd.f32 %v2072, %v2235
  %2237 = vmatmul.f32.gmra.mxu0 %v75
  %v2238 = vpop.f32.mrf.mxu0
  %v2239 = vadd.f32 %v2075, %v2238
  %2240 = vmatmul.f32.gmra.mxu0 %v91
  %v2241 = vpop.f32.mrf.mxu0
  %v2242 = vadd.f32 %v2078, %v2241
  %2243 = vmatmul.f32.gmra.mxu0 %v107
  %v2244 = vpop.f32.mrf.mxu0
  %v2245 = vadd.f32 %v2081, %v2244
  %2246 = vmatmul.f32.gmra.mxu0 %v123
  %v2247 = vpop.f32.mrf.mxu0
  %v2248 = vadd.f32 %v2084, %v2247
  %2249 = vmatmul.f32.gmra.mxu0 %v139
  %v2250 = vpop.f32.mrf.mxu0
  %v2251 = vadd.f32 %v2087, %v2250
  %2252 = vmatmul.f32.gmra.mxu0 %v155
  %v2253 = vpop.f32.mrf.mxu0
  %v2254 = vadd.f32 %v2090, %v2253
  %2255 = vmatmul.f32.gmra.mxu0 %v171
  %v2256 = vpop.f32.mrf.mxu0
  %v2257 = vadd.f32 %v2093, %v2256
  %2258 = vmatmul.f32.gmra.mxu0 %v187
  %v2259 = vpop.f32.mrf.mxu0
  %v2260 = vadd.f32 %v2096, %v2259
  %2261 = vmatmul.f32.gmra.mxu0 %v203
  %v2262 = vpop.f32.mrf.mxu0
  %v2263 = vadd.f32 %v2099, %v2262
  %2264 = vmatmul.f32.gmra.mxu0 %v219
  %v2265 = vpop.f32.mrf.mxu0
  %v2266 = vadd.f32 %v2102, %v2265
  %2267 = vmatmul.f32.gmra.mxu0 %v235
  %v2268 = vpop.f32.mrf.mxu0
  %v2269 = vadd.f32 %v2105, %v2268
  %2270 = vmatmul.f32.gmra.mxu0 %v251
  %v2271 = vpop.f32.mrf.mxu0
  %v2272 = vadd.f32 %v2108, %v2271
  %2273 = vmatmul.f32.gmra.mxu0 %v267
  %v2274 = vpop.f32.mrf.mxu0
  %v2275 = vadd.f32 %v2111, %v2274
  %2276 = vmatmul.f32.gmra.mxu0 %v283
  %v2277 = vpop.f32.mrf.mxu0
  %v2278 = vadd.f32 %v2114, %v2277
  %2279 = vmatmul.f32.gmra.mxu0 %v299
  %v2280 = vpop.f32.mrf.mxu0
  %v2281 = vadd.f32 %v2117, %v2280
  %2282 = vmatmul.f32.gmra.mxu0 %v315
  %v2283 = vpop.f32.mrf.mxu0
  %v2284 = vadd.f32 %v2120, %v2283
  %2285 = vmatmul.f32.gmra.mxu0 %v331
  %v2286 = vpop.f32.mrf.mxu0
  %v2287 = vadd.f32 %v2123, %v2286
  %2288 = vmatmul.f32.gmra.mxu0 %v347
  %v2289 = vpop.f32.mrf.mxu0
  %v2290 = vadd.f32 %v2126, %v2289
  %2291 = vmatmul.f32.gmra.mxu0 %v363
  %v2292 = vpop.f32.mrf.mxu0
  %v2293 = vadd.f32 %v2129, %v2292
  %2294 = vmatmul.f32.gmra.mxu0 %v379
  %v2295 = vpop.f32.mrf.mxu0
  %v2296 = vadd.f32 %v2132, %v2295
  %2297 = vmatmul.f32.gmra.mxu0 %v395
  %v2298 = vpop.f32.mrf.mxu0
  %v2299 = vadd.f32 %v2135, %v2298
  %2300 = vmatmul.f32.gmra.mxu0 %v411
  %v2301 = vpop.f32.mrf.mxu0
  %v2302 = vadd.f32 %v2138, %v2301
  %2303 = vmatmul.f32.gmra.mxu0 %v427
  %v2304 = vpop.f32.mrf.mxu0
  %v2305 = vadd.f32 %v2141, %v2304
  %2306 = vmatmul.f32.gmra.mxu0 %v443
  %v2307 = vpop.f32.mrf.mxu0
  %v2308 = vadd.f32 %v2144, %v2307
  %2309 = vmatmul.f32.gmra.mxu0 %v459
  %v2310 = vpop.f32.mrf.mxu0
  %v2311 = vadd.f32 %v2147, %v2310
  %2312 = vmatmul.f32.gmra.mxu0 %v475
  %v2313 = vpop.f32.mrf.mxu0
  %v2314 = vadd.f32 %v2150, %v2313
  %2315 = vmatmul.f32.gmra.mxu0 %v491
  %v2316 = vpop.f32.mrf.mxu0
  %v2317 = vadd.f32 %v2153, %v2316
  %2318 = vmatmul.f32.gmra.mxu0 %v507
  %v2319 = vpop.f32.mrf.mxu0
  %v2320 = vadd.f32 %v2156, %v2319
  %2321 = vmatmul.f32.gmra.mxu0 %v523
  %v2322 = vpop.f32.mrf.mxu0
  %v2323 = vadd.f32 %v2159, %v2322
  %2324 = vmatmul.f32.gmra.mxu0 %v539
  %v2325 = vpop.f32.mrf.mxu0
  %v2326 = vadd.f32 %v2162, %v2325
  %2327 = vmatmul.f32.gmra.mxu0 %v555
  %v2328 = vpop.f32.mrf.mxu0
  %v2329 = vadd.f32 %v2165, %v2328
  %2330 = vmatmul.f32.gmra.mxu0 %v571
  %v2331 = vpop.f32.mrf.mxu0
  %v2332 = vadd.f32 %v2168, %v2331
  %2333 = vmatmul.f32.gmra.mxu0 %v587
  %v2334 = vpop.f32.mrf.mxu0
  %v2335 = vadd.f32 %v2171, %v2334
  %2336 = vmatmul.f32.gmra.mxu0 %v603
  %v2337 = vpop.f32.mrf.mxu0
  %v2338 = vadd.f32 %v2174, %v2337
  %2339 = vmatmul.f32.gmra.mxu0 %v619
  %v2340 = vpop.f32.mrf.mxu0
  %v2341 = vadd.f32 %v2177, %v2340
  %2342 = vmatmul.f32.gmra.mxu0 %v635
  %v2343 = vpop.f32.mrf.mxu0
  %v2344 = vadd.f32 %v2180, %v2343
  %2345 = vmatmul.f32.gmra.mxu0 %v651
  %v2346 = vpop.f32.mrf.mxu0
  %v2347 = vadd.f32 %v2183, %v2346
  %2348 = vmatmul.f32.gmra.mxu0 %v667
  %v2349 = vpop.f32.mrf.mxu0
  %v2350 = vadd.f32 %v2186, %v2349
  %2351 = vmatmul.f32.gmra.mxu0 %v683
  %v2352 = vpop.f32.mrf.mxu0
  %v2353 = vadd.f32 %v2189, %v2352
  %2354 = vmatmul.f32.gmra.mxu0 %v699
  %v2355 = vpop.f32.mrf.mxu0
  %v2356 = vadd.f32 %v2192, %v2355
  %2357 = vmatmul.f32.gmra.mxu0 %v715
  %v2358 = vpop.f32.mrf.mxu0
  %v2359 = vadd.f32 %v2195, %v2358
  %2360 = vmatmul.f32.gmra.mxu0 %v731
  %v2361 = vpop.f32.mrf.mxu0
  %v2362 = vadd.f32 %v2198, %v2361
  %2363 = vmatmul.f32.gmra.mxu0 %v747
  %v2364 = vpop.f32.mrf.mxu0
  %v2365 = vadd.f32 %v2201, %v2364
  %2366 = vmatmul.f32.gmra.mxu0 %v763
  %v2367 = vpop.f32.mrf.mxu0
  %v2368 = vadd.f32 %v2204, %v2367
  %2369 = vmatmul.f32.gmra.mxu0 %v779
  %v2370 = vpop.f32.mrf.mxu0
  %v2371 = vadd.f32 %v2207, %v2370
  %2372 = vmatmul.f32.gmra.mxu0 %v795
  %v2373 = vpop.f32.mrf.mxu0
  %v2374 = vadd.f32 %v2210, %v2373
  %2375 = vdwg.mxu0
  %2376 = vmatpush.msra.mxu0 %v947
  %2377 = vmatpush.msra.mxu0 %v946
  %2378 = vmatpush.msra.mxu0 %v945
  %2379 = vmatpush.msra.mxu0 %v944
  %2380 = vmatpush.msra.mxu0 %v943
  %2381 = vmatpush.msra.mxu0 %v942
  %2382 = vmatpush.msra.mxu0 %v941
  %2383 = vmatpush.msra.mxu0 %v940
  %2384 = vmatpush.msra.mxu0 %v939
  %2385 = vmatpush.msra.mxu0 %v938
  %2386 = vmatpush.msra.mxu0 %v937
  %2387 = vmatpush.msra.mxu0 %v936
  %2388 = vmatpush.msra.mxu0 %v935
  %2389 = vmatpush.msra.mxu0 %v934
  %2390 = vmatpush.msra.mxu0 %v933
  %2391 = vmatpush.msra.mxu0 %v932
  %2392 = vmatmul.f32.gmra.mxu0 %v28
  %v2393 = vpop.f32.mrf.mxu0
  %v2394 = vadd.f32 %v2230, %v2393
  %2395 = vmatmul.f32.gmra.mxu0 %v44
  %v2396 = vpop.f32.mrf.mxu0
  %v2397 = vadd.f32 %v2233, %v2396
  %2398 = vmatmul.f32.gmra.mxu0 %v60
  %v2399 = vpop.f32.mrf.mxu0
  %v2400 = vadd.f32 %v2236, %v2399
  %2401 = vmatmul.f32.gmra.mxu0 %v76
  %v2402 = vpop.f32.mrf.mxu0
  %v2403 = vadd.f32 %v2239, %v2402
  %2404 = vmatmul.f32.gmra.mxu0 %v92
  %v2405 = vpop.f32.mrf.mxu0
  %v2406 = vadd.f32 %v2242, %v2405
  %2407 = vmatmul.f32.gmra.mxu0 %v108
  %v2408 = vpop.f32.mrf.mxu0
  %v2409 = vadd.f32 %v2245, %v2408
  %2410 = vmatmul.f32.gmra.mxu0 %v124
  %v2411 = vpop.f32.mrf.mxu0
  %v2412 = vadd.f32 %v2248, %v2411
  %2413 = vmatmul.f32.gmra.mxu0 %v140
  %v2414 = vpop.f32.mrf.mxu0
  %v2415 = vadd.f32 %v2251, %v2414
  %2416 = vmatmul.f32.gmra.mxu0 %v156
  %v2417 = vpop.f32.mrf.mxu0
  %v2418 = vadd.f32 %v2254, %v2417
  %2419 = vmatmul.f32.gmra.mxu0 %v172
  %v2420 = vpop.f32.mrf.mxu0
  %v2421 = vadd.f32 %v2257, %v2420
  %2422 = vmatmul.f32.gmra.mxu0 %v188
  %v2423 = vpop.f32.mrf.mxu0
  %v2424 = vadd.f32 %v2260, %v2423
  %2425 = vmatmul.f32.gmra.mxu0 %v204
  %v2426 = vpop.f32.mrf.mxu0
  %v2427 = vadd.f32 %v2263, %v2426
  %2428 = vmatmul.f32.gmra.mxu0 %v220
  %v2429 = vpop.f32.mrf.mxu0
  %v2430 = vadd.f32 %v2266, %v2429
  %2431 = vmatmul.f32.gmra.mxu0 %v236
  %v2432 = vpop.f32.mrf.mxu0
  %v2433 = vadd.f32 %v2269, %v2432
  %2434 = vmatmul.f32.gmra.mxu0 %v252
  %v2435 = vpop.f32.mrf.mxu0
  %v2436 = vadd.f32 %v2272, %v2435
  %2437 = vmatmul.f32.gmra.mxu0 %v268
  %v2438 = vpop.f32.mrf.mxu0
  %v2439 = vadd.f32 %v2275, %v2438
  %2440 = vmatmul.f32.gmra.mxu0 %v284
  %v2441 = vpop.f32.mrf.mxu0
  %v2442 = vadd.f32 %v2278, %v2441
  %2443 = vmatmul.f32.gmra.mxu0 %v300
  %v2444 = vpop.f32.mrf.mxu0
  %v2445 = vadd.f32 %v2281, %v2444
  %2446 = vmatmul.f32.gmra.mxu0 %v316
  %v2447 = vpop.f32.mrf.mxu0
  %v2448 = vadd.f32 %v2284, %v2447
  %2449 = vmatmul.f32.gmra.mxu0 %v332
  %v2450 = vpop.f32.mrf.mxu0
  %v2451 = vadd.f32 %v2287, %v2450
  %2452 = vmatmul.f32.gmra.mxu0 %v348
  %v2453 = vpop.f32.mrf.mxu0
  %v2454 = vadd.f32 %v2290, %v2453
  %2455 = vmatmul.f32.gmra.mxu0 %v364
  %v2456 = vpop.f32.mrf.mxu0
  %v2457 = vadd.f32 %v2293, %v2456
  %2458 = vmatmul.f32.gmra.mxu0 %v380
  %v2459 = vpop.f32.mrf.mxu0
  %v2460 = vadd.f32 %v2296, %v2459
  %2461 = vmatmul.f32.gmra.mxu0 %v396
  %v2462 = vpop.f32.mrf.mxu0
  %v2463 = vadd.f32 %v2299, %v2462
  %2464 = vmatmul.f32.gmra.mxu0 %v412
  %v2465 = vpop.f32.mrf.mxu0
  %v2466 = vadd.f32 %v2302, %v2465
  %2467 = vmatmul.f32.gmra.mxu0 %v428
  %v2468 = vpop.f32.mrf.mxu0
  %v2469 = vadd.f32 %v2305, %v2468
  %2470 = vmatmul.f32.gmra.mxu0 %v444
  %v2471 = vpop.f32.mrf.mxu0
  %v2472 = vadd.f32 %v2308, %v2471
  %2473 = vmatmul.f32.gmra.mxu0 %v460
  %v2474 = vpop.f32.mrf.mxu0
  %v2475 = vadd.f32 %v2311, %v2474
  %2476 = vmatmul.f32.gmra.mxu0 %v476
  %v2477 = vpop.f32.mrf.mxu0
  %v2478 = vadd.f32 %v2314, %v2477
  %2479 = vmatmul.f32.gmra.mxu0 %v492
  %v2480 = vpop.f32.mrf.mxu0
  %v2481 = vadd.f32 %v2317, %v2480
  %2482 = vmatmul.f32.gmra.mxu0 %v508
  %v2483 = vpop.f32.mrf.mxu0
  %v2484 = vadd.f32 %v2320, %v2483
  %2485 = vmatmul.f32.gmra.mxu0 %v524
  %v2486 = vpop.f32.mrf.mxu0
  %v2487 = vadd.f32 %v2323, %v2486
  %2488 = vmatmul.f32.gmra.mxu0 %v540
  %v2489 = vpop.f32.mrf.mxu0
  %v2490 = vadd.f32 %v2326, %v2489
  %2491 = vmatmul.f32.gmra.mxu0 %v556
  %v2492 = vpop.f32.mrf.mxu0
  %v2493 = vadd.f32 %v2329, %v2492
  %2494 = vmatmul.f32.gmra.mxu0 %v572
  %v2495 = vpop.f32.mrf.mxu0
  %v2496 = vadd.f32 %v2332, %v2495
  %2497 = vmatmul.f32.gmra.mxu0 %v588
  %v2498 = vpop.f32.mrf.mxu0
  %v2499 = vadd.f32 %v2335, %v2498
  %2500 = vmatmul.f32.gmra.mxu0 %v604
  %v2501 = vpop.f32.mrf.mxu0
  %v2502 = vadd.f32 %v2338, %v2501
  %2503 = vmatmul.f32.gmra.mxu0 %v620
  %v2504 = vpop.f32.mrf.mxu0
  %v2505 = vadd.f32 %v2341, %v2504
  %2506 = vmatmul.f32.gmra.mxu0 %v636
  %v2507 = vpop.f32.mrf.mxu0
  %v2508 = vadd.f32 %v2344, %v2507
  %2509 = vmatmul.f32.gmra.mxu0 %v652
  %v2510 = vpop.f32.mrf.mxu0
  %v2511 = vadd.f32 %v2347, %v2510
  %2512 = vmatmul.f32.gmra.mxu0 %v668
  %v2513 = vpop.f32.mrf.mxu0
  %v2514 = vadd.f32 %v2350, %v2513
  %2515 = vmatmul.f32.gmra.mxu0 %v684
  %v2516 = vpop.f32.mrf.mxu0
  %v2517 = vadd.f32 %v2353, %v2516
  %2518 = vmatmul.f32.gmra.mxu0 %v700
  %v2519 = vpop.f32.mrf.mxu0
  %v2520 = vadd.f32 %v2356, %v2519
  %2521 = vmatmul.f32.gmra.mxu0 %v716
  %v2522 = vpop.f32.mrf.mxu0
  %v2523 = vadd.f32 %v2359, %v2522
  %2524 = vmatmul.f32.gmra.mxu0 %v732
  %v2525 = vpop.f32.mrf.mxu0
  %v2526 = vadd.f32 %v2362, %v2525
  %2527 = vmatmul.f32.gmra.mxu0 %v748
  %v2528 = vpop.f32.mrf.mxu0
  %v2529 = vadd.f32 %v2365, %v2528
  %2530 = vmatmul.f32.gmra.mxu0 %v764
  %v2531 = vpop.f32.mrf.mxu0
  %v2532 = vadd.f32 %v2368, %v2531
  %2533 = vmatmul.f32.gmra.mxu0 %v780
  %v2534 = vpop.f32.mrf.mxu0
  %v2535 = vadd.f32 %v2371, %v2534
  %2536 = vmatmul.f32.gmra.mxu0 %v796
  %v2537 = vpop.f32.mrf.mxu0
  %v2538 = vadd.f32 %v2374, %v2537
  %2539 = vdwg.mxu0
  %2540 = vmatpush.msra.mxu0 %v963
  %2541 = vmatpush.msra.mxu0 %v962
  %2542 = vmatpush.msra.mxu0 %v961
  %2543 = vmatpush.msra.mxu0 %v960
  %2544 = vmatpush.msra.mxu0 %v959
  %2545 = vmatpush.msra.mxu0 %v958
  %2546 = vmatpush.msra.mxu0 %v957
  %2547 = vmatpush.msra.mxu0 %v956
  %2548 = vmatpush.msra.mxu0 %v955
  %2549 = vmatpush.msra.mxu0 %v954
  %2550 = vmatpush.msra.mxu0 %v953
  %2551 = vmatpush.msra.mxu0 %v952
  %2552 = vmatpush.msra.mxu0 %v951
  %2553 = vmatpush.msra.mxu0 %v950
  %2554 = vmatpush.msra.mxu0 %v949
  %2555 = vmatpush.msra.mxu0 %v948
  %2556 = vmatmul.f32.gmra.mxu0 %v29
  %v2557 = vpop.f32.mrf.mxu0
  %v2558 = vadd.f32 %v2394, %v2557
  %2559 = vmatmul.f32.gmra.mxu0 %v45
  %v2560 = vpop.f32.mrf.mxu0
  %v2561 = vadd.f32 %v2397, %v2560
  %2562 = vmatmul.f32.gmra.mxu0 %v61
  %v2563 = vpop.f32.mrf.mxu0
  %v2564 = vadd.f32 %v2400, %v2563
  %2565 = vmatmul.f32.gmra.mxu0 %v77
  %v2566 = vpop.f32.mrf.mxu0
  %v2567 = vadd.f32 %v2403, %v2566
  %2568 = vmatmul.f32.gmra.mxu0 %v93
  %v2569 = vpop.f32.mrf.mxu0
  %v2570 = vadd.f32 %v2406, %v2569
  %2571 = vmatmul.f32.gmra.mxu0 %v109
  %v2572 = vpop.f32.mrf.mxu0
  %v2573 = vadd.f32 %v2409, %v2572
  %2574 = vmatmul.f32.gmra.mxu0 %v125
  %v2575 = vpop.f32.mrf.mxu0
  %v2576 = vadd.f32 %v2412, %v2575
  %2577 = vmatmul.f32.gmra.mxu0 %v141
  %v2578 = vpop.f32.mrf.mxu0
  %v2579 = vadd.f32 %v2415, %v2578
  %2580 = vmatmul.f32.gmra.mxu0 %v157
  %v2581 = vpop.f32.mrf.mxu0
  %v2582 = vadd.f32 %v2418, %v2581
  %2583 = vmatmul.f32.gmra.mxu0 %v173
  %v2584 = vpop.f32.mrf.mxu0
  %v2585 = vadd.f32 %v2421, %v2584
  %2586 = vmatmul.f32.gmra.mxu0 %v189
  %v2587 = vpop.f32.mrf.mxu0
  %v2588 = vadd.f32 %v2424, %v2587
  %2589 = vmatmul.f32.gmra.mxu0 %v205
  %v2590 = vpop.f32.mrf.mxu0
  %v2591 = vadd.f32 %v2427, %v2590
  %2592 = vmatmul.f32.gmra.mxu0 %v221
  %v2593 = vpop.f32.mrf.mxu0
  %v2594 = vadd.f32 %v2430, %v2593
  %2595 = vmatmul.f32.gmra.mxu0 %v237
  %v2596 = vpop.f32.mrf.mxu0
  %v2597 = vadd.f32 %v2433, %v2596
  %2598 = vmatmul.f32.gmra.mxu0 %v253
  %v2599 = vpop.f32.mrf.mxu0
  %v2600 = vadd.f32 %v2436, %v2599
  %2601 = vmatmul.f32.gmra.mxu0 %v269
  %v2602 = vpop.f32.mrf.mxu0
  %v2603 = vadd.f32 %v2439, %v2602
  %2604 = vmatmul.f32.gmra.mxu0 %v285
  %v2605 = vpop.f32.mrf.mxu0
  %v2606 = vadd.f32 %v2442, %v2605
  %2607 = vmatmul.f32.gmra.mxu0 %v301
  %v2608 = vpop.f32.mrf.mxu0
  %v2609 = vadd.f32 %v2445, %v2608
  %2610 = vmatmul.f32.gmra.mxu0 %v317
  %v2611 = vpop.f32.mrf.mxu0
  %v2612 = vadd.f32 %v2448, %v2611
  %2613 = vmatmul.f32.gmra.mxu0 %v333
  %v2614 = vpop.f32.mrf.mxu0
  %v2615 = vadd.f32 %v2451, %v2614
  %2616 = vmatmul.f32.gmra.mxu0 %v349
  %v2617 = vpop.f32.mrf.mxu0
  %v2618 = vadd.f32 %v2454, %v2617
  %2619 = vmatmul.f32.gmra.mxu0 %v365
  %v2620 = vpop.f32.mrf.mxu0
  %v2621 = vadd.f32 %v2457, %v2620
  %2622 = vmatmul.f32.gmra.mxu0 %v381
  %v2623 = vpop.f32.mrf.mxu0
  %v2624 = vadd.f32 %v2460, %v2623
  %2625 = vmatmul.f32.gmra.mxu0 %v397
  %v2626 = vpop.f32.mrf.mxu0
  %v2627 = vadd.f32 %v2463, %v2626
  %2628 = vmatmul.f32.gmra.mxu0 %v413
  %v2629 = vpop.f32.mrf.mxu0
  %v2630 = vadd.f32 %v2466, %v2629
  %2631 = vmatmul.f32.gmra.mxu0 %v429
  %v2632 = vpop.f32.mrf.mxu0
  %v2633 = vadd.f32 %v2469, %v2632
  %2634 = vmatmul.f32.gmra.mxu0 %v445
  %v2635 = vpop.f32.mrf.mxu0
  %v2636 = vadd.f32 %v2472, %v2635
  %2637 = vmatmul.f32.gmra.mxu0 %v461
  %v2638 = vpop.f32.mrf.mxu0
  %v2639 = vadd.f32 %v2475, %v2638
  %2640 = vmatmul.f32.gmra.mxu0 %v477
  %v2641 = vpop.f32.mrf.mxu0
  %v2642 = vadd.f32 %v2478, %v2641
  %2643 = vmatmul.f32.gmra.mxu0 %v493
  %v2644 = vpop.f32.mrf.mxu0
  %v2645 = vadd.f32 %v2481, %v2644
  %2646 = vmatmul.f32.gmra.mxu0 %v509
  %v2647 = vpop.f32.mrf.mxu0
  %v2648 = vadd.f32 %v2484, %v2647
  %2649 = vmatmul.f32.gmra.mxu0 %v525
  %v2650 = vpop.f32.mrf.mxu0
  %v2651 = vadd.f32 %v2487, %v2650
  %2652 = vmatmul.f32.gmra.mxu0 %v541
  %v2653 = vpop.f32.mrf.mxu0
  %v2654 = vadd.f32 %v2490, %v2653
  %2655 = vmatmul.f32.gmra.mxu0 %v557
  %v2656 = vpop.f32.mrf.mxu0
  %v2657 = vadd.f32 %v2493, %v2656
  %2658 = vmatmul.f32.gmra.mxu0 %v573
  %v2659 = vpop.f32.mrf.mxu0
  %v2660 = vadd.f32 %v2496, %v2659
  %2661 = vmatmul.f32.gmra.mxu0 %v589
  %v2662 = vpop.f32.mrf.mxu0
  %v2663 = vadd.f32 %v2499, %v2662
  %2664 = vmatmul.f32.gmra.mxu0 %v605
  %v2665 = vpop.f32.mrf.mxu0
  %v2666 = vadd.f32 %v2502, %v2665
  %2667 = vmatmul.f32.gmra.mxu0 %v621
  %v2668 = vpop.f32.mrf.mxu0
  %v2669 = vadd.f32 %v2505, %v2668
  %2670 = vmatmul.f32.gmra.mxu0 %v637
  %v2671 = vpop.f32.mrf.mxu0
  %v2672 = vadd.f32 %v2508, %v2671
  %2673 = vmatmul.f32.gmra.mxu0 %v653
  %v2674 = vpop.f32.mrf.mxu0
  %v2675 = vadd.f32 %v2511, %v2674
  %2676 = vmatmul.f32.gmra.mxu0 %v669
  %v2677 = vpop.f32.mrf.mxu0
  %v2678 = vadd.f32 %v2514, %v2677
  %2679 = vmatmul.f32.gmra.mxu0 %v685
  %v2680 = vpop.f32.mrf.mxu0
  %v2681 = vadd.f32 %v2517, %v2680
  %2682 = vmatmul.f32.gmra.mxu0 %v701
  %v2683 = vpop.f32.mrf.mxu0
  %v2684 = vadd.f32 %v2520, %v2683
  %2685 = vmatmul.f32.gmra.mxu0 %v717
  %v2686 = vpop.f32.mrf.mxu0
  %v2687 = vadd.f32 %v2523, %v2686
  %2688 = vmatmul.f32.gmra.mxu0 %v733
  %v2689 = vpop.f32.mrf.mxu0
  %v2690 = vadd.f32 %v2526, %v2689
  %2691 = vmatmul.f32.gmra.mxu0 %v749
  %v2692 = vpop.f32.mrf.mxu0
  %v2693 = vadd.f32 %v2529, %v2692
  %2694 = vmatmul.f32.gmra.mxu0 %v765
  %v2695 = vpop.f32.mrf.mxu0
  %v2696 = vadd.f32 %v2532, %v2695
  %2697 = vmatmul.f32.gmra.mxu0 %v781
  %v2698 = vpop.f32.mrf.mxu0
  %v2699 = vadd.f32 %v2535, %v2698
  %2700 = vmatmul.f32.gmra.mxu0 %v797
  %v2701 = vpop.f32.mrf.mxu0
  %v2702 = vadd.f32 %v2538, %v2701
  %2703 = vdwg.mxu0
  %2704 = vmatpush.msra.mxu0 %v979
  %2705 = vmatpush.msra.mxu0 %v978
  %2706 = vmatpush.msra.mxu0 %v977
  %2707 = vmatpush.msra.mxu0 %v976
  %2708 = vmatpush.msra.mxu0 %v975
  %2709 = vmatpush.msra.mxu0 %v974
  %2710 = vmatpush.msra.mxu0 %v973
  %2711 = vmatpush.msra.mxu0 %v972
  %2712 = vmatpush.msra.mxu0 %v971
  %2713 = vmatpush.msra.mxu0 %v970
  %2714 = vmatpush.msra.mxu0 %v969
  %2715 = vmatpush.msra.mxu0 %v968
  %2716 = vmatpush.msra.mxu0 %v967
  %2717 = vmatpush.msra.mxu0 %v966
  %2718 = vmatpush.msra.mxu0 %v965
  %2719 = vmatpush.msra.mxu0 %v964
  %2720 = vmatmul.f32.gmra.mxu0 %v30
  %v2721 = vpop.f32.mrf.mxu0
  %v2722 = vadd.f32 %v2558, %v2721
  %2723 = vmatmul.f32.gmra.mxu0 %v46
  %v2724 = vpop.f32.mrf.mxu0
  %v2725 = vadd.f32 %v2561, %v2724
  %2726 = vmatmul.f32.gmra.mxu0 %v62
  %v2727 = vpop.f32.mrf.mxu0
  %v2728 = vadd.f32 %v2564, %v2727
  %2729 = vmatmul.f32.gmra.mxu0 %v78
  %v2730 = vpop.f32.mrf.mxu0
  %v2731 = vadd.f32 %v2567, %v2730
  %2732 = vmatmul.f32.gmra.mxu0 %v94
  %v2733 = vpop.f32.mrf.mxu0
  %v2734 = vadd.f32 %v2570, %v2733
  %2735 = vmatmul.f32.gmra.mxu0 %v110
  %v2736 = vpop.f32.mrf.mxu0
  %v2737 = vadd.f32 %v2573, %v2736
  %2738 = vmatmul.f32.gmra.mxu0 %v126
  %v2739 = vpop.f32.mrf.mxu0
  %v2740 = vadd.f32 %v2576, %v2739
  %2741 = vmatmul.f32.gmra.mxu0 %v142
  %v2742 = vpop.f32.mrf.mxu0
  %v2743 = vadd.f32 %v2579, %v2742
  %2744 = vmatmul.f32.gmra.mxu0 %v158
  %v2745 = vpop.f32.mrf.mxu0
  %v2746 = vadd.f32 %v2582, %v2745
  %2747 = vmatmul.f32.gmra.mxu0 %v174
  %v2748 = vpop.f32.mrf.mxu0
  %v2749 = vadd.f32 %v2585, %v2748
  %2750 = vmatmul.f32.gmra.mxu0 %v190
  %v2751 = vpop.f32.mrf.mxu0
  %v2752 = vadd.f32 %v2588, %v2751
  %2753 = vmatmul.f32.gmra.mxu0 %v206
  %v2754 = vpop.f32.mrf.mxu0
  %v2755 = vadd.f32 %v2591, %v2754
  %2756 = vmatmul.f32.gmra.mxu0 %v222
  %v2757 = vpop.f32.mrf.mxu0
  %v2758 = vadd.f32 %v2594, %v2757
  %2759 = vmatmul.f32.gmra.mxu0 %v238
  %v2760 = vpop.f32.mrf.mxu0
  %v2761 = vadd.f32 %v2597, %v2760
  %2762 = vmatmul.f32.gmra.mxu0 %v254
  %v2763 = vpop.f32.mrf.mxu0
  %v2764 = vadd.f32 %v2600, %v2763
  %2765 = vmatmul.f32.gmra.mxu0 %v270
  %v2766 = vpop.f32.mrf.mxu0
  %v2767 = vadd.f32 %v2603, %v2766
  %2768 = vmatmul.f32.gmra.mxu0 %v286
  %v2769 = vpop.f32.mrf.mxu0
  %v2770 = vadd.f32 %v2606, %v2769
  %2771 = vmatmul.f32.gmra.mxu0 %v302
  %v2772 = vpop.f32.mrf.mxu0
  %v2773 = vadd.f32 %v2609, %v2772
  %2774 = vmatmul.f32.gmra.mxu0 %v318
  %v2775 = vpop.f32.mrf.mxu0
  %v2776 = vadd.f32 %v2612, %v2775
  %2777 = vmatmul.f32.gmra.mxu0 %v334
  %v2778 = vpop.f32.mrf.mxu0
  %v2779 = vadd.f32 %v2615, %v2778
  %2780 = vmatmul.f32.gmra.mxu0 %v350
  %v2781 = vpop.f32.mrf.mxu0
  %v2782 = vadd.f32 %v2618, %v2781
  %2783 = vmatmul.f32.gmra.mxu0 %v366
  %v2784 = vpop.f32.mrf.mxu0
  %v2785 = vadd.f32 %v2621, %v2784
  %2786 = vmatmul.f32.gmra.mxu0 %v382
  %v2787 = vpop.f32.mrf.mxu0
  %v2788 = vadd.f32 %v2624, %v2787
  %2789 = vmatmul.f32.gmra.mxu0 %v398
  %v2790 = vpop.f32.mrf.mxu0
  %v2791 = vadd.f32 %v2627, %v2790
  %2792 = vmatmul.f32.gmra.mxu0 %v414
  %v2793 = vpop.f32.mrf.mxu0
  %v2794 = vadd.f32 %v2630, %v2793
  %2795 = vmatmul.f32.gmra.mxu0 %v430
  %v2796 = vpop.f32.mrf.mxu0
  %v2797 = vadd.f32 %v2633, %v2796
  %2798 = vmatmul.f32.gmra.mxu0 %v446
  %v2799 = vpop.f32.mrf.mxu0
  %v2800 = vadd.f32 %v2636, %v2799
  %2801 = vmatmul.f32.gmra.mxu0 %v462
  %v2802 = vpop.f32.mrf.mxu0
  %v2803 = vadd.f32 %v2639, %v2802
  %2804 = vmatmul.f32.gmra.mxu0 %v478
  %v2805 = vpop.f32.mrf.mxu0
  %v2806 = vadd.f32 %v2642, %v2805
  %2807 = vmatmul.f32.gmra.mxu0 %v494
  %v2808 = vpop.f32.mrf.mxu0
  %v2809 = vadd.f32 %v2645, %v2808
  %2810 = vmatmul.f32.gmra.mxu0 %v510
  %v2811 = vpop.f32.mrf.mxu0
  %v2812 = vadd.f32 %v2648, %v2811
  %2813 = vmatmul.f32.gmra.mxu0 %v526
  %v2814 = vpop.f32.mrf.mxu0
  %v2815 = vadd.f32 %v2651, %v2814
  %2816 = vmatmul.f32.gmra.mxu0 %v542
  %v2817 = vpop.f32.mrf.mxu0
  %v2818 = vadd.f32 %v2654, %v2817
  %2819 = vmatmul.f32.gmra.mxu0 %v558
  %v2820 = vpop.f32.mrf.mxu0
  %v2821 = vadd.f32 %v2657, %v2820
  %2822 = vmatmul.f32.gmra.mxu0 %v574
  %v2823 = vpop.f32.mrf.mxu0
  %v2824 = vadd.f32 %v2660, %v2823
  %2825 = vmatmul.f32.gmra.mxu0 %v590
  %v2826 = vpop.f32.mrf.mxu0
  %v2827 = vadd.f32 %v2663, %v2826
  %2828 = vmatmul.f32.gmra.mxu0 %v606
  %v2829 = vpop.f32.mrf.mxu0
  %v2830 = vadd.f32 %v2666, %v2829
  %2831 = vmatmul.f32.gmra.mxu0 %v622
  %v2832 = vpop.f32.mrf.mxu0
  %v2833 = vadd.f32 %v2669, %v2832
  %2834 = vmatmul.f32.gmra.mxu0 %v638
  %v2835 = vpop.f32.mrf.mxu0
  %v2836 = vadd.f32 %v2672, %v2835
  %2837 = vmatmul.f32.gmra.mxu0 %v654
  %v2838 = vpop.f32.mrf.mxu0
  %v2839 = vadd.f32 %v2675, %v2838
  %2840 = vmatmul.f32.gmra.mxu0 %v670
  %v2841 = vpop.f32.mrf.mxu0
  %v2842 = vadd.f32 %v2678, %v2841
  %2843 = vmatmul.f32.gmra.mxu0 %v686
  %v2844 = vpop.f32.mrf.mxu0
  %v2845 = vadd.f32 %v2681, %v2844
  %2846 = vmatmul.f32.gmra.mxu0 %v702
  %v2847 = vpop.f32.mrf.mxu0
  %v2848 = vadd.f32 %v2684, %v2847
  %2849 = vmatmul.f32.gmra.mxu0 %v718
  %v2850 = vpop.f32.mrf.mxu0
  %v2851 = vadd.f32 %v2687, %v2850
  %2852 = vmatmul.f32.gmra.mxu0 %v734
  %v2853 = vpop.f32.mrf.mxu0
  %v2854 = vadd.f32 %v2690, %v2853
  %2855 = vmatmul.f32.gmra.mxu0 %v750
  %v2856 = vpop.f32.mrf.mxu0
  %v2857 = vadd.f32 %v2693, %v2856
  %2858 = vmatmul.f32.gmra.mxu0 %v766
  %v2859 = vpop.f32.mrf.mxu0
  %v2860 = vadd.f32 %v2696, %v2859
  %2861 = vmatmul.f32.gmra.mxu0 %v782
  %v2862 = vpop.f32.mrf.mxu0
  %v2863 = vadd.f32 %v2699, %v2862
  %2864 = vmatmul.f32.gmra.mxu0 %v798
  %v2865 = vpop.f32.mrf.mxu0
  %v2866 = vadd.f32 %v2702, %v2865
  %2867 = vdwg.mxu0
  %2868 = vmatpush.msra.mxu0 %v995
  %2869 = vmatpush.msra.mxu0 %v994
  %2870 = vmatpush.msra.mxu0 %v993
  %2871 = vmatpush.msra.mxu0 %v992
  %2872 = vmatpush.msra.mxu0 %v991
  %2873 = vmatpush.msra.mxu0 %v990
  %2874 = vmatpush.msra.mxu0 %v989
  %2875 = vmatpush.msra.mxu0 %v988
  %2876 = vmatpush.msra.mxu0 %v987
  %2877 = vmatpush.msra.mxu0 %v986
  %2878 = vmatpush.msra.mxu0 %v985
  %2879 = vmatpush.msra.mxu0 %v984
  %2880 = vmatpush.msra.mxu0 %v983
  %2881 = vmatpush.msra.mxu0 %v982
  %2882 = vmatpush.msra.mxu0 %v981
  %2883 = vmatpush.msra.mxu0 %v980
  %2884 = vmatmul.f32.gmra.mxu0 %v31
  %v2885 = vpop.f32.mrf.mxu0
  %v2886 = vadd.f32 %v2722, %v2885
  %2887 = vmatmul.f32.gmra.mxu0 %v47
  %v2888 = vpop.f32.mrf.mxu0
  %v2889 = vadd.f32 %v2725, %v2888
  %2890 = vmatmul.f32.gmra.mxu0 %v63
  %v2891 = vpop.f32.mrf.mxu0
  %v2892 = vadd.f32 %v2728, %v2891
  %2893 = vmatmul.f32.gmra.mxu0 %v79
  %v2894 = vpop.f32.mrf.mxu0
  %v2895 = vadd.f32 %v2731, %v2894
  %2896 = vmatmul.f32.gmra.mxu0 %v95
  %v2897 = vpop.f32.mrf.mxu0
  %v2898 = vadd.f32 %v2734, %v2897
  %2899 = vmatmul.f32.gmra.mxu0 %v111
  %v2900 = vpop.f32.mrf.mxu0
  %v2901 = vadd.f32 %v2737, %v2900
  %2902 = vmatmul.f32.gmra.mxu0 %v127
  %v2903 = vpop.f32.mrf.mxu0
  %v2904 = vadd.f32 %v2740, %v2903
  %2905 = vmatmul.f32.gmra.mxu0 %v143
  %v2906 = vpop.f32.mrf.mxu0
  %v2907 = vadd.f32 %v2743, %v2906
  %2908 = vmatmul.f32.gmra.mxu0 %v159
  %v2909 = vpop.f32.mrf.mxu0
  %v2910 = vadd.f32 %v2746, %v2909
  %2911 = vmatmul.f32.gmra.mxu0 %v175
  %v2912 = vpop.f32.mrf.mxu0
  %v2913 = vadd.f32 %v2749, %v2912
  %2914 = vmatmul.f32.gmra.mxu0 %v191
  %v2915 = vpop.f32.mrf.mxu0
  %v2916 = vadd.f32 %v2752, %v2915
  %2917 = vmatmul.f32.gmra.mxu0 %v207
  %v2918 = vpop.f32.mrf.mxu0
  %v2919 = vadd.f32 %v2755, %v2918
  %2920 = vmatmul.f32.gmra.mxu0 %v223
  %v2921 = vpop.f32.mrf.mxu0
  %v2922 = vadd.f32 %v2758, %v2921
  %2923 = vmatmul.f32.gmra.mxu0 %v239
  %v2924 = vpop.f32.mrf.mxu0
  %v2925 = vadd.f32 %v2761, %v2924
  %2926 = vmatmul.f32.gmra.mxu0 %v255
  %v2927 = vpop.f32.mrf.mxu0
  %v2928 = vadd.f32 %v2764, %v2927
  %2929 = vmatmul.f32.gmra.mxu0 %v271
  %v2930 = vpop.f32.mrf.mxu0
  %v2931 = vadd.f32 %v2767, %v2930
  %2932 = vmatmul.f32.gmra.mxu0 %v287
  %v2933 = vpop.f32.mrf.mxu0
  %v2934 = vadd.f32 %v2770, %v2933
  %2935 = vmatmul.f32.gmra.mxu0 %v303
  %v2936 = vpop.f32.mrf.mxu0
  %v2937 = vadd.f32 %v2773, %v2936
  %2938 = vmatmul.f32.gmra.mxu0 %v319
  %v2939 = vpop.f32.mrf.mxu0
  %v2940 = vadd.f32 %v2776, %v2939
  %2941 = vmatmul.f32.gmra.mxu0 %v335
  %v2942 = vpop.f32.mrf.mxu0
  %v2943 = vadd.f32 %v2779, %v2942
  %2944 = vmatmul.f32.gmra.mxu0 %v351
  %v2945 = vpop.f32.mrf.mxu0
  %v2946 = vadd.f32 %v2782, %v2945
  %2947 = vmatmul.f32.gmra.mxu0 %v367
  %v2948 = vpop.f32.mrf.mxu0
  %v2949 = vadd.f32 %v2785, %v2948
  %2950 = vmatmul.f32.gmra.mxu0 %v383
  %v2951 = vpop.f32.mrf.mxu0
  %v2952 = vadd.f32 %v2788, %v2951
  %2953 = vmatmul.f32.gmra.mxu0 %v399
  %v2954 = vpop.f32.mrf.mxu0
  %v2955 = vadd.f32 %v2791, %v2954
  %2956 = vmatmul.f32.gmra.mxu0 %v415
  %v2957 = vpop.f32.mrf.mxu0
  %v2958 = vadd.f32 %v2794, %v2957
  %2959 = vmatmul.f32.gmra.mxu0 %v431
  %v2960 = vpop.f32.mrf.mxu0
  %v2961 = vadd.f32 %v2797, %v2960
  %2962 = vmatmul.f32.gmra.mxu0 %v447
  %v2963 = vpop.f32.mrf.mxu0
  %v2964 = vadd.f32 %v2800, %v2963
  %2965 = vmatmul.f32.gmra.mxu0 %v463
  %v2966 = vpop.f32.mrf.mxu0
  %v2967 = vadd.f32 %v2803, %v2966
  %2968 = vmatmul.f32.gmra.mxu0 %v479
  %v2969 = vpop.f32.mrf.mxu0
  %v2970 = vadd.f32 %v2806, %v2969
  %2971 = vmatmul.f32.gmra.mxu0 %v495
  %v2972 = vpop.f32.mrf.mxu0
  %v2973 = vadd.f32 %v2809, %v2972
  %2974 = vmatmul.f32.gmra.mxu0 %v511
  %v2975 = vpop.f32.mrf.mxu0
  %v2976 = vadd.f32 %v2812, %v2975
  %2977 = vmatmul.f32.gmra.mxu0 %v527
  %v2978 = vpop.f32.mrf.mxu0
  %v2979 = vadd.f32 %v2815, %v2978
  %2980 = vmatmul.f32.gmra.mxu0 %v543
  %v2981 = vpop.f32.mrf.mxu0
  %v2982 = vadd.f32 %v2818, %v2981
  %2983 = vmatmul.f32.gmra.mxu0 %v559
  %v2984 = vpop.f32.mrf.mxu0
  %v2985 = vadd.f32 %v2821, %v2984
  %2986 = vmatmul.f32.gmra.mxu0 %v575
  %v2987 = vpop.f32.mrf.mxu0
  %v2988 = vadd.f32 %v2824, %v2987
  %2989 = vmatmul.f32.gmra.mxu0 %v591
  %v2990 = vpop.f32.mrf.mxu0
  %v2991 = vadd.f32 %v2827, %v2990
  %2992 = vmatmul.f32.gmra.mxu0 %v607
  %v2993 = vpop.f32.mrf.mxu0
  %v2994 = vadd.f32 %v2830, %v2993
  %2995 = vmatmul.f32.gmra.mxu0 %v623
  %v2996 = vpop.f32.mrf.mxu0
  %v2997 = vadd.f32 %v2833, %v2996
  %2998 = vmatmul.f32.gmra.mxu0 %v639
  %v2999 = vpop.f32.mrf.mxu0
  %v3000 = vadd.f32 %v2836, %v2999
  %3001 = vmatmul.f32.gmra.mxu0 %v655
  %v3002 = vpop.f32.mrf.mxu0
  %v3003 = vadd.f32 %v2839, %v3002
  %3004 = vmatmul.f32.gmra.mxu0 %v671
  %v3005 = vpop.f32.mrf.mxu0
  %v3006 = vadd.f32 %v2842, %v3005
  %3007 = vmatmul.f32.gmra.mxu0 %v687
  %v3008 = vpop.f32.mrf.mxu0
  %v3009 = vadd.f32 %v2845, %v3008
  %3010 = vmatmul.f32.gmra.mxu0 %v703
  %v3011 = vpop.f32.mrf.mxu0
  %v3012 = vadd.f32 %v2848, %v3011
  %3013 = vmatmul.f32.gmra.mxu0 %v719
  %v3014 = vpop.f32.mrf.mxu0
  %v3015 = vadd.f32 %v2851, %v3014
  %3016 = vmatmul.f32.gmra.mxu0 %v735
  %v3017 = vpop.f32.mrf.mxu0
  %v3018 = vadd.f32 %v2854, %v3017
  %3019 = vmatmul.f32.gmra.mxu0 %v751
  %v3020 = vpop.f32.mrf.mxu0
  %v3021 = vadd.f32 %v2857, %v3020
  %3022 = vmatmul.f32.gmra.mxu0 %v767
  %v3023 = vpop.f32.mrf.mxu0
  %v3024 = vadd.f32 %v2860, %v3023
  %3025 = vmatmul.f32.gmra.mxu0 %v783
  %v3026 = vpop.f32.mrf.mxu0
  %v3027 = vadd.f32 %v2863, %v3026
  %3028 = vmatmul.f32.gmra.mxu0 %v799
  %v3029 = vpop.f32.mrf.mxu0
  %v3030 = vadd.f32 %v2866, %v3029
  %3031 = vdwg.mxu0
  %3032 = vmatpush.msra.mxu0 %v1011
  %3033 = vmatpush.msra.mxu0 %v1010
  %3034 = vmatpush.msra.mxu0 %v1009
  %3035 = vmatpush.msra.mxu0 %v1008
  %3036 = vmatpush.msra.mxu0 %v1007
  %3037 = vmatpush.msra.mxu0 %v1006
  %3038 = vmatpush.msra.mxu0 %v1005
  %3039 = vmatpush.msra.mxu0 %v1004
  %3040 = vmatpush.msra.mxu0 %v1003
  %3041 = vmatpush.msra.mxu0 %v1002
  %3042 = vmatpush.msra.mxu0 %v1001
  %3043 = vmatpush.msra.mxu0 %v1000
  %3044 = vmatpush.msra.mxu0 %v999
  %3045 = vmatpush.msra.mxu0 %v998
  %3046 = vmatpush.msra.mxu0 %v997
  %3047 = vmatpush.msra.mxu0 %v996
  %3048 = vmatmul.f32.gmra.mxu0 %v32
  %v3049 = vpop.f32.mrf.mxu0
  %v3050 = vadd.f32 %v2886, %v3049
  %3051 = vmatmul.f32.gmra.mxu0 %v48
  %v3052 = vpop.f32.mrf.mxu0
  %v3053 = vadd.f32 %v2889, %v3052
  %3054 = vmatmul.f32.gmra.mxu0 %v64
  %v3055 = vpop.f32.mrf.mxu0
  %v3056 = vadd.f32 %v2892, %v3055
  %3057 = vmatmul.f32.gmra.mxu0 %v80
  %v3058 = vpop.f32.mrf.mxu0
  %v3059 = vadd.f32 %v2895, %v3058
  %3060 = vmatmul.f32.gmra.mxu0 %v96
  %v3061 = vpop.f32.mrf.mxu0
  %v3062 = vadd.f32 %v2898, %v3061
  %3063 = vmatmul.f32.gmra.mxu0 %v112
  %v3064 = vpop.f32.mrf.mxu0
  %v3065 = vadd.f32 %v2901, %v3064
  %3066 = vmatmul.f32.gmra.mxu0 %v128
  %v3067 = vpop.f32.mrf.mxu0
  %v3068 = vadd.f32 %v2904, %v3067
  %3069 = vmatmul.f32.gmra.mxu0 %v144
  %v3070 = vpop.f32.mrf.mxu0
  %v3071 = vadd.f32 %v2907, %v3070
  %3072 = vmatmul.f32.gmra.mxu0 %v160
  %v3073 = vpop.f32.mrf.mxu0
  %v3074 = vadd.f32 %v2910, %v3073
  %3075 = vmatmul.f32.gmra.mxu0 %v176
  %v3076 = vpop.f32.mrf.mxu0
  %v3077 = vadd.f32 %v2913, %v3076
  %3078 = vmatmul.f32.gmra.mxu0 %v192
  %v3079 = vpop.f32.mrf.mxu0
  %v3080 = vadd.f32 %v2916, %v3079
  %3081 = vmatmul.f32.gmra.mxu0 %v208
  %v3082 = vpop.f32.mrf.mxu0
  %v3083 = vadd.f32 %v2919, %v3082
  %3084 = vmatmul.f32.gmra.mxu0 %v224
  %v3085 = vpop.f32.mrf.mxu0
  %v3086 = vadd.f32 %v2922, %v3085
  %3087 = vmatmul.f32.gmra.mxu0 %v240
  %v3088 = vpop.f32.mrf.mxu0
  %v3089 = vadd.f32 %v2925, %v3088
  %3090 = vmatmul.f32.gmra.mxu0 %v256
  %v3091 = vpop.f32.mrf.mxu0
  %v3092 = vadd.f32 %v2928, %v3091
  %3093 = vmatmul.f32.gmra.mxu0 %v272
  %v3094 = vpop.f32.mrf.mxu0
  %v3095 = vadd.f32 %v2931, %v3094
  %3096 = vmatmul.f32.gmra.mxu0 %v288
  %v3097 = vpop.f32.mrf.mxu0
  %v3098 = vadd.f32 %v2934, %v3097
  %3099 = vmatmul.f32.gmra.mxu0 %v304
  %v3100 = vpop.f32.mrf.mxu0
  %v3101 = vadd.f32 %v2937, %v3100
  %3102 = vmatmul.f32.gmra.mxu0 %v320
  %v3103 = vpop.f32.mrf.mxu0
  %v3104 = vadd.f32 %v2940, %v3103
  %3105 = vmatmul.f32.gmra.mxu0 %v336
  %v3106 = vpop.f32.mrf.mxu0
  %v3107 = vadd.f32 %v2943, %v3106
  %3108 = vmatmul.f32.gmra.mxu0 %v352
  %v3109 = vpop.f32.mrf.mxu0
  %v3110 = vadd.f32 %v2946, %v3109
  %3111 = vmatmul.f32.gmra.mxu0 %v368
  %v3112 = vpop.f32.mrf.mxu0
  %v3113 = vadd.f32 %v2949, %v3112
  %3114 = vmatmul.f32.gmra.mxu0 %v384
  %v3115 = vpop.f32.mrf.mxu0
  %v3116 = vadd.f32 %v2952, %v3115
  %3117 = vmatmul.f32.gmra.mxu0 %v400
  %v3118 = vpop.f32.mrf.mxu0
  %v3119 = vadd.f32 %v2955, %v3118
  %3120 = vmatmul.f32.gmra.mxu0 %v416
  %v3121 = vpop.f32.mrf.mxu0
  %v3122 = vadd.f32 %v2958, %v3121
  %3123 = vmatmul.f32.gmra.mxu0 %v432
  %v3124 = vpop.f32.mrf.mxu0
  %v3125 = vadd.f32 %v2961, %v3124
  %3126 = vmatmul.f32.gmra.mxu0 %v448
  %v3127 = vpop.f32.mrf.mxu0
  %v3128 = vadd.f32 %v2964, %v3127
  %3129 = vmatmul.f32.gmra.mxu0 %v464
  %v3130 = vpop.f32.mrf.mxu0
  %v3131 = vadd.f32 %v2967, %v3130
  %3132 = vmatmul.f32.gmra.mxu0 %v480
  %v3133 = vpop.f32.mrf.mxu0
  %v3134 = vadd.f32 %v2970, %v3133
  %3135 = vmatmul.f32.gmra.mxu0 %v496
  %v3136 = vpop.f32.mrf.mxu0
  %v3137 = vadd.f32 %v2973, %v3136
  %3138 = vmatmul.f32.gmra.mxu0 %v512
  %v3139 = vpop.f32.mrf.mxu0
  %v3140 = vadd.f32 %v2976, %v3139
  %3141 = vmatmul.f32.gmra.mxu0 %v528
  %v3142 = vpop.f32.mrf.mxu0
  %v3143 = vadd.f32 %v2979, %v3142
  %3144 = vmatmul.f32.gmra.mxu0 %v544
  %v3145 = vpop.f32.mrf.mxu0
  %v3146 = vadd.f32 %v2982, %v3145
  %3147 = vmatmul.f32.gmra.mxu0 %v560
  %v3148 = vpop.f32.mrf.mxu0
  %v3149 = vadd.f32 %v2985, %v3148
  %3150 = vmatmul.f32.gmra.mxu0 %v576
  %v3151 = vpop.f32.mrf.mxu0
  %v3152 = vadd.f32 %v2988, %v3151
  %3153 = vmatmul.f32.gmra.mxu0 %v592
  %v3154 = vpop.f32.mrf.mxu0
  %v3155 = vadd.f32 %v2991, %v3154
  %3156 = vmatmul.f32.gmra.mxu0 %v608
  %v3157 = vpop.f32.mrf.mxu0
  %v3158 = vadd.f32 %v2994, %v3157
  %3159 = vmatmul.f32.gmra.mxu0 %v624
  %v3160 = vpop.f32.mrf.mxu0
  %v3161 = vadd.f32 %v2997, %v3160
  %3162 = vmatmul.f32.gmra.mxu0 %v640
  %v3163 = vpop.f32.mrf.mxu0
  %v3164 = vadd.f32 %v3000, %v3163
  %3165 = vmatmul.f32.gmra.mxu0 %v656
  %v3166 = vpop.f32.mrf.mxu0
  %v3167 = vadd.f32 %v3003, %v3166
  %3168 = vmatmul.f32.gmra.mxu0 %v672
  %v3169 = vpop.f32.mrf.mxu0
  %v3170 = vadd.f32 %v3006, %v3169
  %3171 = vmatmul.f32.gmra.mxu0 %v688
  %v3172 = vpop.f32.mrf.mxu0
  %v3173 = vadd.f32 %v3009, %v3172
  %3174 = vmatmul.f32.gmra.mxu0 %v704
  %v3175 = vpop.f32.mrf.mxu0
  %v3176 = vadd.f32 %v3012, %v3175
  %3177 = vmatmul.f32.gmra.mxu0 %v720
  %v3178 = vpop.f32.mrf.mxu0
  %v3179 = vadd.f32 %v3015, %v3178
  %3180 = vmatmul.f32.gmra.mxu0 %v736
  %v3181 = vpop.f32.mrf.mxu0
  %v3182 = vadd.f32 %v3018, %v3181
  %3183 = vmatmul.f32.gmra.mxu0 %v752
  %v3184 = vpop.f32.mrf.mxu0
  %v3185 = vadd.f32 %v3021, %v3184
  %3186 = vmatmul.f32.gmra.mxu0 %v768
  %v3187 = vpop.f32.mrf.mxu0
  %v3188 = vadd.f32 %v3024, %v3187
  %3189 = vmatmul.f32.gmra.mxu0 %v784
  %v3190 = vpop.f32.mrf.mxu0
  %v3191 = vadd.f32 %v3027, %v3190
  %3192 = vmatmul.f32.gmra.mxu0 %v800
  %v3193 = vpop.f32.mrf.mxu0
  %v3194 = vadd.f32 %v3030, %v3193
  %3195 = vdwg.mxu0
  %3196 = vmatpush.msra.mxu0 %v1027
  %3197 = vmatpush.msra.mxu0 %v1026
  %3198 = vmatpush.msra.mxu0 %v1025
  %3199 = vmatpush.msra.mxu0 %v1024
  %3200 = vmatpush.msra.mxu0 %v1023
  %3201 = vmatpush.msra.mxu0 %v1022
  %3202 = vmatpush.msra.mxu0 %v1021
  %3203 = vmatpush.msra.mxu0 %v1020
  %3204 = vmatpush.msra.mxu0 %v1019
  %3205 = vmatpush.msra.mxu0 %v1018
  %3206 = vmatpush.msra.mxu0 %v1017
  %3207 = vmatpush.msra.mxu0 %v1016
  %3208 = vmatpush.msra.mxu0 %v1015
  %3209 = vmatpush.msra.mxu0 %v1014
  %3210 = vmatpush.msra.mxu0 %v1013
  %3211 = vmatpush.msra.mxu0 %v1012
  %3212 = vmatmul.f32.gmra.mxu0 %v33
  %v3213 = vpop.f32.mrf.mxu0
  %v3214 = vadd.f32 %v3050, %v3213
  %3215 = vmatmul.f32.gmra.mxu0 %v49
  %v3216 = vpop.f32.mrf.mxu0
  %v3217 = vadd.f32 %v3053, %v3216
  %3218 = vmatmul.f32.gmra.mxu0 %v65
  %v3219 = vpop.f32.mrf.mxu0
  %v3220 = vadd.f32 %v3056, %v3219
  %3221 = vmatmul.f32.gmra.mxu0 %v81
  %v3222 = vpop.f32.mrf.mxu0
  %v3223 = vadd.f32 %v3059, %v3222
  %3224 = vmatmul.f32.gmra.mxu0 %v97
  %v3225 = vpop.f32.mrf.mxu0
  %v3226 = vadd.f32 %v3062, %v3225
  %3227 = vmatmul.f32.gmra.mxu0 %v113
  %v3228 = vpop.f32.mrf.mxu0
  %v3229 = vadd.f32 %v3065, %v3228
  %3230 = vmatmul.f32.gmra.mxu0 %v129
  %v3231 = vpop.f32.mrf.mxu0
  %v3232 = vadd.f32 %v3068, %v3231
  %3233 = vmatmul.f32.gmra.mxu0 %v145
  %v3234 = vpop.f32.mrf.mxu0
  %v3235 = vadd.f32 %v3071, %v3234
  %3236 = vmatmul.f32.gmra.mxu0 %v161
  %v3237 = vpop.f32.mrf.mxu0
  %v3238 = vadd.f32 %v3074, %v3237
  %3239 = vmatmul.f32.gmra.mxu0 %v177
  %v3240 = vpop.f32.mrf.mxu0
  %v3241 = vadd.f32 %v3077, %v3240
  %3242 = vmatmul.f32.gmra.mxu0 %v193
  %v3243 = vpop.f32.mrf.mxu0
  %v3244 = vadd.f32 %v3080, %v3243
  %3245 = vmatmul.f32.gmra.mxu0 %v209
  %v3246 = vpop.f32.mrf.mxu0
  %v3247 = vadd.f32 %v3083, %v3246
  %3248 = vmatmul.f32.gmra.mxu0 %v225
  %v3249 = vpop.f32.mrf.mxu0
  %v3250 = vadd.f32 %v3086, %v3249
  %3251 = vmatmul.f32.gmra.mxu0 %v241
  %v3252 = vpop.f32.mrf.mxu0
  %v3253 = vadd.f32 %v3089, %v3252
  %3254 = vmatmul.f32.gmra.mxu0 %v257
  %v3255 = vpop.f32.mrf.mxu0
  %v3256 = vadd.f32 %v3092, %v3255
  %3257 = vmatmul.f32.gmra.mxu0 %v273
  %v3258 = vpop.f32.mrf.mxu0
  %v3259 = vadd.f32 %v3095, %v3258
  %3260 = vmatmul.f32.gmra.mxu0 %v289
  %v3261 = vpop.f32.mrf.mxu0
  %v3262 = vadd.f32 %v3098, %v3261
  %3263 = vmatmul.f32.gmra.mxu0 %v305
  %v3264 = vpop.f32.mrf.mxu0
  %v3265 = vadd.f32 %v3101, %v3264
  %3266 = vmatmul.f32.gmra.mxu0 %v321
  %v3267 = vpop.f32.mrf.mxu0
  %v3268 = vadd.f32 %v3104, %v3267
  %3269 = vmatmul.f32.gmra.mxu0 %v337
  %v3270 = vpop.f32.mrf.mxu0
  %v3271 = vadd.f32 %v3107, %v3270
  %3272 = vmatmul.f32.gmra.mxu0 %v353
  %v3273 = vpop.f32.mrf.mxu0
  %v3274 = vadd.f32 %v3110, %v3273
  %3275 = vmatmul.f32.gmra.mxu0 %v369
  %v3276 = vpop.f32.mrf.mxu0
  %v3277 = vadd.f32 %v3113, %v3276
  %3278 = vmatmul.f32.gmra.mxu0 %v385
  %v3279 = vpop.f32.mrf.mxu0
  %v3280 = vadd.f32 %v3116, %v3279
  %3281 = vmatmul.f32.gmra.mxu0 %v401
  %v3282 = vpop.f32.mrf.mxu0
  %v3283 = vadd.f32 %v3119, %v3282
  %3284 = vmatmul.f32.gmra.mxu0 %v417
  %v3285 = vpop.f32.mrf.mxu0
  %v3286 = vadd.f32 %v3122, %v3285
  %3287 = vmatmul.f32.gmra.mxu0 %v433
  %v3288 = vpop.f32.mrf.mxu0
  %v3289 = vadd.f32 %v3125, %v3288
  %3290 = vmatmul.f32.gmra.mxu0 %v449
  %v3291 = vpop.f32.mrf.mxu0
  %v3292 = vadd.f32 %v3128, %v3291
  %3293 = vmatmul.f32.gmra.mxu0 %v465
  %v3294 = vpop.f32.mrf.mxu0
  %v3295 = vadd.f32 %v3131, %v3294
  %3296 = vmatmul.f32.gmra.mxu0 %v481
  %v3297 = vpop.f32.mrf.mxu0
  %v3298 = vadd.f32 %v3134, %v3297
  %3299 = vmatmul.f32.gmra.mxu0 %v497
  %v3300 = vpop.f32.mrf.mxu0
  %v3301 = vadd.f32 %v3137, %v3300
  %3302 = vmatmul.f32.gmra.mxu0 %v513
  %v3303 = vpop.f32.mrf.mxu0
  %v3304 = vadd.f32 %v3140, %v3303
  %3305 = vmatmul.f32.gmra.mxu0 %v529
  %v3306 = vpop.f32.mrf.mxu0
  %v3307 = vadd.f32 %v3143, %v3306
  %3308 = vmatmul.f32.gmra.mxu0 %v545
  %v3309 = vpop.f32.mrf.mxu0
  %v3310 = vadd.f32 %v3146, %v3309
  %3311 = vmatmul.f32.gmra.mxu0 %v561
  %v3312 = vpop.f32.mrf.mxu0
  %v3313 = vadd.f32 %v3149, %v3312
  %3314 = vmatmul.f32.gmra.mxu0 %v577
  %v3315 = vpop.f32.mrf.mxu0
  %v3316 = vadd.f32 %v3152, %v3315
  %3317 = vmatmul.f32.gmra.mxu0 %v593
  %v3318 = vpop.f32.mrf.mxu0
  %v3319 = vadd.f32 %v3155, %v3318
  %3320 = vmatmul.f32.gmra.mxu0 %v609
  %v3321 = vpop.f32.mrf.mxu0
  %v3322 = vadd.f32 %v3158, %v3321
  %3323 = vmatmul.f32.gmra.mxu0 %v625
  %v3324 = vpop.f32.mrf.mxu0
  %v3325 = vadd.f32 %v3161, %v3324
  %3326 = vmatmul.f32.gmra.mxu0 %v641
  %v3327 = vpop.f32.mrf.mxu0
  %v3328 = vadd.f32 %v3164, %v3327
  %3329 = vmatmul.f32.gmra.mxu0 %v657
  %v3330 = vpop.f32.mrf.mxu0
  %v3331 = vadd.f32 %v3167, %v3330
  %3332 = vmatmul.f32.gmra.mxu0 %v673
  %v3333 = vpop.f32.mrf.mxu0
  %v3334 = vadd.f32 %v3170, %v3333
  %3335 = vmatmul.f32.gmra.mxu0 %v689
  %v3336 = vpop.f32.mrf.mxu0
  %v3337 = vadd.f32 %v3173, %v3336
  %3338 = vmatmul.f32.gmra.mxu0 %v705
  %v3339 = vpop.f32.mrf.mxu0
  %v3340 = vadd.f32 %v3176, %v3339
  %3341 = vmatmul.f32.gmra.mxu0 %v721
  %v3342 = vpop.f32.mrf.mxu0
  %v3343 = vadd.f32 %v3179, %v3342
  %3344 = vmatmul.f32.gmra.mxu0 %v737
  %v3345 = vpop.f32.mrf.mxu0
  %v3346 = vadd.f32 %v3182, %v3345
  %3347 = vmatmul.f32.gmra.mxu0 %v753
  %v3348 = vpop.f32.mrf.mxu0
  %v3349 = vadd.f32 %v3185, %v3348
  %3350 = vmatmul.f32.gmra.mxu0 %v769
  %v3351 = vpop.f32.mrf.mxu0
  %v3352 = vadd.f32 %v3188, %v3351
  %3353 = vmatmul.f32.gmra.mxu0 %v785
  %v3354 = vpop.f32.mrf.mxu0
  %v3355 = vadd.f32 %v3191, %v3354
  %3356 = vmatmul.f32.gmra.mxu0 %v801
  %v3357 = vpop.f32.mrf.mxu0
  %v3358 = vadd.f32 %v3194, %v3357
  %3359 = vdwg.mxu0
  %3360 = vmatpush.msra.mxu0 %v1043
  %3361 = vmatpush.msra.mxu0 %v1042
  %3362 = vmatpush.msra.mxu0 %v1041
  %3363 = vmatpush.msra.mxu0 %v1040
  %3364 = vmatpush.msra.mxu0 %v1039
  %3365 = vmatpush.msra.mxu0 %v1038
  %3366 = vmatpush.msra.mxu0 %v1037
  %3367 = vmatpush.msra.mxu0 %v1036
  %3368 = vmatpush.msra.mxu0 %v1035
  %3369 = vmatpush.msra.mxu0 %v1034
  %3370 = vmatpush.msra.mxu0 %v1033
  %3371 = vmatpush.msra.mxu0 %v1032
  %3372 = vmatpush.msra.mxu0 %v1031
  %3373 = vmatpush.msra.mxu0 %v1030
  %3374 = vmatpush.msra.mxu0 %v1029
  %3375 = vmatpush.msra.mxu0 %v1028
  %3376 = vmatmul.f32.gmra.mxu0 %v34
  %v3377 = vpop.f32.mrf.mxu0
  %v3378 = vadd.f32 %v3214, %v3377
  %3379 = vmatmul.f32.gmra.mxu0 %v50
  %v3380 = vpop.f32.mrf.mxu0
  %v3381 = vadd.f32 %v3217, %v3380
  %3382 = vmatmul.f32.gmra.mxu0 %v66
  %v3383 = vpop.f32.mrf.mxu0
  %v3384 = vadd.f32 %v3220, %v3383
  %3385 = vmatmul.f32.gmra.mxu0 %v82
  %v3386 = vpop.f32.mrf.mxu0
  %v3387 = vadd.f32 %v3223, %v3386
  %3388 = vmatmul.f32.gmra.mxu0 %v98
  %v3389 = vpop.f32.mrf.mxu0
  %v3390 = vadd.f32 %v3226, %v3389
  %3391 = vmatmul.f32.gmra.mxu0 %v114
  %v3392 = vpop.f32.mrf.mxu0
  %v3393 = vadd.f32 %v3229, %v3392
  %3394 = vmatmul.f32.gmra.mxu0 %v130
  %v3395 = vpop.f32.mrf.mxu0
  %v3396 = vadd.f32 %v3232, %v3395
  %3397 = vmatmul.f32.gmra.mxu0 %v146
  %v3398 = vpop.f32.mrf.mxu0
  %v3399 = vadd.f32 %v3235, %v3398
  %3400 = vmatmul.f32.gmra.mxu0 %v162
  %v3401 = vpop.f32.mrf.mxu0
  %v3402 = vadd.f32 %v3238, %v3401
  %3403 = vmatmul.f32.gmra.mxu0 %v178
  %v3404 = vpop.f32.mrf.mxu0
  %v3405 = vadd.f32 %v3241, %v3404
  %3406 = vmatmul.f32.gmra.mxu0 %v194
  %v3407 = vpop.f32.mrf.mxu0
  %v3408 = vadd.f32 %v3244, %v3407
  %3409 = vmatmul.f32.gmra.mxu0 %v210
  %v3410 = vpop.f32.mrf.mxu0
  %v3411 = vadd.f32 %v3247, %v3410
  %3412 = vmatmul.f32.gmra.mxu0 %v226
  %v3413 = vpop.f32.mrf.mxu0
  %v3414 = vadd.f32 %v3250, %v3413
  %3415 = vmatmul.f32.gmra.mxu0 %v242
  %v3416 = vpop.f32.mrf.mxu0
  %v3417 = vadd.f32 %v3253, %v3416
  %3418 = vmatmul.f32.gmra.mxu0 %v258
  %v3419 = vpop.f32.mrf.mxu0
  %v3420 = vadd.f32 %v3256, %v3419
  %3421 = vmatmul.f32.gmra.mxu0 %v274
  %v3422 = vpop.f32.mrf.mxu0
  %v3423 = vadd.f32 %v3259, %v3422
  %3424 = vmatmul.f32.gmra.mxu0 %v290
  %v3425 = vpop.f32.mrf.mxu0
  %v3426 = vadd.f32 %v3262, %v3425
  %3427 = vmatmul.f32.gmra.mxu0 %v306
  %v3428 = vpop.f32.mrf.mxu0
  %v3429 = vadd.f32 %v3265, %v3428
  %3430 = vmatmul.f32.gmra.mxu0 %v322
  %v3431 = vpop.f32.mrf.mxu0
  %v3432 = vadd.f32 %v3268, %v3431
  %3433 = vmatmul.f32.gmra.mxu0 %v338
  %v3434 = vpop.f32.mrf.mxu0
  %v3435 = vadd.f32 %v3271, %v3434
  %3436 = vmatmul.f32.gmra.mxu0 %v354
  %v3437 = vpop.f32.mrf.mxu0
  %v3438 = vadd.f32 %v3274, %v3437
  %3439 = vmatmul.f32.gmra.mxu0 %v370
  %v3440 = vpop.f32.mrf.mxu0
  %v3441 = vadd.f32 %v3277, %v3440
  %3442 = vmatmul.f32.gmra.mxu0 %v386
  %v3443 = vpop.f32.mrf.mxu0
  %v3444 = vadd.f32 %v3280, %v3443
  %3445 = vmatmul.f32.gmra.mxu0 %v402
  %v3446 = vpop.f32.mrf.mxu0
  %v3447 = vadd.f32 %v3283, %v3446
  %3448 = vmatmul.f32.gmra.mxu0 %v418
  %v3449 = vpop.f32.mrf.mxu0
  %v3450 = vadd.f32 %v3286, %v3449
  %3451 = vmatmul.f32.gmra.mxu0 %v434
  %v3452 = vpop.f32.mrf.mxu0
  %v3453 = vadd.f32 %v3289, %v3452
  %3454 = vmatmul.f32.gmra.mxu0 %v450
  %v3455 = vpop.f32.mrf.mxu0
  %v3456 = vadd.f32 %v3292, %v3455
  %3457 = vmatmul.f32.gmra.mxu0 %v466
  %v3458 = vpop.f32.mrf.mxu0
  %v3459 = vadd.f32 %v3295, %v3458
  %3460 = vmatmul.f32.gmra.mxu0 %v482
  %v3461 = vpop.f32.mrf.mxu0
  %v3462 = vadd.f32 %v3298, %v3461
  %3463 = vmatmul.f32.gmra.mxu0 %v498
  %v3464 = vpop.f32.mrf.mxu0
  %v3465 = vadd.f32 %v3301, %v3464
  %3466 = vmatmul.f32.gmra.mxu0 %v514
  %v3467 = vpop.f32.mrf.mxu0
  %v3468 = vadd.f32 %v3304, %v3467
  %3469 = vmatmul.f32.gmra.mxu0 %v530
  %v3470 = vpop.f32.mrf.mxu0
  %v3471 = vadd.f32 %v3307, %v3470
  %3472 = vmatmul.f32.gmra.mxu0 %v546
  %v3473 = vpop.f32.mrf.mxu0
  %v3474 = vadd.f32 %v3310, %v3473
  %3475 = vmatmul.f32.gmra.mxu0 %v562
  %v3476 = vpop.f32.mrf.mxu0
  %v3477 = vadd.f32 %v3313, %v3476
  %3478 = vmatmul.f32.gmra.mxu0 %v578
  %v3479 = vpop.f32.mrf.mxu0
  %v3480 = vadd.f32 %v3316, %v3479
  %3481 = vmatmul.f32.gmra.mxu0 %v594
  %v3482 = vpop.f32.mrf.mxu0
  %v3483 = vadd.f32 %v3319, %v3482
  %3484 = vmatmul.f32.gmra.mxu0 %v610
  %v3485 = vpop.f32.mrf.mxu0
  %v3486 = vadd.f32 %v3322, %v3485
  %3487 = vmatmul.f32.gmra.mxu0 %v626
  %v3488 = vpop.f32.mrf.mxu0
  %v3489 = vadd.f32 %v3325, %v3488
  %3490 = vmatmul.f32.gmra.mxu0 %v642
  %v3491 = vpop.f32.mrf.mxu0
  %v3492 = vadd.f32 %v3328, %v3491
  %3493 = vmatmul.f32.gmra.mxu0 %v658
  %v3494 = vpop.f32.mrf.mxu0
  %v3495 = vadd.f32 %v3331, %v3494
  %3496 = vmatmul.f32.gmra.mxu0 %v674
  %v3497 = vpop.f32.mrf.mxu0
  %v3498 = vadd.f32 %v3334, %v3497
  %3499 = vmatmul.f32.gmra.mxu0 %v690
  %v3500 = vpop.f32.mrf.mxu0
  %v3501 = vadd.f32 %v3337, %v3500
  %3502 = vmatmul.f32.gmra.mxu0 %v706
  %v3503 = vpop.f32.mrf.mxu0
  %v3504 = vadd.f32 %v3340, %v3503
  %3505 = vmatmul.f32.gmra.mxu0 %v722
  %v3506 = vpop.f32.mrf.mxu0
  %v3507 = vadd.f32 %v3343, %v3506
  %3508 = vmatmul.f32.gmra.mxu0 %v738
  %v3509 = vpop.f32.mrf.mxu0
  %v3510 = vadd.f32 %v3346, %v3509
  %3511 = vmatmul.f32.gmra.mxu0 %v754
  %v3512 = vpop.f32.mrf.mxu0
  %v3513 = vadd.f32 %v3349, %v3512
  %3514 = vmatmul.f32.gmra.mxu0 %v770
  %v3515 = vpop.f32.mrf.mxu0
  %v3516 = vadd.f32 %v3352, %v3515
  %3517 = vmatmul.f32.gmra.mxu0 %v786
  %v3518 = vpop.f32.mrf.mxu0
  %v3519 = vadd.f32 %v3355, %v3518
  %3520 = vmatmul.f32.gmra.mxu0 %v802
  %v3521 = vpop.f32.mrf.mxu0
  %v3522 = vadd.f32 %v3358, %v3521
  %3523 = vdwg.mxu0
  %3524 = vmatpush.msra.mxu0 %v1059
  %3525 = vmatpush.msra.mxu0 %v1058
  %3526 = vmatpush.msra.mxu0 %v1057
  %3527 = vmatpush.msra.mxu0 %v1056
  %3528 = vmatpush.msra.mxu0 %v1055
  %3529 = vmatpush.msra.mxu0 %v1054
  %3530 = vmatpush.msra.mxu0 %v1053
  %3531 = vmatpush.msra.mxu0 %v1052
  %3532 = vmatpush.msra.mxu0 %v1051
  %3533 = vmatpush.msra.mxu0 %v1050
  %3534 = vmatpush.msra.mxu0 %v1049
  %3535 = vmatpush.msra.mxu0 %v1048
  %3536 = vmatpush.msra.mxu0 %v1047
  %3537 = vmatpush.msra.mxu0 %v1046
  %3538 = vmatpush.msra.mxu0 %v1045
  %3539 = vmatpush.msra.mxu0 %v1044
  %3540 = vmatmul.f32.gmra.mxu0 %v35
  %v3541 = vpop.f32.mrf.mxu0
  %v3542 = vadd.f32 %v3378, %v3541
  %3543 = vmatmul.f32.gmra.mxu0 %v51
  %v3544 = vpop.f32.mrf.mxu0
  %v3545 = vadd.f32 %v3381, %v3544
  %3546 = vmatmul.f32.gmra.mxu0 %v67
  %v3547 = vpop.f32.mrf.mxu0
  %v3548 = vadd.f32 %v3384, %v3547
  %3549 = vmatmul.f32.gmra.mxu0 %v83
  %v3550 = vpop.f32.mrf.mxu0
  %v3551 = vadd.f32 %v3387, %v3550
  %3552 = vmatmul.f32.gmra.mxu0 %v99
  %v3553 = vpop.f32.mrf.mxu0
  %v3554 = vadd.f32 %v3390, %v3553
  %3555 = vmatmul.f32.gmra.mxu0 %v115
  %v3556 = vpop.f32.mrf.mxu0
  %v3557 = vadd.f32 %v3393, %v3556
  %3558 = vmatmul.f32.gmra.mxu0 %v131
  %v3559 = vpop.f32.mrf.mxu0
  %v3560 = vadd.f32 %v3396, %v3559
  %3561 = vmatmul.f32.gmra.mxu0 %v147
  %v3562 = vpop.f32.mrf.mxu0
  %v3563 = vadd.f32 %v3399, %v3562
  %3564 = vmatmul.f32.gmra.mxu0 %v163
  %v3565 = vpop.f32.mrf.mxu0
  %v3566 = vadd.f32 %v3402, %v3565
  %3567 = vmatmul.f32.gmra.mxu0 %v179
  %v3568 = vpop.f32.mrf.mxu0
  %v3569 = vadd.f32 %v3405, %v3568
  %3570 = vmatmul.f32.gmra.mxu0 %v195
  %v3571 = vpop.f32.mrf.mxu0
  %v3572 = vadd.f32 %v3408, %v3571
  %3573 = vmatmul.f32.gmra.mxu0 %v211
  %v3574 = vpop.f32.mrf.mxu0
  %v3575 = vadd.f32 %v3411, %v3574
  %3576 = vmatmul.f32.gmra.mxu0 %v227
  %v3577 = vpop.f32.mrf.mxu0
  %v3578 = vadd.f32 %v3414, %v3577
  %3579 = vmatmul.f32.gmra.mxu0 %v243
  %v3580 = vpop.f32.mrf.mxu0
  %v3581 = vadd.f32 %v3417, %v3580
  %3582 = vmatmul.f32.gmra.mxu0 %v259
  %v3583 = vpop.f32.mrf.mxu0
  %v3584 = vadd.f32 %v3420, %v3583
  %3585 = vmatmul.f32.gmra.mxu0 %v275
  %v3586 = vpop.f32.mrf.mxu0
  %v3587 = vadd.f32 %v3423, %v3586
  %3588 = vmatmul.f32.gmra.mxu0 %v291
  %v3589 = vpop.f32.mrf.mxu0
  %v3590 = vadd.f32 %v3426, %v3589
  %3591 = vmatmul.f32.gmra.mxu0 %v307
  %v3592 = vpop.f32.mrf.mxu0
  %v3593 = vadd.f32 %v3429, %v3592
  %3594 = vmatmul.f32.gmra.mxu0 %v323
  %v3595 = vpop.f32.mrf.mxu0
  %v3596 = vadd.f32 %v3432, %v3595
  %3597 = vmatmul.f32.gmra.mxu0 %v339
  %v3598 = vpop.f32.mrf.mxu0
  %v3599 = vadd.f32 %v3435, %v3598
  %3600 = vmatmul.f32.gmra.mxu0 %v355
  %v3601 = vpop.f32.mrf.mxu0
  %v3602 = vadd.f32 %v3438, %v3601
  %3603 = vmatmul.f32.gmra.mxu0 %v371
  %v3604 = vpop.f32.mrf.mxu0
  %v3605 = vadd.f32 %v3441, %v3604
  %3606 = vmatmul.f32.gmra.mxu0 %v387
  %v3607 = vpop.f32.mrf.mxu0
  %v3608 = vadd.f32 %v3444, %v3607
  %3609 = vmatmul.f32.gmra.mxu0 %v403
  %v3610 = vpop.f32.mrf.mxu0
  %v3611 = vadd.f32 %v3447, %v3610
  %3612 = vmatmul.f32.gmra.mxu0 %v419
  %v3613 = vpop.f32.mrf.mxu0
  %v3614 = vadd.f32 %v3450, %v3613
  %3615 = vmatmul.f32.gmra.mxu0 %v435
  %v3616 = vpop.f32.mrf.mxu0
  %v3617 = vadd.f32 %v3453, %v3616
  %3618 = vmatmul.f32.gmra.mxu0 %v451
  %v3619 = vpop.f32.mrf.mxu0
  %v3620 = vadd.f32 %v3456, %v3619
  %3621 = vmatmul.f32.gmra.mxu0 %v467
  %v3622 = vpop.f32.mrf.mxu0
  %v3623 = vadd.f32 %v3459, %v3622
  %3624 = vmatmul.f32.gmra.mxu0 %v483
  %v3625 = vpop.f32.mrf.mxu0
  %v3626 = vadd.f32 %v3462, %v3625
  %3627 = vmatmul.f32.gmra.mxu0 %v499
  %v3628 = vpop.f32.mrf.mxu0
  %v3629 = vadd.f32 %v3465, %v3628
  %3630 = vmatmul.f32.gmra.mxu0 %v515
  %v3631 = vpop.f32.mrf.mxu0
  %v3632 = vadd.f32 %v3468, %v3631
  %3633 = vmatmul.f32.gmra.mxu0 %v531
  %v3634 = vpop.f32.mrf.mxu0
  %v3635 = vadd.f32 %v3471, %v3634
  %3636 = vmatmul.f32.gmra.mxu0 %v547
  %v3637 = vpop.f32.mrf.mxu0
  %v3638 = vadd.f32 %v3474, %v3637
  %3639 = vmatmul.f32.gmra.mxu0 %v563
  %v3640 = vpop.f32.mrf.mxu0
  %v3641 = vadd.f32 %v3477, %v3640
  %3642 = vmatmul.f32.gmra.mxu0 %v579
  %v3643 = vpop.f32.mrf.mxu0
  %v3644 = vadd.f32 %v3480, %v3643
  %3645 = vmatmul.f32.gmra.mxu0 %v595
  %v3646 = vpop.f32.mrf.mxu0
  %v3647 = vadd.f32 %v3483, %v3646
  %3648 = vmatmul.f32.gmra.mxu0 %v611
  %v3649 = vpop.f32.mrf.mxu0
  %v3650 = vadd.f32 %v3486, %v3649
  %3651 = vmatmul.f32.gmra.mxu0 %v627
  %v3652 = vpop.f32.mrf.mxu0
  %v3653 = vadd.f32 %v3489, %v3652
  %3654 = vmatmul.f32.gmra.mxu0 %v643
  %v3655 = vpop.f32.mrf.mxu0
  %v3656 = vadd.f32 %v3492, %v3655
  %3657 = vmatmul.f32.gmra.mxu0 %v659
  %v3658 = vpop.f32.mrf.mxu0
  %v3659 = vadd.f32 %v3495, %v3658
  %3660 = vmatmul.f32.gmra.mxu0 %v675
  %v3661 = vpop.f32.mrf.mxu0
  %v3662 = vadd.f32 %v3498, %v3661
  %3663 = vmatmul.f32.gmra.mxu0 %v691
  %v3664 = vpop.f32.mrf.mxu0
  %v3665 = vadd.f32 %v3501, %v3664
  %3666 = vmatmul.f32.gmra.mxu0 %v707
  %v3667 = vpop.f32.mrf.mxu0
  %v3668 = vadd.f32 %v3504, %v3667
  %3669 = vmatmul.f32.gmra.mxu0 %v723
  %v3670 = vpop.f32.mrf.mxu0
  %v3671 = vadd.f32 %v3507, %v3670
  %3672 = vmatmul.f32.gmra.mxu0 %v739
  %v3673 = vpop.f32.mrf.mxu0
  %v3674 = vadd.f32 %v3510, %v3673
  %3675 = vmatmul.f32.gmra.mxu0 %v755
  %v3676 = vpop.f32.mrf.mxu0
  %v3677 = vadd.f32 %v3513, %v3676
  %3678 = vmatmul.f32.gmra.mxu0 %v771
  %v3679 = vpop.f32.mrf.mxu0
  %v3680 = vadd.f32 %v3516, %v3679
  %3681 = vmatmul.f32.gmra.mxu0 %v787
  %v3682 = vpop.f32.mrf.mxu0
  %v3683 = vadd.f32 %v3519, %v3682
  %3684 = vmatmul.f32.gmra.mxu0 %v803
  %v3685 = vpop.f32.mrf.mxu0
  %v3686 = vadd.f32 %v3522, %v3685
  %3687 = vdwg.mxu0
  %vm3688 = vcmask 523264
  %v3689 = vsel %vm3688, %v3542, 0.0
  %v3690 = vsel %vm3688, %v3545, 0.0
  %v3691 = vadd.f32 %v3689, %v3690
  %v3692 = vsel %vm3688, %v3548, 0.0
  %v3693 = vadd.f32 %v3691, %v3692
  %v3694 = vsel %vm3688, %v3551, 0.0
  %v3695 = vadd.f32 %v3693, %v3694
  %v3696 = vsel %vm3688, %v3554, 0.0
  %v3697 = vadd.f32 %v3695, %v3696
  %v3698 = vsel %vm3688, %v3557, 0.0
  %v3699 = vadd.f32 %v3697, %v3698
  %v3700 = vsel %vm3688, %v3560, 0.0
  %v3701 = vadd.f32 %v3699, %v3700
  %v3702 = vsel %vm3688, %v3563, 0.0
  %v3703 = vadd.f32 %v3701, %v3702
  %v3704 = vsel %vm3688, %v3566, 0.0
  %v3705 = vadd.f32 %v3703, %v3704
  %v3706 = vsel %vm3688, %v3569, 0.0
  %v3707 = vadd.f32 %v3705, %v3706
  %v3708 = vsel %vm3688, %v3572, 0.0
  %v3709 = vadd.f32 %v3707, %v3708
  %v3710 = vsel %vm3688, %v3575, 0.0
  %v3711 = vadd.f32 %v3709, %v3710
  %v3712 = vsel %vm3688, %v3578, 0.0
  %v3713 = vadd.f32 %v3711, %v3712
  %v3714 = vsel %vm3688, %v3581, 0.0
  %v3715 = vadd.f32 %v3713, %v3714
  %v3716 = vsel %vm3688, %v3584, 0.0
  %v3717 = vadd.f32 %v3715, %v3716
  %v3718 = vsel %vm3688, %v3587, 0.0
  %v3719 = vadd.f32 %v3717, %v3718
  %v3720 = vsel %vm3688, %v3590, 0.0
  %v3721 = vadd.f32 %v3719, %v3720
  %v3722 = vsel %vm3688, %v3593, 0.0
  %v3723 = vadd.f32 %v3721, %v3722
  %v3724 = vsel %vm3688, %v3596, 0.0
  %v3725 = vadd.f32 %v3723, %v3724
  %v3726 = vsel %vm3688, %v3599, 0.0
  %v3727 = vadd.f32 %v3725, %v3726
  %v3728 = vsel %vm3688, %v3602, 0.0
  %v3729 = vadd.f32 %v3727, %v3728
  %v3730 = vsel %vm3688, %v3605, 0.0
  %v3731 = vadd.f32 %v3729, %v3730
  %v3732 = vsel %vm3688, %v3608, 0.0
  %v3733 = vadd.f32 %v3731, %v3732
  %v3734 = vsel %vm3688, %v3611, 0.0
  %v3735 = vadd.f32 %v3733, %v3734
  %v3736 = vsel %vm3688, %v3614, 0.0
  %v3737 = vadd.f32 %v3735, %v3736
  %v3738 = vsel %vm3688, %v3617, 0.0
  %v3739 = vadd.f32 %v3737, %v3738
  %v3740 = vsel %vm3688, %v3620, 0.0
  %v3741 = vadd.f32 %v3739, %v3740
  %v3742 = vsel %vm3688, %v3623, 0.0
  %v3743 = vadd.f32 %v3741, %v3742
  %v3744 = vsel %vm3688, %v3626, 0.0
  %v3745 = vadd.f32 %v3743, %v3744
  %v3746 = vsel %vm3688, %v3629, 0.0
  %v3747 = vadd.f32 %v3745, %v3746
  %v3748 = vsel %vm3688, %v3632, 0.0
  %v3749 = vadd.f32 %v3747, %v3748
  %v3750 = vsel %vm3688, %v3635, 0.0
  %v3751 = vadd.f32 %v3749, %v3750
  %v3752 = vsel %vm3688, %v3638, 0.0
  %v3753 = vadd.f32 %v3751, %v3752
  %v3754 = vsel %vm3688, %v3641, 0.0
  %v3755 = vadd.f32 %v3753, %v3754
  %v3756 = vsel %vm3688, %v3644, 0.0
  %v3757 = vadd.f32 %v3755, %v3756
  %v3758 = vsel %vm3688, %v3647, 0.0
  %v3759 = vadd.f32 %v3757, %v3758
  %v3760 = vsel %vm3688, %v3650, 0.0
  %v3761 = vadd.f32 %v3759, %v3760
  %v3762 = vsel %vm3688, %v3653, 0.0
  %v3763 = vadd.f32 %v3761, %v3762
  %v3764 = vsel %vm3688, %v3656, 0.0
  %v3765 = vadd.f32 %v3763, %v3764
  %v3766 = vsel %vm3688, %v3659, 0.0
  %v3767 = vadd.f32 %v3765, %v3766
  %v3768 = vsel %vm3688, %v3662, 0.0
  %v3769 = vadd.f32 %v3767, %v3768
  %v3770 = vsel %vm3688, %v3665, 0.0
  %v3771 = vadd.f32 %v3769, %v3770
  %v3772 = vsel %vm3688, %v3668, 0.0
  %v3773 = vadd.f32 %v3771, %v3772
  %v3774 = vsel %vm3688, %v3671, 0.0
  %v3775 = vadd.f32 %v3773, %v3774
  %v3776 = vsel %vm3688, %v3674, 0.0
  %v3777 = vadd.f32 %v3775, %v3776
  %v3778 = vsel %vm3688, %v3677, 0.0
  %v3779 = vadd.f32 %v3777, %v3778
  %v3780 = vsel %vm3688, %v3680, 0.0
  %v3781 = vadd.f32 %v3779, %v3780
  %v3782 = vsel %vm3688, %v3683, 0.0
  %v3783 = vadd.f32 %v3781, %v3782
  %v3784 = vsel %vm3688, %v3686, 0.0
  %v3785 = vadd.f32 %v3783, %v3784
  %v3786 = vrot.slane %v3785, 4
  %v3787 = vadd.f32 %v3785, %v3786
  %v3788 = vrot.slane %v3787, 2
  %v3789 = vadd.f32 %v3787, %v3788
  %v3790 = vrot.slane %v3789, 1
  %v3791 = vadd.f32 %v3789, %v3790
  %v3792 = vrcp.pop 392.0
  %v3793 = vmul.f32 392.0, %v3792
  %v3794 = vsub.f32 1.0, %v3793
  %v3795 = vmul.f32 %v3792, %v3794
  %v3796 = vadd.f32 %v3792, %v3795
  %vm3797 = vweird.f32 %v3792
  %v3798 = vsel %vm3797, %v3792, %v3796
  %v3799 = vmul.f32 %v3791, %v3798
  %v3800 = vsub.f32 %v3542, %v3799
  %v3801 = vsub.f32 %v3545, %v3799
  %v3802 = vsub.f32 %v3548, %v3799
  %v3803 = vsub.f32 %v3551, %v3799
  %v3804 = vsub.f32 %v3554, %v3799
  %v3805 = vsub.f32 %v3557, %v3799
  %v3806 = vsub.f32 %v3560, %v3799
  %v3807 = vsub.f32 %v3563, %v3799
  %v3808 = vsub.f32 %v3566, %v3799
  %v3809 = vsub.f32 %v3569, %v3799
  %v3810 = vsub.f32 %v3572, %v3799
  %v3811 = vsub.f32 %v3575, %v3799
  %v3812 = vsub.f32 %v3578, %v3799
  %v3813 = vsub.f32 %v3581, %v3799
  %v3814 = vsub.f32 %v3584, %v3799
  %v3815 = vsub.f32 %v3587, %v3799
  %v3816 = vsub.f32 %v3590, %v3799
  %v3817 = vsub.f32 %v3593, %v3799
  %v3818 = vsub.f32 %v3596, %v3799
  %v3819 = vsub.f32 %v3599, %v3799
  %v3820 = vsub.f32 %v3602, %v3799
  %v3821 = vsub.f32 %v3605, %v3799
  %v3822 = vsub.f32 %v3608, %v3799
  %v3823 = vsub.f32 %v3611, %v3799
  %v3824 = vsub.f32 %v3614, %v3799
  %v3825 = vsub.f32 %v3617, %v3799
  %v3826 = vsub.f32 %v3620, %v3799
  %v3827 = vsub.f32 %v3623, %v3799
  %v3828 = vsub.f32 %v3626, %v3799
  %v3829 = vsub.f32 %v3629, %v3799
  %v3830 = vsub.f32 %v3632, %v3799
  %v3831 = vsub.f32 %v3635, %v3799
  %v3832 = vsub.f32 %v3638, %v3799
  %v3833 = vsub.f32 %v3641, %v3799
  %v3834 = vsub.f32 %v3644, %v3799
  %v3835 = vsub.f32 %v3647, %v3799
  %v3836 = vsub.f32 %v3650, %v3799
  %v3837 = vsub.f32 %v3653, %v3799
  %v3838 = vsub.f32 %v3656, %v3799
  %v3839 = vsub.f32 %v3659, %v3799
  %v3840 = vsub.f32 %v3662, %v3799
  %v3841 = vsub.f32 %v3665, %v3799
  %v3842 = vsub.f32 %v3668, %v3799
  %v3843 = vsub.f32 %v3671, %v3799
  %v3844 = vsub.f32 %v3674, %v3799
  %v3845 = vsub.f32 %v3677, %v3799
  %v3846 = vsub.f32 %v3680, %v3799
  %v3847 = vsub.f32 %v3683, %v3799
  %v3848 = vsub.f32 %v3686, %v3799
  %v3849 = vmul.f32 %v3800, %v3800
  %v3850 = vmul.f32 %v3801, %v3801
  %v3851 = vmul.f32 %v3802, %v3802
  %v3852 = vmul.f32 %v3803, %v3803
  %v3853 = vmul.f32 %v3804, %v3804
  %v3854 = vmul.f32 %v3805, %v3805
  %v3855 = vmul.f32 %v3806, %v3806
  %v3856 = vmul.f32 %v3807, %v3807
  %v3857 = vmul.f32 %v3808, %v3808
  %v3858 = vmul.f32 %v3809, %v3809
  %v3859 = vmul.f32 %v3810, %v3810
  %v3860 = vmul.f32 %v3811, %v3811
  %v3861 = vmul.f32 %v3812, %v3812
  %v3862 = vmul.f32 %v3813, %v3813
  %v3863 = vmul.f32 %v3814, %v3814
  %v3864 = vmul.f32 %v3815, %v3815
  %v3865 = vmul.f32 %v3816, %v3816
  %v3866 = vmul.f32 %v3817, %v3817
  %v3867 = vmul.f32 %v3818, %v3818
  %v3868 = vmul.f32 %v3819, %v3819
  %v3869 = vmul.f32 %v3820, %v3820
  %v3870 = vmul.f32 %v3821, %v3821
  %v3871 = vmul.f32 %v3822, %v3822
  %v3872 = vmul.f32 %v3823, %v3823
  %v3873 = vmul.f32 %v3824, %v3824
  %v3874 = vmul.f32 %v3825, %v3825
  %v3875 = vmul.f32 %v3826, %v3826
  %v3876 = vmul.f32 %v3827, %v3827
  %v3877 = vmul.f32 %v3828, %v3828
  %v3878 = vmul.f32 %v3829, %v3829
  %v3879 = vmul.f32 %v3830, %v3830
  %v3880 = vmul.f32 %v3831, %v3831
  %v3881 = vmul.f32 %v3832, %v3832
  %v3882 = vmul.f32 %v3833, %v3833
  %v3883 = vmul.f32 %v3834, %v3834
  %v3884 = vmul.f32 %v3835, %v3835
  %v3885 = vmul.f32 %v3836, %v3836
  %v3886 = vmul.f32 %v3837, %v3837
  %v3887 = vmul.f32 %v3838, %v3838
  %v3888 = vmul.f32 %v3839, %v3839
  %v3889 = vmul.f32 %v3840, %v3840
  %v3890 = vmul.f32 %v3841, %v3841
  %v3891 = vmul.f32 %v3842, %v3842
  %v3892 = vmul.f32 %v3843, %v3843
  %v3893 = vmul.f32 %v3844, %v3844
  %v3894 = vmul.f32 %v3845, %v3845
  %v3895 = vmul.f32 %v3846, %v3846
  %v3896 = vmul.f32 %v3847, %v3847
  %v3897 = vmul.f32 %v3848, %v3848
  %v3898 = vsel %vm3688, %v3849, 0.0
  %v3899 = vsel %vm3688, %v3850, 0.0
  %v3900 = vadd.f32 %v3898, %v3899
  %v3901 = vsel %vm3688, %v3851, 0.0
  %v3902 = vadd.f32 %v3900, %v3901
  %v3903 = vsel %vm3688, %v3852, 0.0
  %v3904 = vadd.f32 %v3902, %v3903
  %v3905 = vsel %vm3688, %v3853, 0.0
  %v3906 = vadd.f32 %v3904, %v3905
  %v3907 = vsel %vm3688, %v3854, 0.0
  %v3908 = vadd.f32 %v3906, %v3907
  %v3909 = vsel %vm3688, %v3855, 0.0
  %v3910 = vadd.f32 %v3908, %v3909
  %v3911 = vsel %vm3688, %v3856, 0.0
  %v3912 = vadd.f32 %v3910, %v3911
  %v3913 = vsel %vm3688, %v3857, 0.0
  %v3914 = vadd.f32 %v3912, %v3913
  %v3915 = vsel %vm3688, %v3858, 0.0
  %v3916 = vadd.f32 %v3914, %v3915
  %v3917 = vsel %vm3688, %v3859, 0.0
  %v3918 = vadd.f32 %v3916, %v3917
  %v3919 = vsel %vm3688, %v3860, 0.0
  %v3920 = vadd.f32 %v3918, %v3919
  %v3921 = vsel %vm3688, %v3861, 0.0
  %v3922 = vadd.f32 %v3920, %v3921
  %v3923 = vsel %vm3688, %v3862, 0.0
  %v3924 = vadd.f32 %v3922, %v3923
  %v3925 = vsel %vm3688, %v3863, 0.0
  %v3926 = vadd.f32 %v3924, %v3925
  %v3927 = vsel %vm3688, %v3864, 0.0
  %v3928 = vadd.f32 %v3926, %v3927
  %v3929 = vsel %vm3688, %v3865, 0.0
  %v3930 = vadd.f32 %v3928, %v3929
  %v3931 = vsel %vm3688, %v3866, 0.0
  %v3932 = vadd.f32 %v3930, %v3931
  %v3933 = vsel %vm3688, %v3867, 0.0
  %v3934 = vadd.f32 %v3932, %v3933
  %v3935 = vsel %vm3688, %v3868, 0.0
  %v3936 = vadd.f32 %v3934, %v3935
  %v3937 = vsel %vm3688, %v3869, 0.0
  %v3938 = vadd.f32 %v3936, %v3937
  %v3939 = vsel %vm3688, %v3870, 0.0
  %v3940 = vadd.f32 %v3938, %v3939
  %v3941 = vsel %vm3688, %v3871, 0.0
  %v3942 = vadd.f32 %v3940, %v3941
  %v3943 = vsel %vm3688, %v3872, 0.0
  %v3944 = vadd.f32 %v3942, %v3943
  %v3945 = vsel %vm3688, %v3873, 0.0
  %v3946 = vadd.f32 %v3944, %v3945
  %v3947 = vsel %vm3688, %v3874, 0.0
  %v3948 = vadd.f32 %v3946, %v3947
  %v3949 = vsel %vm3688, %v3875, 0.0
  %v3950 = vadd.f32 %v3948, %v3949
  %v3951 = vsel %vm3688, %v3876, 0.0
  %v3952 = vadd.f32 %v3950, %v3951
  %v3953 = vsel %vm3688, %v3877, 0.0
  %v3954 = vadd.f32 %v3952, %v3953
  %v3955 = vsel %vm3688, %v3878, 0.0
  %v3956 = vadd.f32 %v3954, %v3955
  %v3957 = vsel %vm3688, %v3879, 0.0
  %v3958 = vadd.f32 %v3956, %v3957
  %v3959 = vsel %vm3688, %v3880, 0.0
  %v3960 = vadd.f32 %v3958, %v3959
  %v3961 = vsel %vm3688, %v3881, 0.0
  %v3962 = vadd.f32 %v3960, %v3961
  %v3963 = vsel %vm3688, %v3882, 0.0
  %v3964 = vadd.f32 %v3962, %v3963
  %v3965 = vsel %vm3688, %v3883, 0.0
  %v3966 = vadd.f32 %v3964, %v3965
  %v3967 = vsel %vm3688, %v3884, 0.0
  %v3968 = vadd.f32 %v3966, %v3967
  %v3969 = vsel %vm3688, %v3885, 0.0
  %v3970 = vadd.f32 %v3968, %v3969
  %v3971 = vsel %vm3688, %v3886, 0.0
  %v3972 = vadd.f32 %v3970, %v3971
  %v3973 = vsel %vm3688, %v3887, 0.0
  %v3974 = vadd.f32 %v3972, %v3973
  %v3975 = vsel %vm3688, %v3888, 0.0
  %v3976 = vadd.f32 %v3974, %v3975
  %v3977 = vsel %vm3688, %v3889, 0.0
  %v3978 = vadd.f32 %v3976, %v3977
  %v3979 = vsel %vm3688, %v3890, 0.0
  %v3980 = vadd.f32 %v3978, %v3979
  %v3981 = vsel %vm3688, %v3891, 0.0
  %v3982 = vadd.f32 %v3980, %v3981
  %v3983 = vsel %vm3688, %v3892, 0.0
  %v3984 = vadd.f32 %v3982, %v3983
  %v3985 = vsel %vm3688, %v3893, 0.0
  %v3986 = vadd.f32 %v3984, %v3985
  %v3987 = vsel %vm3688, %v3894, 0.0
  %v3988 = vadd.f32 %v3986, %v3987
  %v3989 = vsel %vm3688, %v3895, 0.0
  %v3990 = vadd.f32 %v3988, %v3989
  %v3991 = vsel %vm3688, %v3896, 0.0
  %v3992 = vadd.f32 %v3990, %v3991
  %v3993 = vsel %vm3688, %v3897, 0.0
  %v3994 = vadd.f32 %v3992, %v3993
  %v3995 = vrot.slane %v3994, 4
  %v3996 = vadd.f32 %v3994, %v3995
  %v3997 = vrot.slane %v3996, 2
  %v3998 = vadd.f32 %v3996, %v3997
  %v3999 = vrot.slane %v3998, 1
  %v4000 = vadd.f32 %v3998, %v3999
  %v4001 = vmul.f32 %v4000, %v3798
  %v4002 = vld [vmem:[%s3] sm:$0x1]
  %v4003 = vadd.f32 %v4001, 1e-05
  %v4004 = vrsqrt.pop %v4003
  %v4005 = vmul.f32 %v4004, %v4003
  %v4006 = vmul.f32 %v4005, %v4004
  %v4007 = vmul.f32 0.5, %v4006
  %v4008 = vsub.f32 1.5, %v4007
  %v4009 = vmul.f32 %v4004, %v4008
  %vm4010 = vweird.f32 %v4003
  %vm4011 = vweird.f32 %v4004
  %vm4012 = vmor %vm4010, %vm4011
  %v4013 = vsel %vm4012, %v4004, %v4009
  %v4014 = vmul.f32 %v4002, %v4013
  %v4016 = vperm.slane %v4014, 0
  %v4018 = vmul.f32 %v3800, %v4016
  %v4019 = vmul.f32 %v3801, %v4016
  %v4020 = vmul.f32 %v3802, %v4016
  %v4021 = vmul.f32 %v3803, %v4016
  %v4022 = vmul.f32 %v3804, %v4016
  %v4023 = vmul.f32 %v3805, %v4016
  %v4024 = vmul.f32 %v3806, %v4016
  %v4025 = vmul.f32 %v3807, %v4016
  %v4026 = vmul.f32 %v3808, %v4016
  %v4027 = vmul.f32 %v3809, %v4016
  %v4028 = vmul.f32 %v3810, %v4016
  %v4029 = vmul.f32 %v3811, %v4016
  %v4030 = vmul.f32 %v3812, %v4016
  %v4031 = vmul.f32 %v3813, %v4016
  %v4032 = vmul.f32 %v3814, %v4016
  %v4033 = vmul.f32 %v3815, %v4016
  %v4034 = vmul.f32 %v3816, %v4016
  %v4035 = vmul.f32 %v3817, %v4016
  %v4036 = vmul.f32 %v3818, %v4016
  %v4037 = vmul.f32 %v3819, %v4016
  %v4038 = vmul.f32 %v3820, %v4016
  %v4039 = vmul.f32 %v3821, %v4016
  %v4040 = vmul.f32 %v3822, %v4016
  %v4041 = vmul.f32 %v3823, %v4016
  %v4042 = vmul.f32 %v3824, %v4016
  %v4043 = vmul.f32 %v3825, %v4016
  %v4044 = vmul.f32 %v3826, %v4016
  %v4045 = vmul.f32 %v3827, %v4016
  %v4046 = vmul.f32 %v3828, %v4016
  %v4047 = vmul.f32 %v3829, %v4016
  %v4048 = vmul.f32 %v3830, %v4016
  %v4049 = vmul.f32 %v3831, %v4016
  %v4050 = vmul.f32 %v3832, %v4016
  %v4051 = vmul.f32 %v3833, %v4016
  %v4052 = vmul.f32 %v3834, %v4016
  %v4053 = vmul.f32 %v3835, %v4016
  %v4054 = vmul.f32 %v3836, %v4016
  %v4055 = vmul.f32 %v3837, %v4016
  %v4056 = vmul.f32 %v3838, %v4016
  %v4057 = vmul.f32 %v3839, %v4016
  %v4058 = vmul.f32 %v3840, %v4016
  %v4059 = vmul.f32 %v3841, %v4016
  %v4060 = vmul.f32 %v3842, %v4016
  %v4061 = vmul.f32 %v3843, %v4016
  %v4062 = vmul.f32 %v3844, %v4016
  %v4063 = vmul.f32 %v3845, %v4016
  %v4064 = vmul.f32 %v3846, %v4016
  %v4065 = vmul.f32 %v3847, %v4016
  %v4066 = vmul.f32 %v3848, %v4016
  %v4067 = vld [vmem:[%s4] sm:$0x1]
  %v4069 = vperm.slane %v4067, 0
  %v4071 = vadd.f32 %v4018, %v4069
  %v4072 = vadd.f32 %v4019, %v4069
  %v4073 = vadd.f32 %v4020, %v4069
  %v4074 = vadd.f32 %v4021, %v4069
  %v4075 = vadd.f32 %v4022, %v4069
  %v4076 = vadd.f32 %v4023, %v4069
  %v4077 = vadd.f32 %v4024, %v4069
  %v4078 = vadd.f32 %v4025, %v4069
  %v4079 = vadd.f32 %v4026, %v4069
  %v4080 = vadd.f32 %v4027, %v4069
  %v4081 = vadd.f32 %v4028, %v4069
  %v4082 = vadd.f32 %v4029, %v4069
  %v4083 = vadd.f32 %v4030, %v4069
  %v4084 = vadd.f32 %v4031, %v4069
  %v4085 = vadd.f32 %v4032, %v4069
  %v4086 = vadd.f32 %v4033, %v4069
  %v4087 = vadd.f32 %v4034, %v4069
  %v4088 = vadd.f32 %v4035, %v4069
  %v4089 = vadd.f32 %v4036, %v4069
  %v4090 = vadd.f32 %v4037, %v4069
  %v4091 = vadd.f32 %v4038, %v4069
  %v4092 = vadd.f32 %v4039, %v4069
  %v4093 = vadd.f32 %v4040, %v4069
  %v4094 = vadd.f32 %v4041, %v4069
  %v4095 = vadd.f32 %v4042, %v4069
  %v4096 = vadd.f32 %v4043, %v4069
  %v4097 = vadd.f32 %v4044, %v4069
  %v4098 = vadd.f32 %v4045, %v4069
  %v4099 = vadd.f32 %v4046, %v4069
  %v4100 = vadd.f32 %v4047, %v4069
  %v4101 = vadd.f32 %v4048, %v4069
  %v4102 = vadd.f32 %v4049, %v4069
  %v4103 = vadd.f32 %v4050, %v4069
  %v4104 = vadd.f32 %v4051, %v4069
  %v4105 = vadd.f32 %v4052, %v4069
  %v4106 = vadd.f32 %v4053, %v4069
  %v4107 = vadd.f32 %v4054, %v4069
  %v4108 = vadd.f32 %v4055, %v4069
  %v4109 = vadd.f32 %v4056, %v4069
  %v4110 = vadd.f32 %v4057, %v4069
  %v4111 = vadd.f32 %v4058, %v4069
  %v4112 = vadd.f32 %v4059, %v4069
  %v4113 = vadd.f32 %v4060, %v4069
  %v4114 = vadd.f32 %v4061, %v4069
  %v4115 = vadd.f32 %v4062, %v4069
  %v4116 = vadd.f32 %v4063, %v4069
  %v4117 = vadd.f32 %v4064, %v4069
  %v4118 = vadd.f32 %v4065, %v4069
  %v4119 = vadd.f32 %v4066, %v4069
  %v4120 = vmax.f32 %v4071, 0.0
  %v4121 = vmax.f32 %v4072, 0.0
  %v4122 = vmax.f32 %v4073, 0.0
  %v4123 = vmax.f32 %v4074, 0.0
  %v4124 = vmax.f32 %v4075, 0.0
  %v4125 = vmax.f32 %v4076, 0.0
  %v4126 = vmax.f32 %v4077, 0.0
  %v4127 = vmax.f32 %v4078, 0.0
  %v4128 = vmax.f32 %v4079, 0.0
  %v4129 = vmax.f32 %v4080, 0.0
  %v4130 = vmax.f32 %v4081, 0.0
  %v4131 = vmax.f32 %v4082, 0.0
  %v4132 = vmax.f32 %v4083, 0.0
  %v4133 = vmax.f32 %v4084, 0.0
  %v4134 = vmax.f32 %v4085, 0.0
  %v4135 = vmax.f32 %v4086, 0.0
  %v4136 = vmax.f32 %v4087, 0.0
  %v4137 = vmax.f32 %v4088, 0.0
  %v4138 = vmax.f32 %v4089, 0.0
  %v4139 = vmax.f32 %v4090, 0.0
  %v4140 = vmax.f32 %v4091, 0.0
  %v4141 = vmax.f32 %v4092, 0.0
  %v4142 = vmax.f32 %v4093, 0.0
  %v4143 = vmax.f32 %v4094, 0.0
  %v4144 = vmax.f32 %v4095, 0.0
  %v4145 = vmax.f32 %v4096, 0.0
  %v4146 = vmax.f32 %v4097, 0.0
  %v4147 = vmax.f32 %v4098, 0.0
  %v4148 = vmax.f32 %v4099, 0.0
  %v4149 = vmax.f32 %v4100, 0.0
  %v4150 = vmax.f32 %v4101, 0.0
  %v4151 = vmax.f32 %v4102, 0.0
  %v4152 = vmax.f32 %v4103, 0.0
  %v4153 = vmax.f32 %v4104, 0.0
  %v4154 = vmax.f32 %v4105, 0.0
  %v4155 = vmax.f32 %v4106, 0.0
  %v4156 = vmax.f32 %v4107, 0.0
  %v4157 = vmax.f32 %v4108, 0.0
  %v4158 = vmax.f32 %v4109, 0.0
  %v4159 = vmax.f32 %v4110, 0.0
  %v4160 = vmax.f32 %v4111, 0.0
  %v4161 = vmax.f32 %v4112, 0.0
  %v4162 = vmax.f32 %v4113, 0.0
  %v4163 = vmax.f32 %v4114, 0.0
  %v4164 = vmax.f32 %v4115, 0.0
  %v4165 = vmax.f32 %v4116, 0.0
  %v4166 = vmax.f32 %v4117, 0.0
  %v4167 = vmax.f32 %v4118, 0.0
  %v4168 = vmax.f32 %v4119, 0.0
  %4169 = vst.msk [vmem:[%s5] sm:$0xff] %vm3688, %v4120
  %4170 = vst.msk [vmem:[%s5 + $0x8] sm:$0xff] %vm3688, %v4121
  %4171 = vst.msk [vmem:[%s5 + $0x10] sm:$0xff] %vm3688, %v4122
  %4172 = vst.msk [vmem:[%s5 + $0x18] sm:$0xff] %vm3688, %v4123
  %4173 = vst.msk [vmem:[%s5 + $0x20] sm:$0xff] %vm3688, %v4124
  %4174 = vst.msk [vmem:[%s5 + $0x28] sm:$0xff] %vm3688, %v4125
  %4175 = vst.msk [vmem:[%s5 + $0x30] sm:$0xff] %vm3688, %v4126
  %4176 = vst.msk [vmem:[%s5 + $0x38] sm:$0xff] %vm3688, %v4127
  %4177 = vst.msk [vmem:[%s5 + $0x40] sm:$0xff] %vm3688, %v4128
  %4178 = vst.msk [vmem:[%s5 + $0x48] sm:$0xff] %vm3688, %v4129
  %4179 = vst.msk [vmem:[%s5 + $0x50] sm:$0xff] %vm3688, %v4130
  %4180 = vst.msk [vmem:[%s5 + $0x58] sm:$0xff] %vm3688, %v4131
  %4181 = vst.msk [vmem:[%s5 + $0x60] sm:$0xff] %vm3688, %v4132
  %4182 = vst.msk [vmem:[%s5 + $0x68] sm:$0xff] %vm3688, %v4133
  %4183 = vst.msk [vmem:[%s5 + $0x70] sm:$0xff] %vm3688, %v4134
  %4184 = vst.msk [vmem:[%s5 + $0x78] sm:$0xff] %vm3688, %v4135
  %4185 = vst.msk [vmem:[%s5 + $0x80] sm:$0xff] %vm3688, %v4136
  %4186 = vst.msk [vmem:[%s5 + $0x88] sm:$0xff] %vm3688, %v4137
  %4187 = vst.msk [vmem:[%s5 + $0x90] sm:$0xff] %vm3688, %v4138
  %4188 = vst.msk [vmem:[%s5 + $0x98] sm:$0xff] %vm3688, %v4139
  %4189 = vst.msk [vmem:[%s5 + $0xa0] sm:$0xff] %vm3688, %v4140
  %4190 = vst.msk [vmem:[%s5 + $0xa8] sm:$0xff] %vm3688, %v4141
  %4191 = vst.msk [vmem:[%s5 + $0xb0] sm:$0xff] %vm3688, %v4142
  %4192 = vst.msk [vmem:[%s5 + $0xb8] sm:$0xff] %vm3688, %v4143
  %4193 = vst.msk [vmem:[%s5 + $0xc0] sm:$0xff] %vm3688, %v4144
  %4194 = vst.msk [vmem:[%s5 + $0xc8] sm:$0xff] %vm3688, %v4145
  %4195 = vst.msk [vmem:[%s5 + $0xd0] sm:$0xff] %vm3688, %v4146
  %4196 = vst.msk [vmem:[%s5 + $0xd8] sm:$0xff] %vm3688, %v4147
  %4197 = vst.msk [vmem:[%s5 + $0xe0] sm:$0xff] %vm3688, %v4148
  %4198 = vst.msk [vmem:[%s5 + $0xe8] sm:$0xff] %vm3688, %v4149
  %4199 = vst.msk [vmem:[%s5 + $0xf0] sm:$0xff] %vm3688, %v4150
  %4200 = vst.msk [vmem:[%s5 + $0xf8] sm:$0xff] %vm3688, %v4151
  %4201 = vst.msk [vmem:[%s5 + $0x100] sm:$0xff] %vm3688, %v4152
  %4202 = vst.msk [vmem:[%s5 + $0x108] sm:$0xff] %vm3688, %v4153
  %4203 = vst.msk [vmem:[%s5 + $0x110] sm:$0xff] %vm3688, %v4154
  %4204 = vst.msk [vmem:[%s5 + $0x118] sm:$0xff] %vm3688, %v4155
  %4205 = vst.msk [vmem:[%s5 + $0x120] sm:$0xff] %vm3688, %v4156
  %4206 = vst.msk [vmem:[%s5 + $0x128] sm:$0xff] %vm3688, %v4157
  %4207 = vst.msk [vmem:[%s5 + $0x130] sm:$0xff] %vm3688, %v4158
  %4208 = vst.msk [vmem:[%s5 + $0x138] sm:$0xff] %vm3688, %v4159
  %4209 = vst.msk [vmem:[%s5 + $0x140] sm:$0xff] %vm3688, %v4160
  %4210 = vst.msk [vmem:[%s5 + $0x148] sm:$0xff] %vm3688, %v4161
  %4211 = vst.msk [vmem:[%s5 + $0x150] sm:$0xff] %vm3688, %v4162
  %4212 = vst.msk [vmem:[%s5 + $0x158] sm:$0xff] %vm3688, %v4163
  %4213 = vst.msk [vmem:[%s5 + $0x160] sm:$0xff] %vm3688, %v4164
  %4214 = vst.msk [vmem:[%s5 + $0x168] sm:$0xff] %vm3688, %v4165
  %4215 = vst.msk [vmem:[%s5 + $0x170] sm:$0xff] %vm3688, %v4166
  %4216 = vst.msk [vmem:[%s5 + $0x178] sm:$0xff] %vm3688, %v4167
  %4217 = vst.msk [vmem:[%s5 + $0x180] sm:$0xff] %vm3688, %v4168
  // Predicated region
  $region22: #{generator_forward.4} parent=0 // pred_check
    _
  $region23: #{generator_forward.4} parent=0 // pred_check_branch
    %4219 = sbr.rel (0) target = $region25
  $region24: #{generator_forward.4} parent=0 // pred_region
    _
  $region25: #{generator_forward.4} parent=0 // pred_fallthru
    _
  // Predicated region
  $region26: #{generator_forward.4} parent=0 // pred_check
    _
  $region27: #{generator_forward.4} parent=0 // pred_check_branch
    %4221 = sbr.rel (0) target = $region29
  $region28: #{generator_forward.4} parent=0 // pred_region
    _
  $region29: #{generator_forward.4} parent=0 // pred_fallthru
    _

// kernel: generator_forward.5
$region0: #{generator_forward.5}
  #allocation0 [shape = 'u32[]', space=smem, size = 0x4, offset = 0x4, fixed_abs, tag = 'smem constant byte address 0x4 - core index']
  #allocation1 [shape = 'u32[72,128]{1,0:T(1,128)}', space=vmem, size = 0x9000, scoped, tag = 'internal scratch']
  #allocation2 [shape = 'f32[1,1]{1,0:T(1,128)S(1)}', space=vmem, size = 0x200, scoped, tag = 'scoped memory for generator_forward.5']
  %s0 = inlined_call_operand.vmem [shape: f32[1568,1024], index: 0, kind: input, shape index: {}]
  %s1 = inlined_call_operand.vmem [shape: f32[1,1024], index: 1, kind: input, shape index: {}]
  %s2 = inlined_call_operand.<no memory space> [shape: f32[1,1], index: 2, kind: input, shape index: {}]
  %s3 = inlined_call_operand.vmem [shape: f32[1568,1], index: 3, kind: output, shape index: {}]
  %s4 = sld [smem:[#allocation0]]
  $region45: #{generator_forward.5} parent=0
    _
  %s6 = ssub.s32 1, %s4
  %s7 = scalar_select 0, %s6, %s4
  %v8 = vstv %s2
  %9 = vst [vmem:[#allocation2] sm:$0x1] %v8
  loop: start=0, step=1, limit=4
  $region2: #{generator_forward.5} parent=0 // loop_pre_header
    _
  $region3: #{generator_forward.5} parent=0 // loop_header
    %s11 = sphi 0, %s15
    %p12 = scmp.ge.s32.totalorder %s11, 4
    %s21 = sphi 0, %s23
    %s24 = sphi 0, %s21
    %s25 = sphi 0, %s24
    %s41 = sphi 0, %s25
    %s45 = sphi 0, %s45
    %s47 = sphi 0, %s45
    %s48 = sphi 0, %s47
    %s62 = sphi 0, %s48
    %s66 = sphi 0, %s66
    %s68 = sphi 0, %s66
    %s69 = sphi 0, %s68
    %s83 = sphi 0, %s69
    %s89 = sphi 0, %s91
    %s92 = sphi 0, %s89
    %s93 = sphi 0, %s92
    %s109 = sphi 0, %s93
  $region4: #{generator_forward.5} parent=0 // loop_header_branch
    %14 = sbr.rel (%p12) target = $region8
  $region5: #{generator_forward.5} parent=0 // loop_body
    %s16 = ssub.s32 %s11, 1
    %s17 = ssub.s32 %s11, 2
    %s18 = sadd.s32 %s11, 1
    %s19 = ssub.s32 %s11, %s18
    %p20 = scmp.eq.s32.totalorder %s19, 0
    %s22 = sadd.s32 %s21, 1
    %s23 = scalar_select %p20, %s21, %s22
    %p26 = pneg %p20
    %p27 = scmp.eq.s32.totalorder %s11, 1
    %p28 = por %p26, %p27
    %p29 = scmp.ne.s32.totalorder %s21, %s24
    %p30 = scmp.eq.s32.totalorder %s11, 0
    %p31 = por %p29, %p30
    %p32 = scmp.ne.s32.totalorder %s21, %s24
    %p33 = scmp.eq.s32.totalorder %s16, 1
    %p34 = por %p32, %p33
    %p35 = scmp.ne.s32.totalorder %s24, %s25
    %p36 = scmp.eq.s32.totalorder %s16, 0
    %p37 = por %p35, %p36
    %p38 = scmp.ne.s32.totalorder %s24, %s25
    %p39 = scmp.eq.s32.totalorder %s17, 1
    %p40 = por %p38, %p39
    %p42 = scmp.ne.s32.totalorder %s25, %s41
    %p43 = scmp.eq.s32.totalorder %s17, 0
    %p44 = por %p42, %p43
    %s46 = sadd.s32 %s45, 1
    %p49 = scmp.eq.s32.totalorder %s11, 1
    %p50 = scmp.ne.s32.totalorder %s45, %s47
    %p51 = scmp.eq.s32.totalorder %s11, 0
    %p52 = por %p50, %p51
    %p53 = scmp.ne.s32.totalorder %s45, %s47
    %p54 = scmp.eq.s32.totalorder %s16, 1
    %p55 = por %p53, %p54
    %p56 = scmp.ne.s32.totalorder %s47, %s48
    %p57 = scmp.eq.s32.totalorder %s16, 0
    %p58 = por %p56, %p57
    %p59 = scmp.ne.s32.totalorder %s47, %s48
    %p60 = scmp.eq.s32.totalorder %s17, 1
    %p61 = por %p59, %p60
    %p63 = scmp.ne.s32.totalorder %s48, %s62
    %p64 = scmp.eq.s32.totalorder %s17, 0
    %p65 = por %p63, %p64
    %s67 = sadd.s32 %s66, 1
    %p70 = scmp.eq.s32.totalorder %s11, 1
    %p71 = scmp.ne.s32.totalorder %s66, %s68
    %p72 = scmp.eq.s32.totalorder %s11, 0
    %p73 = por %p71, %p72
    %p74 = scmp.ne.s32.totalorder %s66, %s68
    %p75 = scmp.eq.s32.totalorder %s16, 1
    %p76 = por %p74, %p75
    %p77 = scmp.ne.s32.totalorder %s68, %s69
    %p78 = scmp.eq.s32.totalorder %s16, 0
    %p79 = por %p77, %p78
    %p80 = scmp.ne.s32.totalorder %s68, %s69
    %p81 = scmp.eq.s32.totalorder %s17, 1
    %p82 = por %p80, %p81
    %p84 = scmp.ne.s32.totalorder %s69, %s83
    %p85 = scmp.eq.s32.totalorder %s17, 0
    %p86 = por %p84, %p85
    %s87 = ssub.s32 %s11, %s18
    %p88 = scmp.eq.s32.totalorder %s87, 0
    %s90 = sadd.s32 %s89, 1
    %s91 = scalar_select %p88, %s89, %s90
    %p94 = pneg %p88
    %p95 = scmp.eq.s32.totalorder %s11, 1
    %p96 = por %p94, %p95
    %p97 = scmp.ne.s32.totalorder %s89, %s92
    %p98 = scmp.eq.s32.totalorder %s11, 0
    %p99 = por %p97, %p98
    %p100 = scmp.ne.s32.totalorder %s89, %s92
    %p101 = scmp.eq.s32.totalorder %s16, 1
    %p102 = por %p100, %p101
    %p103 = scmp.ne.s32.totalorder %s92, %s93
    %p104 = scmp.eq.s32.totalorder %s16, 0
    %p105 = por %p103, %p104
    %p106 = scmp.ne.s32.totalorder %s92, %s93
    %p107 = scmp.eq.s32.totalorder %s17, 1
    %p108 = por %p106, %p107
    %p110 = scmp.ne.s32.totalorder %s93, %s109
    %p111 = scmp.eq.s32.totalorder %s17, 0
    %p112 = por %p110, %p111
    %p113 = scmp.le.s32.totalorder 1, %s11
    %p114 = scmp.lt.s32.totalorder %s11, 3
    %p115 = pnand %p113, %p114
    %p116 = pneg %p115
    // Predicated region
    $region9: #{generator_forward.5} parent=5 // pred_check
      _
    $region10: #{generator_forward.5} parent=5 // pred_check_branch
      %118 = sbr.rel (%p115) target = $region12
    $region11: #{generator_forward.5} parent=5 // pred_region
      %s119 = ssub.s32 %s11, 1
      // Predicated region
      $region13: #{generator_forward.5} parent=11 // pred_check
        %p120 = pneg %p58
      $region14: #{generator_forward.5} parent=11 // pred_check_branch
        %122 = sbr.rel (%p120) target = $region16
      $region15: #{generator_forward.5} parent=11 // pred_region
        _
      $region16: #{generator_forward.5} parent=11 // pred_fallthru
        _
      // Predicated region
      $region17: #{generator_forward.5} parent=11 // pred_check
        %p123 = pneg %p79
      $region18: #{generator_forward.5} parent=11 // pred_check_branch
        %125 = sbr.rel (%p123) target = $region20
      $region19: #{generator_forward.5} parent=11 // pred_region
        _
      $region20: #{generator_forward.5} parent=11 // pred_fallthru
        _
    $region12: #{generator_forward.5} parent=5 // pred_fallthru
      _
    %p126 = scmp.lt.s32.totalorder %s11, 2
    // Predicated region
    $region21: #{generator_forward.5} parent=5 // pred_check
      %p127 = pneg %p126
    $region22: #{generator_forward.5} parent=5 // pred_check_branch
      %129 = sbr.rel (%p127) target = $region24
    $region23: #{generator_forward.5} parent=5 // pred_region
      // Predicated region
      $region25: #{generator_forward.5} parent=23 // pred_check
        %p130 = pneg %p31
      $region26: #{generator_forward.5} parent=23 // pred_check_branch
        %132 = sbr.rel (%p130) target = $region28
      $region27: #{generator_forward.5} parent=23 // pred_region
        %s133 = smul.u32 98, %s11
        %p134 = scmp.lt.s32.totalorder %s133, 195
        %s135 = scalar_select %p134, %s133, 195
        %s136 = smul.addr %s135, 8
        %s137 = smul.addr %s136, 8
        %s138 = scalar_lea.vmem %s0, %s137
        %s139 = smul.u32 98, %s11
      $region28: #{generator_forward.5} parent=23 // pred_fallthru
        _
    $region24: #{generator_forward.5} parent=5 // pred_fallthru
      _
    %p140 = scmp.le.s32.totalorder 1, %s11
    %p141 = scmp.lt.s32.totalorder %s11, 3
    %p142 = pnand %p140, %p141
    %p143 = pneg %p142
    // Predicated region
    $region29: #{generator_forward.5} parent=5 // pred_check
      _
    $region30: #{generator_forward.5} parent=5 // pred_check_branch
      %145 = sbr.rel (%p142) target = $region32
    $region31: #{generator_forward.5} parent=5 // pred_region
      %s146 = ssub.s32 %s11, 1
      %s147 = smul.u32 98, %s16
      %p148 = scmp.lt.s32.totalorder %s147, 195
      %s149 = scalar_select %p148, %s147, 195
      %s150 = smul.addr %s149, 8
      %s151 = smul.addr %s150, 8
      %s152 = scalar_lea.vmem %s0, %s151
      %p153 = pneg %p37
      %p154 = pneg %p34
      %p155 = pneg %p58
      %p156 = pneg %p55
      %p157 = pneg %p79
      %p158 = pneg %p76
      %p159 = pneg %p105
      %p160 = pneg %p102
      %s161 = smul.u32 98, %s16
      %p162 = scmp.lt.s32.totalorder %s161, 195
      %s163 = scalar_select %p162, %s161, 195
      %s164 = smul.addr %s163, 8
      %s165 = scalar_lea.vmem %s3, %s164
      %s166 = smul.u32 98, %s16
      %p167 = scmp.lt.s32.totalorder %s166, 195
      %s168 = scalar_select %p167, %s166, 195
      %s169 = smul.addr %s168, 8
      %s170 = smul.addr %s169, 8
      %s171 = scalar_lea.vmem %s0, %s170
      %s172 = smul.u32 98, %s16
      %s173 = smul.u32 98, %s16
      %p174 = scmp.lt.s32.totalorder %s173, 195
      %s175 = scalar_select %p174, %s173, 195
      %s176 = smul.addr %s175, 8
      %s177 = scalar_lea.vmem %s3, %s176
      %s178 = smul.u32 98, %s16
      %v179 = vld [vmem:[%s171] sm:$0xff]
      %v180 = vld [vmem:[%s171 + $0x8] sm:$0xff]
      %v181 = vld [vmem:[%s171 + $0x10] sm:$0xff]
      %v182 = vld [vmem:[%s171 + $0x18] sm:$0xff]
      %v183 = vld [vmem:[%s171 + $0x20] sm:$0xff]
      %v184 = vld [vmem:[%s171 + $0x28] sm:$0xff]
      %v185 = vld [vmem:[%s171 + $0x30] sm:$0xff]
      %v186 = vld [vmem:[%s171 + $0x38] sm:$0xff]
      %v187 = vld [vmem:[%s171 + $0x40] sm:$0xff]
      %v188 = vld [vmem:[%s171 + $0x48] sm:$0xff]
      %v189 = vld [vmem:[%s171 + $0x50] sm:$0xff]
      %v190 = vld [vmem:[%s171 + $0x58] sm:$0xff]
      %v191 = vld [vmem:[%s171 + $0x60] sm:$0xff]
      %v192 = vld [vmem:[%s171 + $0x68] sm:$0xff]
      %v193 = vld [vmem:[%s171 + $0x70] sm:$0xff]
      %v194 = vld [vmem:[%s171 + $0x78] sm:$0xff]
      %v195 = vld [vmem:[%s171 + $0x80] sm:$0xff]
      %v196 = vld [vmem:[%s171 + $0x88] sm:$0xff]
      %v197 = vld [vmem:[%s171 + $0x90] sm:$0xff]
      %v198 = vld [vmem:[%s171 + $0x98] sm:$0xff]
      %v199 = vld [vmem:[%s171 + $0xa0] sm:$0xff]
      %v200 = vld [vmem:[%s171 + $0xa8] sm:$0xff]
      %v201 = vld [vmem:[%s171 + $0xb0] sm:$0xff]
      %v202 = vld [vmem:[%s171 + $0xb8] sm:$0xff]
      %v203 = vld [vmem:[%s171 + $0xc0] sm:$0xff]
      %v204 = vld [vmem:[%s171 + $0xc8] sm:$0xff]
      %v205 = vld [vmem:[%s171 + $0xd0] sm:$0xff]
      %v206 = vld [vmem:[%s171 + $0xd8] sm:$0xff]
      %v207 = vld [vmem:[%s171 + $0xe0] sm:$0xff]
      %v208 = vld [vmem:[%s171 + $0xe8] sm:$0xff]
      %v209 = vld [vmem:[%s171 + $0xf0] sm:$0xff]
      %v210 = vld [vmem:[%s171 + $0xf8] sm:$0xff]
      %v211 = vld [vmem:[%s171 + $0x100] sm:$0xff]
      %v212 = vld [vmem:[%s171 + $0x108] sm:$0xff]
      %v213 = vld [vmem:[%s171 + $0x110] sm:$0xff]
      %v214 = vld [vmem:[%s171 + $0x118] sm:$0xff]
      %v215 = vld [vmem:[%s171 + $0x120] sm:$0xff]
      %v216 = vld [vmem:[%s171 + $0x128] sm:$0xff]
      %v217 = vld [vmem:[%s171 + $0x130] sm:$0xff]
      %v218 = vld [vmem:[%s171 + $0x138] sm:$0xff]
      %v219 = vld [vmem:[%s171 + $0x140] sm:$0xff]
      %v220 = vld [vmem:[%s171 + $0x148] sm:$0xff]
      %v221 = vld [vmem:[%s171 + $0x150] sm:$0xff]
      %v222 = vld [vmem:[%s171 + $0x158] sm:$0xff]
      %v223 = vld [vmem:[%s171 + $0x160] sm:$0xff]
      %v224 = vld [vmem:[%s171 + $0x168] sm:$0xff]
      %v225 = vld [vmem:[%s171 + $0x170] sm:$0xff]
      %v226 = vld [vmem:[%s171 + $0x178] sm:$0xff]
      %v227 = vld [vmem:[%s171 + $0x180] sm:$0xff]
      %v228 = vld [vmem:[%s171 + $0x188] sm:$0xff]
      %v229 = vld [vmem:[%s171 + $0x190] sm:$0xff]
      %v230 = vld [vmem:[%s171 + $0x198] sm:$0xff]
      %v231 = vld [vmem:[%s171 + $0x1a0] sm:$0xff]
      %v232 = vld [vmem:[%s171 + $0x1a8] sm:$0xff]
      %v233 = vld [vmem:[%s171 + $0x1b0] sm:$0xff]
      %v234 = vld [vmem:[%s171 + $0x1b8] sm:$0xff]
      %v235 = vld [vmem:[%s171 + $0x1c0] sm:$0xff]
      %v236 = vld [vmem:[%s171 + $0x1c8] sm:$0xff]
      %v237 = vld [vmem:[%s171 + $0x1d0] sm:$0xff]
      %v238 = vld [vmem:[%s171 + $0x1d8] sm:$0xff]
      %v239 = vld [vmem:[%s171 + $0x1e0] sm:$0xff]
      %v240 = vld [vmem:[%s171 + $0x1e8] sm:$0xff]
      %v241 = vld [vmem:[%s171 + $0x1f0] sm:$0xff]
      %v242 = vld [vmem:[%s171 + $0x1f8] sm:$0xff]
      %v243 = vld [vmem:[%s171 + $0x200] sm:$0xff]
      %v244 = vld [vmem:[%s171 + $0x208] sm:$0xff]
      %v245 = vld [vmem:[%s171 + $0x210] sm:$0xff]
      %v246 = vld [vmem:[%s171 + $0x218] sm:$0xff]
      %v247 = vld [vmem:[%s171 + $0x220] sm:$0xff]
      %v248 = vld [vmem:[%s171 + $0x228] sm:$0xff]
      %v249 = vld [vmem:[%s171 + $0x230] sm:$0xff]
      %v250 = vld [vmem:[%s171 + $0x238] sm:$0xff]
      %v251 = vld [vmem:[%s171 + $0x240] sm:$0xff]
      %v252 = vld [vmem:[%s171 + $0x248] sm:$0xff]
      %v253 = vld [vmem:[%s171 + $0x250] sm:$0xff]
      %v254 = vld [vmem:[%s171 + $0x258] sm:$0xff]
      %v255 = vld [vmem:[%s171 + $0x260] sm:$0xff]
      %v256 = vld [vmem:[%s171 + $0x268] sm:$0xff]
      %v257 = vld [vmem:[%s171 + $0x270] sm:$0xff]
      %v258 = vld [vmem:[%s171 + $0x278] sm:$0xff]
      %v259 = vld [vmem:[%s171 + $0x280] sm:$0xff]
      %v260 = vld [vmem:[%s171 + $0x288] sm:$0xff]
      %v261 = vld [vmem:[%s171 + $0x290] sm:$0xff]
      %v262 = vld [vmem:[%s171 + $0x298] sm:$0xff]
      %v263 = vld [vmem:[%s171 + $0x2a0] sm:$0xff]
      %v264 = vld [vmem:[%s171 + $0x2a8] sm:$0xff]
      %v265 = vld [vmem:[%s171 + $0x2b0] sm:$0xff]
      %v266 = vld [vmem:[%s171 + $0x2b8] sm:$0xff]
      %v267 = vld [vmem:[%s171 + $0x2c0] sm:$0xff]
      %v268 = vld [vmem:[%s171 + $0x2c8] sm:$0xff]
      %v269 = vld [vmem:[%s171 + $0x2d0] sm:$0xff]
      %v270 = vld [vmem:[%s171 + $0x2d8] sm:$0xff]
      %v271 = vld [vmem:[%s171 + $0x2e0] sm:$0xff]
      %v272 = vld [vmem:[%s171 + $0x2e8] sm:$0xff]
      %v273 = vld [vmem:[%s171 + $0x2f0] sm:$0xff]
      %v274 = vld [vmem:[%s171 + $0x2f8] sm:$0xff]
      %v275 = vld [vmem:[%s171 + $0x300] sm:$0xff]
      %v276 = vld [vmem:[%s171 + $0x308] sm:$0xff]
      %v277 = vld [vmem:[%s171 + $0x310] sm:$0xff]
      %v278 = vld [vmem:[%s171 + $0x318] sm:$0xff]
      %v279 = vld [vmem:[%s171 + $0x320] sm:$0xff]
      %v280 = vld [vmem:[%s171 + $0x328] sm:$0xff]
      %v281 = vld [vmem:[%s171 + $0x330] sm:$0xff]
      %v282 = vld [vmem:[%s171 + $0x338] sm:$0xff]
      %v283 = vld [vmem:[%s171 + $0x340] sm:$0xff]
      %v284 = vld [vmem:[%s171 + $0x348] sm:$0xff]
      %v285 = vld [vmem:[%s171 + $0x350] sm:$0xff]
      %v286 = vld [vmem:[%s171 + $0x358] sm:$0xff]
      %v287 = vld [vmem:[%s171 + $0x360] sm:$0xff]
      %v288 = vld [vmem:[%s171 + $0x368] sm:$0xff]
      %v289 = vld [vmem:[%s171 + $0x370] sm:$0xff]
      %v290 = vld [vmem:[%s171 + $0x378] sm:$0xff]
      %v291 = vld [vmem:[%s171 + $0x380] sm:$0xff]
      %v292 = vld [vmem:[%s171 + $0x388] sm:$0xff]
      %v293 = vld [vmem:[%s171 + $0x390] sm:$0xff]
      %v294 = vld [vmem:[%s171 + $0x398] sm:$0xff]
      %v295 = vld [vmem:[%s171 + $0x3a0] sm:$0xff]
      %v296 = vld [vmem:[%s171 + $0x3a8] sm:$0xff]
      %v297 = vld [vmem:[%s171 + $0x3b0] sm:$0xff]
      %v298 = vld [vmem:[%s171 + $0x3b8] sm:$0xff]
      %v299 = vld [vmem:[%s171 + $0x3c0] sm:$0xff]
      %v300 = vld [vmem:[%s171 + $0x3c8] sm:$0xff]
      %v301 = vld [vmem:[%s171 + $0x3d0] sm:$0xff]
      %v302 = vld [vmem:[%s171 + $0x3d8] sm:$0xff]
      %v303 = vld [vmem:[%s171 + $0x3e0] sm:$0xff]
      %v304 = vld [vmem:[%s171 + $0x3e8] sm:$0xff]
      %v305 = vld [vmem:[%s171 + $0x3f0] sm:$0xff]
      %v306 = vld [vmem:[%s171 + $0x3f8] sm:$0xff]
      %v307 = vld [vmem:[%s171 + $0x400] sm:$0xff]
      %v308 = vld [vmem:[%s171 + $0x408] sm:$0xff]
      %v309 = vld [vmem:[%s171 + $0x410] sm:$0xff]
      %v310 = vld [vmem:[%s171 + $0x418] sm:$0xff]
      %v311 = vld [vmem:[%s171 + $0x420] sm:$0xff]
      %v312 = vld [vmem:[%s171 + $0x428] sm:$0xff]
      %v313 = vld [vmem:[%s171 + $0x430] sm:$0xff]
      %v314 = vld [vmem:[%s171 + $0x438] sm:$0xff]
      %v315 = vld [vmem:[%s171 + $0x440] sm:$0xff]
      %v316 = vld [vmem:[%s171 + $0x448] sm:$0xff]
      %v317 = vld [vmem:[%s171 + $0x450] sm:$0xff]
      %v318 = vld [vmem:[%s171 + $0x458] sm:$0xff]
      %v319 = vld [vmem:[%s171 + $0x460] sm:$0xff]
      %v320 = vld [vmem:[%s171 + $0x468] sm:$0xff]
      %v321 = vld [vmem:[%s171 + $0x470] sm:$0xff]
      %v322 = vld [vmem:[%s171 + $0x478] sm:$0xff]
      %v323 = vld [vmem:[%s171 + $0x480] sm:$0xff]
      %v324 = vld [vmem:[%s171 + $0x488] sm:$0xff]
      %v325 = vld [vmem:[%s171 + $0x490] sm:$0xff]
      %v326 = vld [vmem:[%s171 + $0x498] sm:$0xff]
      %v327 = vld [vmem:[%s171 + $0x4a0] sm:$0xff]
      %v328 = vld [vmem:[%s171 + $0x4a8] sm:$0xff]
      %v329 = vld [vmem:[%s171 + $0x4b0] sm:$0xff]
      %v330 = vld [vmem:[%s171 + $0x4b8] sm:$0xff]
      %v331 = vld [vmem:[%s171 + $0x4c0] sm:$0xff]
      %v332 = vld [vmem:[%s171 + $0x4c8] sm:$0xff]
      %v333 = vld [vmem:[%s171 + $0x4d0] sm:$0xff]
      %v334 = vld [vmem:[%s171 + $0x4d8] sm:$0xff]
      %v335 = vld [vmem:[%s171 + $0x4e0] sm:$0xff]
      %v336 = vld [vmem:[%s171 + $0x4e8] sm:$0xff]
      %v337 = vld [vmem:[%s171 + $0x4f0] sm:$0xff]
      %v338 = vld [vmem:[%s171 + $0x4f8] sm:$0xff]
      %v339 = vld [vmem:[%s171 + $0x500] sm:$0xff]
      %v340 = vld [vmem:[%s171 + $0x508] sm:$0xff]
      %v341 = vld [vmem:[%s171 + $0x510] sm:$0xff]
      %v342 = vld [vmem:[%s171 + $0x518] sm:$0xff]
      %v343 = vld [vmem:[%s171 + $0x520] sm:$0xff]
      %v344 = vld [vmem:[%s171 + $0x528] sm:$0xff]
      %v345 = vld [vmem:[%s171 + $0x530] sm:$0xff]
      %v346 = vld [vmem:[%s171 + $0x538] sm:$0xff]
      %v347 = vld [vmem:[%s171 + $0x540] sm:$0xff]
      %v348 = vld [vmem:[%s171 + $0x548] sm:$0xff]
      %v349 = vld [vmem:[%s171 + $0x550] sm:$0xff]
      %v350 = vld [vmem:[%s171 + $0x558] sm:$0xff]
      %v351 = vld [vmem:[%s171 + $0x560] sm:$0xff]
      %v352 = vld [vmem:[%s171 + $0x568] sm:$0xff]
      %v353 = vld [vmem:[%s171 + $0x570] sm:$0xff]
      %v354 = vld [vmem:[%s171 + $0x578] sm:$0xff]
      %v355 = vld [vmem:[%s171 + $0x580] sm:$0xff]
      %v356 = vld [vmem:[%s171 + $0x588] sm:$0xff]
      %v357 = vld [vmem:[%s171 + $0x590] sm:$0xff]
      %v358 = vld [vmem:[%s171 + $0x598] sm:$0xff]
      %v359 = vld [vmem:[%s171 + $0x5a0] sm:$0xff]
      %v360 = vld [vmem:[%s171 + $0x5a8] sm:$0xff]
      %v361 = vld [vmem:[%s171 + $0x5b0] sm:$0xff]
      %v362 = vld [vmem:[%s171 + $0x5b8] sm:$0xff]
      %v363 = vld [vmem:[%s171 + $0x5c0] sm:$0xff]
      %v364 = vld [vmem:[%s171 + $0x5c8] sm:$0xff]
      %v365 = vld [vmem:[%s171 + $0x5d0] sm:$0xff]
      %v366 = vld [vmem:[%s171 + $0x5d8] sm:$0xff]
      %v367 = vld [vmem:[%s171 + $0x5e0] sm:$0xff]
      %v368 = vld [vmem:[%s171 + $0x5e8] sm:$0xff]
      %v369 = vld [vmem:[%s171 + $0x5f0] sm:$0xff]
      %v370 = vld [vmem:[%s171 + $0x5f8] sm:$0xff]
      %v371 = vld [vmem:[%s171 + $0x600] sm:$0xff]
      %v372 = vld [vmem:[%s171 + $0x608] sm:$0xff]
      %v373 = vld [vmem:[%s171 + $0x610] sm:$0xff]
      %v374 = vld [vmem:[%s171 + $0x618] sm:$0xff]
      %v375 = vld [vmem:[%s171 + $0x620] sm:$0xff]
      %v376 = vld [vmem:[%s171 + $0x628] sm:$0xff]
      %v377 = vld [vmem:[%s171 + $0x630] sm:$0xff]
      %v378 = vld [vmem:[%s171 + $0x638] sm:$0xff]
      %v379 = vld [vmem:[%s171 + $0x640] sm:$0xff]
      %v380 = vld [vmem:[%s171 + $0x648] sm:$0xff]
      %v381 = vld [vmem:[%s171 + $0x650] sm:$0xff]
      %v382 = vld [vmem:[%s171 + $0x658] sm:$0xff]
      %v383 = vld [vmem:[%s171 + $0x660] sm:$0xff]
      %v384 = vld [vmem:[%s171 + $0x668] sm:$0xff]
      %v385 = vld [vmem:[%s171 + $0x670] sm:$0xff]
      %v386 = vld [vmem:[%s171 + $0x678] sm:$0xff]
      %v387 = vld [vmem:[%s171 + $0x680] sm:$0xff]
      %v388 = vld [vmem:[%s171 + $0x688] sm:$0xff]
      %v389 = vld [vmem:[%s171 + $0x690] sm:$0xff]
      %v390 = vld [vmem:[%s171 + $0x698] sm:$0xff]
      %v391 = vld [vmem:[%s171 + $0x6a0] sm:$0xff]
      %v392 = vld [vmem:[%s171 + $0x6a8] sm:$0xff]
      %v393 = vld [vmem:[%s171 + $0x6b0] sm:$0xff]
      %v394 = vld [vmem:[%s171 + $0x6b8] sm:$0xff]
      %v395 = vld [vmem:[%s171 + $0x6c0] sm:$0xff]
      %v396 = vld [vmem:[%s171 + $0x6c8] sm:$0xff]
      %v397 = vld [vmem:[%s171 + $0x6d0] sm:$0xff]
      %v398 = vld [vmem:[%s171 + $0x6d8] sm:$0xff]
      %v399 = vld [vmem:[%s171 + $0x6e0] sm:$0xff]
      %v400 = vld [vmem:[%s171 + $0x6e8] sm:$0xff]
      %v401 = vld [vmem:[%s171 + $0x6f0] sm:$0xff]
      %v402 = vld [vmem:[%s171 + $0x6f8] sm:$0xff]
      %v403 = vld [vmem:[%s171 + $0x700] sm:$0xff]
      %v404 = vld [vmem:[%s171 + $0x708] sm:$0xff]
      %v405 = vld [vmem:[%s171 + $0x710] sm:$0xff]
      %v406 = vld [vmem:[%s171 + $0x718] sm:$0xff]
      %v407 = vld [vmem:[%s171 + $0x720] sm:$0xff]
      %v408 = vld [vmem:[%s171 + $0x728] sm:$0xff]
      %v409 = vld [vmem:[%s171 + $0x730] sm:$0xff]
      %v410 = vld [vmem:[%s171 + $0x738] sm:$0xff]
      %v411 = vld [vmem:[%s171 + $0x740] sm:$0xff]
      %v412 = vld [vmem:[%s171 + $0x748] sm:$0xff]
      %v413 = vld [vmem:[%s171 + $0x750] sm:$0xff]
      %v414 = vld [vmem:[%s171 + $0x758] sm:$0xff]
      %v415 = vld [vmem:[%s171 + $0x760] sm:$0xff]
      %v416 = vld [vmem:[%s171 + $0x768] sm:$0xff]
      %v417 = vld [vmem:[%s171 + $0x770] sm:$0xff]
      %v418 = vld [vmem:[%s171 + $0x778] sm:$0xff]
      %v419 = vld [vmem:[%s171 + $0x780] sm:$0xff]
      %v420 = vld [vmem:[%s171 + $0x788] sm:$0xff]
      %v421 = vld [vmem:[%s171 + $0x790] sm:$0xff]
      %v422 = vld [vmem:[%s171 + $0x798] sm:$0xff]
      %v423 = vld [vmem:[%s171 + $0x7a0] sm:$0xff]
      %v424 = vld [vmem:[%s171 + $0x7a8] sm:$0xff]
      %v425 = vld [vmem:[%s171 + $0x7b0] sm:$0xff]
      %v426 = vld [vmem:[%s171 + $0x7b8] sm:$0xff]
      %v427 = vld [vmem:[%s171 + $0x7c0] sm:$0xff]
      %v428 = vld [vmem:[%s171 + $0x7c8] sm:$0xff]
      %v429 = vld [vmem:[%s171 + $0x7d0] sm:$0xff]
      %v430 = vld [vmem:[%s171 + $0x7d8] sm:$0xff]
      %v431 = vld [vmem:[%s171 + $0x7e0] sm:$0xff]
      %v432 = vld [vmem:[%s171 + $0x7e8] sm:$0xff]
      %v433 = vld [vmem:[%s171 + $0x7f0] sm:$0xff]
      %v434 = vld [vmem:[%s171 + $0x7f8] sm:$0xff]
      %v435 = vld [vmem:[%s171 + $0x800] sm:$0xff]
      %v436 = vld [vmem:[%s171 + $0x808] sm:$0xff]
      %v437 = vld [vmem:[%s171 + $0x810] sm:$0xff]
      %v438 = vld [vmem:[%s171 + $0x818] sm:$0xff]
      %v439 = vld [vmem:[%s171 + $0x820] sm:$0xff]
      %v440 = vld [vmem:[%s171 + $0x828] sm:$0xff]
      %v441 = vld [vmem:[%s171 + $0x830] sm:$0xff]
      %v442 = vld [vmem:[%s171 + $0x838] sm:$0xff]
      %v443 = vld [vmem:[%s171 + $0x840] sm:$0xff]
      %v444 = vld [vmem:[%s171 + $0x848] sm:$0xff]
      %v445 = vld [vmem:[%s171 + $0x850] sm:$0xff]
      %v446 = vld [vmem:[%s171 + $0x858] sm:$0xff]
      %v447 = vld [vmem:[%s171 + $0x860] sm:$0xff]
      %v448 = vld [vmem:[%s171 + $0x868] sm:$0xff]
      %v449 = vld [vmem:[%s171 + $0x870] sm:$0xff]
      %v450 = vld [vmem:[%s171 + $0x878] sm:$0xff]
      %v451 = vld [vmem:[%s171 + $0x880] sm:$0xff]
      %v452 = vld [vmem:[%s171 + $0x888] sm:$0xff]
      %v453 = vld [vmem:[%s171 + $0x890] sm:$0xff]
      %v454 = vld [vmem:[%s171 + $0x898] sm:$0xff]
      %v455 = vld [vmem:[%s171 + $0x8a0] sm:$0xff]
      %v456 = vld [vmem:[%s171 + $0x8a8] sm:$0xff]
      %v457 = vld [vmem:[%s171 + $0x8b0] sm:$0xff]
      %v458 = vld [vmem:[%s171 + $0x8b8] sm:$0xff]
      %v459 = vld [vmem:[%s171 + $0x8c0] sm:$0xff]
      %v460 = vld [vmem:[%s171 + $0x8c8] sm:$0xff]
      %v461 = vld [vmem:[%s171 + $0x8d0] sm:$0xff]
      %v462 = vld [vmem:[%s171 + $0x8d8] sm:$0xff]
      %v463 = vld [vmem:[%s171 + $0x8e0] sm:$0xff]
      %v464 = vld [vmem:[%s171 + $0x8e8] sm:$0xff]
      %v465 = vld [vmem:[%s171 + $0x8f0] sm:$0xff]
      %v466 = vld [vmem:[%s171 + $0x8f8] sm:$0xff]
      %v467 = vld [vmem:[%s171 + $0x900] sm:$0xff]
      %v468 = vld [vmem:[%s171 + $0x908] sm:$0xff]
      %v469 = vld [vmem:[%s171 + $0x910] sm:$0xff]
      %v470 = vld [vmem:[%s171 + $0x918] sm:$0xff]
      %v471 = vld [vmem:[%s171 + $0x920] sm:$0xff]
      %v472 = vld [vmem:[%s171 + $0x928] sm:$0xff]
      %v473 = vld [vmem:[%s171 + $0x930] sm:$0xff]
      %v474 = vld [vmem:[%s171 + $0x938] sm:$0xff]
      %v475 = vld [vmem:[%s171 + $0x940] sm:$0xff]
      %v476 = vld [vmem:[%s171 + $0x948] sm:$0xff]
      %v477 = vld [vmem:[%s171 + $0x950] sm:$0xff]
      %v478 = vld [vmem:[%s171 + $0x958] sm:$0xff]
      %v479 = vld [vmem:[%s171 + $0x960] sm:$0xff]
      %v480 = vld [vmem:[%s171 + $0x968] sm:$0xff]
      %v481 = vld [vmem:[%s171 + $0x970] sm:$0xff]
      %v482 = vld [vmem:[%s171 + $0x978] sm:$0xff]
      %v483 = vld [vmem:[%s171 + $0x980] sm:$0xff]
      %v484 = vld [vmem:[%s171 + $0x988] sm:$0xff]
      %v485 = vld [vmem:[%s171 + $0x990] sm:$0xff]
      %v486 = vld [vmem:[%s171 + $0x998] sm:$0xff]
      %v487 = vld [vmem:[%s171 + $0x9a0] sm:$0xff]
      %v488 = vld [vmem:[%s171 + $0x9a8] sm:$0xff]
      %v489 = vld [vmem:[%s171 + $0x9b0] sm:$0xff]
      %v490 = vld [vmem:[%s171 + $0x9b8] sm:$0xff]
      %v491 = vld [vmem:[%s171 + $0x9c0] sm:$0xff]
      %v492 = vld [vmem:[%s171 + $0x9c8] sm:$0xff]
      %v493 = vld [vmem:[%s171 + $0x9d0] sm:$0xff]
      %v494 = vld [vmem:[%s171 + $0x9d8] sm:$0xff]
      %v495 = vld [vmem:[%s171 + $0x9e0] sm:$0xff]
      %v496 = vld [vmem:[%s171 + $0x9e8] sm:$0xff]
      %v497 = vld [vmem:[%s171 + $0x9f0] sm:$0xff]
      %v498 = vld [vmem:[%s171 + $0x9f8] sm:$0xff]
      %v499 = vld [vmem:[%s171 + $0xa00] sm:$0xff]
      %v500 = vld [vmem:[%s171 + $0xa08] sm:$0xff]
      %v501 = vld [vmem:[%s171 + $0xa10] sm:$0xff]
      %v502 = vld [vmem:[%s171 + $0xa18] sm:$0xff]
      %v503 = vld [vmem:[%s171 + $0xa20] sm:$0xff]
      %v504 = vld [vmem:[%s171 + $0xa28] sm:$0xff]
      %v505 = vld [vmem:[%s171 + $0xa30] sm:$0xff]
      %v506 = vld [vmem:[%s171 + $0xa38] sm:$0xff]
      %v507 = vld [vmem:[%s171 + $0xa40] sm:$0xff]
      %v508 = vld [vmem:[%s171 + $0xa48] sm:$0xff]
      %v509 = vld [vmem:[%s171 + $0xa50] sm:$0xff]
      %v510 = vld [vmem:[%s171 + $0xa58] sm:$0xff]
      %v511 = vld [vmem:[%s171 + $0xa60] sm:$0xff]
      %v512 = vld [vmem:[%s171 + $0xa68] sm:$0xff]
      %v513 = vld [vmem:[%s171 + $0xa70] sm:$0xff]
      %v514 = vld [vmem:[%s171 + $0xa78] sm:$0xff]
      %v515 = vld [vmem:[%s171 + $0xa80] sm:$0xff]
      %v516 = vld [vmem:[%s171 + $0xa88] sm:$0xff]
      %v517 = vld [vmem:[%s171 + $0xa90] sm:$0xff]
      %v518 = vld [vmem:[%s171 + $0xa98] sm:$0xff]
      %v519 = vld [vmem:[%s171 + $0xaa0] sm:$0xff]
      %v520 = vld [vmem:[%s171 + $0xaa8] sm:$0xff]
      %v521 = vld [vmem:[%s171 + $0xab0] sm:$0xff]
      %v522 = vld [vmem:[%s171 + $0xab8] sm:$0xff]
      %v523 = vld [vmem:[%s171 + $0xac0] sm:$0xff]
      %v524 = vld [vmem:[%s171 + $0xac8] sm:$0xff]
      %v525 = vld [vmem:[%s171 + $0xad0] sm:$0xff]
      %v526 = vld [vmem:[%s171 + $0xad8] sm:$0xff]
      %v527 = vld [vmem:[%s171 + $0xae0] sm:$0xff]
      %v528 = vld [vmem:[%s171 + $0xae8] sm:$0xff]
      %v529 = vld [vmem:[%s171 + $0xaf0] sm:$0xff]
      %v530 = vld [vmem:[%s171 + $0xaf8] sm:$0xff]
      %v531 = vld [vmem:[%s171 + $0xb00] sm:$0xff]
      %v532 = vld [vmem:[%s171 + $0xb08] sm:$0xff]
      %v533 = vld [vmem:[%s171 + $0xb10] sm:$0xff]
      %v534 = vld [vmem:[%s171 + $0xb18] sm:$0xff]
      %v535 = vld [vmem:[%s171 + $0xb20] sm:$0xff]
      %v536 = vld [vmem:[%s171 + $0xb28] sm:$0xff]
      %v537 = vld [vmem:[%s171 + $0xb30] sm:$0xff]
      %v538 = vld [vmem:[%s171 + $0xb38] sm:$0xff]
      %v539 = vld [vmem:[%s171 + $0xb40] sm:$0xff]
      %v540 = vld [vmem:[%s171 + $0xb48] sm:$0xff]
      %v541 = vld [vmem:[%s171 + $0xb50] sm:$0xff]
      %v542 = vld [vmem:[%s171 + $0xb58] sm:$0xff]
      %v543 = vld [vmem:[%s171 + $0xb60] sm:$0xff]
      %v544 = vld [vmem:[%s171 + $0xb68] sm:$0xff]
      %v545 = vld [vmem:[%s171 + $0xb70] sm:$0xff]
      %v546 = vld [vmem:[%s171 + $0xb78] sm:$0xff]
      %v547 = vld [vmem:[%s171 + $0xb80] sm:$0xff]
      %v548 = vld [vmem:[%s171 + $0xb88] sm:$0xff]
      %v549 = vld [vmem:[%s171 + $0xb90] sm:$0xff]
      %v550 = vld [vmem:[%s171 + $0xb98] sm:$0xff]
      %v551 = vld [vmem:[%s171 + $0xba0] sm:$0xff]
      %v552 = vld [vmem:[%s171 + $0xba8] sm:$0xff]
      %v553 = vld [vmem:[%s171 + $0xbb0] sm:$0xff]
      %v554 = vld [vmem:[%s171 + $0xbb8] sm:$0xff]
      %v555 = vld [vmem:[%s171 + $0xbc0] sm:$0xff]
      %v556 = vld [vmem:[%s171 + $0xbc8] sm:$0xff]
      %v557 = vld [vmem:[%s171 + $0xbd0] sm:$0xff]
      %v558 = vld [vmem:[%s171 + $0xbd8] sm:$0xff]
      %v559 = vld [vmem:[%s171 + $0xbe0] sm:$0xff]
      %v560 = vld [vmem:[%s171 + $0xbe8] sm:$0xff]
      %v561 = vld [vmem:[%s171 + $0xbf0] sm:$0xff]
      %v562 = vld [vmem:[%s171 + $0xbf8] sm:$0xff]
      %v563 = vld [vmem:[%s171 + $0xc00] sm:$0xff]
      %v564 = vld [vmem:[%s171 + $0xc08] sm:$0xff]
      %v565 = vld [vmem:[%s171 + $0xc10] sm:$0xff]
      %v566 = vld [vmem:[%s171 + $0xc18] sm:$0xff]
      %v567 = vld [vmem:[%s171 + $0xc20] sm:$0xff]
      %v568 = vld [vmem:[%s171 + $0xc28] sm:$0xff]
      %v569 = vld [vmem:[%s171 + $0xc30] sm:$0xff]
      %v570 = vld [vmem:[%s171 + $0xc38] sm:$0xff]
      %v571 = vld [vmem:[%s171 + $0xc40] sm:$0xff]
      %v572 = vld [vmem:[%s171 + $0xc48] sm:$0xff]
      %v573 = vld [vmem:[%s171 + $0xc50] sm:$0xff]
      %v574 = vld [vmem:[%s171 + $0xc58] sm:$0xff]
      %v575 = vld [vmem:[%s171 + $0xc60] sm:$0xff]
      %v576 = vld [vmem:[%s171 + $0xc68] sm:$0xff]
      %v577 = vld [vmem:[%s171 + $0xc70] sm:$0xff]
      %v578 = vld [vmem:[%s171 + $0xc78] sm:$0xff]
      %v579 = vld [vmem:[%s171 + $0xc80] sm:$0xff]
      %v580 = vld [vmem:[%s171 + $0xc88] sm:$0xff]
      %v581 = vld [vmem:[%s171 + $0xc90] sm:$0xff]
      %v582 = vld [vmem:[%s171 + $0xc98] sm:$0xff]
      %v583 = vld [vmem:[%s171 + $0xca0] sm:$0xff]
      %v584 = vld [vmem:[%s171 + $0xca8] sm:$0xff]
      %v585 = vld [vmem:[%s171 + $0xcb0] sm:$0xff]
      %v586 = vld [vmem:[%s171 + $0xcb8] sm:$0xff]
      %v587 = vld [vmem:[%s171 + $0xcc0] sm:$0xff]
      %v588 = vld [vmem:[%s171 + $0xcc8] sm:$0xff]
      %v589 = vld [vmem:[%s171 + $0xcd0] sm:$0xff]
      %v590 = vld [vmem:[%s171 + $0xcd8] sm:$0xff]
      %v591 = vld [vmem:[%s171 + $0xce0] sm:$0xff]
      %v592 = vld [vmem:[%s171 + $0xce8] sm:$0xff]
      %v593 = vld [vmem:[%s171 + $0xcf0] sm:$0xff]
      %v594 = vld [vmem:[%s171 + $0xcf8] sm:$0xff]
      %v595 = vld [vmem:[%s171 + $0xd00] sm:$0xff]
      %v596 = vld [vmem:[%s171 + $0xd08] sm:$0xff]
      %v597 = vld [vmem:[%s171 + $0xd10] sm:$0xff]
      %v598 = vld [vmem:[%s171 + $0xd18] sm:$0xff]
      %v599 = vld [vmem:[%s171 + $0xd20] sm:$0xff]
      %v600 = vld [vmem:[%s171 + $0xd28] sm:$0xff]
      %v601 = vld [vmem:[%s171 + $0xd30] sm:$0xff]
      %v602 = vld [vmem:[%s171 + $0xd38] sm:$0xff]
      %v603 = vld [vmem:[%s171 + $0xd40] sm:$0xff]
      %v604 = vld [vmem:[%s171 + $0xd48] sm:$0xff]
      %v605 = vld [vmem:[%s171 + $0xd50] sm:$0xff]
      %v606 = vld [vmem:[%s171 + $0xd58] sm:$0xff]
      %v607 = vld [vmem:[%s171 + $0xd60] sm:$0xff]
      %v608 = vld [vmem:[%s171 + $0xd68] sm:$0xff]
      %v609 = vld [vmem:[%s171 + $0xd70] sm:$0xff]
      %v610 = vld [vmem:[%s171 + $0xd78] sm:$0xff]
      %v611 = vld [vmem:[%s171 + $0xd80] sm:$0xff]
      %v612 = vld [vmem:[%s171 + $0xd88] sm:$0xff]
      %v613 = vld [vmem:[%s171 + $0xd90] sm:$0xff]
      %v614 = vld [vmem:[%s171 + $0xd98] sm:$0xff]
      %v615 = vld [vmem:[%s171 + $0xda0] sm:$0xff]
      %v616 = vld [vmem:[%s171 + $0xda8] sm:$0xff]
      %v617 = vld [vmem:[%s171 + $0xdb0] sm:$0xff]
      %v618 = vld [vmem:[%s171 + $0xdb8] sm:$0xff]
      %v619 = vld [vmem:[%s171 + $0xdc0] sm:$0xff]
      %v620 = vld [vmem:[%s171 + $0xdc8] sm:$0xff]
      %v621 = vld [vmem:[%s171 + $0xdd0] sm:$0xff]
      %v622 = vld [vmem:[%s171 + $0xdd8] sm:$0xff]
      %v623 = vld [vmem:[%s171 + $0xde0] sm:$0xff]
      %v624 = vld [vmem:[%s171 + $0xde8] sm:$0xff]
      %v625 = vld [vmem:[%s171 + $0xdf0] sm:$0xff]
      %v626 = vld [vmem:[%s171 + $0xdf8] sm:$0xff]
      %v627 = vld [vmem:[%s171 + $0xe00] sm:$0xff]
      %v628 = vld [vmem:[%s171 + $0xe08] sm:$0xff]
      %v629 = vld [vmem:[%s171 + $0xe10] sm:$0xff]
      %v630 = vld [vmem:[%s171 + $0xe18] sm:$0xff]
      %v631 = vld [vmem:[%s171 + $0xe20] sm:$0xff]
      %v632 = vld [vmem:[%s171 + $0xe28] sm:$0xff]
      %v633 = vld [vmem:[%s171 + $0xe30] sm:$0xff]
      %v634 = vld [vmem:[%s171 + $0xe38] sm:$0xff]
      %v635 = vld [vmem:[%s171 + $0xe40] sm:$0xff]
      %v636 = vld [vmem:[%s171 + $0xe48] sm:$0xff]
      %v637 = vld [vmem:[%s171 + $0xe50] sm:$0xff]
      %v638 = vld [vmem:[%s171 + $0xe58] sm:$0xff]
      %v639 = vld [vmem:[%s171 + $0xe60] sm:$0xff]
      %v640 = vld [vmem:[%s171 + $0xe68] sm:$0xff]
      %v641 = vld [vmem:[%s171 + $0xe70] sm:$0xff]
      %v642 = vld [vmem:[%s171 + $0xe78] sm:$0xff]
      %v643 = vld [vmem:[%s171 + $0xe80] sm:$0xff]
      %v644 = vld [vmem:[%s171 + $0xe88] sm:$0xff]
      %v645 = vld [vmem:[%s171 + $0xe90] sm:$0xff]
      %v646 = vld [vmem:[%s171 + $0xe98] sm:$0xff]
      %v647 = vld [vmem:[%s171 + $0xea0] sm:$0xff]
      %v648 = vld [vmem:[%s171 + $0xea8] sm:$0xff]
      %v649 = vld [vmem:[%s171 + $0xeb0] sm:$0xff]
      %v650 = vld [vmem:[%s171 + $0xeb8] sm:$0xff]
      %v651 = vld [vmem:[%s171 + $0xec0] sm:$0xff]
      %v652 = vld [vmem:[%s171 + $0xec8] sm:$0xff]
      %v653 = vld [vmem:[%s171 + $0xed0] sm:$0xff]
      %v654 = vld [vmem:[%s171 + $0xed8] sm:$0xff]
      %v655 = vld [vmem:[%s171 + $0xee0] sm:$0xff]
      %v656 = vld [vmem:[%s171 + $0xee8] sm:$0xff]
      %v657 = vld [vmem:[%s171 + $0xef0] sm:$0xff]
      %v658 = vld [vmem:[%s171 + $0xef8] sm:$0xff]
      %v659 = vld [vmem:[%s171 + $0xf00] sm:$0xff]
      %v660 = vld [vmem:[%s171 + $0xf08] sm:$0xff]
      %v661 = vld [vmem:[%s171 + $0xf10] sm:$0xff]
      %v662 = vld [vmem:[%s171 + $0xf18] sm:$0xff]
      %v663 = vld [vmem:[%s171 + $0xf20] sm:$0xff]
      %v664 = vld [vmem:[%s171 + $0xf28] sm:$0xff]
      %v665 = vld [vmem:[%s171 + $0xf30] sm:$0xff]
      %v666 = vld [vmem:[%s171 + $0xf38] sm:$0xff]
      %v667 = vld [vmem:[%s171 + $0xf40] sm:$0xff]
      %v668 = vld [vmem:[%s171 + $0xf48] sm:$0xff]
      %v669 = vld [vmem:[%s171 + $0xf50] sm:$0xff]
      %v670 = vld [vmem:[%s171 + $0xf58] sm:$0xff]
      %v671 = vld [vmem:[%s171 + $0xf60] sm:$0xff]
      %v672 = vld [vmem:[%s171 + $0xf68] sm:$0xff]
      %v673 = vld [vmem:[%s171 + $0xf70] sm:$0xff]
      %v674 = vld [vmem:[%s171 + $0xf78] sm:$0xff]
      %v675 = vld [vmem:[%s171 + $0xf80] sm:$0xff]
      %v676 = vld [vmem:[%s171 + $0xf88] sm:$0xff]
      %v677 = vld [vmem:[%s171 + $0xf90] sm:$0xff]
      %v678 = vld [vmem:[%s171 + $0xf98] sm:$0xff]
      %v679 = vld [vmem:[%s171 + $0xfa0] sm:$0xff]
      %v680 = vld [vmem:[%s171 + $0xfa8] sm:$0xff]
      %v681 = vld [vmem:[%s171 + $0xfb0] sm:$0xff]
      %v682 = vld [vmem:[%s171 + $0xfb8] sm:$0xff]
      %v683 = vld [vmem:[%s171 + $0xfc0] sm:$0xff]
      %v684 = vld [vmem:[%s171 + $0xfc8] sm:$0xff]
      %v685 = vld [vmem:[%s171 + $0xfd0] sm:$0xff]
      %v686 = vld [vmem:[%s171 + $0xfd8] sm:$0xff]
      %v687 = vld [vmem:[%s171 + $0xfe0] sm:$0xff]
      %v688 = vld [vmem:[%s171 + $0xfe8] sm:$0xff]
      %v689 = vld [vmem:[%s171 + $0xff0] sm:$0xff]
      %v690 = vld [vmem:[%s171 + $0xff8] sm:$0xff]
      %v691 = vld [vmem:[%s171 + $0x1000] sm:$0xff]
      %v692 = vld [vmem:[%s171 + $0x1008] sm:$0xff]
      %v693 = vld [vmem:[%s171 + $0x1010] sm:$0xff]
      %v694 = vld [vmem:[%s171 + $0x1018] sm:$0xff]
      %v695 = vld [vmem:[%s171 + $0x1020] sm:$0xff]
      %v696 = vld [vmem:[%s171 + $0x1028] sm:$0xff]
      %v697 = vld [vmem:[%s171 + $0x1030] sm:$0xff]
      %v698 = vld [vmem:[%s171 + $0x1038] sm:$0xff]
      %v699 = vld [vmem:[%s171 + $0x1040] sm:$0xff]
      %v700 = vld [vmem:[%s171 + $0x1048] sm:$0xff]
      %v701 = vld [vmem:[%s171 + $0x1050] sm:$0xff]
      %v702 = vld [vmem:[%s171 + $0x1058] sm:$0xff]
      %v703 = vld [vmem:[%s171 + $0x1060] sm:$0xff]
      %v704 = vld [vmem:[%s171 + $0x1068] sm:$0xff]
      %v705 = vld [vmem:[%s171 + $0x1070] sm:$0xff]
      %v706 = vld [vmem:[%s171 + $0x1078] sm:$0xff]
      %v707 = vld [vmem:[%s171 + $0x1080] sm:$0xff]
      %v708 = vld [vmem:[%s171 + $0x1088] sm:$0xff]
      %v709 = vld [vmem:[%s171 + $0x1090] sm:$0xff]
      %v710 = vld [vmem:[%s171 + $0x1098] sm:$0xff]
      %v711 = vld [vmem:[%s171 + $0x10a0] sm:$0xff]
      %v712 = vld [vmem:[%s171 + $0x10a8] sm:$0xff]
      %v713 = vld [vmem:[%s171 + $0x10b0] sm:$0xff]
      %v714 = vld [vmem:[%s171 + $0x10b8] sm:$0xff]
      %v715 = vld [vmem:[%s171 + $0x10c0] sm:$0xff]
      %v716 = vld [vmem:[%s171 + $0x10c8] sm:$0xff]
      %v717 = vld [vmem:[%s171 + $0x10d0] sm:$0xff]
      %v718 = vld [vmem:[%s171 + $0x10d8] sm:$0xff]
      %v719 = vld [vmem:[%s171 + $0x10e0] sm:$0xff]
      %v720 = vld [vmem:[%s171 + $0x10e8] sm:$0xff]
      %v721 = vld [vmem:[%s171 + $0x10f0] sm:$0xff]
      %v722 = vld [vmem:[%s171 + $0x10f8] sm:$0xff]
      %v723 = vld [vmem:[%s171 + $0x1100] sm:$0xff]
      %v724 = vld [vmem:[%s171 + $0x1108] sm:$0xff]
      %v725 = vld [vmem:[%s171 + $0x1110] sm:$0xff]
      %v726 = vld [vmem:[%s171 + $0x1118] sm:$0xff]
      %v727 = vld [vmem:[%s171 + $0x1120] sm:$0xff]
      %v728 = vld [vmem:[%s171 + $0x1128] sm:$0xff]
      %v729 = vld [vmem:[%s171 + $0x1130] sm:$0xff]
      %v730 = vld [vmem:[%s171 + $0x1138] sm:$0xff]
      %v731 = vld [vmem:[%s171 + $0x1140] sm:$0xff]
      %v732 = vld [vmem:[%s171 + $0x1148] sm:$0xff]
      %v733 = vld [vmem:[%s171 + $0x1150] sm:$0xff]
      %v734 = vld [vmem:[%s171 + $0x1158] sm:$0xff]
      %v735 = vld [vmem:[%s171 + $0x1160] sm:$0xff]
      %v736 = vld [vmem:[%s171 + $0x1168] sm:$0xff]
      %v737 = vld [vmem:[%s171 + $0x1170] sm:$0xff]
      %v738 = vld [vmem:[%s171 + $0x1178] sm:$0xff]
      %v739 = vld [vmem:[%s171 + $0x1180] sm:$0xff]
      %v740 = vld [vmem:[%s171 + $0x1188] sm:$0xff]
      %v741 = vld [vmem:[%s171 + $0x1190] sm:$0xff]
      %v742 = vld [vmem:[%s171 + $0x1198] sm:$0xff]
      %v743 = vld [vmem:[%s171 + $0x11a0] sm:$0xff]
      %v744 = vld [vmem:[%s171 + $0x11a8] sm:$0xff]
      %v745 = vld [vmem:[%s171 + $0x11b0] sm:$0xff]
      %v746 = vld [vmem:[%s171 + $0x11b8] sm:$0xff]
      %v747 = vld [vmem:[%s171 + $0x11c0] sm:$0xff]
      %v748 = vld [vmem:[%s171 + $0x11c8] sm:$0xff]
      %v749 = vld [vmem:[%s171 + $0x11d0] sm:$0xff]
      %v750 = vld [vmem:[%s171 + $0x11d8] sm:$0xff]
      %v751 = vld [vmem:[%s171 + $0x11e0] sm:$0xff]
      %v752 = vld [vmem:[%s171 + $0x11e8] sm:$0xff]
      %v753 = vld [vmem:[%s171 + $0x11f0] sm:$0xff]
      %v754 = vld [vmem:[%s171 + $0x11f8] sm:$0xff]
      %v755 = vld [vmem:[%s171 + $0x1200] sm:$0xff]
      %v756 = vld [vmem:[%s171 + $0x1208] sm:$0xff]
      %v757 = vld [vmem:[%s171 + $0x1210] sm:$0xff]
      %v758 = vld [vmem:[%s171 + $0x1218] sm:$0xff]
      %v759 = vld [vmem:[%s171 + $0x1220] sm:$0xff]
      %v760 = vld [vmem:[%s171 + $0x1228] sm:$0xff]
      %v761 = vld [vmem:[%s171 + $0x1230] sm:$0xff]
      %v762 = vld [vmem:[%s171 + $0x1238] sm:$0xff]
      %v763 = vld [vmem:[%s171 + $0x1240] sm:$0xff]
      %v764 = vld [vmem:[%s171 + $0x1248] sm:$0xff]
      %v765 = vld [vmem:[%s171 + $0x1250] sm:$0xff]
      %v766 = vld [vmem:[%s171 + $0x1258] sm:$0xff]
      %v767 = vld [vmem:[%s171 + $0x1260] sm:$0xff]
      %v768 = vld [vmem:[%s171 + $0x1268] sm:$0xff]
      %v769 = vld [vmem:[%s171 + $0x1270] sm:$0xff]
      %v770 = vld [vmem:[%s171 + $0x1278] sm:$0xff]
      %v771 = vld [vmem:[%s171 + $0x1280] sm:$0xff]
      %v772 = vld [vmem:[%s171 + $0x1288] sm:$0xff]
      %v773 = vld [vmem:[%s171 + $0x1290] sm:$0xff]
      %v774 = vld [vmem:[%s171 + $0x1298] sm:$0xff]
      %v775 = vld [vmem:[%s171 + $0x12a0] sm:$0xff]
      %v776 = vld [vmem:[%s171 + $0x12a8] sm:$0xff]
      %v777 = vld [vmem:[%s171 + $0x12b0] sm:$0xff]
      %v778 = vld [vmem:[%s171 + $0x12b8] sm:$0xff]
      %v779 = vld [vmem:[%s171 + $0x12c0] sm:$0xff]
      %v780 = vld [vmem:[%s171 + $0x12c8] sm:$0xff]
      %v781 = vld [vmem:[%s171 + $0x12d0] sm:$0xff]
      %v782 = vld [vmem:[%s171 + $0x12d8] sm:$0xff]
      %v783 = vld [vmem:[%s171 + $0x12e0] sm:$0xff]
      %v784 = vld [vmem:[%s171 + $0x12e8] sm:$0xff]
      %v785 = vld [vmem:[%s171 + $0x12f0] sm:$0xff]
      %v786 = vld [vmem:[%s171 + $0x12f8] sm:$0xff]
      %v787 = vld [vmem:[%s171 + $0x1300] sm:$0xff]
      %v788 = vld [vmem:[%s171 + $0x1308] sm:$0xff]
      %v789 = vld [vmem:[%s171 + $0x1310] sm:$0xff]
      %v790 = vld [vmem:[%s171 + $0x1318] sm:$0xff]
      %v791 = vld [vmem:[%s171 + $0x1320] sm:$0xff]
      %v792 = vld [vmem:[%s171 + $0x1328] sm:$0xff]
      %v793 = vld [vmem:[%s171 + $0x1330] sm:$0xff]
      %v794 = vld [vmem:[%s171 + $0x1338] sm:$0xff]
      %v795 = vld [vmem:[%s171 + $0x1340] sm:$0xff]
      %v796 = vld [vmem:[%s171 + $0x1348] sm:$0xff]
      %v797 = vld [vmem:[%s171 + $0x1350] sm:$0xff]
      %v798 = vld [vmem:[%s171 + $0x1358] sm:$0xff]
      %v799 = vld [vmem:[%s171 + $0x1360] sm:$0xff]
      %v800 = vld [vmem:[%s171 + $0x1368] sm:$0xff]
      %v801 = vld [vmem:[%s171 + $0x1370] sm:$0xff]
      %v802 = vld [vmem:[%s171 + $0x1378] sm:$0xff]
      %v803 = vld [vmem:[%s171 + $0x1380] sm:$0xff]
      %v804 = vld [vmem:[%s171 + $0x1388] sm:$0xff]
      %v805 = vld [vmem:[%s171 + $0x1390] sm:$0xff]
      %v806 = vld [vmem:[%s171 + $0x1398] sm:$0xff]
      %v807 = vld [vmem:[%s171 + $0x13a0] sm:$0xff]
      %v808 = vld [vmem:[%s171 + $0x13a8] sm:$0xff]
      %v809 = vld [vmem:[%s171 + $0x13b0] sm:$0xff]
      %v810 = vld [vmem:[%s171 + $0x13b8] sm:$0xff]
      %v811 = vld [vmem:[%s171 + $0x13c0] sm:$0xff]
      %v812 = vld [vmem:[%s171 + $0x13c8] sm:$0xff]
      %v813 = vld [vmem:[%s171 + $0x13d0] sm:$0xff]
      %v814 = vld [vmem:[%s171 + $0x13d8] sm:$0xff]
      %v815 = vld [vmem:[%s171 + $0x13e0] sm:$0xff]
      %v816 = vld [vmem:[%s171 + $0x13e8] sm:$0xff]
      %v817 = vld [vmem:[%s171 + $0x13f0] sm:$0xff]
      %v818 = vld [vmem:[%s171 + $0x13f8] sm:$0xff]
      %v819 = vld [vmem:[%s171 + $0x1400] sm:$0xff]
      %v820 = vld [vmem:[%s171 + $0x1408] sm:$0xff]
      %v821 = vld [vmem:[%s171 + $0x1410] sm:$0xff]
      %v822 = vld [vmem:[%s171 + $0x1418] sm:$0xff]
      %v823 = vld [vmem:[%s171 + $0x1420] sm:$0xff]
      %v824 = vld [vmem:[%s171 + $0x1428] sm:$0xff]
      %v825 = vld [vmem:[%s171 + $0x1430] sm:$0xff]
      %v826 = vld [vmem:[%s171 + $0x1438] sm:$0xff]
      %v827 = vld [vmem:[%s171 + $0x1440] sm:$0xff]
      %v828 = vld [vmem:[%s171 + $0x1448] sm:$0xff]
      %v829 = vld [vmem:[%s171 + $0x1450] sm:$0xff]
      %v830 = vld [vmem:[%s171 + $0x1458] sm:$0xff]
      %v831 = vld [vmem:[%s171 + $0x1460] sm:$0xff]
      %v832 = vld [vmem:[%s171 + $0x1468] sm:$0xff]
      %v833 = vld [vmem:[%s171 + $0x1470] sm:$0xff]
      %v834 = vld [vmem:[%s171 + $0x1478] sm:$0xff]
      %v835 = vld [vmem:[%s171 + $0x1480] sm:$0xff]
      %v836 = vld [vmem:[%s171 + $0x1488] sm:$0xff]
      %v837 = vld [vmem:[%s171 + $0x1490] sm:$0xff]
      %v838 = vld [vmem:[%s171 + $0x1498] sm:$0xff]
      %v839 = vld [vmem:[%s171 + $0x14a0] sm:$0xff]
      %v840 = vld [vmem:[%s171 + $0x14a8] sm:$0xff]
      %v841 = vld [vmem:[%s171 + $0x14b0] sm:$0xff]
      %v842 = vld [vmem:[%s171 + $0x14b8] sm:$0xff]
      %v843 = vld [vmem:[%s171 + $0x14c0] sm:$0xff]
      %v844 = vld [vmem:[%s171 + $0x14c8] sm:$0xff]
      %v845 = vld [vmem:[%s171 + $0x14d0] sm:$0xff]
      %v846 = vld [vmem:[%s171 + $0x14d8] sm:$0xff]
      %v847 = vld [vmem:[%s171 + $0x14e0] sm:$0xff]
      %v848 = vld [vmem:[%s171 + $0x14e8] sm:$0xff]
      %v849 = vld [vmem:[%s171 + $0x14f0] sm:$0xff]
      %v850 = vld [vmem:[%s171 + $0x14f8] sm:$0xff]
      %v851 = vld [vmem:[%s171 + $0x1500] sm:$0xff]
      %v852 = vld [vmem:[%s171 + $0x1508] sm:$0xff]
      %v853 = vld [vmem:[%s171 + $0x1510] sm:$0xff]
      %v854 = vld [vmem:[%s171 + $0x1518] sm:$0xff]
      %v855 = vld [vmem:[%s171 + $0x1520] sm:$0xff]
      %v856 = vld [vmem:[%s171 + $0x1528] sm:$0xff]
      %v857 = vld [vmem:[%s171 + $0x1530] sm:$0xff]
      %v858 = vld [vmem:[%s171 + $0x1538] sm:$0xff]
      %v859 = vld [vmem:[%s171 + $0x1540] sm:$0xff]
      %v860 = vld [vmem:[%s171 + $0x1548] sm:$0xff]
      %v861 = vld [vmem:[%s171 + $0x1550] sm:$0xff]
      %v862 = vld [vmem:[%s171 + $0x1558] sm:$0xff]
      %v863 = vld [vmem:[%s171 + $0x1560] sm:$0xff]
      %v864 = vld [vmem:[%s171 + $0x1568] sm:$0xff]
      %v865 = vld [vmem:[%s171 + $0x1570] sm:$0xff]
      %v866 = vld [vmem:[%s171 + $0x1578] sm:$0xff]
      %v867 = vld [vmem:[%s171 + $0x1580] sm:$0xff]
      %v868 = vld [vmem:[%s171 + $0x1588] sm:$0xff]
      %v869 = vld [vmem:[%s171 + $0x1590] sm:$0xff]
      %v870 = vld [vmem:[%s171 + $0x1598] sm:$0xff]
      %v871 = vld [vmem:[%s171 + $0x15a0] sm:$0xff]
      %v872 = vld [vmem:[%s171 + $0x15a8] sm:$0xff]
      %v873 = vld [vmem:[%s171 + $0x15b0] sm:$0xff]
      %v874 = vld [vmem:[%s171 + $0x15b8] sm:$0xff]
      %v875 = vld [vmem:[%s171 + $0x15c0] sm:$0xff]
      %v876 = vld [vmem:[%s171 + $0x15c8] sm:$0xff]
      %v877 = vld [vmem:[%s171 + $0x15d0] sm:$0xff]
      %v878 = vld [vmem:[%s171 + $0x15d8] sm:$0xff]
      %v879 = vld [vmem:[%s171 + $0x15e0] sm:$0xff]
      %v880 = vld [vmem:[%s171 + $0x15e8] sm:$0xff]
      %v881 = vld [vmem:[%s171 + $0x15f0] sm:$0xff]
      %v882 = vld [vmem:[%s171 + $0x15f8] sm:$0xff]
      %v883 = vld [vmem:[%s171 + $0x1600] sm:$0xff]
      %v884 = vld [vmem:[%s171 + $0x1608] sm:$0xff]
      %v885 = vld [vmem:[%s171 + $0x1610] sm:$0xff]
      %v886 = vld [vmem:[%s171 + $0x1618] sm:$0xff]
      %v887 = vld [vmem:[%s171 + $0x1620] sm:$0xff]
      %v888 = vld [vmem:[%s171 + $0x1628] sm:$0xff]
      %v889 = vld [vmem:[%s171 + $0x1630] sm:$0xff]
      %v890 = vld [vmem:[%s171 + $0x1638] sm:$0xff]
      %v891 = vld [vmem:[%s171 + $0x1640] sm:$0xff]
      %v892 = vld [vmem:[%s171 + $0x1648] sm:$0xff]
      %v893 = vld [vmem:[%s171 + $0x1650] sm:$0xff]
      %v894 = vld [vmem:[%s171 + $0x1658] sm:$0xff]
      %v895 = vld [vmem:[%s171 + $0x1660] sm:$0xff]
      %v896 = vld [vmem:[%s171 + $0x1668] sm:$0xff]
      %v897 = vld [vmem:[%s171 + $0x1670] sm:$0xff]
      %v898 = vld [vmem:[%s171 + $0x1678] sm:$0xff]
      %v899 = vld [vmem:[%s171 + $0x1680] sm:$0xff]
      %v900 = vld [vmem:[%s171 + $0x1688] sm:$0xff]
      %v901 = vld [vmem:[%s171 + $0x1690] sm:$0xff]
      %v902 = vld [vmem:[%s171 + $0x1698] sm:$0xff]
      %v903 = vld [vmem:[%s171 + $0x16a0] sm:$0xff]
      %v904 = vld [vmem:[%s171 + $0x16a8] sm:$0xff]
      %v905 = vld [vmem:[%s171 + $0x16b0] sm:$0xff]
      %v906 = vld [vmem:[%s171 + $0x16b8] sm:$0xff]
      %v907 = vld [vmem:[%s171 + $0x16c0] sm:$0xff]
      %v908 = vld [vmem:[%s171 + $0x16c8] sm:$0xff]
      %v909 = vld [vmem:[%s171 + $0x16d0] sm:$0xff]
      %v910 = vld [vmem:[%s171 + $0x16d8] sm:$0xff]
      %v911 = vld [vmem:[%s171 + $0x16e0] sm:$0xff]
      %v912 = vld [vmem:[%s171 + $0x16e8] sm:$0xff]
      %v913 = vld [vmem:[%s171 + $0x16f0] sm:$0xff]
      %v914 = vld [vmem:[%s171 + $0x16f8] sm:$0xff]
      %v915 = vld [vmem:[%s171 + $0x1700] sm:$0xff]
      %v916 = vld [vmem:[%s171 + $0x1708] sm:$0xff]
      %v917 = vld [vmem:[%s171 + $0x1710] sm:$0xff]
      %v918 = vld [vmem:[%s171 + $0x1718] sm:$0xff]
      %v919 = vld [vmem:[%s171 + $0x1720] sm:$0xff]
      %v920 = vld [vmem:[%s171 + $0x1728] sm:$0xff]
      %v921 = vld [vmem:[%s171 + $0x1730] sm:$0xff]
      %v922 = vld [vmem:[%s171 + $0x1738] sm:$0xff]
      %v923 = vld [vmem:[%s171 + $0x1740] sm:$0xff]
      %v924 = vld [vmem:[%s171 + $0x1748] sm:$0xff]
      %v925 = vld [vmem:[%s171 + $0x1750] sm:$0xff]
      %v926 = vld [vmem:[%s171 + $0x1758] sm:$0xff]
      %v927 = vld [vmem:[%s171 + $0x1760] sm:$0xff]
      %v928 = vld [vmem:[%s171 + $0x1768] sm:$0xff]
      %v929 = vld [vmem:[%s171 + $0x1770] sm:$0xff]
      %v930 = vld [vmem:[%s171 + $0x1778] sm:$0xff]
      %v931 = vld [vmem:[%s171 + $0x1780] sm:$0xff]
      %v932 = vld [vmem:[%s171 + $0x1788] sm:$0xff]
      %v933 = vld [vmem:[%s171 + $0x1790] sm:$0xff]
      %v934 = vld [vmem:[%s171 + $0x1798] sm:$0xff]
      %v935 = vld [vmem:[%s171 + $0x17a0] sm:$0xff]
      %v936 = vld [vmem:[%s171 + $0x17a8] sm:$0xff]
      %v937 = vld [vmem:[%s171 + $0x17b0] sm:$0xff]
      %v938 = vld [vmem:[%s171 + $0x17b8] sm:$0xff]
      %v939 = vld [vmem:[%s171 + $0x17c0] sm:$0xff]
      %v940 = vld [vmem:[%s171 + $0x17c8] sm:$0xff]
      %v941 = vld [vmem:[%s171 + $0x17d0] sm:$0xff]
      %v942 = vld [vmem:[%s171 + $0x17d8] sm:$0xff]
      %v943 = vld [vmem:[%s171 + $0x17e0] sm:$0xff]
      %v944 = vld [vmem:[%s171 + $0x17e8] sm:$0xff]
      %v945 = vld [vmem:[%s171 + $0x17f0] sm:$0xff]
      %v946 = vld [vmem:[%s171 + $0x17f8] sm:$0xff]
      %v947 = vld [vmem:[%s171 + $0x1800] sm:$0xff]
      %v948 = vld [vmem:[%s171 + $0x1808] sm:$0xff]
      %v949 = vld [vmem:[%s171 + $0x1810] sm:$0xff]
      %v950 = vld [vmem:[%s171 + $0x1818] sm:$0xff]
      %v951 = vld [vmem:[%s171 + $0x1820] sm:$0xff]
      %v952 = vld [vmem:[%s171 + $0x1828] sm:$0xff]
      %v953 = vld [vmem:[%s171 + $0x1830] sm:$0xff]
      %v954 = vld [vmem:[%s171 + $0x1838] sm:$0xff]
      %v955 = vld [vmem:[%s171 + $0x1840] sm:$0xff]
      %v956 = vld [vmem:[%s171 + $0x1848] sm:$0xff]
      %v957 = vld [vmem:[%s171 + $0x1850] sm:$0xff]
      %v958 = vld [vmem:[%s171 + $0x1858] sm:$0xff]
      %v959 = vld [vmem:[%s171 + $0x1860] sm:$0xff]
      %v960 = vld [vmem:[%s171 + $0x1868] sm:$0xff]
      %v961 = vld [vmem:[%s171 + $0x1870] sm:$0xff]
      %v962 = vld [vmem:[%s171 + $0x1878] sm:$0xff]
      %v963 = vld [vmem:[%s1] sm:$0xff]
      %v965 = vperm.slane %v963, 0
      %v966 = vperm.slane %v963, 1
      %v967 = vperm.slane %v963, 2
      %v968 = vperm.slane %v963, 3
      %v969 = vperm.slane %v963, 4
      %v970 = vperm.slane %v963, 5
      %v971 = vperm.slane %v963, 6
      %v972 = vperm.slane %v963, 7
      %v981 = vmul.f32 %v179, %v965
      %v982 = vmul.f32 %v180, %v966
      %v983 = vmul.f32 %v181, %v967
      %v984 = vmul.f32 %v182, %v968
      %v985 = vmul.f32 %v183, %v969
      %v986 = vmul.f32 %v184, %v970
      %v987 = vmul.f32 %v185, %v971
      %v988 = vmul.f32 %v186, %v972
      %v989 = vmul.f32 %v187, %v965
      %v990 = vmul.f32 %v188, %v966
      %v991 = vmul.f32 %v189, %v967
      %v992 = vmul.f32 %v190, %v968
      %v993 = vmul.f32 %v191, %v969
      %v994 = vmul.f32 %v192, %v970
      %v995 = vmul.f32 %v193, %v971
      %v996 = vmul.f32 %v194, %v972
      %v997 = vmul.f32 %v195, %v965
      %v998 = vmul.f32 %v196, %v966
      %v999 = vmul.f32 %v197, %v967
      %v1000 = vmul.f32 %v198, %v968
      %v1001 = vmul.f32 %v199, %v969
      %v1002 = vmul.f32 %v200, %v970
      %v1003 = vmul.f32 %v201, %v971
      %v1004 = vmul.f32 %v202, %v972
      %v1005 = vmul.f32 %v203, %v965
      %v1006 = vmul.f32 %v204, %v966
      %v1007 = vmul.f32 %v205, %v967
      %v1008 = vmul.f32 %v206, %v968
      %v1009 = vmul.f32 %v207, %v969
      %v1010 = vmul.f32 %v208, %v970
      %v1011 = vmul.f32 %v209, %v971
      %v1012 = vmul.f32 %v210, %v972
      %v1013 = vmul.f32 %v211, %v965
      %v1014 = vmul.f32 %v212, %v966
      %v1015 = vmul.f32 %v213, %v967
      %v1016 = vmul.f32 %v214, %v968
      %v1017 = vmul.f32 %v215, %v969
      %v1018 = vmul.f32 %v216, %v970
      %v1019 = vmul.f32 %v217, %v971
      %v1020 = vmul.f32 %v218, %v972
      %v1021 = vmul.f32 %v219, %v965
      %v1022 = vmul.f32 %v220, %v966
      %v1023 = vmul.f32 %v221, %v967
      %v1024 = vmul.f32 %v222, %v968
      %v1025 = vmul.f32 %v223, %v969
      %v1026 = vmul.f32 %v224, %v970
      %v1027 = vmul.f32 %v225, %v971
      %v1028 = vmul.f32 %v226, %v972
      %v1029 = vmul.f32 %v227, %v965
      %v1030 = vmul.f32 %v228, %v966
      %v1031 = vmul.f32 %v229, %v967
      %v1032 = vmul.f32 %v230, %v968
      %v1033 = vmul.f32 %v231, %v969
      %v1034 = vmul.f32 %v232, %v970
      %v1035 = vmul.f32 %v233, %v971
      %v1036 = vmul.f32 %v234, %v972
      %v1037 = vmul.f32 %v235, %v965
      %v1038 = vmul.f32 %v236, %v966
      %v1039 = vmul.f32 %v237, %v967
      %v1040 = vmul.f32 %v238, %v968
      %v1041 = vmul.f32 %v239, %v969
      %v1042 = vmul.f32 %v240, %v970
      %v1043 = vmul.f32 %v241, %v971
      %v1044 = vmul.f32 %v242, %v972
      %v1045 = vmul.f32 %v243, %v965
      %v1046 = vmul.f32 %v244, %v966
      %v1047 = vmul.f32 %v245, %v967
      %v1048 = vmul.f32 %v246, %v968
      %v1049 = vmul.f32 %v247, %v969
      %v1050 = vmul.f32 %v248, %v970
      %v1051 = vmul.f32 %v249, %v971
      %v1052 = vmul.f32 %v250, %v972
      %v1053 = vmul.f32 %v251, %v965
      %v1054 = vmul.f32 %v252, %v966
      %v1055 = vmul.f32 %v253, %v967
      %v1056 = vmul.f32 %v254, %v968
      %v1057 = vmul.f32 %v255, %v969
      %v1058 = vmul.f32 %v256, %v970
      %v1059 = vmul.f32 %v257, %v971
      %v1060 = vmul.f32 %v258, %v972
      %v1061 = vmul.f32 %v259, %v965
      %v1062 = vmul.f32 %v260, %v966
      %v1063 = vmul.f32 %v261, %v967
      %v1064 = vmul.f32 %v262, %v968
      %v1065 = vmul.f32 %v263, %v969
      %v1066 = vmul.f32 %v264, %v970
      %v1067 = vmul.f32 %v265, %v971
      %v1068 = vmul.f32 %v266, %v972
      %v1069 = vmul.f32 %v267, %v965
      %v1070 = vmul.f32 %v268, %v966
      %v1071 = vmul.f32 %v269, %v967
      %v1072 = vmul.f32 %v270, %v968
      %v1073 = vmul.f32 %v271, %v969
      %v1074 = vmul.f32 %v272, %v970
      %v1075 = vmul.f32 %v273, %v971
      %v1076 = vmul.f32 %v274, %v972
      %v1077 = vmul.f32 %v275, %v965
      %v1078 = vmul.f32 %v276, %v966
      %v1079 = vmul.f32 %v277, %v967
      %v1080 = vmul.f32 %v278, %v968
      %v1081 = vmul.f32 %v279, %v969
      %v1082 = vmul.f32 %v280, %v970
      %v1083 = vmul.f32 %v281, %v971
      %v1084 = vmul.f32 %v282, %v972
      %v1085 = vmul.f32 %v283, %v965
      %v1086 = vmul.f32 %v284, %v966
      %v1087 = vmul.f32 %v285, %v967
      %v1088 = vmul.f32 %v286, %v968
      %v1089 = vmul.f32 %v287, %v969
      %v1090 = vmul.f32 %v288, %v970
      %v1091 = vmul.f32 %v289, %v971
      %v1092 = vmul.f32 %v290, %v972
      %v1093 = vmul.f32 %v291, %v965
      %v1094 = vmul.f32 %v292, %v966
      %v1095 = vmul.f32 %v293, %v967
      %v1096 = vmul.f32 %v294, %v968
      %v1097 = vmul.f32 %v295, %v969
      %v1098 = vmul.f32 %v296, %v970
      %v1099 = vmul.f32 %v297, %v971
      %v1100 = vmul.f32 %v298, %v972
      %v1101 = vmul.f32 %v299, %v965
      %v1102 = vmul.f32 %v300, %v966
      %v1103 = vmul.f32 %v301, %v967
      %v1104 = vmul.f32 %v302, %v968
      %v1105 = vmul.f32 %v303, %v969
      %v1106 = vmul.f32 %v304, %v970
      %v1107 = vmul.f32 %v305, %v971
      %v1108 = vmul.f32 %v306, %v972
      %v1109 = vmul.f32 %v307, %v965
      %v1110 = vmul.f32 %v308, %v966
      %v1111 = vmul.f32 %v309, %v967
      %v1112 = vmul.f32 %v310, %v968
      %v1113 = vmul.f32 %v311, %v969
      %v1114 = vmul.f32 %v312, %v970
      %v1115 = vmul.f32 %v313, %v971
      %v1116 = vmul.f32 %v314, %v972
      %v1117 = vmul.f32 %v315, %v965
      %v1118 = vmul.f32 %v316, %v966
      %v1119 = vmul.f32 %v317, %v967
      %v1120 = vmul.f32 %v318, %v968
      %v1121 = vmul.f32 %v319, %v969
      %v1122 = vmul.f32 %v320, %v970
      %v1123 = vmul.f32 %v321, %v971
      %v1124 = vmul.f32 %v322, %v972
      %v1125 = vmul.f32 %v323, %v965
      %v1126 = vmul.f32 %v324, %v966
      %v1127 = vmul.f32 %v325, %v967
      %v1128 = vmul.f32 %v326, %v968
      %v1129 = vmul.f32 %v327, %v969
      %v1130 = vmul.f32 %v328, %v970
      %v1131 = vmul.f32 %v329, %v971
      %v1132 = vmul.f32 %v330, %v972
      %v1133 = vmul.f32 %v331, %v965
      %v1134 = vmul.f32 %v332, %v966
      %v1135 = vmul.f32 %v333, %v967
      %v1136 = vmul.f32 %v334, %v968
      %v1137 = vmul.f32 %v335, %v969
      %v1138 = vmul.f32 %v336, %v970
      %v1139 = vmul.f32 %v337, %v971
      %v1140 = vmul.f32 %v338, %v972
      %v1141 = vmul.f32 %v339, %v965
      %v1142 = vmul.f32 %v340, %v966
      %v1143 = vmul.f32 %v341, %v967
      %v1144 = vmul.f32 %v342, %v968
      %v1145 = vmul.f32 %v343, %v969
      %v1146 = vmul.f32 %v344, %v970
      %v1147 = vmul.f32 %v345, %v971
      %v1148 = vmul.f32 %v346, %v972
      %v1149 = vmul.f32 %v347, %v965
      %v1150 = vmul.f32 %v348, %v966
      %v1151 = vmul.f32 %v349, %v967
      %v1152 = vmul.f32 %v350, %v968
      %v1153 = vmul.f32 %v351, %v969
      %v1154 = vmul.f32 %v352, %v970
      %v1155 = vmul.f32 %v353, %v971
      %v1156 = vmul.f32 %v354, %v972
      %v1157 = vmul.f32 %v355, %v965
      %v1158 = vmul.f32 %v356, %v966
      %v1159 = vmul.f32 %v357, %v967
      %v1160 = vmul.f32 %v358, %v968
      %v1161 = vmul.f32 %v359, %v969
      %v1162 = vmul.f32 %v360, %v970
      %v1163 = vmul.f32 %v361, %v971
      %v1164 = vmul.f32 %v362, %v972
      %v1165 = vmul.f32 %v363, %v965
      %v1166 = vmul.f32 %v364, %v966
      %v1167 = vmul.f32 %v365, %v967
      %v1168 = vmul.f32 %v366, %v968
      %v1169 = vmul.f32 %v367, %v969
      %v1170 = vmul.f32 %v368, %v970
      %v1171 = vmul.f32 %v369, %v971
      %v1172 = vmul.f32 %v370, %v972
      %v1173 = vmul.f32 %v371, %v965
      %v1174 = vmul.f32 %v372, %v966
      %v1175 = vmul.f32 %v373, %v967
      %v1176 = vmul.f32 %v374, %v968
      %v1177 = vmul.f32 %v375, %v969
      %v1178 = vmul.f32 %v376, %v970
      %v1179 = vmul.f32 %v377, %v971
      %v1180 = vmul.f32 %v378, %v972
      %v1181 = vmul.f32 %v379, %v965
      %v1182 = vmul.f32 %v380, %v966
      %v1183 = vmul.f32 %v381, %v967
      %v1184 = vmul.f32 %v382, %v968
      %v1185 = vmul.f32 %v383, %v969
      %v1186 = vmul.f32 %v384, %v970
      %v1187 = vmul.f32 %v385, %v971
      %v1188 = vmul.f32 %v386, %v972
      %v1189 = vmul.f32 %v387, %v965
      %v1190 = vmul.f32 %v388, %v966
      %v1191 = vmul.f32 %v389, %v967
      %v1192 = vmul.f32 %v390, %v968
      %v1193 = vmul.f32 %v391, %v969
      %v1194 = vmul.f32 %v392, %v970
      %v1195 = vmul.f32 %v393, %v971
      %v1196 = vmul.f32 %v394, %v972
      %v1197 = vmul.f32 %v395, %v965
      %v1198 = vmul.f32 %v396, %v966
      %v1199 = vmul.f32 %v397, %v967
      %v1200 = vmul.f32 %v398, %v968
      %v1201 = vmul.f32 %v399, %v969
      %v1202 = vmul.f32 %v400, %v970
      %v1203 = vmul.f32 %v401, %v971
      %v1204 = vmul.f32 %v402, %v972
      %v1205 = vmul.f32 %v403, %v965
      %v1206 = vmul.f32 %v404, %v966
      %v1207 = vmul.f32 %v405, %v967
      %v1208 = vmul.f32 %v406, %v968
      %v1209 = vmul.f32 %v407, %v969
      %v1210 = vmul.f32 %v408, %v970
      %v1211 = vmul.f32 %v409, %v971
      %v1212 = vmul.f32 %v410, %v972
      %v1213 = vmul.f32 %v411, %v965
      %v1214 = vmul.f32 %v412, %v966
      %v1215 = vmul.f32 %v413, %v967
      %v1216 = vmul.f32 %v414, %v968
      %v1217 = vmul.f32 %v415, %v969
      %v1218 = vmul.f32 %v416, %v970
      %v1219 = vmul.f32 %v417, %v971
      %v1220 = vmul.f32 %v418, %v972
      %v1221 = vmul.f32 %v419, %v965
      %v1222 = vmul.f32 %v420, %v966
      %v1223 = vmul.f32 %v421, %v967
      %v1224 = vmul.f32 %v422, %v968
      %v1225 = vmul.f32 %v423, %v969
      %v1226 = vmul.f32 %v424, %v970
      %v1227 = vmul.f32 %v425, %v971
      %v1228 = vmul.f32 %v426, %v972
      %v1229 = vmul.f32 %v427, %v965
      %v1230 = vmul.f32 %v428, %v966
      %v1231 = vmul.f32 %v429, %v967
      %v1232 = vmul.f32 %v430, %v968
      %v1233 = vmul.f32 %v431, %v969
      %v1234 = vmul.f32 %v432, %v970
      %v1235 = vmul.f32 %v433, %v971
      %v1236 = vmul.f32 %v434, %v972
      %v1237 = vmul.f32 %v435, %v965
      %v1238 = vmul.f32 %v436, %v966
      %v1239 = vmul.f32 %v437, %v967
      %v1240 = vmul.f32 %v438, %v968
      %v1241 = vmul.f32 %v439, %v969
      %v1242 = vmul.f32 %v440, %v970
      %v1243 = vmul.f32 %v441, %v971
      %v1244 = vmul.f32 %v442, %v972
      %v1245 = vmul.f32 %v443, %v965
      %v1246 = vmul.f32 %v444, %v966
      %v1247 = vmul.f32 %v445, %v967
      %v1248 = vmul.f32 %v446, %v968
      %v1249 = vmul.f32 %v447, %v969
      %v1250 = vmul.f32 %v448, %v970
      %v1251 = vmul.f32 %v449, %v971
      %v1252 = vmul.f32 %v450, %v972
      %v1253 = vmul.f32 %v451, %v965
      %v1254 = vmul.f32 %v452, %v966
      %v1255 = vmul.f32 %v453, %v967
      %v1256 = vmul.f32 %v454, %v968
      %v1257 = vmul.f32 %v455, %v969
      %v1258 = vmul.f32 %v456, %v970
      %v1259 = vmul.f32 %v457, %v971
      %v1260 = vmul.f32 %v458, %v972
      %v1261 = vmul.f32 %v459, %v965
      %v1262 = vmul.f32 %v460, %v966
      %v1263 = vmul.f32 %v461, %v967
      %v1264 = vmul.f32 %v462, %v968
      %v1265 = vmul.f32 %v463, %v969
      %v1266 = vmul.f32 %v464, %v970
      %v1267 = vmul.f32 %v465, %v971
      %v1268 = vmul.f32 %v466, %v972
      %v1269 = vmul.f32 %v467, %v965
      %v1270 = vmul.f32 %v468, %v966
      %v1271 = vmul.f32 %v469, %v967
      %v1272 = vmul.f32 %v470, %v968
      %v1273 = vmul.f32 %v471, %v969
      %v1274 = vmul.f32 %v472, %v970
      %v1275 = vmul.f32 %v473, %v971
      %v1276 = vmul.f32 %v474, %v972
      %v1277 = vmul.f32 %v475, %v965
      %v1278 = vmul.f32 %v476, %v966
      %v1279 = vmul.f32 %v477, %v967
      %v1280 = vmul.f32 %v478, %v968
      %v1281 = vmul.f32 %v479, %v969
      %v1282 = vmul.f32 %v480, %v970
      %v1283 = vmul.f32 %v481, %v971
      %v1284 = vmul.f32 %v482, %v972
      %v1285 = vmul.f32 %v483, %v965
      %v1286 = vmul.f32 %v484, %v966
      %v1287 = vmul.f32 %v485, %v967
      %v1288 = vmul.f32 %v486, %v968
      %v1289 = vmul.f32 %v487, %v969
      %v1290 = vmul.f32 %v488, %v970
      %v1291 = vmul.f32 %v489, %v971
      %v1292 = vmul.f32 %v490, %v972
      %v1293 = vmul.f32 %v491, %v965
      %v1294 = vmul.f32 %v492, %v966
      %v1295 = vmul.f32 %v493, %v967
      %v1296 = vmul.f32 %v494, %v968
      %v1297 = vmul.f32 %v495, %v969
      %v1298 = vmul.f32 %v496, %v970
      %v1299 = vmul.f32 %v497, %v971
      %v1300 = vmul.f32 %v498, %v972
      %v1301 = vmul.f32 %v499, %v965
      %v1302 = vmul.f32 %v500, %v966
      %v1303 = vmul.f32 %v501, %v967
      %v1304 = vmul.f32 %v502, %v968
      %v1305 = vmul.f32 %v503, %v969
      %v1306 = vmul.f32 %v504, %v970
      %v1307 = vmul.f32 %v505, %v971
      %v1308 = vmul.f32 %v506, %v972
      %v1309 = vmul.f32 %v507, %v965
      %v1310 = vmul.f32 %v508, %v966
      %v1311 = vmul.f32 %v509, %v967
      %v1312 = vmul.f32 %v510, %v968
      %v1313 = vmul.f32 %v511, %v969
      %v1314 = vmul.f32 %v512, %v970
      %v1315 = vmul.f32 %v513, %v971
      %v1316 = vmul.f32 %v514, %v972
      %v1317 = vmul.f32 %v515, %v965
      %v1318 = vmul.f32 %v516, %v966
      %v1319 = vmul.f32 %v517, %v967
      %v1320 = vmul.f32 %v518, %v968
      %v1321 = vmul.f32 %v519, %v969
      %v1322 = vmul.f32 %v520, %v970
      %v1323 = vmul.f32 %v521, %v971
      %v1324 = vmul.f32 %v522, %v972
      %v1325 = vmul.f32 %v523, %v965
      %v1326 = vmul.f32 %v524, %v966
      %v1327 = vmul.f32 %v525, %v967
      %v1328 = vmul.f32 %v526, %v968
      %v1329 = vmul.f32 %v527, %v969
      %v1330 = vmul.f32 %v528, %v970
      %v1331 = vmul.f32 %v529, %v971
      %v1332 = vmul.f32 %v530, %v972
      %v1333 = vmul.f32 %v531, %v965
      %v1334 = vmul.f32 %v532, %v966
      %v1335 = vmul.f32 %v533, %v967
      %v1336 = vmul.f32 %v534, %v968
      %v1337 = vmul.f32 %v535, %v969
      %v1338 = vmul.f32 %v536, %v970
      %v1339 = vmul.f32 %v537, %v971
      %v1340 = vmul.f32 %v538, %v972
      %v1341 = vmul.f32 %v539, %v965
      %v1342 = vmul.f32 %v540, %v966
      %v1343 = vmul.f32 %v541, %v967
      %v1344 = vmul.f32 %v542, %v968
      %v1345 = vmul.f32 %v543, %v969
      %v1346 = vmul.f32 %v544, %v970
      %v1347 = vmul.f32 %v545, %v971
      %v1348 = vmul.f32 %v546, %v972
      %v1349 = vmul.f32 %v547, %v965
      %v1350 = vmul.f32 %v548, %v966
      %v1351 = vmul.f32 %v549, %v967
      %v1352 = vmul.f32 %v550, %v968
      %v1353 = vmul.f32 %v551, %v969
      %v1354 = vmul.f32 %v552, %v970
      %v1355 = vmul.f32 %v553, %v971
      %v1356 = vmul.f32 %v554, %v972
      %v1357 = vmul.f32 %v555, %v965
      %v1358 = vmul.f32 %v556, %v966
      %v1359 = vmul.f32 %v557, %v967
      %v1360 = vmul.f32 %v558, %v968
      %v1361 = vmul.f32 %v559, %v969
      %v1362 = vmul.f32 %v560, %v970
      %v1363 = vmul.f32 %v561, %v971
      %v1364 = vmul.f32 %v562, %v972
      %v1365 = vmul.f32 %v563, %v965
      %v1366 = vmul.f32 %v564, %v966
      %v1367 = vmul.f32 %v565, %v967
      %v1368 = vmul.f32 %v566, %v968
      %v1369 = vmul.f32 %v567, %v969
      %v1370 = vmul.f32 %v568, %v970
      %v1371 = vmul.f32 %v569, %v971
      %v1372 = vmul.f32 %v570, %v972
      %v1373 = vmul.f32 %v571, %v965
      %v1374 = vmul.f32 %v572, %v966
      %v1375 = vmul.f32 %v573, %v967
      %v1376 = vmul.f32 %v574, %v968
      %v1377 = vmul.f32 %v575, %v969
      %v1378 = vmul.f32 %v576, %v970
      %v1379 = vmul.f32 %v577, %v971
      %v1380 = vmul.f32 %v578, %v972
      %v1381 = vmul.f32 %v579, %v965
      %v1382 = vmul.f32 %v580, %v966
      %v1383 = vmul.f32 %v581, %v967
      %v1384 = vmul.f32 %v582, %v968
      %v1385 = vmul.f32 %v583, %v969
      %v1386 = vmul.f32 %v584, %v970
      %v1387 = vmul.f32 %v585, %v971
      %v1388 = vmul.f32 %v586, %v972
      %v1389 = vmul.f32 %v587, %v965
      %v1390 = vmul.f32 %v588, %v966
      %v1391 = vmul.f32 %v589, %v967
      %v1392 = vmul.f32 %v590, %v968
      %v1393 = vmul.f32 %v591, %v969
      %v1394 = vmul.f32 %v592, %v970
      %v1395 = vmul.f32 %v593, %v971
      %v1396 = vmul.f32 %v594, %v972
      %v1397 = vmul.f32 %v595, %v965
      %v1398 = vmul.f32 %v596, %v966
      %v1399 = vmul.f32 %v597, %v967
      %v1400 = vmul.f32 %v598, %v968
      %v1401 = vmul.f32 %v599, %v969
      %v1402 = vmul.f32 %v600, %v970
      %v1403 = vmul.f32 %v601, %v971
      %v1404 = vmul.f32 %v602, %v972
      %v1405 = vmul.f32 %v603, %v965
      %v1406 = vmul.f32 %v604, %v966
      %v1407 = vmul.f32 %v605, %v967
      %v1408 = vmul.f32 %v606, %v968
      %v1409 = vmul.f32 %v607, %v969
      %v1410 = vmul.f32 %v608, %v970
      %v1411 = vmul.f32 %v609, %v971
      %v1412 = vmul.f32 %v610, %v972
      %v1413 = vmul.f32 %v611, %v965
      %v1414 = vmul.f32 %v612, %v966
      %v1415 = vmul.f32 %v613, %v967
      %v1416 = vmul.f32 %v614, %v968
      %v1417 = vmul.f32 %v615, %v969
      %v1418 = vmul.f32 %v616, %v970
      %v1419 = vmul.f32 %v617, %v971
      %v1420 = vmul.f32 %v618, %v972
      %v1421 = vmul.f32 %v619, %v965
      %v1422 = vmul.f32 %v620, %v966
      %v1423 = vmul.f32 %v621, %v967
      %v1424 = vmul.f32 %v622, %v968
      %v1425 = vmul.f32 %v623, %v969
      %v1426 = vmul.f32 %v624, %v970
      %v1427 = vmul.f32 %v625, %v971
      %v1428 = vmul.f32 %v626, %v972
      %v1429 = vmul.f32 %v627, %v965
      %v1430 = vmul.f32 %v628, %v966
      %v1431 = vmul.f32 %v629, %v967
      %v1432 = vmul.f32 %v630, %v968
      %v1433 = vmul.f32 %v631, %v969
      %v1434 = vmul.f32 %v632, %v970
      %v1435 = vmul.f32 %v633, %v971
      %v1436 = vmul.f32 %v634, %v972
      %v1437 = vmul.f32 %v635, %v965
      %v1438 = vmul.f32 %v636, %v966
      %v1439 = vmul.f32 %v637, %v967
      %v1440 = vmul.f32 %v638, %v968
      %v1441 = vmul.f32 %v639, %v969
      %v1442 = vmul.f32 %v640, %v970
      %v1443 = vmul.f32 %v641, %v971
      %v1444 = vmul.f32 %v642, %v972
      %v1445 = vmul.f32 %v643, %v965
      %v1446 = vmul.f32 %v644, %v966
      %v1447 = vmul.f32 %v645, %v967
      %v1448 = vmul.f32 %v646, %v968
      %v1449 = vmul.f32 %v647, %v969
      %v1450 = vmul.f32 %v648, %v970
      %v1451 = vmul.f32 %v649, %v971
      %v1452 = vmul.f32 %v650, %v972
      %v1453 = vmul.f32 %v651, %v965
      %v1454 = vmul.f32 %v652, %v966
      %v1455 = vmul.f32 %v653, %v967
      %v1456 = vmul.f32 %v654, %v968
      %v1457 = vmul.f32 %v655, %v969
      %v1458 = vmul.f32 %v656, %v970
      %v1459 = vmul.f32 %v657, %v971
      %v1460 = vmul.f32 %v658, %v972
      %v1461 = vmul.f32 %v659, %v965
      %v1462 = vmul.f32 %v660, %v966
      %v1463 = vmul.f32 %v661, %v967
      %v1464 = vmul.f32 %v662, %v968
      %v1465 = vmul.f32 %v663, %v969
      %v1466 = vmul.f32 %v664, %v970
      %v1467 = vmul.f32 %v665, %v971
      %v1468 = vmul.f32 %v666, %v972
      %v1469 = vmul.f32 %v667, %v965
      %v1470 = vmul.f32 %v668, %v966
      %v1471 = vmul.f32 %v669, %v967
      %v1472 = vmul.f32 %v670, %v968
      %v1473 = vmul.f32 %v671, %v969
      %v1474 = vmul.f32 %v672, %v970
      %v1475 = vmul.f32 %v673, %v971
      %v1476 = vmul.f32 %v674, %v972
      %v1477 = vmul.f32 %v675, %v965
      %v1478 = vmul.f32 %v676, %v966
      %v1479 = vmul.f32 %v677, %v967
      %v1480 = vmul.f32 %v678, %v968
      %v1481 = vmul.f32 %v679, %v969
      %v1482 = vmul.f32 %v680, %v970
      %v1483 = vmul.f32 %v681, %v971
      %v1484 = vmul.f32 %v682, %v972
      %v1485 = vmul.f32 %v683, %v965
      %v1486 = vmul.f32 %v684, %v966
      %v1487 = vmul.f32 %v685, %v967
      %v1488 = vmul.f32 %v686, %v968
      %v1489 = vmul.f32 %v687, %v969
      %v1490 = vmul.f32 %v688, %v970
      %v1491 = vmul.f32 %v689, %v971
      %v1492 = vmul.f32 %v690, %v972
      %v1493 = vmul.f32 %v691, %v965
      %v1494 = vmul.f32 %v692, %v966
      %v1495 = vmul.f32 %v693, %v967
      %v1496 = vmul.f32 %v694, %v968
      %v1497 = vmul.f32 %v695, %v969
      %v1498 = vmul.f32 %v696, %v970
      %v1499 = vmul.f32 %v697, %v971
      %v1500 = vmul.f32 %v698, %v972
      %v1501 = vmul.f32 %v699, %v965
      %v1502 = vmul.f32 %v700, %v966
      %v1503 = vmul.f32 %v701, %v967
      %v1504 = vmul.f32 %v702, %v968
      %v1505 = vmul.f32 %v703, %v969
      %v1506 = vmul.f32 %v704, %v970
      %v1507 = vmul.f32 %v705, %v971
      %v1508 = vmul.f32 %v706, %v972
      %v1509 = vmul.f32 %v707, %v965
      %v1510 = vmul.f32 %v708, %v966
      %v1511 = vmul.f32 %v709, %v967
      %v1512 = vmul.f32 %v710, %v968
      %v1513 = vmul.f32 %v711, %v969
      %v1514 = vmul.f32 %v712, %v970
      %v1515 = vmul.f32 %v713, %v971
      %v1516 = vmul.f32 %v714, %v972
      %v1517 = vmul.f32 %v715, %v965
      %v1518 = vmul.f32 %v716, %v966
      %v1519 = vmul.f32 %v717, %v967
      %v1520 = vmul.f32 %v718, %v968
      %v1521 = vmul.f32 %v719, %v969
      %v1522 = vmul.f32 %v720, %v970
      %v1523 = vmul.f32 %v721, %v971
      %v1524 = vmul.f32 %v722, %v972
      %v1525 = vmul.f32 %v723, %v965
      %v1526 = vmul.f32 %v724, %v966
      %v1527 = vmul.f32 %v725, %v967
      %v1528 = vmul.f32 %v726, %v968
      %v1529 = vmul.f32 %v727, %v969
      %v1530 = vmul.f32 %v728, %v970
      %v1531 = vmul.f32 %v729, %v971
      %v1532 = vmul.f32 %v730, %v972
      %v1533 = vmul.f32 %v731, %v965
      %v1534 = vmul.f32 %v732, %v966
      %v1535 = vmul.f32 %v733, %v967
      %v1536 = vmul.f32 %v734, %v968
      %v1537 = vmul.f32 %v735, %v969
      %v1538 = vmul.f32 %v736, %v970
      %v1539 = vmul.f32 %v737, %v971
      %v1540 = vmul.f32 %v738, %v972
      %v1541 = vmul.f32 %v739, %v965
      %v1542 = vmul.f32 %v740, %v966
      %v1543 = vmul.f32 %v741, %v967
      %v1544 = vmul.f32 %v742, %v968
      %v1545 = vmul.f32 %v743, %v969
      %v1546 = vmul.f32 %v744, %v970
      %v1547 = vmul.f32 %v745, %v971
      %v1548 = vmul.f32 %v746, %v972
      %v1549 = vmul.f32 %v747, %v965
      %v1550 = vmul.f32 %v748, %v966
      %v1551 = vmul.f32 %v749, %v967
      %v1552 = vmul.f32 %v750, %v968
      %v1553 = vmul.f32 %v751, %v969
      %v1554 = vmul.f32 %v752, %v970
      %v1555 = vmul.f32 %v753, %v971
      %v1556 = vmul.f32 %v754, %v972
      %v1557 = vmul.f32 %v755, %v965
      %v1558 = vmul.f32 %v756, %v966
      %v1559 = vmul.f32 %v757, %v967
      %v1560 = vmul.f32 %v758, %v968
      %v1561 = vmul.f32 %v759, %v969
      %v1562 = vmul.f32 %v760, %v970
      %v1563 = vmul.f32 %v761, %v971
      %v1564 = vmul.f32 %v762, %v972
      %v1565 = vmul.f32 %v763, %v965
      %v1566 = vmul.f32 %v764, %v966
      %v1567 = vmul.f32 %v765, %v967
      %v1568 = vmul.f32 %v766, %v968
      %v1569 = vmul.f32 %v767, %v969
      %v1570 = vmul.f32 %v768, %v970
      %v1571 = vmul.f32 %v769, %v971
      %v1572 = vmul.f32 %v770, %v972
      %v1573 = vmul.f32 %v771, %v965
      %v1574 = vmul.f32 %v772, %v966
      %v1575 = vmul.f32 %v773, %v967
      %v1576 = vmul.f32 %v774, %v968
      %v1577 = vmul.f32 %v775, %v969
      %v1578 = vmul.f32 %v776, %v970
      %v1579 = vmul.f32 %v777, %v971
      %v1580 = vmul.f32 %v778, %v972
      %v1581 = vmul.f32 %v779, %v965
      %v1582 = vmul.f32 %v780, %v966
      %v1583 = vmul.f32 %v781, %v967
      %v1584 = vmul.f32 %v782, %v968
      %v1585 = vmul.f32 %v783, %v969
      %v1586 = vmul.f32 %v784, %v970
      %v1587 = vmul.f32 %v785, %v971
      %v1588 = vmul.f32 %v786, %v972
      %v1589 = vmul.f32 %v787, %v965
      %v1590 = vmul.f32 %v788, %v966
      %v1591 = vmul.f32 %v789, %v967
      %v1592 = vmul.f32 %v790, %v968
      %v1593 = vmul.f32 %v791, %v969
      %v1594 = vmul.f32 %v792, %v970
      %v1595 = vmul.f32 %v793, %v971
      %v1596 = vmul.f32 %v794, %v972
      %v1597 = vmul.f32 %v795, %v965
      %v1598 = vmul.f32 %v796, %v966
      %v1599 = vmul.f32 %v797, %v967
      %v1600 = vmul.f32 %v798, %v968
      %v1601 = vmul.f32 %v799, %v969
      %v1602 = vmul.f32 %v800, %v970
      %v1603 = vmul.f32 %v801, %v971
      %v1604 = vmul.f32 %v802, %v972
      %v1605 = vmul.f32 %v803, %v965
      %v1606 = vmul.f32 %v804, %v966
      %v1607 = vmul.f32 %v805, %v967
      %v1608 = vmul.f32 %v806, %v968
      %v1609 = vmul.f32 %v807, %v969
      %v1610 = vmul.f32 %v808, %v970
      %v1611 = vmul.f32 %v809, %v971
      %v1612 = vmul.f32 %v810, %v972
      %v1613 = vmul.f32 %v811, %v965
      %v1614 = vmul.f32 %v812, %v966
      %v1615 = vmul.f32 %v813, %v967
      %v1616 = vmul.f32 %v814, %v968
      %v1617 = vmul.f32 %v815, %v969
      %v1618 = vmul.f32 %v816, %v970
      %v1619 = vmul.f32 %v817, %v971
      %v1620 = vmul.f32 %v818, %v972
      %v1621 = vmul.f32 %v819, %v965
      %v1622 = vmul.f32 %v820, %v966
      %v1623 = vmul.f32 %v821, %v967
      %v1624 = vmul.f32 %v822, %v968
      %v1625 = vmul.f32 %v823, %v969
      %v1626 = vmul.f32 %v824, %v970
      %v1627 = vmul.f32 %v825, %v971
      %v1628 = vmul.f32 %v826, %v972
      %v1629 = vmul.f32 %v827, %v965
      %v1630 = vmul.f32 %v828, %v966
      %v1631 = vmul.f32 %v829, %v967
      %v1632 = vmul.f32 %v830, %v968
      %v1633 = vmul.f32 %v831, %v969
      %v1634 = vmul.f32 %v832, %v970
      %v1635 = vmul.f32 %v833, %v971
      %v1636 = vmul.f32 %v834, %v972
      %v1637 = vmul.f32 %v835, %v965
      %v1638 = vmul.f32 %v836, %v966
      %v1639 = vmul.f32 %v837, %v967
      %v1640 = vmul.f32 %v838, %v968
      %v1641 = vmul.f32 %v839, %v969
      %v1642 = vmul.f32 %v840, %v970
      %v1643 = vmul.f32 %v841, %v971
      %v1644 = vmul.f32 %v842, %v972
      %v1645 = vmul.f32 %v843, %v965
      %v1646 = vmul.f32 %v844, %v966
      %v1647 = vmul.f32 %v845, %v967
      %v1648 = vmul.f32 %v846, %v968
      %v1649 = vmul.f32 %v847, %v969
      %v1650 = vmul.f32 %v848, %v970
      %v1651 = vmul.f32 %v849, %v971
      %v1652 = vmul.f32 %v850, %v972
      %v1653 = vmul.f32 %v851, %v965
      %v1654 = vmul.f32 %v852, %v966
      %v1655 = vmul.f32 %v853, %v967
      %v1656 = vmul.f32 %v854, %v968
      %v1657 = vmul.f32 %v855, %v969
      %v1658 = vmul.f32 %v856, %v970
      %v1659 = vmul.f32 %v857, %v971
      %v1660 = vmul.f32 %v858, %v972
      %v1661 = vmul.f32 %v859, %v965
      %v1662 = vmul.f32 %v860, %v966
      %v1663 = vmul.f32 %v861, %v967
      %v1664 = vmul.f32 %v862, %v968
      %v1665 = vmul.f32 %v863, %v969
      %v1666 = vmul.f32 %v864, %v970
      %v1667 = vmul.f32 %v865, %v971
      %v1668 = vmul.f32 %v866, %v972
      %v1669 = vmul.f32 %v867, %v965
      %v1670 = vmul.f32 %v868, %v966
      %v1671 = vmul.f32 %v869, %v967
      %v1672 = vmul.f32 %v870, %v968
      %v1673 = vmul.f32 %v871, %v969
      %v1674 = vmul.f32 %v872, %v970
      %v1675 = vmul.f32 %v873, %v971
      %v1676 = vmul.f32 %v874, %v972
      %v1677 = vmul.f32 %v875, %v965
      %v1678 = vmul.f32 %v876, %v966
      %v1679 = vmul.f32 %v877, %v967
      %v1680 = vmul.f32 %v878, %v968
      %v1681 = vmul.f32 %v879, %v969
      %v1682 = vmul.f32 %v880, %v970
      %v1683 = vmul.f32 %v881, %v971
      %v1684 = vmul.f32 %v882, %v972
      %v1685 = vmul.f32 %v883, %v965
      %v1686 = vmul.f32 %v884, %v966
      %v1687 = vmul.f32 %v885, %v967
      %v1688 = vmul.f32 %v886, %v968
      %v1689 = vmul.f32 %v887, %v969
      %v1690 = vmul.f32 %v888, %v970
      %v1691 = vmul.f32 %v889, %v971
      %v1692 = vmul.f32 %v890, %v972
      %v1693 = vmul.f32 %v891, %v965
      %v1694 = vmul.f32 %v892, %v966
      %v1695 = vmul.f32 %v893, %v967
      %v1696 = vmul.f32 %v894, %v968
      %v1697 = vmul.f32 %v895, %v969
      %v1698 = vmul.f32 %v896, %v970
      %v1699 = vmul.f32 %v897, %v971
      %v1700 = vmul.f32 %v898, %v972
      %v1701 = vmul.f32 %v899, %v965
      %v1702 = vmul.f32 %v900, %v966
      %v1703 = vmul.f32 %v901, %v967
      %v1704 = vmul.f32 %v902, %v968
      %v1705 = vmul.f32 %v903, %v969
      %v1706 = vmul.f32 %v904, %v970
      %v1707 = vmul.f32 %v905, %v971
      %v1708 = vmul.f32 %v906, %v972
      %v1709 = vmul.f32 %v907, %v965
      %v1710 = vmul.f32 %v908, %v966
      %v1711 = vmul.f32 %v909, %v967
      %v1712 = vmul.f32 %v910, %v968
      %v1713 = vmul.f32 %v911, %v969
      %v1714 = vmul.f32 %v912, %v970
      %v1715 = vmul.f32 %v913, %v971
      %v1716 = vmul.f32 %v914, %v972
      %v1717 = vmul.f32 %v915, %v965
      %v1718 = vmul.f32 %v916, %v966
      %v1719 = vmul.f32 %v917, %v967
      %v1720 = vmul.f32 %v918, %v968
      %v1721 = vmul.f32 %v919, %v969
      %v1722 = vmul.f32 %v920, %v970
      %v1723 = vmul.f32 %v921, %v971
      %v1724 = vmul.f32 %v922, %v972
      %v1725 = vmul.f32 %v923, %v965
      %v1726 = vmul.f32 %v924, %v966
      %v1727 = vmul.f32 %v925, %v967
      %v1728 = vmul.f32 %v926, %v968
      %v1729 = vmul.f32 %v927, %v969
      %v1730 = vmul.f32 %v928, %v970
      %v1731 = vmul.f32 %v929, %v971
      %v1732 = vmul.f32 %v930, %v972
      %v1733 = vmul.f32 %v931, %v965
      %v1734 = vmul.f32 %v932, %v966
      %v1735 = vmul.f32 %v933, %v967
      %v1736 = vmul.f32 %v934, %v968
      %v1737 = vmul.f32 %v935, %v969
      %v1738 = vmul.f32 %v936, %v970
      %v1739 = vmul.f32 %v937, %v971
      %v1740 = vmul.f32 %v938, %v972
      %v1741 = vmul.f32 %v939, %v965
      %v1742 = vmul.f32 %v940, %v966
      %v1743 = vmul.f32 %v941, %v967
      %v1744 = vmul.f32 %v942, %v968
      %v1745 = vmul.f32 %v943, %v969
      %v1746 = vmul.f32 %v944, %v970
      %v1747 = vmul.f32 %v945, %v971
      %v1748 = vmul.f32 %v946, %v972
      %v1749 = vmul.f32 %v947, %v965
      %v1750 = vmul.f32 %v948, %v966
      %v1751 = vmul.f32 %v949, %v967
      %v1752 = vmul.f32 %v950, %v968
      %v1753 = vmul.f32 %v951, %v969
      %v1754 = vmul.f32 %v952, %v970
      %v1755 = vmul.f32 %v953, %v971
      %v1756 = vmul.f32 %v954, %v972
      %v1757 = vmul.f32 %v955, %v965
      %v1758 = vmul.f32 %v956, %v966
      %v1759 = vmul.f32 %v957, %v967
      %v1760 = vmul.f32 %v958, %v968
      %v1761 = vmul.f32 %v959, %v969
      %v1762 = vmul.f32 %v960, %v970
      %v1763 = vmul.f32 %v961, %v971
      %v1764 = vmul.f32 %v962, %v972
      %v1765 = vadd.f32 %v981, %v982
      %v1766 = vadd.f32 %v1765, %v983
      %v1767 = vadd.f32 %v1766, %v984
      %v1768 = vadd.f32 %v1767, %v985
      %v1769 = vadd.f32 %v1768, %v986
      %v1770 = vadd.f32 %v1769, %v987
      %v1771 = vadd.f32 %v1770, %v988
      %1772 = vadd.xlane.f32.xlu0 %v1771
      %v1773 = vpop.xlane.xlu0 %1772
      %v1774 = vadd.f32 %v989, %v990
      %v1775 = vadd.f32 %v1774, %v991
      %v1776 = vadd.f32 %v1775, %v992
      %v1777 = vadd.f32 %v1776, %v993
      %v1778 = vadd.f32 %v1777, %v994
      %v1779 = vadd.f32 %v1778, %v995
      %v1780 = vadd.f32 %v1779, %v996
      %1781 = vadd.xlane.f32.xlu0 %v1780
      %v1782 = vpop.xlane.xlu0 %1781
      %v1783 = vadd.f32 %v997, %v998
      %v1784 = vadd.f32 %v1783, %v999
      %v1785 = vadd.f32 %v1784, %v1000
      %v1786 = vadd.f32 %v1785, %v1001
      %v1787 = vadd.f32 %v1786, %v1002
      %v1788 = vadd.f32 %v1787, %v1003
      %v1789 = vadd.f32 %v1788, %v1004
      %1790 = vadd.xlane.f32.xlu0 %v1789
      %v1791 = vpop.xlane.xlu0 %1790
      %v1792 = vadd.f32 %v1005, %v1006
      %v1793 = vadd.f32 %v1792, %v1007
      %v1794 = vadd.f32 %v1793, %v1008
      %v1795 = vadd.f32 %v1794, %v1009
      %v1796 = vadd.f32 %v1795, %v1010
      %v1797 = vadd.f32 %v1796, %v1011
      %v1798 = vadd.f32 %v1797, %v1012
      %1799 = vadd.xlane.f32.xlu0 %v1798
      %v1800 = vpop.xlane.xlu0 %1799
      %v1801 = vadd.f32 %v1013, %v1014
      %v1802 = vadd.f32 %v1801, %v1015
      %v1803 = vadd.f32 %v1802, %v1016
      %v1804 = vadd.f32 %v1803, %v1017
      %v1805 = vadd.f32 %v1804, %v1018
      %v1806 = vadd.f32 %v1805, %v1019
      %v1807 = vadd.f32 %v1806, %v1020
      %1808 = vadd.xlane.f32.xlu0 %v1807
      %v1809 = vpop.xlane.xlu0 %1808
      %v1810 = vadd.f32 %v1021, %v1022
      %v1811 = vadd.f32 %v1810, %v1023
      %v1812 = vadd.f32 %v1811, %v1024
      %v1813 = vadd.f32 %v1812, %v1025
      %v1814 = vadd.f32 %v1813, %v1026
      %v1815 = vadd.f32 %v1814, %v1027
      %v1816 = vadd.f32 %v1815, %v1028
      %1817 = vadd.xlane.f32.xlu0 %v1816
      %v1818 = vpop.xlane.xlu0 %1817
      %v1819 = vadd.f32 %v1029, %v1030
      %v1820 = vadd.f32 %v1819, %v1031
      %v1821 = vadd.f32 %v1820, %v1032
      %v1822 = vadd.f32 %v1821, %v1033
      %v1823 = vadd.f32 %v1822, %v1034
      %v1824 = vadd.f32 %v1823, %v1035
      %v1825 = vadd.f32 %v1824, %v1036
      %1826 = vadd.xlane.f32.xlu0 %v1825
      %v1827 = vpop.xlane.xlu0 %1826
      %v1828 = vadd.f32 %v1037, %v1038
      %v1829 = vadd.f32 %v1828, %v1039
      %v1830 = vadd.f32 %v1829, %v1040
      %v1831 = vadd.f32 %v1830, %v1041
      %v1832 = vadd.f32 %v1831, %v1042
      %v1833 = vadd.f32 %v1832, %v1043
      %v1834 = vadd.f32 %v1833, %v1044
      %1835 = vadd.xlane.f32.xlu0 %v1834
      %v1836 = vpop.xlane.xlu0 %1835
      %v1837 = vadd.f32 %v1045, %v1046
      %v1838 = vadd.f32 %v1837, %v1047
      %v1839 = vadd.f32 %v1838, %v1048
      %v1840 = vadd.f32 %v1839, %v1049
      %v1841 = vadd.f32 %v1840, %v1050
      %v1842 = vadd.f32 %v1841, %v1051
      %v1843 = vadd.f32 %v1842, %v1052
      %1844 = vadd.xlane.f32.xlu0 %v1843
      %v1845 = vpop.xlane.xlu0 %1844
      %v1846 = vadd.f32 %v1053, %v1054
      %v1847 = vadd.f32 %v1846, %v1055
      %v1848 = vadd.f32 %v1847, %v1056
      %v1849 = vadd.f32 %v1848, %v1057
      %v1850 = vadd.f32 %v1849, %v1058
      %v1851 = vadd.f32 %v1850, %v1059
      %v1852 = vadd.f32 %v1851, %v1060
      %1853 = vadd.xlane.f32.xlu0 %v1852
      %v1854 = vpop.xlane.xlu0 %1853
      %v1855 = vadd.f32 %v1061, %v1062
      %v1856 = vadd.f32 %v1855, %v1063
      %v1857 = vadd.f32 %v1856, %v1064
      %v1858 = vadd.f32 %v1857, %v1065
      %v1859 = vadd.f32 %v1858, %v1066
      %v1860 = vadd.f32 %v1859, %v1067
      %v1861 = vadd.f32 %v1860, %v1068
      %1862 = vadd.xlane.f32.xlu0 %v1861
      %v1863 = vpop.xlane.xlu0 %1862
      %v1864 = vadd.f32 %v1069, %v1070
      %v1865 = vadd.f32 %v1864, %v1071
      %v1866 = vadd.f32 %v1865, %v1072
      %v1867 = vadd.f32 %v1866, %v1073
      %v1868 = vadd.f32 %v1867, %v1074
      %v1869 = vadd.f32 %v1868, %v1075
      %v1870 = vadd.f32 %v1869, %v1076
      %1871 = vadd.xlane.f32.xlu0 %v1870
      %v1872 = vpop.xlane.xlu0 %1871
      %v1873 = vadd.f32 %v1077, %v1078
      %v1874 = vadd.f32 %v1873, %v1079
      %v1875 = vadd.f32 %v1874, %v1080
      %v1876 = vadd.f32 %v1875, %v1081
      %v1877 = vadd.f32 %v1876, %v1082
      %v1878 = vadd.f32 %v1877, %v1083
      %v1879 = vadd.f32 %v1878, %v1084
      %1880 = vadd.xlane.f32.xlu0 %v1879
      %v1881 = vpop.xlane.xlu0 %1880
      %v1882 = vadd.f32 %v1085, %v1086
      %v1883 = vadd.f32 %v1882, %v1087
      %v1884 = vadd.f32 %v1883, %v1088
      %v1885 = vadd.f32 %v1884, %v1089
      %v1886 = vadd.f32 %v1885, %v1090
      %v1887 = vadd.f32 %v1886, %v1091
      %v1888 = vadd.f32 %v1887, %v1092
      %1889 = vadd.xlane.f32.xlu0 %v1888
      %v1890 = vpop.xlane.xlu0 %1889
      %v1891 = vadd.f32 %v1093, %v1094
      %v1892 = vadd.f32 %v1891, %v1095
      %v1893 = vadd.f32 %v1892, %v1096
      %v1894 = vadd.f32 %v1893, %v1097
      %v1895 = vadd.f32 %v1894, %v1098
      %v1896 = vadd.f32 %v1895, %v1099
      %v1897 = vadd.f32 %v1896, %v1100
      %1898 = vadd.xlane.f32.xlu0 %v1897
      %v1899 = vpop.xlane.xlu0 %1898
      %v1900 = vadd.f32 %v1101, %v1102
      %v1901 = vadd.f32 %v1900, %v1103
      %v1902 = vadd.f32 %v1901, %v1104
      %v1903 = vadd.f32 %v1902, %v1105
      %v1904 = vadd.f32 %v1903, %v1106
      %v1905 = vadd.f32 %v1904, %v1107
      %v1906 = vadd.f32 %v1905, %v1108
      %1907 = vadd.xlane.f32.xlu0 %v1906
      %v1908 = vpop.xlane.xlu0 %1907
      %v1909 = vadd.f32 %v1109, %v1110
      %v1910 = vadd.f32 %v1909, %v1111
      %v1911 = vadd.f32 %v1910, %v1112
      %v1912 = vadd.f32 %v1911, %v1113
      %v1913 = vadd.f32 %v1912, %v1114
      %v1914 = vadd.f32 %v1913, %v1115
      %v1915 = vadd.f32 %v1914, %v1116
      %1916 = vadd.xlane.f32.xlu0 %v1915
      %v1917 = vpop.xlane.xlu0 %1916
      %v1918 = vadd.f32 %v1117, %v1118
      %v1919 = vadd.f32 %v1918, %v1119
      %v1920 = vadd.f32 %v1919, %v1120
      %v1921 = vadd.f32 %v1920, %v1121
      %v1922 = vadd.f32 %v1921, %v1122
      %v1923 = vadd.f32 %v1922, %v1123
      %v1924 = vadd.f32 %v1923, %v1124
      %1925 = vadd.xlane.f32.xlu0 %v1924
      %v1926 = vpop.xlane.xlu0 %1925
      %v1927 = vadd.f32 %v1125, %v1126
      %v1928 = vadd.f32 %v1927, %v1127
      %v1929 = vadd.f32 %v1928, %v1128
      %v1930 = vadd.f32 %v1929, %v1129
      %v1931 = vadd.f32 %v1930, %v1130
      %v1932 = vadd.f32 %v1931, %v1131
      %v1933 = vadd.f32 %v1932, %v1132
      %1934 = vadd.xlane.f32.xlu0 %v1933
      %v1935 = vpop.xlane.xlu0 %1934
      %v1936 = vadd.f32 %v1133, %v1134
      %v1937 = vadd.f32 %v1936, %v1135
      %v1938 = vadd.f32 %v1937, %v1136
      %v1939 = vadd.f32 %v1938, %v1137
      %v1940 = vadd.f32 %v1939, %v1138
      %v1941 = vadd.f32 %v1940, %v1139
      %v1942 = vadd.f32 %v1941, %v1140
      %1943 = vadd.xlane.f32.xlu0 %v1942
      %v1944 = vpop.xlane.xlu0 %1943
      %v1945 = vadd.f32 %v1141, %v1142
      %v1946 = vadd.f32 %v1945, %v1143
      %v1947 = vadd.f32 %v1946, %v1144
      %v1948 = vadd.f32 %v1947, %v1145
      %v1949 = vadd.f32 %v1948, %v1146
      %v1950 = vadd.f32 %v1949, %v1147
      %v1951 = vadd.f32 %v1950, %v1148
      %1952 = vadd.xlane.f32.xlu0 %v1951
      %v1953 = vpop.xlane.xlu0 %1952
      %v1954 = vadd.f32 %v1149, %v1150
      %v1955 = vadd.f32 %v1954, %v1151
      %v1956 = vadd.f32 %v1955, %v1152
      %v1957 = vadd.f32 %v1956, %v1153
      %v1958 = vadd.f32 %v1957, %v1154
      %v1959 = vadd.f32 %v1958, %v1155
      %v1960 = vadd.f32 %v1959, %v1156
      %1961 = vadd.xlane.f32.xlu0 %v1960
      %v1962 = vpop.xlane.xlu0 %1961
      %v1963 = vadd.f32 %v1157, %v1158
      %v1964 = vadd.f32 %v1963, %v1159
      %v1965 = vadd.f32 %v1964, %v1160
      %v1966 = vadd.f32 %v1965, %v1161
      %v1967 = vadd.f32 %v1966, %v1162
      %v1968 = vadd.f32 %v1967, %v1163
      %v1969 = vadd.f32 %v1968, %v1164
      %1970 = vadd.xlane.f32.xlu0 %v1969
      %v1971 = vpop.xlane.xlu0 %1970
      %v1972 = vadd.f32 %v1165, %v1166
      %v1973 = vadd.f32 %v1972, %v1167
      %v1974 = vadd.f32 %v1973, %v1168
      %v1975 = vadd.f32 %v1974, %v1169
      %v1976 = vadd.f32 %v1975, %v1170
      %v1977 = vadd.f32 %v1976, %v1171
      %v1978 = vadd.f32 %v1977, %v1172
      %1979 = vadd.xlane.f32.xlu0 %v1978
      %v1980 = vpop.xlane.xlu0 %1979
      %v1981 = vadd.f32 %v1173, %v1174
      %v1982 = vadd.f32 %v1981, %v1175
      %v1983 = vadd.f32 %v1982, %v1176
      %v1984 = vadd.f32 %v1983, %v1177
      %v1985 = vadd.f32 %v1984, %v1178
      %v1986 = vadd.f32 %v1985, %v1179
      %v1987 = vadd.f32 %v1986, %v1180
      %1988 = vadd.xlane.f32.xlu0 %v1987
      %v1989 = vpop.xlane.xlu0 %1988
      %v1990 = vadd.f32 %v1181, %v1182
      %v1991 = vadd.f32 %v1990, %v1183
      %v1992 = vadd.f32 %v1991, %v1184
      %v1993 = vadd.f32 %v1992, %v1185
      %v1994 = vadd.f32 %v1993, %v1186
      %v1995 = vadd.f32 %v1994, %v1187
      %v1996 = vadd.f32 %v1995, %v1188
      %1997 = vadd.xlane.f32.xlu0 %v1996
      %v1998 = vpop.xlane.xlu0 %1997
      %v1999 = vadd.f32 %v1189, %v1190
      %v2000 = vadd.f32 %v1999, %v1191
      %v2001 = vadd.f32 %v2000, %v1192
      %v2002 = vadd.f32 %v2001, %v1193
      %v2003 = vadd.f32 %v2002, %v1194
      %v2004 = vadd.f32 %v2003, %v1195
      %v2005 = vadd.f32 %v2004, %v1196
      %2006 = vadd.xlane.f32.xlu0 %v2005
      %v2007 = vpop.xlane.xlu0 %2006
      %v2008 = vadd.f32 %v1197, %v1198
      %v2009 = vadd.f32 %v2008, %v1199
      %v2010 = vadd.f32 %v2009, %v1200
      %v2011 = vadd.f32 %v2010, %v1201
      %v2012 = vadd.f32 %v2011, %v1202
      %v2013 = vadd.f32 %v2012, %v1203
      %v2014 = vadd.f32 %v2013, %v1204
      %2015 = vadd.xlane.f32.xlu0 %v2014
      %v2016 = vpop.xlane.xlu0 %2015
      %v2017 = vadd.f32 %v1205, %v1206
      %v2018 = vadd.f32 %v2017, %v1207
      %v2019 = vadd.f32 %v2018, %v1208
      %v2020 = vadd.f32 %v2019, %v1209
      %v2021 = vadd.f32 %v2020, %v1210
      %v2022 = vadd.f32 %v2021, %v1211
      %v2023 = vadd.f32 %v2022, %v1212
      %2024 = vadd.xlane.f32.xlu0 %v2023
      %v2025 = vpop.xlane.xlu0 %2024
      %v2026 = vadd.f32 %v1213, %v1214
      %v2027 = vadd.f32 %v2026, %v1215
      %v2028 = vadd.f32 %v2027, %v1216
      %v2029 = vadd.f32 %v2028, %v1217
      %v2030 = vadd.f32 %v2029, %v1218
      %v2031 = vadd.f32 %v2030, %v1219
      %v2032 = vadd.f32 %v2031, %v1220
      %2033 = vadd.xlane.f32.xlu0 %v2032
      %v2034 = vpop.xlane.xlu0 %2033
      %v2035 = vadd.f32 %v1221, %v1222
      %v2036 = vadd.f32 %v2035, %v1223
      %v2037 = vadd.f32 %v2036, %v1224
      %v2038 = vadd.f32 %v2037, %v1225
      %v2039 = vadd.f32 %v2038, %v1226
      %v2040 = vadd.f32 %v2039, %v1227
      %v2041 = vadd.f32 %v2040, %v1228
      %2042 = vadd.xlane.f32.xlu0 %v2041
      %v2043 = vpop.xlane.xlu0 %2042
      %v2044 = vadd.f32 %v1229, %v1230
      %v2045 = vadd.f32 %v2044, %v1231
      %v2046 = vadd.f32 %v2045, %v1232
      %v2047 = vadd.f32 %v2046, %v1233
      %v2048 = vadd.f32 %v2047, %v1234
      %v2049 = vadd.f32 %v2048, %v1235
      %v2050 = vadd.f32 %v2049, %v1236
      %2051 = vadd.xlane.f32.xlu0 %v2050
      %v2052 = vpop.xlane.xlu0 %2051
      %v2053 = vadd.f32 %v1237, %v1238
      %v2054 = vadd.f32 %v2053, %v1239
      %v2055 = vadd.f32 %v2054, %v1240
      %v2056 = vadd.f32 %v2055, %v1241
      %v2057 = vadd.f32 %v2056, %v1242
      %v2058 = vadd.f32 %v2057, %v1243
      %v2059 = vadd.f32 %v2058, %v1244
      %2060 = vadd.xlane.f32.xlu0 %v2059
      %v2061 = vpop.xlane.xlu0 %2060
      %v2062 = vadd.f32 %v1245, %v1246
      %v2063 = vadd.f32 %v2062, %v1247
      %v2064 = vadd.f32 %v2063, %v1248
      %v2065 = vadd.f32 %v2064, %v1249
      %v2066 = vadd.f32 %v2065, %v1250
      %v2067 = vadd.f32 %v2066, %v1251
      %v2068 = vadd.f32 %v2067, %v1252
      %2069 = vadd.xlane.f32.xlu0 %v2068
      %v2070 = vpop.xlane.xlu0 %2069
      %v2071 = vadd.f32 %v1253, %v1254
      %v2072 = vadd.f32 %v2071, %v1255
      %v2073 = vadd.f32 %v2072, %v1256
      %v2074 = vadd.f32 %v2073, %v1257
      %v2075 = vadd.f32 %v2074, %v1258
      %v2076 = vadd.f32 %v2075, %v1259
      %v2077 = vadd.f32 %v2076, %v1260
      %2078 = vadd.xlane.f32.xlu0 %v2077
      %v2079 = vpop.xlane.xlu0 %2078
      %v2080 = vadd.f32 %v1261, %v1262
      %v2081 = vadd.f32 %v2080, %v1263
      %v2082 = vadd.f32 %v2081, %v1264
      %v2083 = vadd.f32 %v2082, %v1265
      %v2084 = vadd.f32 %v2083, %v1266
      %v2085 = vadd.f32 %v2084, %v1267
      %v2086 = vadd.f32 %v2085, %v1268
      %2087 = vadd.xlane.f32.xlu0 %v2086
      %v2088 = vpop.xlane.xlu0 %2087
      %v2089 = vadd.f32 %v1269, %v1270
      %v2090 = vadd.f32 %v2089, %v1271
      %v2091 = vadd.f32 %v2090, %v1272
      %v2092 = vadd.f32 %v2091, %v1273
      %v2093 = vadd.f32 %v2092, %v1274
      %v2094 = vadd.f32 %v2093, %v1275
      %v2095 = vadd.f32 %v2094, %v1276
      %2096 = vadd.xlane.f32.xlu0 %v2095
      %v2097 = vpop.xlane.xlu0 %2096
      %v2098 = vadd.f32 %v1277, %v1278
      %v2099 = vadd.f32 %v2098, %v1279
      %v2100 = vadd.f32 %v2099, %v1280
      %v2101 = vadd.f32 %v2100, %v1281
      %v2102 = vadd.f32 %v2101, %v1282
      %v2103 = vadd.f32 %v2102, %v1283
      %v2104 = vadd.f32 %v2103, %v1284
      %2105 = vadd.xlane.f32.xlu0 %v2104
      %v2106 = vpop.xlane.xlu0 %2105
      %v2107 = vadd.f32 %v1285, %v1286
      %v2108 = vadd.f32 %v2107, %v1287
      %v2109 = vadd.f32 %v2108, %v1288
      %v2110 = vadd.f32 %v2109, %v1289
      %v2111 = vadd.f32 %v2110, %v1290
      %v2112 = vadd.f32 %v2111, %v1291
      %v2113 = vadd.f32 %v2112, %v1292
      %2114 = vadd.xlane.f32.xlu0 %v2113
      %v2115 = vpop.xlane.xlu0 %2114
      %v2116 = vadd.f32 %v1293, %v1294
      %v2117 = vadd.f32 %v2116, %v1295
      %v2118 = vadd.f32 %v2117, %v1296
      %v2119 = vadd.f32 %v2118, %v1297
      %v2120 = vadd.f32 %v2119, %v1298
      %v2121 = vadd.f32 %v2120, %v1299
      %v2122 = vadd.f32 %v2121, %v1300
      %2123 = vadd.xlane.f32.xlu0 %v2122
      %v2124 = vpop.xlane.xlu0 %2123
      %v2125 = vadd.f32 %v1301, %v1302
      %v2126 = vadd.f32 %v2125, %v1303
      %v2127 = vadd.f32 %v2126, %v1304
      %v2128 = vadd.f32 %v2127, %v1305
      %v2129 = vadd.f32 %v2128, %v1306
      %v2130 = vadd.f32 %v2129, %v1307
      %v2131 = vadd.f32 %v2130, %v1308
      %2132 = vadd.xlane.f32.xlu0 %v2131
      %v2133 = vpop.xlane.xlu0 %2132
      %v2134 = vadd.f32 %v1309, %v1310
      %v2135 = vadd.f32 %v2134, %v1311
      %v2136 = vadd.f32 %v2135, %v1312
      %v2137 = vadd.f32 %v2136, %v1313
      %v2138 = vadd.f32 %v2137, %v1314
      %v2139 = vadd.f32 %v2138, %v1315
      %v2140 = vadd.f32 %v2139, %v1316
      %2141 = vadd.xlane.f32.xlu0 %v2140
      %v2142 = vpop.xlane.xlu0 %2141
      %v2143 = vadd.f32 %v1317, %v1318
      %v2144 = vadd.f32 %v2143, %v1319
      %v2145 = vadd.f32 %v2144, %v1320
      %v2146 = vadd.f32 %v2145, %v1321
      %v2147 = vadd.f32 %v2146, %v1322
      %v2148 = vadd.f32 %v2147, %v1323
      %v2149 = vadd.f32 %v2148, %v1324
      %2150 = vadd.xlane.f32.xlu0 %v2149
      %v2151 = vpop.xlane.xlu0 %2150
      %v2152 = vadd.f32 %v1325, %v1326
      %v2153 = vadd.f32 %v2152, %v1327
      %v2154 = vadd.f32 %v2153, %v1328
      %v2155 = vadd.f32 %v2154, %v1329
      %v2156 = vadd.f32 %v2155, %v1330
      %v2157 = vadd.f32 %v2156, %v1331
      %v2158 = vadd.f32 %v2157, %v1332
      %2159 = vadd.xlane.f32.xlu0 %v2158
      %v2160 = vpop.xlane.xlu0 %2159
      %v2161 = vadd.f32 %v1333, %v1334
      %v2162 = vadd.f32 %v2161, %v1335
      %v2163 = vadd.f32 %v2162, %v1336
      %v2164 = vadd.f32 %v2163, %v1337
      %v2165 = vadd.f32 %v2164, %v1338
      %v2166 = vadd.f32 %v2165, %v1339
      %v2167 = vadd.f32 %v2166, %v1340
      %2168 = vadd.xlane.f32.xlu0 %v2167
      %v2169 = vpop.xlane.xlu0 %2168
      %v2170 = vadd.f32 %v1341, %v1342
      %v2171 = vadd.f32 %v2170, %v1343
      %v2172 = vadd.f32 %v2171, %v1344
      %v2173 = vadd.f32 %v2172, %v1345
      %v2174 = vadd.f32 %v2173, %v1346
      %v2175 = vadd.f32 %v2174, %v1347
      %v2176 = vadd.f32 %v2175, %v1348
      %2177 = vadd.xlane.f32.xlu0 %v2176
      %v2178 = vpop.xlane.xlu0 %2177
      %v2179 = vadd.f32 %v1349, %v1350
      %v2180 = vadd.f32 %v2179, %v1351
      %v2181 = vadd.f32 %v2180, %v1352
      %v2182 = vadd.f32 %v2181, %v1353
      %v2183 = vadd.f32 %v2182, %v1354
      %v2184 = vadd.f32 %v2183, %v1355
      %v2185 = vadd.f32 %v2184, %v1356
      %2186 = vadd.xlane.f32.xlu0 %v2185
      %v2187 = vpop.xlane.xlu0 %2186
      %v2188 = vadd.f32 %v1357, %v1358
      %v2189 = vadd.f32 %v2188, %v1359
      %v2190 = vadd.f32 %v2189, %v1360
      %v2191 = vadd.f32 %v2190, %v1361
      %v2192 = vadd.f32 %v2191, %v1362
      %v2193 = vadd.f32 %v2192, %v1363
      %v2194 = vadd.f32 %v2193, %v1364
      %2195 = vadd.xlane.f32.xlu0 %v2194
      %v2196 = vpop.xlane.xlu0 %2195
      %v2197 = vadd.f32 %v1365, %v1366
      %v2198 = vadd.f32 %v2197, %v1367
      %v2199 = vadd.f32 %v2198, %v1368
      %v2200 = vadd.f32 %v2199, %v1369
      %v2201 = vadd.f32 %v2200, %v1370
      %v2202 = vadd.f32 %v2201, %v1371
      %v2203 = vadd.f32 %v2202, %v1372
      %2204 = vadd.xlane.f32.xlu0 %v2203
      %v2205 = vpop.xlane.xlu0 %2204
      %v2206 = vadd.f32 %v1373, %v1374
      %v2207 = vadd.f32 %v2206, %v1375
      %v2208 = vadd.f32 %v2207, %v1376
      %v2209 = vadd.f32 %v2208, %v1377
      %v2210 = vadd.f32 %v2209, %v1378
      %v2211 = vadd.f32 %v2210, %v1379
      %v2212 = vadd.f32 %v2211, %v1380
      %2213 = vadd.xlane.f32.xlu0 %v2212
      %v2214 = vpop.xlane.xlu0 %2213
      %v2215 = vadd.f32 %v1381, %v1382
      %v2216 = vadd.f32 %v2215, %v1383
      %v2217 = vadd.f32 %v2216, %v1384
      %v2218 = vadd.f32 %v2217, %v1385
      %v2219 = vadd.f32 %v2218, %v1386
      %v2220 = vadd.f32 %v2219, %v1387
      %v2221 = vadd.f32 %v2220, %v1388
      %2222 = vadd.xlane.f32.xlu0 %v2221
      %v2223 = vpop.xlane.xlu0 %2222
      %v2224 = vadd.f32 %v1389, %v1390
      %v2225 = vadd.f32 %v2224, %v1391
      %v2226 = vadd.f32 %v2225, %v1392
      %v2227 = vadd.f32 %v2226, %v1393
      %v2228 = vadd.f32 %v2227, %v1394
      %v2229 = vadd.f32 %v2228, %v1395
      %v2230 = vadd.f32 %v2229, %v1396
      %2231 = vadd.xlane.f32.xlu0 %v2230
      %v2232 = vpop.xlane.xlu0 %2231
      %v2233 = vadd.f32 %v1397, %v1398
      %v2234 = vadd.f32 %v2233, %v1399
      %v2235 = vadd.f32 %v2234, %v1400
      %v2236 = vadd.f32 %v2235, %v1401
      %v2237 = vadd.f32 %v2236, %v1402
      %v2238 = vadd.f32 %v2237, %v1403
      %v2239 = vadd.f32 %v2238, %v1404
      %2240 = vadd.xlane.f32.xlu0 %v2239
      %v2241 = vpop.xlane.xlu0 %2240
      %v2242 = vadd.f32 %v1405, %v1406
      %v2243 = vadd.f32 %v2242, %v1407
      %v2244 = vadd.f32 %v2243, %v1408
      %v2245 = vadd.f32 %v2244, %v1409
      %v2246 = vadd.f32 %v2245, %v1410
      %v2247 = vadd.f32 %v2246, %v1411
      %v2248 = vadd.f32 %v2247, %v1412
      %2249 = vadd.xlane.f32.xlu0 %v2248
      %v2250 = vpop.xlane.xlu0 %2249
      %v2251 = vadd.f32 %v1413, %v1414
      %v2252 = vadd.f32 %v2251, %v1415
      %v2253 = vadd.f32 %v2252, %v1416
      %v2254 = vadd.f32 %v2253, %v1417
      %v2255 = vadd.f32 %v2254, %v1418
      %v2256 = vadd.f32 %v2255, %v1419
      %v2257 = vadd.f32 %v2256, %v1420
      %2258 = vadd.xlane.f32.xlu0 %v2257
      %v2259 = vpop.xlane.xlu0 %2258
      %v2260 = vadd.f32 %v1421, %v1422
      %v2261 = vadd.f32 %v2260, %v1423
      %v2262 = vadd.f32 %v2261, %v1424
      %v2263 = vadd.f32 %v2262, %v1425
      %v2264 = vadd.f32 %v2263, %v1426
      %v2265 = vadd.f32 %v2264, %v1427
      %v2266 = vadd.f32 %v2265, %v1428
      %2267 = vadd.xlane.f32.xlu0 %v2266
      %v2268 = vpop.xlane.xlu0 %2267
      %v2269 = vadd.f32 %v1429, %v1430
      %v2270 = vadd.f32 %v2269, %v1431
      %v2271 = vadd.f32 %v2270, %v1432
      %v2272 = vadd.f32 %v2271, %v1433
      %v2273 = vadd.f32 %v2272, %v1434
      %v2274 = vadd.f32 %v2273, %v1435
      %v2275 = vadd.f32 %v2274, %v1436
      %2276 = vadd.xlane.f32.xlu0 %v2275
      %v2277 = vpop.xlane.xlu0 %2276
      %v2278 = vadd.f32 %v1437, %v1438
      %v2279 = vadd.f32 %v2278, %v1439
      %v2280 = vadd.f32 %v2279, %v1440
      %v2281 = vadd.f32 %v2280, %v1441
      %v2282 = vadd.f32 %v2281, %v1442
      %v2283 = vadd.f32 %v2282, %v1443
      %v2284 = vadd.f32 %v2283, %v1444
      %2285 = vadd.xlane.f32.xlu0 %v2284
      %v2286 = vpop.xlane.xlu0 %2285
      %v2287 = vadd.f32 %v1445, %v1446
      %v2288 = vadd.f32 %v2287, %v1447
      %v2289 = vadd.f32 %v2288, %v1448
      %v2290 = vadd.f32 %v2289, %v1449
      %v2291 = vadd.f32 %v2290, %v1450
      %v2292 = vadd.f32 %v2291, %v1451
      %v2293 = vadd.f32 %v2292, %v1452
      %2294 = vadd.xlane.f32.xlu0 %v2293
      %v2295 = vpop.xlane.xlu0 %2294
      %v2296 = vadd.f32 %v1453, %v1454
      %v2297 = vadd.f32 %v2296, %v1455
      %v2298 = vadd.f32 %v2297, %v1456
      %v2299 = vadd.f32 %v2298, %v1457
      %v2300 = vadd.f32 %v2299, %v1458
      %v2301 = vadd.f32 %v2300, %v1459
      %v2302 = vadd.f32 %v2301, %v1460
      %2303 = vadd.xlane.f32.xlu0 %v2302
      %v2304 = vpop.xlane.xlu0 %2303
      %v2305 = vadd.f32 %v1461, %v1462
      %v2306 = vadd.f32 %v2305, %v1463
      %v2307 = vadd.f32 %v2306, %v1464
      %v2308 = vadd.f32 %v2307, %v1465
      %v2309 = vadd.f32 %v2308, %v1466
      %v2310 = vadd.f32 %v2309, %v1467
      %v2311 = vadd.f32 %v2310, %v1468
      %2312 = vadd.xlane.f32.xlu0 %v2311
      %v2313 = vpop.xlane.xlu0 %2312
      %v2314 = vadd.f32 %v1469, %v1470
      %v2315 = vadd.f32 %v2314, %v1471
      %v2316 = vadd.f32 %v2315, %v1472
      %v2317 = vadd.f32 %v2316, %v1473
      %v2318 = vadd.f32 %v2317, %v1474
      %v2319 = vadd.f32 %v2318, %v1475
      %v2320 = vadd.f32 %v2319, %v1476
      %2321 = vadd.xlane.f32.xlu0 %v2320
      %v2322 = vpop.xlane.xlu0 %2321
      %v2323 = vadd.f32 %v1477, %v1478
      %v2324 = vadd.f32 %v2323, %v1479
      %v2325 = vadd.f32 %v2324, %v1480
      %v2326 = vadd.f32 %v2325, %v1481
      %v2327 = vadd.f32 %v2326, %v1482
      %v2328 = vadd.f32 %v2327, %v1483
      %v2329 = vadd.f32 %v2328, %v1484
      %2330 = vadd.xlane.f32.xlu0 %v2329
      %v2331 = vpop.xlane.xlu0 %2330
      %v2332 = vadd.f32 %v1485, %v1486
      %v2333 = vadd.f32 %v2332, %v1487
      %v2334 = vadd.f32 %v2333, %v1488
      %v2335 = vadd.f32 %v2334, %v1489
      %v2336 = vadd.f32 %v2335, %v1490
      %v2337 = vadd.f32 %v2336, %v1491
      %v2338 = vadd.f32 %v2337, %v1492
      %2339 = vadd.xlane.f32.xlu0 %v2338
      %v2340 = vpop.xlane.xlu0 %2339
      %v2341 = vadd.f32 %v1493, %v1494
      %v2342 = vadd.f32 %v2341, %v1495
      %v2343 = vadd.f32 %v2342, %v1496
      %v2344 = vadd.f32 %v2343, %v1497
      %v2345 = vadd.f32 %v2344, %v1498
      %v2346 = vadd.f32 %v2345, %v1499
      %v2347 = vadd.f32 %v2346, %v1500
      %2348 = vadd.xlane.f32.xlu0 %v2347
      %v2349 = vpop.xlane.xlu0 %2348
      %v2350 = vadd.f32 %v1501, %v1502
      %v2351 = vadd.f32 %v2350, %v1503
      %v2352 = vadd.f32 %v2351, %v1504
      %v2353 = vadd.f32 %v2352, %v1505
      %v2354 = vadd.f32 %v2353, %v1506
      %v2355 = vadd.f32 %v2354, %v1507
      %v2356 = vadd.f32 %v2355, %v1508
      %2357 = vadd.xlane.f32.xlu0 %v2356
      %v2358 = vpop.xlane.xlu0 %2357
      %v2359 = vadd.f32 %v1509, %v1510
      %v2360 = vadd.f32 %v2359, %v1511
      %v2361 = vadd.f32 %v2360, %v1512
      %v2362 = vadd.f32 %v2361, %v1513
      %v2363 = vadd.f32 %v2362, %v1514
      %v2364 = vadd.f32 %v2363, %v1515
      %v2365 = vadd.f32 %v2364, %v1516
      %2366 = vadd.xlane.f32.xlu0 %v2365
      %v2367 = vpop.xlane.xlu0 %2366
      %v2368 = vadd.f32 %v1517, %v1518
      %v2369 = vadd.f32 %v2368, %v1519
      %v2370 = vadd.f32 %v2369, %v1520
      %v2371 = vadd.f32 %v2370, %v1521
      %v2372 = vadd.f32 %v2371, %v1522
      %v2373 = vadd.f32 %v2372, %v1523
      %v2374 = vadd.f32 %v2373, %v1524
      %2375 = vadd.xlane.f32.xlu0 %v2374
      %v2376 = vpop.xlane.xlu0 %2375
      %v2377 = vadd.f32 %v1525, %v1526
      %v2378 = vadd.f32 %v2377, %v1527
      %v2379 = vadd.f32 %v2378, %v1528
      %v2380 = vadd.f32 %v2379, %v1529
      %v2381 = vadd.f32 %v2380, %v1530
      %v2382 = vadd.f32 %v2381, %v1531
      %v2383 = vadd.f32 %v2382, %v1532
      %2384 = vadd.xlane.f32.xlu0 %v2383
      %v2385 = vpop.xlane.xlu0 %2384
      %v2386 = vadd.f32 %v1533, %v1534
      %v2387 = vadd.f32 %v2386, %v1535
      %v2388 = vadd.f32 %v2387, %v1536
      %v2389 = vadd.f32 %v2388, %v1537
      %v2390 = vadd.f32 %v2389, %v1538
      %v2391 = vadd.f32 %v2390, %v1539
      %v2392 = vadd.f32 %v2391, %v1540
      %2393 = vadd.xlane.f32.xlu0 %v2392
      %v2394 = vpop.xlane.xlu0 %2393
      %v2395 = vadd.f32 %v1541, %v1542
      %v2396 = vadd.f32 %v2395, %v1543
      %v2397 = vadd.f32 %v2396, %v1544
      %v2398 = vadd.f32 %v2397, %v1545
      %v2399 = vadd.f32 %v2398, %v1546
      %v2400 = vadd.f32 %v2399, %v1547
      %v2401 = vadd.f32 %v2400, %v1548
      %2402 = vadd.xlane.f32.xlu0 %v2401
      %v2403 = vpop.xlane.xlu0 %2402
      %v2404 = vadd.f32 %v1549, %v1550
      %v2405 = vadd.f32 %v2404, %v1551
      %v2406 = vadd.f32 %v2405, %v1552
      %v2407 = vadd.f32 %v2406, %v1553
      %v2408 = vadd.f32 %v2407, %v1554
      %v2409 = vadd.f32 %v2408, %v1555
      %v2410 = vadd.f32 %v2409, %v1556
      %2411 = vadd.xlane.f32.xlu0 %v2410
      %v2412 = vpop.xlane.xlu0 %2411
      %v2413 = vadd.f32 %v1557, %v1558
      %v2414 = vadd.f32 %v2413, %v1559
      %v2415 = vadd.f32 %v2414, %v1560
      %v2416 = vadd.f32 %v2415, %v1561
      %v2417 = vadd.f32 %v2416, %v1562
      %v2418 = vadd.f32 %v2417, %v1563
      %v2419 = vadd.f32 %v2418, %v1564
      %2420 = vadd.xlane.f32.xlu0 %v2419
      %v2421 = vpop.xlane.xlu0 %2420
      %v2422 = vadd.f32 %v1565, %v1566
      %v2423 = vadd.f32 %v2422, %v1567
      %v2424 = vadd.f32 %v2423, %v1568
      %v2425 = vadd.f32 %v2424, %v1569
      %v2426 = vadd.f32 %v2425, %v1570
      %v2427 = vadd.f32 %v2426, %v1571
      %v2428 = vadd.f32 %v2427, %v1572
      %2429 = vadd.xlane.f32.xlu0 %v2428
      %v2430 = vpop.xlane.xlu0 %2429
      %v2431 = vadd.f32 %v1573, %v1574
      %v2432 = vadd.f32 %v2431, %v1575
      %v2433 = vadd.f32 %v2432, %v1576
      %v2434 = vadd.f32 %v2433, %v1577
      %v2435 = vadd.f32 %v2434, %v1578
      %v2436 = vadd.f32 %v2435, %v1579
      %v2437 = vadd.f32 %v2436, %v1580
      %2438 = vadd.xlane.f32.xlu0 %v2437
      %v2439 = vpop.xlane.xlu0 %2438
      %v2440 = vadd.f32 %v1581, %v1582
      %v2441 = vadd.f32 %v2440, %v1583
      %v2442 = vadd.f32 %v2441, %v1584
      %v2443 = vadd.f32 %v2442, %v1585
      %v2444 = vadd.f32 %v2443, %v1586
      %v2445 = vadd.f32 %v2444, %v1587
      %v2446 = vadd.f32 %v2445, %v1588
      %2447 = vadd.xlane.f32.xlu0 %v2446
      %v2448 = vpop.xlane.xlu0 %2447
      %v2449 = vadd.f32 %v1589, %v1590
      %v2450 = vadd.f32 %v2449, %v1591
      %v2451 = vadd.f32 %v2450, %v1592
      %v2452 = vadd.f32 %v2451, %v1593
      %v2453 = vadd.f32 %v2452, %v1594
      %v2454 = vadd.f32 %v2453, %v1595
      %v2455 = vadd.f32 %v2454, %v1596
      %2456 = vadd.xlane.f32.xlu0 %v2455
      %v2457 = vpop.xlane.xlu0 %2456
      %v2458 = vadd.f32 %v1597, %v1598
      %v2459 = vadd.f32 %v2458, %v1599
      %v2460 = vadd.f32 %v2459, %v1600
      %v2461 = vadd.f32 %v2460, %v1601
      %v2462 = vadd.f32 %v2461, %v1602
      %v2463 = vadd.f32 %v2462, %v1603
      %v2464 = vadd.f32 %v2463, %v1604
      %2465 = vadd.xlane.f32.xlu0 %v2464
      %v2466 = vpop.xlane.xlu0 %2465
      %v2467 = vadd.f32 %v1605, %v1606
      %v2468 = vadd.f32 %v2467, %v1607
      %v2469 = vadd.f32 %v2468, %v1608
      %v2470 = vadd.f32 %v2469, %v1609
      %v2471 = vadd.f32 %v2470, %v1610
      %v2472 = vadd.f32 %v2471, %v1611
      %v2473 = vadd.f32 %v2472, %v1612
      %2474 = vadd.xlane.f32.xlu0 %v2473
      %v2475 = vpop.xlane.xlu0 %2474
      %v2476 = vadd.f32 %v1613, %v1614
      %v2477 = vadd.f32 %v2476, %v1615
      %v2478 = vadd.f32 %v2477, %v1616
      %v2479 = vadd.f32 %v2478, %v1617
      %v2480 = vadd.f32 %v2479, %v1618
      %v2481 = vadd.f32 %v2480, %v1619
      %v2482 = vadd.f32 %v2481, %v1620
      %2483 = vadd.xlane.f32.xlu0 %v2482
      %v2484 = vpop.xlane.xlu0 %2483
      %v2485 = vadd.f32 %v1621, %v1622
      %v2486 = vadd.f32 %v2485, %v1623
      %v2487 = vadd.f32 %v2486, %v1624
      %v2488 = vadd.f32 %v2487, %v1625
      %v2489 = vadd.f32 %v2488, %v1626
      %v2490 = vadd.f32 %v2489, %v1627
      %v2491 = vadd.f32 %v2490, %v1628
      %2492 = vadd.xlane.f32.xlu0 %v2491
      %v2493 = vpop.xlane.xlu0 %2492
      %v2494 = vadd.f32 %v1629, %v1630
      %v2495 = vadd.f32 %v2494, %v1631
      %v2496 = vadd.f32 %v2495, %v1632
      %v2497 = vadd.f32 %v2496, %v1633
      %v2498 = vadd.f32 %v2497, %v1634
      %v2499 = vadd.f32 %v2498, %v1635
      %v2500 = vadd.f32 %v2499, %v1636
      %2501 = vadd.xlane.f32.xlu0 %v2500
      %v2502 = vpop.xlane.xlu0 %2501
      %v2503 = vadd.f32 %v1637, %v1638
      %v2504 = vadd.f32 %v2503, %v1639
      %v2505 = vadd.f32 %v2504, %v1640
      %v2506 = vadd.f32 %v2505, %v1641
      %v2507 = vadd.f32 %v2506, %v1642
      %v2508 = vadd.f32 %v2507, %v1643
      %v2509 = vadd.f32 %v2508, %v1644
      %2510 = vadd.xlane.f32.xlu0 %v2509
      %v2511 = vpop.xlane.xlu0 %2510
      %v2512 = vadd.f32 %v1645, %v1646
      %v2513 = vadd.f32 %v2512, %v1647
      %v2514 = vadd.f32 %v2513, %v1648
      %v2515 = vadd.f32 %v2514, %v1649
      %v2516 = vadd.f32 %v2515, %v1650
      %v2517 = vadd.f32 %v2516, %v1651
      %v2518 = vadd.f32 %v2517, %v1652
      %2519 = vadd.xlane.f32.xlu0 %v2518
      %v2520 = vpop.xlane.xlu0 %2519
      %v2521 = vadd.f32 %v1653, %v1654
      %v2522 = vadd.f32 %v2521, %v1655
      %v2523 = vadd.f32 %v2522, %v1656
      %v2524 = vadd.f32 %v2523, %v1657
      %v2525 = vadd.f32 %v2524, %v1658
      %v2526 = vadd.f32 %v2525, %v1659
      %v2527 = vadd.f32 %v2526, %v1660
      %2528 = vadd.xlane.f32.xlu0 %v2527
      %v2529 = vpop.xlane.xlu0 %2528
      %v2530 = vadd.f32 %v1661, %v1662
      %v2531 = vadd.f32 %v2530, %v1663
      %v2532 = vadd.f32 %v2531, %v1664
      %v2533 = vadd.f32 %v2532, %v1665
      %v2534 = vadd.f32 %v2533, %v1666
      %v2535 = vadd.f32 %v2534, %v1667
      %v2536 = vadd.f32 %v2535, %v1668
      %2537 = vadd.xlane.f32.xlu0 %v2536
      %v2538 = vpop.xlane.xlu0 %2537
      %v2539 = vadd.f32 %v1669, %v1670
      %v2540 = vadd.f32 %v2539, %v1671
      %v2541 = vadd.f32 %v2540, %v1672
      %v2542 = vadd.f32 %v2541, %v1673
      %v2543 = vadd.f32 %v2542, %v1674
      %v2544 = vadd.f32 %v2543, %v1675
      %v2545 = vadd.f32 %v2544, %v1676
      %2546 = vadd.xlane.f32.xlu0 %v2545
      %v2547 = vpop.xlane.xlu0 %2546
      %v2548 = vadd.f32 %v1677, %v1678
      %v2549 = vadd.f32 %v2548, %v1679
      %v2550 = vadd.f32 %v2549, %v1680
      %v2551 = vadd.f32 %v2550, %v1681
      %v2552 = vadd.f32 %v2551, %v1682
      %v2553 = vadd.f32 %v2552, %v1683
      %v2554 = vadd.f32 %v2553, %v1684
      %2555 = vadd.xlane.f32.xlu0 %v2554
      %v2556 = vpop.xlane.xlu0 %2555
      %v2557 = vadd.f32 %v1685, %v1686
      %v2558 = vadd.f32 %v2557, %v1687
      %v2559 = vadd.f32 %v2558, %v1688
      %v2560 = vadd.f32 %v2559, %v1689
      %v2561 = vadd.f32 %v2560, %v1690
      %v2562 = vadd.f32 %v2561, %v1691
      %v2563 = vadd.f32 %v2562, %v1692
      %2564 = vadd.xlane.f32.xlu0 %v2563
      %v2565 = vpop.xlane.xlu0 %2564
      %v2566 = vadd.f32 %v1693, %v1694
      %v2567 = vadd.f32 %v2566, %v1695
      %v2568 = vadd.f32 %v2567, %v1696
      %v2569 = vadd.f32 %v2568, %v1697
      %v2570 = vadd.f32 %v2569, %v1698
      %v2571 = vadd.f32 %v2570, %v1699
      %v2572 = vadd.f32 %v2571, %v1700
      %2573 = vadd.xlane.f32.xlu0 %v2572
      %v2574 = vpop.xlane.xlu0 %2573
      %v2575 = vadd.f32 %v1701, %v1702
      %v2576 = vadd.f32 %v2575, %v1703
      %v2577 = vadd.f32 %v2576, %v1704
      %v2578 = vadd.f32 %v2577, %v1705
      %v2579 = vadd.f32 %v2578, %v1706
      %v2580 = vadd.f32 %v2579, %v1707
      %v2581 = vadd.f32 %v2580, %v1708
      %2582 = vadd.xlane.f32.xlu0 %v2581
      %v2583 = vpop.xlane.xlu0 %2582
      %v2584 = vadd.f32 %v1709, %v1710
      %v2585 = vadd.f32 %v2584, %v1711
      %v2586 = vadd.f32 %v2585, %v1712
      %v2587 = vadd.f32 %v2586, %v1713
      %v2588 = vadd.f32 %v2587, %v1714
      %v2589 = vadd.f32 %v2588, %v1715
      %v2590 = vadd.f32 %v2589, %v1716
      %2591 = vadd.xlane.f32.xlu0 %v2590
      %v2592 = vpop.xlane.xlu0 %2591
      %v2593 = vadd.f32 %v1717, %v1718
      %v2594 = vadd.f32 %v2593, %v1719
      %v2595 = vadd.f32 %v2594, %v1720
      %v2596 = vadd.f32 %v2595, %v1721
      %v2597 = vadd.f32 %v2596, %v1722
      %v2598 = vadd.f32 %v2597, %v1723
      %v2599 = vadd.f32 %v2598, %v1724
      %2600 = vadd.xlane.f32.xlu0 %v2599
      %v2601 = vpop.xlane.xlu0 %2600
      %v2602 = vadd.f32 %v1725, %v1726
      %v2603 = vadd.f32 %v2602, %v1727
      %v2604 = vadd.f32 %v2603, %v1728
      %v2605 = vadd.f32 %v2604, %v1729
      %v2606 = vadd.f32 %v2605, %v1730
      %v2607 = vadd.f32 %v2606, %v1731
      %v2608 = vadd.f32 %v2607, %v1732
      %2609 = vadd.xlane.f32.xlu0 %v2608
      %v2610 = vpop.xlane.xlu0 %2609
      %v2611 = vadd.f32 %v1733, %v1734
      %v2612 = vadd.f32 %v2611, %v1735
      %v2613 = vadd.f32 %v2612, %v1736
      %v2614 = vadd.f32 %v2613, %v1737
      %v2615 = vadd.f32 %v2614, %v1738
      %v2616 = vadd.f32 %v2615, %v1739
      %v2617 = vadd.f32 %v2616, %v1740
      %2618 = vadd.xlane.f32.xlu0 %v2617
      %v2619 = vpop.xlane.xlu0 %2618
      %v2620 = vadd.f32 %v1741, %v1742
      %v2621 = vadd.f32 %v2620, %v1743
      %v2622 = vadd.f32 %v2621, %v1744
      %v2623 = vadd.f32 %v2622, %v1745
      %v2624 = vadd.f32 %v2623, %v1746
      %v2625 = vadd.f32 %v2624, %v1747
      %v2626 = vadd.f32 %v2625, %v1748
      %2627 = vadd.xlane.f32.xlu0 %v2626
      %v2628 = vpop.xlane.xlu0 %2627
      %v2629 = vadd.f32 %v1749, %v1750
      %v2630 = vadd.f32 %v2629, %v1751
      %v2631 = vadd.f32 %v2630, %v1752
      %v2632 = vadd.f32 %v2631, %v1753
      %v2633 = vadd.f32 %v2632, %v1754
      %v2634 = vadd.f32 %v2633, %v1755
      %v2635 = vadd.f32 %v2634, %v1756
      %2636 = vadd.xlane.f32.xlu0 %v2635
      %v2637 = vpop.xlane.xlu0 %2636
      %v2638 = vadd.f32 %v1757, %v1758
      %v2639 = vadd.f32 %v2638, %v1759
      %v2640 = vadd.f32 %v2639, %v1760
      %v2641 = vadd.f32 %v2640, %v1761
      %v2642 = vadd.f32 %v2641, %v1762
      %v2643 = vadd.f32 %v2642, %v1763
      %v2644 = vadd.f32 %v2643, %v1764
      %2645 = vadd.xlane.f32.xlu0 %v2644
      %v2646 = vpop.xlane.xlu0 %2645
      %v2647 = vld [vmem:[#allocation2] sm:$0x1]
      %v2649 = vperm.slane %v2647, 0
      %v2651 = vadd.f32 %v1773, %v2649
      %v2652 = vadd.f32 %v1782, %v2649
      %v2653 = vadd.f32 %v1791, %v2649
      %v2654 = vadd.f32 %v1800, %v2649
      %v2655 = vadd.f32 %v1809, %v2649
      %v2656 = vadd.f32 %v1818, %v2649
      %v2657 = vadd.f32 %v1827, %v2649
      %v2658 = vadd.f32 %v1836, %v2649
      %v2659 = vadd.f32 %v1845, %v2649
      %v2660 = vadd.f32 %v1854, %v2649
      %v2661 = vadd.f32 %v1863, %v2649
      %v2662 = vadd.f32 %v1872, %v2649
      %v2663 = vadd.f32 %v1881, %v2649
      %v2664 = vadd.f32 %v1890, %v2649
      %v2665 = vadd.f32 %v1899, %v2649
      %v2666 = vadd.f32 %v1908, %v2649
      %v2667 = vadd.f32 %v1917, %v2649
      %v2668 = vadd.f32 %v1926, %v2649
      %v2669 = vadd.f32 %v1935, %v2649
      %v2670 = vadd.f32 %v1944, %v2649
      %v2671 = vadd.f32 %v1953, %v2649
      %v2672 = vadd.f32 %v1962, %v2649
      %v2673 = vadd.f32 %v1971, %v2649
      %v2674 = vadd.f32 %v1980, %v2649
      %v2675 = vadd.f32 %v1989, %v2649
      %v2676 = vadd.f32 %v1998, %v2649
      %v2677 = vadd.f32 %v2007, %v2649
      %v2678 = vadd.f32 %v2016, %v2649
      %v2679 = vadd.f32 %v2025, %v2649
      %v2680 = vadd.f32 %v2034, %v2649
      %v2681 = vadd.f32 %v2043, %v2649
      %v2682 = vadd.f32 %v2052, %v2649
      %v2683 = vadd.f32 %v2061, %v2649
      %v2684 = vadd.f32 %v2070, %v2649
      %v2685 = vadd.f32 %v2079, %v2649
      %v2686 = vadd.f32 %v2088, %v2649
      %v2687 = vadd.f32 %v2097, %v2649
      %v2688 = vadd.f32 %v2106, %v2649
      %v2689 = vadd.f32 %v2115, %v2649
      %v2690 = vadd.f32 %v2124, %v2649
      %v2691 = vadd.f32 %v2133, %v2649
      %v2692 = vadd.f32 %v2142, %v2649
      %v2693 = vadd.f32 %v2151, %v2649
      %v2694 = vadd.f32 %v2160, %v2649
      %v2695 = vadd.f32 %v2169, %v2649
      %v2696 = vadd.f32 %v2178, %v2649
      %v2697 = vadd.f32 %v2187, %v2649
      %v2698 = vadd.f32 %v2196, %v2649
      %v2699 = vadd.f32 %v2205, %v2649
      %v2700 = vadd.f32 %v2214, %v2649
      %v2701 = vadd.f32 %v2223, %v2649
      %v2702 = vadd.f32 %v2232, %v2649
      %v2703 = vadd.f32 %v2241, %v2649
      %v2704 = vadd.f32 %v2250, %v2649
      %v2705 = vadd.f32 %v2259, %v2649
      %v2706 = vadd.f32 %v2268, %v2649
      %v2707 = vadd.f32 %v2277, %v2649
      %v2708 = vadd.f32 %v2286, %v2649
      %v2709 = vadd.f32 %v2295, %v2649
      %v2710 = vadd.f32 %v2304, %v2649
      %v2711 = vadd.f32 %v2313, %v2649
      %v2712 = vadd.f32 %v2322, %v2649
      %v2713 = vadd.f32 %v2331, %v2649
      %v2714 = vadd.f32 %v2340, %v2649
      %v2715 = vadd.f32 %v2349, %v2649
      %v2716 = vadd.f32 %v2358, %v2649
      %v2717 = vadd.f32 %v2367, %v2649
      %v2718 = vadd.f32 %v2376, %v2649
      %v2719 = vadd.f32 %v2385, %v2649
      %v2720 = vadd.f32 %v2394, %v2649
      %v2721 = vadd.f32 %v2403, %v2649
      %v2722 = vadd.f32 %v2412, %v2649
      %v2723 = vadd.f32 %v2421, %v2649
      %v2724 = vadd.f32 %v2430, %v2649
      %v2725 = vadd.f32 %v2439, %v2649
      %v2726 = vadd.f32 %v2448, %v2649
      %v2727 = vadd.f32 %v2457, %v2649
      %v2728 = vadd.f32 %v2466, %v2649
      %v2729 = vadd.f32 %v2475, %v2649
      %v2730 = vadd.f32 %v2484, %v2649
      %v2731 = vadd.f32 %v2493, %v2649
      %v2732 = vadd.f32 %v2502, %v2649
      %v2733 = vadd.f32 %v2511, %v2649
      %v2734 = vadd.f32 %v2520, %v2649
      %v2735 = vadd.f32 %v2529, %v2649
      %v2736 = vadd.f32 %v2538, %v2649
      %v2737 = vadd.f32 %v2547, %v2649
      %v2738 = vadd.f32 %v2556, %v2649
      %v2739 = vadd.f32 %v2565, %v2649
      %v2740 = vadd.f32 %v2574, %v2649
      %v2741 = vadd.f32 %v2583, %v2649
      %v2742 = vadd.f32 %v2592, %v2649
      %v2743 = vadd.f32 %v2601, %v2649
      %v2744 = vadd.f32 %v2610, %v2649
      %v2745 = vadd.f32 %v2619, %v2649
      %v2746 = vadd.f32 %v2628, %v2649
      %v2747 = vadd.f32 %v2637, %v2649
      %v2748 = vadd.f32 %v2646, %v2649
      %v2749 = vtanh.pop %v2651
      %v2750 = vtanh.pop %v2652
      %v2751 = vtanh.pop %v2653
      %v2752 = vtanh.pop %v2654
      %v2753 = vtanh.pop %v2655
      %v2754 = vtanh.pop %v2656
      %v2755 = vtanh.pop %v2657
      %v2756 = vtanh.pop %v2658
      %v2757 = vtanh.pop %v2659
      %v2758 = vtanh.pop %v2660
      %v2759 = vtanh.pop %v2661
      %v2760 = vtanh.pop %v2662
      %v2761 = vtanh.pop %v2663
      %v2762 = vtanh.pop %v2664
      %v2763 = vtanh.pop %v2665
      %v2764 = vtanh.pop %v2666
      %v2765 = vtanh.pop %v2667
      %v2766 = vtanh.pop %v2668
      %v2767 = vtanh.pop %v2669
      %v2768 = vtanh.pop %v2670
      %v2769 = vtanh.pop %v2671
      %v2770 = vtanh.pop %v2672
      %v2771 = vtanh.pop %v2673
      %v2772 = vtanh.pop %v2674
      %v2773 = vtanh.pop %v2675
      %v2774 = vtanh.pop %v2676
      %v2775 = vtanh.pop %v2677
      %v2776 = vtanh.pop %v2678
      %v2777 = vtanh.pop %v2679
      %v2778 = vtanh.pop %v2680
      %v2779 = vtanh.pop %v2681
      %v2780 = vtanh.pop %v2682
      %v2781 = vtanh.pop %v2683
      %v2782 = vtanh.pop %v2684
      %v2783 = vtanh.pop %v2685
      %v2784 = vtanh.pop %v2686
      %v2785 = vtanh.pop %v2687
      %v2786 = vtanh.pop %v2688
      %v2787 = vtanh.pop %v2689
      %v2788 = vtanh.pop %v2690
      %v2789 = vtanh.pop %v2691
      %v2790 = vtanh.pop %v2692
      %v2791 = vtanh.pop %v2693
      %v2792 = vtanh.pop %v2694
      %v2793 = vtanh.pop %v2695
      %v2794 = vtanh.pop %v2696
      %v2795 = vtanh.pop %v2697
      %v2796 = vtanh.pop %v2698
      %v2797 = vtanh.pop %v2699
      %v2798 = vtanh.pop %v2700
      %v2799 = vtanh.pop %v2701
      %v2800 = vtanh.pop %v2702
      %v2801 = vtanh.pop %v2703
      %v2802 = vtanh.pop %v2704
      %v2803 = vtanh.pop %v2705
      %v2804 = vtanh.pop %v2706
      %v2805 = vtanh.pop %v2707
      %v2806 = vtanh.pop %v2708
      %v2807 = vtanh.pop %v2709
      %v2808 = vtanh.pop %v2710
      %v2809 = vtanh.pop %v2711
      %v2810 = vtanh.pop %v2712
      %v2811 = vtanh.pop %v2713
      %v2812 = vtanh.pop %v2714
      %v2813 = vtanh.pop %v2715
      %v2814 = vtanh.pop %v2716
      %v2815 = vtanh.pop %v2717
      %v2816 = vtanh.pop %v2718
      %v2817 = vtanh.pop %v2719
      %v2818 = vtanh.pop %v2720
      %v2819 = vtanh.pop %v2721
      %v2820 = vtanh.pop %v2722
      %v2821 = vtanh.pop %v2723
      %v2822 = vtanh.pop %v2724
      %v2823 = vtanh.pop %v2725
      %v2824 = vtanh.pop %v2726
      %v2825 = vtanh.pop %v2727
      %v2826 = vtanh.pop %v2728
      %v2827 = vtanh.pop %v2729
      %v2828 = vtanh.pop %v2730
      %v2829 = vtanh.pop %v2731
      %v2830 = vtanh.pop %v2732
      %v2831 = vtanh.pop %v2733
      %v2832 = vtanh.pop %v2734
      %v2833 = vtanh.pop %v2735
      %v2834 = vtanh.pop %v2736
      %v2835 = vtanh.pop %v2737
      %v2836 = vtanh.pop %v2738
      %v2837 = vtanh.pop %v2739
      %v2838 = vtanh.pop %v2740
      %v2839 = vtanh.pop %v2741
      %v2840 = vtanh.pop %v2742
      %v2841 = vtanh.pop %v2743
      %v2842 = vtanh.pop %v2744
      %v2843 = vtanh.pop %v2745
      %v2844 = vtanh.pop %v2746
      %v2845 = vtanh.pop %v2747
      %v2846 = vtanh.pop %v2748
      %vm2847 = vcmask 7168
      %2848 = vst.msk [vmem:[%s177] sm:$0xff] %vm2847, %v2749
      %2849 = vst.msk [vmem:[%s177 + $0x8] sm:$0xff] %vm2847, %v2750
      %2850 = vst.msk [vmem:[%s177 + $0x10] sm:$0xff] %vm2847, %v2751
      %2851 = vst.msk [vmem:[%s177 + $0x18] sm:$0xff] %vm2847, %v2752
      %2852 = vst.msk [vmem:[%s177 + $0x20] sm:$0xff] %vm2847, %v2753
      %2853 = vst.msk [vmem:[%s177 + $0x28] sm:$0xff] %vm2847, %v2754
      %2854 = vst.msk [vmem:[%s177 + $0x30] sm:$0xff] %vm2847, %v2755
      %2855 = vst.msk [vmem:[%s177 + $0x38] sm:$0xff] %vm2847, %v2756
      %2856 = vst.msk [vmem:[%s177 + $0x40] sm:$0xff] %vm2847, %v2757
      %2857 = vst.msk [vmem:[%s177 + $0x48] sm:$0xff] %vm2847, %v2758
      %2858 = vst.msk [vmem:[%s177 + $0x50] sm:$0xff] %vm2847, %v2759
      %2859 = vst.msk [vmem:[%s177 + $0x58] sm:$0xff] %vm2847, %v2760
      %2860 = vst.msk [vmem:[%s177 + $0x60] sm:$0xff] %vm2847, %v2761
      %2861 = vst.msk [vmem:[%s177 + $0x68] sm:$0xff] %vm2847, %v2762
      %2862 = vst.msk [vmem:[%s177 + $0x70] sm:$0xff] %vm2847, %v2763
      %2863 = vst.msk [vmem:[%s177 + $0x78] sm:$0xff] %vm2847, %v2764
      %2864 = vst.msk [vmem:[%s177 + $0x80] sm:$0xff] %vm2847, %v2765
      %2865 = vst.msk [vmem:[%s177 + $0x88] sm:$0xff] %vm2847, %v2766
      %2866 = vst.msk [vmem:[%s177 + $0x90] sm:$0xff] %vm2847, %v2767
      %2867 = vst.msk [vmem:[%s177 + $0x98] sm:$0xff] %vm2847, %v2768
      %2868 = vst.msk [vmem:[%s177 + $0xa0] sm:$0xff] %vm2847, %v2769
      %2869 = vst.msk [vmem:[%s177 + $0xa8] sm:$0xff] %vm2847, %v2770
      %2870 = vst.msk [vmem:[%s177 + $0xb0] sm:$0xff] %vm2847, %v2771
      %2871 = vst.msk [vmem:[%s177 + $0xb8] sm:$0xff] %vm2847, %v2772
      %2872 = vst.msk [vmem:[%s177 + $0xc0] sm:$0xff] %vm2847, %v2773
      %2873 = vst.msk [vmem:[%s177 + $0xc8] sm:$0xff] %vm2847, %v2774
      %2874 = vst.msk [vmem:[%s177 + $0xd0] sm:$0xff] %vm2847, %v2775
      %2875 = vst.msk [vmem:[%s177 + $0xd8] sm:$0xff] %vm2847, %v2776
      %2876 = vst.msk [vmem:[%s177 + $0xe0] sm:$0xff] %vm2847, %v2777
      %2877 = vst.msk [vmem:[%s177 + $0xe8] sm:$0xff] %vm2847, %v2778
      %2878 = vst.msk [vmem:[%s177 + $0xf0] sm:$0xff] %vm2847, %v2779
      %2879 = vst.msk [vmem:[%s177 + $0xf8] sm:$0xff] %vm2847, %v2780
      %2880 = vst.msk [vmem:[%s177 + $0x100] sm:$0xff] %vm2847, %v2781
      %2881 = vst.msk [vmem:[%s177 + $0x108] sm:$0xff] %vm2847, %v2782
      %2882 = vst.msk [vmem:[%s177 + $0x110] sm:$0xff] %vm2847, %v2783
      %2883 = vst.msk [vmem:[%s177 + $0x118] sm:$0xff] %vm2847, %v2784
      %2884 = vst.msk [vmem:[%s177 + $0x120] sm:$0xff] %vm2847, %v2785
      %2885 = vst.msk [vmem:[%s177 + $0x128] sm:$0xff] %vm2847, %v2786
      %2886 = vst.msk [vmem:[%s177 + $0x130] sm:$0xff] %vm2847, %v2787
      %2887 = vst.msk [vmem:[%s177 + $0x138] sm:$0xff] %vm2847, %v2788
      %2888 = vst.msk [vmem:[%s177 + $0x140] sm:$0xff] %vm2847, %v2789
      %2889 = vst.msk [vmem:[%s177 + $0x148] sm:$0xff] %vm2847, %v2790
      %2890 = vst.msk [vmem:[%s177 + $0x150] sm:$0xff] %vm2847, %v2791
      %2891 = vst.msk [vmem:[%s177 + $0x158] sm:$0xff] %vm2847, %v2792
      %2892 = vst.msk [vmem:[%s177 + $0x160] sm:$0xff] %vm2847, %v2793
      %2893 = vst.msk [vmem:[%s177 + $0x168] sm:$0xff] %vm2847, %v2794
      %2894 = vst.msk [vmem:[%s177 + $0x170] sm:$0xff] %vm2847, %v2795
      %2895 = vst.msk [vmem:[%s177 + $0x178] sm:$0xff] %vm2847, %v2796
      %2896 = vst.msk [vmem:[%s177 + $0x180] sm:$0xff] %vm2847, %v2797
      %2897 = vst.msk [vmem:[%s177 + $0x188] sm:$0xff] %vm2847, %v2798
      %2898 = vst.msk [vmem:[%s177 + $0x190] sm:$0xff] %vm2847, %v2799
      %2899 = vst.msk [vmem:[%s177 + $0x198] sm:$0xff] %vm2847, %v2800
      %2900 = vst.msk [vmem:[%s177 + $0x1a0] sm:$0xff] %vm2847, %v2801
      %2901 = vst.msk [vmem:[%s177 + $0x1a8] sm:$0xff] %vm2847, %v2802
      %2902 = vst.msk [vmem:[%s177 + $0x1b0] sm:$0xff] %vm2847, %v2803
      %2903 = vst.msk [vmem:[%s177 + $0x1b8] sm:$0xff] %vm2847, %v2804
      %2904 = vst.msk [vmem:[%s177 + $0x1c0] sm:$0xff] %vm2847, %v2805
      %2905 = vst.msk [vmem:[%s177 + $0x1c8] sm:$0xff] %vm2847, %v2806
      %2906 = vst.msk [vmem:[%s177 + $0x1d0] sm:$0xff] %vm2847, %v2807
      %2907 = vst.msk [vmem:[%s177 + $0x1d8] sm:$0xff] %vm2847, %v2808
      %2908 = vst.msk [vmem:[%s177 + $0x1e0] sm:$0xff] %vm2847, %v2809
      %2909 = vst.msk [vmem:[%s177 + $0x1e8] sm:$0xff] %vm2847, %v2810
      %2910 = vst.msk [vmem:[%s177 + $0x1f0] sm:$0xff] %vm2847, %v2811
      %2911 = vst.msk [vmem:[%s177 + $0x1f8] sm:$0xff] %vm2847, %v2812
      %2912 = vst.msk [vmem:[%s177 + $0x200] sm:$0xff] %vm2847, %v2813
      %2913 = vst.msk [vmem:[%s177 + $0x208] sm:$0xff] %vm2847, %v2814
      %2914 = vst.msk [vmem:[%s177 + $0x210] sm:$0xff] %vm2847, %v2815
      %2915 = vst.msk [vmem:[%s177 + $0x218] sm:$0xff] %vm2847, %v2816
      %2916 = vst.msk [vmem:[%s177 + $0x220] sm:$0xff] %vm2847, %v2817
      %2917 = vst.msk [vmem:[%s177 + $0x228] sm:$0xff] %vm2847, %v2818
      %2918 = vst.msk [vmem:[%s177 + $0x230] sm:$0xff] %vm2847, %v2819
      %2919 = vst.msk [vmem:[%s177 + $0x238] sm:$0xff] %vm2847, %v2820
      %2920 = vst.msk [vmem:[%s177 + $0x240] sm:$0xff] %vm2847, %v2821
      %2921 = vst.msk [vmem:[%s177 + $0x248] sm:$0xff] %vm2847, %v2822
      %2922 = vst.msk [vmem:[%s177 + $0x250] sm:$0xff] %vm2847, %v2823
      %2923 = vst.msk [vmem:[%s177 + $0x258] sm:$0xff] %vm2847, %v2824
      %2924 = vst.msk [vmem:[%s177 + $0x260] sm:$0xff] %vm2847, %v2825
      %2925 = vst.msk [vmem:[%s177 + $0x268] sm:$0xff] %vm2847, %v2826
      %2926 = vst.msk [vmem:[%s177 + $0x270] sm:$0xff] %vm2847, %v2827
      %2927 = vst.msk [vmem:[%s177 + $0x278] sm:$0xff] %vm2847, %v2828
      %2928 = vst.msk [vmem:[%s177 + $0x280] sm:$0xff] %vm2847, %v2829
      %2929 = vst.msk [vmem:[%s177 + $0x288] sm:$0xff] %vm2847, %v2830
      %2930 = vst.msk [vmem:[%s177 + $0x290] sm:$0xff] %vm2847, %v2831
      %2931 = vst.msk [vmem:[%s177 + $0x298] sm:$0xff] %vm2847, %v2832
      %2932 = vst.msk [vmem:[%s177 + $0x2a0] sm:$0xff] %vm2847, %v2833
      %2933 = vst.msk [vmem:[%s177 + $0x2a8] sm:$0xff] %vm2847, %v2834
      %2934 = vst.msk [vmem:[%s177 + $0x2b0] sm:$0xff] %vm2847, %v2835
      %2935 = vst.msk [vmem:[%s177 + $0x2b8] sm:$0xff] %vm2847, %v2836
      %2936 = vst.msk [vmem:[%s177 + $0x2c0] sm:$0xff] %vm2847, %v2837
      %2937 = vst.msk [vmem:[%s177 + $0x2c8] sm:$0xff] %vm2847, %v2838
      %2938 = vst.msk [vmem:[%s177 + $0x2d0] sm:$0xff] %vm2847, %v2839
      %2939 = vst.msk [vmem:[%s177 + $0x2d8] sm:$0xff] %vm2847, %v2840
      %2940 = vst.msk [vmem:[%s177 + $0x2e0] sm:$0xff] %vm2847, %v2841
      %2941 = vst.msk [vmem:[%s177 + $0x2e8] sm:$0xff] %vm2847, %v2842
      %2942 = vst.msk [vmem:[%s177 + $0x2f0] sm:$0xff] %vm2847, %v2843
      %2943 = vst.msk [vmem:[%s177 + $0x2f8] sm:$0xff] %vm2847, %v2844
      %2944 = vst.msk [vmem:[%s177 + $0x300] sm:$0xff] %vm2847, %v2845
      %2945 = vst.msk [vmem:[%s177 + $0x308] sm:$0xff] %vm2847, %v2846
      %s2946 = smul.u32 98, %s16
      %p2947 = scmp.lt.s32.totalorder %s2946, 195
      %s2948 = scalar_select %p2947, %s2946, 195
      %s2949 = smul.addr %s2948, 8
      %s2950 = scalar_lea.vmem %s3, %s2949
      // Predicated region
      $region33: #{generator_forward.5} parent=31 // pred_check
        %p2951 = pneg %p102
      $region34: #{generator_forward.5} parent=31 // pred_check_branch
        %2953 = sbr.rel (%p2951) target = $region36
      $region35: #{generator_forward.5} parent=31 // pred_region
        %s2954 = smul.u32 98, %s16
      $region36: #{generator_forward.5} parent=31 // pred_fallthru
        _
    $region32: #{generator_forward.5} parent=5 // pred_fallthru
      _
    %p2955 = scmp.le.s32.totalorder 2, %s11
    // Predicated region
    $region37: #{generator_forward.5} parent=5 // pred_check
      %p2956 = pneg %p2955
    $region38: #{generator_forward.5} parent=5 // pred_check_branch
      %2958 = sbr.rel (%p2956) target = $region40
    $region39: #{generator_forward.5} parent=5 // pred_region
      %s2959 = ssub.s32 %s11, 2
      // Predicated region
      $region41: #{generator_forward.5} parent=39 // pred_check
        %p2960 = pneg %p108
      $region42: #{generator_forward.5} parent=39 // pred_check_branch
        %2962 = sbr.rel (%p2960) target = $region44
      $region43: #{generator_forward.5} parent=39 // pred_region
        %s2963 = smul.u32 98, %s17
        %p2964 = scmp.lt.s32.totalorder %s2963, 195
        %s2965 = scalar_select %p2964, %s2963, 195
        %s2966 = smul.addr %s2965, 8
        %s2967 = scalar_lea.vmem %s3, %s2966
      $region44: #{generator_forward.5} parent=39 // pred_fallthru
        _
    $region40: #{generator_forward.5} parent=5 // pred_fallthru
      _
  $region6: #{generator_forward.5} parent=0 // loop_footer
    %s15 = sadd.s32 1, %s11
  $region7: #{generator_forward.5} parent=0 // loop_footer_branch
    %10 = sbr.rel target = $region3
  $region8: #{generator_forward.5} parent=0 // loop_exit
    _

</llo_original>
